<compile_context>
chip_gen: v7x
topology: tpu7x:2x2x1
jax: 0.10.0
libtpu: 0.0.40
codegen_flags: <defaults>
</compile_context>

<pallas_src>
import functools

import numpy as np
import jax
import jax.numpy as jnp
from jax import lax
from jax.experimental import pallas as pl
from jax.experimental.pallas import tpu as pltpu


# ------------------------------ geometry helpers ------------------------------
def _conv_out(size, k, stride):
    return (size - k) // stride + 1


def _pick_block_b(n):
    """Batch-block size: multiple of 8, larger for bigger batches so the grid
    still has several steps (keeps both v7x TensorCores busy)."""
    if n >= 256:
        return 32
    if n >= 64:
        return 16
    return 8


# ------------------------------ fused kernel ----------------------------------
def _dqn_fused_kernel(x_ref, wt1_ref, bt1_ref, wt2_ref, bt2_ref, wt3_ref,
                      bt3_ref, v1_ref, bf1_ref, v2_ref, bf2_ref, o_ref,
                      *, bb, dims):
    """Whole DQN forward for a block of `bb` samples.

    Activation layout throughout: rows = (h, b), cols = (w, c); all gathers are
    static 8-row-aligned slices, all heavy math is a handful of large-K GEMMs.
    """
    (_, w0), (h1, w1), (h2, w2), (h3, w3) = dims
    mxu_dtype = wt1_ref.dtype

    def mm(a, b):
        return jnp.dot(a.astype(mxu_dtype), b,
                       preferred_element_type=jnp.float32)

    # ---- conv1 + ReLU: 8 row-tap GEMMs, column gather folded into wt1 -------
    # LHS_i rows are image rows 4*oh + i for every sample: (h1*bb, w0).
    acc = None
    for i in range(8):
        lhs = jnp.concatenate(
            [x_ref[:, 4 * oh + i, :] for oh in range(h1)], axis=0)
        term = mm(lhs, wt1_ref[i])                       # (h1*bb, w1*32)
        acc = term if acc is None else acc + term
    a1 = jnp.maximum(acc + bt1_ref[...], 0.0)            # rows (h1, b), cols (w1, c)

    # ---- conv2 + ReLU: 4 row-tap GEMMs, K = w1*32 ----------------------------
    acc = None
    for i in range(4):
        lhs = jnp.concatenate(
            [a1[(2 * oh + i) * bb:(2 * oh + i + 1) * bb] for oh in range(h2)],
            axis=0)                                      # (h2*bb, w1*32)
        term = mm(lhs, wt2_ref[i])                       # (h2*bb, w2*64)
        acc = term if acc is None else acc + term
    a2 = jnp.maximum(acc + bt2_ref[...], 0.0)

    # ---- conv3 + ReLU: 3 row-tap GEMMs, K = w2*64 ----------------------------
    acc = None
    for i in range(3):
        lhs = jnp.concatenate(
            [a2[(oh + i) * bb:(oh + i + 1) * bb] for oh in range(h3)], axis=0)
        term = mm(lhs, wt3_ref[i])                       # (h3*bb, w3*64)
        acc = term if acc is None else acc + term
    a3 = jnp.maximum(acc + bt3_ref[...], 0.0)            # rows (h3, b), cols (w3, c)

    # ---- fc1 + ReLU: ONE (bb, h3*w3*64) @ (h3*w3*64, 512) GEMM ---------------
    # PyTorch's NCHW flatten is folded into v1 in prepare_params.
    flat = jnp.concatenate(
        [a3[y * bb:(y + 1) * bb] for y in range(h3)], axis=1)   # (bb, h3*w3*64)
    hid = jnp.maximum(mm(flat, v1_ref[...]) + bf1_ref[...], 0.0)  # (bb, 512)

    # ---- fc2: ONE (bb, 512) @ (512, n_pad) GEMM, lane-dense store ------------
    o_ref[...] = (mm(hid, v2_ref[...]) + bf2_ref[...]).astype(o_ref.dtype)


# ------------------------------ parameters ------------------------------------
def init_params(key, input_dims, n_actions):
    """Raw parameters in PyTorch layout (Conv2d OIHW, Linear (out, in))."""
    c_in, h, w = input_dims
    h1, w1 = _conv_out(h, 8, 4), _conv_out(w, 8, 4)
    h2, w2 = _conv_out(h1, 4, 2), _conv_out(w1, 4, 2)
    h3, w3 = _conv_out(h2, 3, 1), _conv_out(w2, 3, 1)
    fc_input_dims = 64 * h3 * w3

    ks = jax.random.split(key, 10)

    def u(k, shape, fan_in):
        bound = 1.0 / jnp.sqrt(fan_in)
        return jax.random.uniform(k, shape, jnp.float32, -bound, bound)

    params = {
        "conv1_w": u(ks[0], (32, c_in, 8, 8), c_in * 8 * 8),
        "conv1_b": u(ks[1], (32,), c_in * 8 * 8),
        "conv2_w": u(ks[2], (64, 32, 4, 4), 32 * 4 * 4),
        "conv2_b": u(ks[3], (64,), 32 * 4 * 4),
        "conv3_w": u(ks[4], (64, 64, 3, 3), 64 * 3 * 3),
        "conv3_b": u(ks[5], (64,), 64 * 3 * 3),
        "fc1_w":   u(ks[6], (512, fc_input_dims), fc_input_dims),
        "fc1_b":   u(ks[7], (512,), fc_input_dims),
        "fc2_w":   u(ks[8], (n_actions, 512), 512),
        "fc2_b":   u(ks[9], (n_actions,), 512),
    }
    return params, fc_input_dims


def prepare_params(params, input_dims, n_actions, mxu_dtype=jnp.float32):
    """One-time conversion of PyTorch-layout params into kernel-ready operands.

    Each conv layer l becomes KH "row-tap" weights wt_l[i] of shape
    (W_in*C_in, W_out*C_out): the kernel-column (j) gather is folded into a
    banded matrix so the kernel never gathers along lanes or pays selection
    FLOPs as a separate matmul.  mxu_dtype=jnp.bfloat16 enables bf16 MXU
    inputs on v6e/v7x (accumulation stays f32 in-kernel).
    """
    c_in, h0, w0 = input_dims
    assert c_in == 1, "DeepQNetwork.conv1 has a single input channel"
    h1, w1 = _conv_out(h0, 8, 4), _conv_out(w0, 8, 4)
    h2, w2 = _conv_out(h1, 4, 2), _conv_out(w1, 4, 2)
    h3, w3 = _conv_out(h2, 3, 1), _conv_out(w2, 3, 1)
    n_pad = pl.cdiv(n_actions, 128) * 128

    c1w = np.asarray(params["conv1_w"], np.float32)   # (32, 1, 8, 8)
    c1b = np.asarray(params["conv1_b"], np.float32)
    c2w = np.asarray(params["conv2_w"], np.float32)   # (64, 32, 4, 4)
    c2b = np.asarray(params["conv2_b"], np.float32)
    c3w = np.asarray(params["conv3_w"], np.float32)   # (64, 64, 3, 3)
    c3b = np.asarray(params["conv3_b"], np.float32)
    f1w = np.asarray(params["fc1_w"], np.float32)     # (512, 64*h3*w3)
    f1b = np.asarray(params["fc1_b"], np.float32)
    f2w = np.asarray(params["fc2_w"], np.float32)     # (n_actions, 512)
    f2b = np.asarray(params["fc2_b"], np.float32)

    # conv1: wt1[i, 4*ow + j, ow*32 + co] = c1w[co, 0, i, j]
    wt1 = np.zeros((8, w0, w1 * 32), np.float32)
    for i in range(8):
        for ow in range(w1):
            for j in range(8):
                wt1[i, 4 * ow + j, ow * 32:(ow + 1) * 32] = c1w[:, 0, i, j]
    bt1 = np.tile(c1b, w1)[None, :]

    # conv2: wt2[i, (2*ow + j)*32 + ci, ow*64 + co] = c2w[co, ci, i, j]
    wt2 = np.zeros((4, w1 * 32, w2 * 64), np.float32)
    for i in range(4):
        for ow in range(w2):
            for j in range(4):
                wc = 2 * ow + j
                wt2[i, wc * 32:(wc + 1) * 32,
                    ow * 64:(ow + 1) * 64] = c2w[:, :, i, j].T
    bt2 = np.tile(c2b, w2)[None, :]

    # conv3: wt3[i, (ow + j)*64 + ci, ow*64 + co] = c3w[co, ci, i, j]
    wt3 = np.zeros((3, w2 * 64, w3 * 64), np.float32)
    for i in range(3):
        for ow in range(w3):
            for j in range(3):
                wc = ow + j
                wt3[i, wc * 64:(wc + 1) * 64,
                    ow * 64:(ow + 1) * 64] = c3w[:, :, i, j].T
    bt3 = np.tile(c3b, w3)[None, :]

    # fc1: kernel feeds cols ordered (h3, w3, c); PyTorch flatten is (c, h3, w3).
    v1 = np.transpose(f1w.reshape(512, 64, h3, w3),
                      (2, 3, 1, 0)).reshape(h3 * w3 * 64, 512)
    bf1 = f1b[None, :]

    # fc2: transpose + zero-pad output channels to a lane-dense width.
    v2 = np.zeros((512, n_pad), np.float32)
    v2[:, :n_actions] = f2w.T
    bf2 = np.zeros((1, n_pad), np.float32)
    bf2[0, :n_actions] = f2b

    def cvt(a, dt):
        return jnp.asarray(a, dtype=dt)

    return {
        "wt1": cvt(wt1, mxu_dtype), "bt1": cvt(bt1, jnp.float32),
        "wt2": cvt(wt2, mxu_dtype), "bt2": cvt(bt2, jnp.float32),
        "wt3": cvt(wt3, mxu_dtype), "bt3": cvt(bt3, jnp.float32),
        "v1":  cvt(v1,  mxu_dtype), "bf1": cvt(bf1, jnp.float32),
        "v2":  cvt(v2,  mxu_dtype), "bf2": cvt(bf2, jnp.float32),
    }


# ------------------------------ forward ----------------------------------------
def deep_q_network_forward(prep, x, *, input_dims, n_actions, block_b=None):
    """x: (N, 1, H, W) float32 -> action values (N, n_actions)."""
    c_in, h0, w0 = input_dims
    assert c_in == 1, "DeepQNetwork.conv1 has a single input channel"
    h1, w1 = _conv_out(h0, 8, 4), _conv_out(w0, 8, 4)
    h2, w2 = _conv_out(h1, 4, 2), _conv_out(w1, 4, 2)
    h3, w3 = _conv_out(h2, 3, 1), _conv_out(w2, 3, 1)
    dims = ((h0, w0), (h1, w1), (h2, w2), (h3, w3))

    x = x.astype(jnp.float32)
    n = x.shape[0]
    xs = x.reshape(n, h0, w0)                       # drop the single channel

    bb = block_b if block_b is not None else _pick_block_b(n)
    n_blocks = pl.cdiv(n, bb)
    n_padded = n_blocks * bb
    if n_padded != n:
        xs = jnp.pad(xs, ((0, n_padded - n), (0, 0), (0, 0)))

    n_pad_act = prep["v2"].shape[1]
    weights = (prep["wt1"], prep["bt1"], prep["wt2"], prep["bt2"],
               prep["wt3"], prep["bt3"], prep["v1"], prep["bf1"],
               prep["v2"], prep["bf2"])

    def const_spec(a):
        if a.ndim == 2:
            return pl.BlockSpec(a.shape, lambda i: (0, 0))
        return pl.BlockSpec(a.shape, lambda i: (0, 0, 0))

    kernel = functools.partial(_dqn_fused_kernel, bb=bb, dims=dims)

    out = pl.pallas_call(
        kernel,
        out_shape=jax.ShapeDtypeStruct((n_padded, n_pad_act), jnp.float32),
        grid=(n_blocks,),                            # one program per B samples
        in_specs=[pl.BlockSpec((bb, h0, w0), lambda i: (i, 0, 0))]
                 + [const_spec(wt) for wt in weights],
        out_specs=pl.BlockSpec((bb, n_pad_act), lambda i: (i, 0)),
        compiler_params=pltpu.CompilerParams(
            dimension_semantics=("parallel",)),      # shards blocks across TCs
    )(xs, *weights)
    return out[:n, :n_actions]


# ------------------------------ pure-JAX reference ------------------------------
def _reference_forward(params, x):
    def conv(x, w, b, s):
        y = lax.conv_general_dilated(
            x, w, window_strides=(s, s), padding="VALID",
            dimension_numbers=("NCHW", "OIHW", "NCHW"))
        return jax.nn.relu(y + b[None, :, None, None])

    x = conv(x, params["conv1_w"], params["conv1_b"], 4)
    x = conv(x, params["conv2_w"], params["conv2_b"], 2)
    x = conv(x, params["conv3_w"], params["conv3_b"], 1)
    flat = x.reshape(x.shape[0], -1)
    flat1 = jax.nn.relu(flat @ params["fc1_w"].T + params["fc1_b"])
    return flat1 @ params["fc2_w"].T + params["fc2_b"]


if __name__ == "__main__":
    # conv1 -> 11x11, conv2 -> 4x4, conv3 -> 2x2  =>  fc_input_dims = 64*2*2 = 256.
    input_dims = (1, 48, 48)
    n_actions = 3
    batch = 2

    key = jax.random.PRNGKey(0)
    k_params, k_x = jax.random.split(key)
    params, _ = init_params(k_params, input_dims, n_actions)
    x = jax.random.normal(k_x, (batch,) + input_dims, dtype=jnp.float32)

    fwd = jax.jit(deep_q_network_forward,
                  static_argnames=("input_dims", "n_actions", "block_b"))

    ref = jax.block_until_ready(_reference_forward(params, x))

    # f32 MXU path (exact vs. the reference, v5e-friendly).
    prep = prepare_params(params, input_dims, n_actions)
    actions = jax.block_until_ready(
        fwd(prep, x, input_dims=input_dims, n_actions=n_actions))
    assert actions.shape == (batch, n_actions), actions.shape
    assert jnp.allclose(actions, ref, atol=2e-3, rtol=2e-3), (
        float(jnp.max(jnp.abs(actions - ref))))

    # bf16 MXU-input path (v6e/v7x feedback): f32 accumulation, looser check.
    prep_bf16 = prepare_params(params, input_dims, n_actions,
                               mxu_dtype=jnp.bfloat16)
    actions_bf16 = jax.block_until_ready(
        fwd(prep_bf16, x, input_dims=input_dims, n_actions=n_actions))
    assert jnp.allclose(actions_bf16, ref, atol=0.1, rtol=0.1), (
        float(jnp.max(jnp.abs(actions_bf16 - ref))))

    print("KERNEL_OK")
</pallas_src>

<mosaic_0001>
module attributes {stable_mosaic.version = 11 : i64} {
  func.func @_dqn_fused_kernel(%arg0: i32, %arg1: memref<8x48x48xf32, #tpu.memory_space<vmem>>, %arg2: memref<8x48x352xf32, #tpu.memory_space<vmem>>, %arg3: memref<1x352xf32, #tpu.memory_space<vmem>>, %arg4: memref<4x352x256xf32, #tpu.memory_space<vmem>>, %arg5: memref<1x256xf32, #tpu.memory_space<vmem>>, %arg6: memref<3x256x128xf32, #tpu.memory_space<vmem>>, %arg7: memref<1x128xf32, #tpu.memory_space<vmem>>, %arg8: memref<256x512xf32, #tpu.memory_space<vmem>>, %arg9: memref<1x512xf32, #tpu.memory_space<vmem>>, %arg10: memref<512x128xf32, #tpu.memory_space<vmem>>, %arg11: memref<1x128xf32, #tpu.memory_space<vmem>>, %arg12: memref<8x128xf32, #tpu.memory_space<vmem>>) attributes {dimension_semantics = [#tpu.dimension_semantics<parallel>], iteration_bounds = array<i64: 1>, scalar_prefetch = 0 : i64, scratch_operands = 0 : i64, tpu.core_type = #tpu.core_type<tc>, window_params = [{transform_indices = @transform_0, window_bounds = array<i64: 8, 48, 48>}, {pipeline_mode = #tpu.pipeline_mode<synchronous>, transform_indices = @transform_1, window_bounds = array<i64: 8, 48, 352>}, {pipeline_mode = #tpu.pipeline_mode<synchronous>, transform_indices = @transform_2, window_bounds = array<i64: 1, 352>}, {pipeline_mode = #tpu.pipeline_mode<synchronous>, transform_indices = @transform_3, window_bounds = array<i64: 4, 352, 256>}, {pipeline_mode = #tpu.pipeline_mode<synchronous>, transform_indices = @transform_4, window_bounds = array<i64: 1, 256>}, {pipeline_mode = #tpu.pipeline_mode<synchronous>, transform_indices = @transform_5, window_bounds = array<i64: 3, 256, 128>}, {pipeline_mode = #tpu.pipeline_mode<synchronous>, transform_indices = @transform_6, window_bounds = array<i64: 1, 128>}, {pipeline_mode = #tpu.pipeline_mode<synchronous>, transform_indices = @transform_7, window_bounds = array<i64: 256, 512>}, {pipeline_mode = #tpu.pipeline_mode<synchronous>, transform_indices = @transform_8, window_bounds = array<i64: 1, 512>}, {pipeline_mode = #tpu.pipeline_mode<synchronous>, transform_indices = @transform_9, window_bounds = array<i64: 512, 128>}, {pipeline_mode = #tpu.pipeline_mode<synchronous>, transform_indices = @transform_10, window_bounds = array<i64: 1, 128>}, {transform_indices = @transform_11, window_bounds = array<i64: 8, 128>}]} {
    %c0 = arith.constant 0 : index
    %c0_0 = arith.constant 0 : index
    %c0_1 = arith.constant 0 : index
    %0 = vector.load %arg1[%c0, %c0_0, %c0_1] : memref<8x48x48xf32, #tpu.memory_space<vmem>>, vector<8x1x48xf32>
    %1 = vector.shape_cast %0 : vector<8x1x48xf32> to vector<8x48xf32>
    %c0_2 = arith.constant 0 : index
    %c4 = arith.constant 4 : index
    %c0_3 = arith.constant 0 : index
    %2 = vector.load %arg1[%c0_2, %c4, %c0_3] : memref<8x48x48xf32, #tpu.memory_space<vmem>>, vector<8x1x48xf32>
    %3 = vector.shape_cast %2 : vector<8x1x48xf32> to vector<8x48xf32>
    %c0_4 = arith.constant 0 : index
    %c8 = arith.constant 8 : index
    %c0_5 = arith.constant 0 : index
    %4 = vector.load %arg1[%c0_4, %c8, %c0_5] : memref<8x48x48xf32, #tpu.memory_space<vmem>>, vector<8x1x48xf32>
    %5 = vector.shape_cast %4 : vector<8x1x48xf32> to vector<8x48xf32>
    %c0_6 = arith.constant 0 : index
    %c12 = arith.constant 12 : index
    %c0_7 = arith.constant 0 : index
    %6 = vector.load %arg1[%c0_6, %c12, %c0_7] : memref<8x48x48xf32, #tpu.memory_space<vmem>>, vector<8x1x48xf32>
    %7 = vector.shape_cast %6 : vector<8x1x48xf32> to vector<8x48xf32>
    %c0_8 = arith.constant 0 : index
    %c16 = arith.constant 16 : index
    %c0_9 = arith.constant 0 : index
    %8 = vector.load %arg1[%c0_8, %c16, %c0_9] : memref<8x48x48xf32, #tpu.memory_space<vmem>>, vector<8x1x48xf32>
    %9 = vector.shape_cast %8 : vector<8x1x48xf32> to vector<8x48xf32>
    %c0_10 = arith.constant 0 : index
    %c20 = arith.constant 20 : index
    %c0_11 = arith.constant 0 : index
    %10 = vector.load %arg1[%c0_10, %c20, %c0_11] : memref<8x48x48xf32, #tpu.memory_space<vmem>>, vector<8x1x48xf32>
    %11 = vector.shape_cast %10 : vector<8x1x48xf32> to vector<8x48xf32>
    %c0_12 = arith.constant 0 : index
    %c24 = arith.constant 24 : index
    %c0_13 = arith.constant 0 : index
    %12 = vector.load %arg1[%c0_12, %c24, %c0_13] : memref<8x48x48xf32, #tpu.memory_space<vmem>>, vector<8x1x48xf32>
    %13 = vector.shape_cast %12 : vector<8x1x48xf32> to vector<8x48xf32>
    %c0_14 = arith.constant 0 : index
    %c28 = arith.constant 28 : index
    %c0_15 = arith.constant 0 : index
    %14 = vector.load %arg1[%c0_14, %c28, %c0_15] : memref<8x48x48xf32, #tpu.memory_space<vmem>>, vector<8x1x48xf32>
    %15 = vector.shape_cast %14 : vector<8x1x48xf32> to vector<8x48xf32>
    %c0_16 = arith.constant 0 : index
    %c32 = arith.constant 32 : index
    %c0_17 = arith.constant 0 : index
    %16 = vector.load %arg1[%c0_16, %c32, %c0_17] : memref<8x48x48xf32, #tpu.memory_space<vmem>>, vector<8x1x48xf32>
    %17 = vector.shape_cast %16 : vector<8x1x48xf32> to vector<8x48xf32>
    %c0_18 = arith.constant 0 : index
    %c36 = arith.constant 36 : index
    %c0_19 = arith.constant 0 : index
    %18 = vector.load %arg1[%c0_18, %c36, %c0_19] : memref<8x48x48xf32, #tpu.memory_space<vmem>>, vector<8x1x48xf32>
    %19 = vector.shape_cast %18 : vector<8x1x48xf32> to vector<8x48xf32>
    %c0_20 = arith.constant 0 : index
    %c40 = arith.constant 40 : index
    %c0_21 = arith.constant 0 : index
    %20 = vector.load %arg1[%c0_20, %c40, %c0_21] : memref<8x48x48xf32, #tpu.memory_space<vmem>>, vector<8x1x48xf32>
    %21 = vector.shape_cast %20 : vector<8x1x48xf32> to vector<8x48xf32>
    %22 = tpu.concatenate %1, %3, %5, %7, %9, %11, %13, %15, %17, %19, %21 in 0 : vector<8x48xf32>, vector<8x48xf32>, vector<8x48xf32>, vector<8x48xf32>, vector<8x48xf32>, vector<8x48xf32>, vector<8x48xf32>, vector<8x48xf32>, vector<8x48xf32>, vector<8x48xf32>, vector<8x48xf32> -> vector<88x48xf32>
    %c0_22 = arith.constant 0 : index
    %c0_23 = arith.constant 0 : index
    %c0_24 = arith.constant 0 : index
    %23 = vector.load %arg2[%c0_22, %c0_23, %c0_24] : memref<8x48x352xf32, #tpu.memory_space<vmem>>, vector<1x48x352xf32>
    %24 = vector.shape_cast %23 : vector<1x48x352xf32> to vector<48x352xf32>
    %cst = arith.constant dense<0.000000e+00> : vector<88x352xf32>
    %25 = tpu.matmul %22, %24, %cst {dimension_numbers = #tpu.dot_dimension_numbers<[1], [0], [0], [1], [0, 0, 1, 1], [], []>} : vector<88x48xf32>, vector<48x352xf32>, vector<88x352xf32> -> vector<88x352xf32>
    %c0_25 = arith.constant 0 : index
    %c1 = arith.constant 1 : index
    %c0_26 = arith.constant 0 : index
    %26 = vector.load %arg1[%c0_25, %c1, %c0_26] : memref<8x48x48xf32, #tpu.memory_space<vmem>>, vector<8x1x48xf32>
    %27 = vector.shape_cast %26 : vector<8x1x48xf32> to vector<8x48xf32>
    %c0_27 = arith.constant 0 : index
    %c5 = arith.constant 5 : index
    %c0_28 = arith.constant 0 : index
    %28 = vector.load %arg1[%c0_27, %c5, %c0_28] : memref<8x48x48xf32, #tpu.memory_space<vmem>>, vector<8x1x48xf32>
    %29 = vector.shape_cast %28 : vector<8x1x48xf32> to vector<8x48xf32>
    %c0_29 = arith.constant 0 : index
    %c9 = arith.constant 9 : index
    %c0_30 = arith.constant 0 : index
    %30 = vector.load %arg1[%c0_29, %c9, %c0_30] : memref<8x48x48xf32, #tpu.memory_space<vmem>>, vector<8x1x48xf32>
    %31 = vector.shape_cast %30 : vector<8x1x48xf32> to vector<8x48xf32>
    %c0_31 = arith.constant 0 : index
    %c13 = arith.constant 13 : index
    %c0_32 = arith.constant 0 : index
    %32 = vector.load %arg1[%c0_31, %c13, %c0_32] : memref<8x48x48xf32, #tpu.memory_space<vmem>>, vector<8x1x48xf32>
    %33 = vector.shape_cast %32 : vector<8x1x48xf32> to vector<8x48xf32>
    %c0_33 = arith.constant 0 : index
    %c17 = arith.constant 17 : index
    %c0_34 = arith.constant 0 : index
    %34 = vector.load %arg1[%c0_33, %c17, %c0_34] : memref<8x48x48xf32, #tpu.memory_space<vmem>>, vector<8x1x48xf32>
    %35 = vector.shape_cast %34 : vector<8x1x48xf32> to vector<8x48xf32>
    %c0_35 = arith.constant 0 : index
    %c21 = arith.constant 21 : index
    %c0_36 = arith.constant 0 : index
    %36 = vector.load %arg1[%c0_35, %c21, %c0_36] : memref<8x48x48xf32, #tpu.memory_space<vmem>>, vector<8x1x48xf32>
    %37 = vector.shape_cast %36 : vector<8x1x48xf32> to vector<8x48xf32>
    %c0_37 = arith.constant 0 : index
    %c25 = arith.constant 25 : index
    %c0_38 = arith.constant 0 : index
    %38 = vector.load %arg1[%c0_37, %c25, %c0_38] : memref<8x48x48xf32, #tpu.memory_space<vmem>>, vector<8x1x48xf32>
    %39 = vector.shape_cast %38 : vector<8x1x48xf32> to vector<8x48xf32>
    %c0_39 = arith.constant 0 : index
    %c29 = arith.constant 29 : index
    %c0_40 = arith.constant 0 : index
    %40 = vector.load %arg1[%c0_39, %c29, %c0_40] : memref<8x48x48xf32, #tpu.memory_space<vmem>>, vector<8x1x48xf32>
    %41 = vector.shape_cast %40 : vector<8x1x48xf32> to vector<8x48xf32>
    %c0_41 = arith.constant 0 : index
    %c33 = arith.constant 33 : index
    %c0_42 = arith.constant 0 : index
    %42 = vector.load %arg1[%c0_41, %c33, %c0_42] : memref<8x48x48xf32, #tpu.memory_space<vmem>>, vector<8x1x48xf32>
    %43 = vector.shape_cast %42 : vector<8x1x48xf32> to vector<8x48xf32>
    %c0_43 = arith.constant 0 : index
    %c37 = arith.constant 37 : index
    %c0_44 = arith.constant 0 : index
    %44 = vector.load %arg1[%c0_43, %c37, %c0_44] : memref<8x48x48xf32, #tpu.memory_space<vmem>>, vector<8x1x48xf32>
    %45 = vector.shape_cast %44 : vector<8x1x48xf32> to vector<8x48xf32>
    %c0_45 = arith.constant 0 : index
    %c41 = arith.constant 41 : index
    %c0_46 = arith.constant 0 : index
    %46 = vector.load %arg1[%c0_45, %c41, %c0_46] : memref<8x48x48xf32, #tpu.memory_space<vmem>>, vector<8x1x48xf32>
    %47 = vector.shape_cast %46 : vector<8x1x48xf32> to vector<8x48xf32>
    %48 = tpu.concatenate %27, %29, %31, %33, %35, %37, %39, %41, %43, %45, %47 in 0 : vector<8x48xf32>, vector<8x48xf32>, vector<8x48xf32>, vector<8x48xf32>, vector<8x48xf32>, vector<8x48xf32>, vector<8x48xf32>, vector<8x48xf32>, vector<8x48xf32>, vector<8x48xf32>, vector<8x48xf32> -> vector<88x48xf32>
    %c1_47 = arith.constant 1 : index
    %c0_48 = arith.constant 0 : index
    %c0_49 = arith.constant 0 : index
    %49 = vector.load %arg2[%c1_47, %c0_48, %c0_49] : memref<8x48x352xf32, #tpu.memory_space<vmem>>, vector<1x48x352xf32>
    %50 = vector.shape_cast %49 : vector<1x48x352xf32> to vector<48x352xf32>
    %cst_50 = arith.constant dense<0.000000e+00> : vector<88x352xf32>
    %51 = tpu.matmul %48, %50, %cst_50 {dimension_numbers = #tpu.dot_dimension_numbers<[1], [0], [0], [1], [0, 0, 1, 1], [], []>} : vector<88x48xf32>, vector<48x352xf32>, vector<88x352xf32> -> vector<88x352xf32>
    %52 = arith.addf %25, %51 : vector<88x352xf32>
    %c0_51 = arith.constant 0 : index
    %c2 = arith.constant 2 : index
    %c0_52 = arith.constant 0 : index
    %53 = vector.load %arg1[%c0_51, %c2, %c0_52] : memref<8x48x48xf32, #tpu.memory_space<vmem>>, vector<8x1x48xf32>
    %54 = vector.shape_cast %53 : vector<8x1x48xf32> to vector<8x48xf32>
    %c0_53 = arith.constant 0 : index
    %c6 = arith.constant 6 : index
    %c0_54 = arith.constant 0 : index
    %55 = vector.load %arg1[%c0_53, %c6, %c0_54] : memref<8x48x48xf32, #tpu.memory_space<vmem>>, vector<8x1x48xf32>
    %56 = vector.shape_cast %55 : vector<8x1x48xf32> to vector<8x48xf32>
    %c0_55 = arith.constant 0 : index
    %c10 = arith.constant 10 : index
    %c0_56 = arith.constant 0 : index
    %57 = vector.load %arg1[%c0_55, %c10, %c0_56] : memref<8x48x48xf32, #tpu.memory_space<vmem>>, vector<8x1x48xf32>
    %58 = vector.shape_cast %57 : vector<8x1x48xf32> to vector<8x48xf32>
    %c0_57 = arith.constant 0 : index
    %c14 = arith.constant 14 : index
    %c0_58 = arith.constant 0 : index
    %59 = vector.load %arg1[%c0_57, %c14, %c0_58] : memref<8x48x48xf32, #tpu.memory_space<vmem>>, vector<8x1x48xf32>
    %60 = vector.shape_cast %59 : vector<8x1x48xf32> to vector<8x48xf32>
    %c0_59 = arith.constant 0 : index
    %c18 = arith.constant 18 : index
    %c0_60 = arith.constant 0 : index
    %61 = vector.load %arg1[%c0_59, %c18, %c0_60] : memref<8x48x48xf32, #tpu.memory_space<vmem>>, vector<8x1x48xf32>
    %62 = vector.shape_cast %61 : vector<8x1x48xf32> to vector<8x48xf32>
    %c0_61 = arith.constant 0 : index
    %c22 = arith.constant 22 : index
    %c0_62 = arith.constant 0 : index
    %63 = vector.load %arg1[%c0_61, %c22, %c0_62] : memref<8x48x48xf32, #tpu.memory_space<vmem>>, vector<8x1x48xf32>
    %64 = vector.shape_cast %63 : vector<8x1x48xf32> to vector<8x48xf32>
    %c0_63 = arith.constant 0 : index
    %c26 = arith.constant 26 : index
    %c0_64 = arith.constant 0 : index
    %65 = vector.load %arg1[%c0_63, %c26, %c0_64] : memref<8x48x48xf32, #tpu.memory_space<vmem>>, vector<8x1x48xf32>
    %66 = vector.shape_cast %65 : vector<8x1x48xf32> to vector<8x48xf32>
    %c0_65 = arith.constant 0 : index
    %c30 = arith.constant 30 : index
    %c0_66 = arith.constant 0 : index
    %67 = vector.load %arg1[%c0_65, %c30, %c0_66] : memref<8x48x48xf32, #tpu.memory_space<vmem>>, vector<8x1x48xf32>
    %68 = vector.shape_cast %67 : vector<8x1x48xf32> to vector<8x48xf32>
    %c0_67 = arith.constant 0 : index
    %c34 = arith.constant 34 : index
    %c0_68 = arith.constant 0 : index
    %69 = vector.load %arg1[%c0_67, %c34, %c0_68] : memref<8x48x48xf32, #tpu.memory_space<vmem>>, vector<8x1x48xf32>
    %70 = vector.shape_cast %69 : vector<8x1x48xf32> to vector<8x48xf32>
    %c0_69 = arith.constant 0 : index
    %c38 = arith.constant 38 : index
    %c0_70 = arith.constant 0 : index
    %71 = vector.load %arg1[%c0_69, %c38, %c0_70] : memref<8x48x48xf32, #tpu.memory_space<vmem>>, vector<8x1x48xf32>
    %72 = vector.shape_cast %71 : vector<8x1x48xf32> to vector<8x48xf32>
    %c0_71 = arith.constant 0 : index
    %c42 = arith.constant 42 : index
    %c0_72 = arith.constant 0 : index
    %73 = vector.load %arg1[%c0_71, %c42, %c0_72] : memref<8x48x48xf32, #tpu.memory_space<vmem>>, vector<8x1x48xf32>
    %74 = vector.shape_cast %73 : vector<8x1x48xf32> to vector<8x48xf32>
    %75 = tpu.concatenate %54, %56, %58, %60, %62, %64, %66, %68, %70, %72, %74 in 0 : vector<8x48xf32>, vector<8x48xf32>, vector<8x48xf32>, vector<8x48xf32>, vector<8x48xf32>, vector<8x48xf32>, vector<8x48xf32>, vector<8x48xf32>, vector<8x48xf32>, vector<8x48xf32>, vector<8x48xf32> -> vector<88x48xf32>
    %c2_73 = arith.constant 2 : index
    %c0_74 = arith.constant 0 : index
    %c0_75 = arith.constant 0 : index
    %76 = vector.load %arg2[%c2_73, %c0_74, %c0_75] : memref<8x48x352xf32, #tpu.memory_space<vmem>>, vector<1x48x352xf32>
    %77 = vector.shape_cast %76 : vector<1x48x352xf32> to vector<48x352xf32>
    %cst_76 = arith.constant dense<0.000000e+00> : vector<88x352xf32>
    %78 = tpu.matmul %75, %77, %cst_76 {dimension_numbers = #tpu.dot_dimension_numbers<[1], [0], [0], [1], [0, 0, 1, 1], [], []>} : vector<88x48xf32>, vector<48x352xf32>, vector<88x352xf32> -> vector<88x352xf32>
    %79 = arith.addf %52, %78 : vector<88x352xf32>
    %c0_77 = arith.constant 0 : index
    %c3 = arith.constant 3 : index
    %c0_78 = arith.constant 0 : index
    %80 = vector.load %arg1[%c0_77, %c3, %c0_78] : memref<8x48x48xf32, #tpu.memory_space<vmem>>, vector<8x1x48xf32>
    %81 = vector.shape_cast %80 : vector<8x1x48xf32> to vector<8x48xf32>
    %c0_79 = arith.constant 0 : index
    %c7 = arith.constant 7 : index
    %c0_80 = arith.constant 0 : index
    %82 = vector.load %arg1[%c0_79, %c7, %c0_80] : memref<8x48x48xf32, #tpu.memory_space<vmem>>, vector<8x1x48xf32>
    %83 = vector.shape_cast %82 : vector<8x1x48xf32> to vector<8x48xf32>
    %c0_81 = arith.constant 0 : index
    %c11 = arith.constant 11 : index
    %c0_82 = arith.constant 0 : index
    %84 = vector.load %arg1[%c0_81, %c11, %c0_82] : memref<8x48x48xf32, #tpu.memory_space<vmem>>, vector<8x1x48xf32>
    %85 = vector.shape_cast %84 : vector<8x1x48xf32> to vector<8x48xf32>
    %c0_83 = arith.constant 0 : index
    %c15 = arith.constant 15 : index
    %c0_84 = arith.constant 0 : index
    %86 = vector.load %arg1[%c0_83, %c15, %c0_84] : memref<8x48x48xf32, #tpu.memory_space<vmem>>, vector<8x1x48xf32>
    %87 = vector.shape_cast %86 : vector<8x1x48xf32> to vector<8x48xf32>
    %c0_85 = arith.constant 0 : index
    %c19 = arith.constant 19 : index
    %c0_86 = arith.constant 0 : index
    %88 = vector.load %arg1[%c0_85, %c19, %c0_86] : memref<8x48x48xf32, #tpu.memory_space<vmem>>, vector<8x1x48xf32>
    %89 = vector.shape_cast %88 : vector<8x1x48xf32> to vector<8x48xf32>
    %c0_87 = arith.constant 0 : index
    %c23 = arith.constant 23 : index
    %c0_88 = arith.constant 0 : index
    %90 = vector.load %arg1[%c0_87, %c23, %c0_88] : memref<8x48x48xf32, #tpu.memory_space<vmem>>, vector<8x1x48xf32>
    %91 = vector.shape_cast %90 : vector<8x1x48xf32> to vector<8x48xf32>
    %c0_89 = arith.constant 0 : index
    %c27 = arith.constant 27 : index
    %c0_90 = arith.constant 0 : index
    %92 = vector.load %arg1[%c0_89, %c27, %c0_90] : memref<8x48x48xf32, #tpu.memory_space<vmem>>, vector<8x1x48xf32>
    %93 = vector.shape_cast %92 : vector<8x1x48xf32> to vector<8x48xf32>
    %c0_91 = arith.constant 0 : index
    %c31 = arith.constant 31 : index
    %c0_92 = arith.constant 0 : index
    %94 = vector.load %arg1[%c0_91, %c31, %c0_92] : memref<8x48x48xf32, #tpu.memory_space<vmem>>, vector<8x1x48xf32>
    %95 = vector.shape_cast %94 : vector<8x1x48xf32> to vector<8x48xf32>
    %c0_93 = arith.constant 0 : index
    %c35 = arith.constant 35 : index
    %c0_94 = arith.constant 0 : index
    %96 = vector.load %arg1[%c0_93, %c35, %c0_94] : memref<8x48x48xf32, #tpu.memory_space<vmem>>, vector<8x1x48xf32>
    %97 = vector.shape_cast %96 : vector<8x1x48xf32> to vector<8x48xf32>
    %c0_95 = arith.constant 0 : index
    %c39 = arith.constant 39 : index
    %c0_96 = arith.constant 0 : index
    %98 = vector.load %arg1[%c0_95, %c39, %c0_96] : memref<8x48x48xf32, #tpu.memory_space<vmem>>, vector<8x1x48xf32>
    %99 = vector.shape_cast %98 : vector<8x1x48xf32> to vector<8x48xf32>
    %c0_97 = arith.constant 0 : index
    %c43 = arith.constant 43 : index
    %c0_98 = arith.constant 0 : index
    %100 = vector.load %arg1[%c0_97, %c43, %c0_98] : memref<8x48x48xf32, #tpu.memory_space<vmem>>, vector<8x1x48xf32>
    %101 = vector.shape_cast %100 : vector<8x1x48xf32> to vector<8x48xf32>
    %102 = tpu.concatenate %81, %83, %85, %87, %89, %91, %93, %95, %97, %99, %101 in 0 : vector<8x48xf32>, vector<8x48xf32>, vector<8x48xf32>, vector<8x48xf32>, vector<8x48xf32>, vector<8x48xf32>, vector<8x48xf32>, vector<8x48xf32>, vector<8x48xf32>, vector<8x48xf32>, vector<8x48xf32> -> vector<88x48xf32>
    %c3_99 = arith.constant 3 : index
    %c0_100 = arith.constant 0 : index
    %c0_101 = arith.constant 0 : index
    %103 = vector.load %arg2[%c3_99, %c0_100, %c0_101] : memref<8x48x352xf32, #tpu.memory_space<vmem>>, vector<1x48x352xf32>
    %104 = vector.shape_cast %103 : vector<1x48x352xf32> to vector<48x352xf32>
    %cst_102 = arith.constant dense<0.000000e+00> : vector<88x352xf32>
    %105 = tpu.matmul %102, %104, %cst_102 {dimension_numbers = #tpu.dot_dimension_numbers<[1], [0], [0], [1], [0, 0, 1, 1], [], []>} : vector<88x48xf32>, vector<48x352xf32>, vector<88x352xf32> -> vector<88x352xf32>
    %106 = arith.addf %79, %105 : vector<88x352xf32>
    %c0_103 = arith.constant 0 : index
    %c4_104 = arith.constant 4 : index
    %c0_105 = arith.constant 0 : index
    %107 = vector.load %arg1[%c0_103, %c4_104, %c0_105] : memref<8x48x48xf32, #tpu.memory_space<vmem>>, vector<8x1x48xf32>
    %108 = vector.shape_cast %107 : vector<8x1x48xf32> to vector<8x48xf32>
    %c0_106 = arith.constant 0 : index
    %c8_107 = arith.constant 8 : index
    %c0_108 = arith.constant 0 : index
    %109 = vector.load %arg1[%c0_106, %c8_107, %c0_108] : memref<8x48x48xf32, #tpu.memory_space<vmem>>, vector<8x1x48xf32>
    %110 = vector.shape_cast %109 : vector<8x1x48xf32> to vector<8x48xf32>
    %c0_109 = arith.constant 0 : index
    %c12_110 = arith.constant 12 : index
    %c0_111 = arith.constant 0 : index
    %111 = vector.load %arg1[%c0_109, %c12_110, %c0_111] : memref<8x48x48xf32, #tpu.memory_space<vmem>>, vector<8x1x48xf32>
    %112 = vector.shape_cast %111 : vector<8x1x48xf32> to vector<8x48xf32>
    %c0_112 = arith.constant 0 : index
    %c16_113 = arith.constant 16 : index
    %c0_114 = arith.constant 0 : index
    %113 = vector.load %arg1[%c0_112, %c16_113, %c0_114] : memref<8x48x48xf32, #tpu.memory_space<vmem>>, vector<8x1x48xf32>
    %114 = vector.shape_cast %113 : vector<8x1x48xf32> to vector<8x48xf32>
    %c0_115 = arith.constant 0 : index
    %c20_116 = arith.constant 20 : index
    %c0_117 = arith.constant 0 : index
    %115 = vector.load %arg1[%c0_115, %c20_116, %c0_117] : memref<8x48x48xf32, #tpu.memory_space<vmem>>, vector<8x1x48xf32>
    %116 = vector.shape_cast %115 : vector<8x1x48xf32> to vector<8x48xf32>
    %c0_118 = arith.constant 0 : index
    %c24_119 = arith.constant 24 : index
    %c0_120 = arith.constant 0 : index
    %117 = vector.load %arg1[%c0_118, %c24_119, %c0_120] : memref<8x48x48xf32, #tpu.memory_space<vmem>>, vector<8x1x48xf32>
    %118 = vector.shape_cast %117 : vector<8x1x48xf32> to vector<8x48xf32>
    %c0_121 = arith.constant 0 : index
    %c28_122 = arith.constant 28 : index
    %c0_123 = arith.constant 0 : index
    %119 = vector.load %arg1[%c0_121, %c28_122, %c0_123] : memref<8x48x48xf32, #tpu.memory_space<vmem>>, vector<8x1x48xf32>
    %120 = vector.shape_cast %119 : vector<8x1x48xf32> to vector<8x48xf32>
    %c0_124 = arith.constant 0 : index
    %c32_125 = arith.constant 32 : index
    %c0_126 = arith.constant 0 : index
    %121 = vector.load %arg1[%c0_124, %c32_125, %c0_126] : memref<8x48x48xf32, #tpu.memory_space<vmem>>, vector<8x1x48xf32>
    %122 = vector.shape_cast %121 : vector<8x1x48xf32> to vector<8x48xf32>
    %c0_127 = arith.constant 0 : index
    %c36_128 = arith.constant 36 : index
    %c0_129 = arith.constant 0 : index
    %123 = vector.load %arg1[%c0_127, %c36_128, %c0_129] : memref<8x48x48xf32, #tpu.memory_space<vmem>>, vector<8x1x48xf32>
    %124 = vector.shape_cast %123 : vector<8x1x48xf32> to vector<8x48xf32>
    %c0_130 = arith.constant 0 : index
    %c40_131 = arith.constant 40 : index
    %c0_132 = arith.constant 0 : index
    %125 = vector.load %arg1[%c0_130, %c40_131, %c0_132] : memref<8x48x48xf32, #tpu.memory_space<vmem>>, vector<8x1x48xf32>
    %126 = vector.shape_cast %125 : vector<8x1x48xf32> to vector<8x48xf32>
    %c0_133 = arith.constant 0 : index
    %c44 = arith.constant 44 : index
    %c0_134 = arith.constant 0 : index
    %127 = vector.load %arg1[%c0_133, %c44, %c0_134] : memref<8x48x48xf32, #tpu.memory_space<vmem>>, vector<8x1x48xf32>
    %128 = vector.shape_cast %127 : vector<8x1x48xf32> to vector<8x48xf32>
    %129 = tpu.concatenate %108, %110, %112, %114, %116, %118, %120, %122, %124, %126, %128 in 0 : vector<8x48xf32>, vector<8x48xf32>, vector<8x48xf32>, vector<8x48xf32>, vector<8x48xf32>, vector<8x48xf32>, vector<8x48xf32>, vector<8x48xf32>, vector<8x48xf32>, vector<8x48xf32>, vector<8x48xf32> -> vector<88x48xf32>
    %c4_135 = arith.constant 4 : index
    %c0_136 = arith.constant 0 : index
    %c0_137 = arith.constant 0 : index
    %130 = vector.load %arg2[%c4_135, %c0_136, %c0_137] : memref<8x48x352xf32, #tpu.memory_space<vmem>>, vector<1x48x352xf32>
    %131 = vector.shape_cast %130 : vector<1x48x352xf32> to vector<48x352xf32>
    %cst_138 = arith.constant dense<0.000000e+00> : vector<88x352xf32>
    %132 = tpu.matmul %129, %131, %cst_138 {dimension_numbers = #tpu.dot_dimension_numbers<[1], [0], [0], [1], [0, 0, 1, 1], [], []>} : vector<88x48xf32>, vector<48x352xf32>, vector<88x352xf32> -> vector<88x352xf32>
    %133 = arith.addf %106, %132 : vector<88x352xf32>
    %c0_139 = arith.constant 0 : index
    %c5_140 = arith.constant 5 : index
    %c0_141 = arith.constant 0 : index
    %134 = vector.load %arg1[%c0_139, %c5_140, %c0_141] : memref<8x48x48xf32, #tpu.memory_space<vmem>>, vector<8x1x48xf32>
    %135 = vector.shape_cast %134 : vector<8x1x48xf32> to vector<8x48xf32>
    %c0_142 = arith.constant 0 : index
    %c9_143 = arith.constant 9 : index
    %c0_144 = arith.constant 0 : index
    %136 = vector.load %arg1[%c0_142, %c9_143, %c0_144] : memref<8x48x48xf32, #tpu.memory_space<vmem>>, vector<8x1x48xf32>
    %137 = vector.shape_cast %136 : vector<8x1x48xf32> to vector<8x48xf32>
    %c0_145 = arith.constant 0 : index
    %c13_146 = arith.constant 13 : index
    %c0_147 = arith.constant 0 : index
    %138 = vector.load %arg1[%c0_145, %c13_146, %c0_147] : memref<8x48x48xf32, #tpu.memory_space<vmem>>, vector<8x1x48xf32>
    %139 = vector.shape_cast %138 : vector<8x1x48xf32> to vector<8x48xf32>
    %c0_148 = arith.constant 0 : index
    %c17_149 = arith.constant 17 : index
    %c0_150 = arith.constant 0 : index
    %140 = vector.load %arg1[%c0_148, %c17_149, %c0_150] : memref<8x48x48xf32, #tpu.memory_space<vmem>>, vector<8x1x48xf32>
    %141 = vector.shape_cast %140 : vector<8x1x48xf32> to vector<8x48xf32>
    %c0_151 = arith.constant 0 : index
    %c21_152 = arith.constant 21 : index
    %c0_153 = arith.constant 0 : index
    %142 = vector.load %arg1[%c0_151, %c21_152, %c0_153] : memref<8x48x48xf32, #tpu.memory_space<vmem>>, vector<8x1x48xf32>
    %143 = vector.shape_cast %142 : vector<8x1x48xf32> to vector<8x48xf32>
    %c0_154 = arith.constant 0 : index
    %c25_155 = arith.constant 25 : index
    %c0_156 = arith.constant 0 : index
    %144 = vector.load %arg1[%c0_154, %c25_155, %c0_156] : memref<8x48x48xf32, #tpu.memory_space<vmem>>, vector<8x1x48xf32>
    %145 = vector.shape_cast %144 : vector<8x1x48xf32> to vector<8x48xf32>
    %c0_157 = arith.constant 0 : index
    %c29_158 = arith.constant 29 : index
    %c0_159 = arith.constant 0 : index
    %146 = vector.load %arg1[%c0_157, %c29_158, %c0_159] : memref<8x48x48xf32, #tpu.memory_space<vmem>>, vector<8x1x48xf32>
    %147 = vector.shape_cast %146 : vector<8x1x48xf32> to vector<8x48xf32>
    %c0_160 = arith.constant 0 : index
    %c33_161 = arith.constant 33 : index
    %c0_162 = arith.constant 0 : index
    %148 = vector.load %arg1[%c0_160, %c33_161, %c0_162] : memref<8x48x48xf32, #tpu.memory_space<vmem>>, vector<8x1x48xf32>
    %149 = vector.shape_cast %148 : vector<8x1x48xf32> to vector<8x48xf32>
    %c0_163 = arith.constant 0 : index
    %c37_164 = arith.constant 37 : index
    %c0_165 = arith.constant 0 : index
    %150 = vector.load %arg1[%c0_163, %c37_164, %c0_165] : memref<8x48x48xf32, #tpu.memory_space<vmem>>, vector<8x1x48xf32>
    %151 = vector.shape_cast %150 : vector<8x1x48xf32> to vector<8x48xf32>
    %c0_166 = arith.constant 0 : index
    %c41_167 = arith.constant 41 : index
    %c0_168 = arith.constant 0 : index
    %152 = vector.load %arg1[%c0_166, %c41_167, %c0_168] : memref<8x48x48xf32, #tpu.memory_space<vmem>>, vector<8x1x48xf32>
    %153 = vector.shape_cast %152 : vector<8x1x48xf32> to vector<8x48xf32>
    %c0_169 = arith.constant 0 : index
    %c45 = arith.constant 45 : index
    %c0_170 = arith.constant 0 : index
    %154 = vector.load %arg1[%c0_169, %c45, %c0_170] : memref<8x48x48xf32, #tpu.memory_space<vmem>>, vector<8x1x48xf32>
    %155 = vector.shape_cast %154 : vector<8x1x48xf32> to vector<8x48xf32>
    %156 = tpu.concatenate %135, %137, %139, %141, %143, %145, %147, %149, %151, %153, %155 in 0 : vector<8x48xf32>, vector<8x48xf32>, vector<8x48xf32>, vector<8x48xf32>, vector<8x48xf32>, vector<8x48xf32>, vector<8x48xf32>, vector<8x48xf32>, vector<8x48xf32>, vector<8x48xf32>, vector<8x48xf32> -> vector<88x48xf32>
    %c5_171 = arith.constant 5 : index
    %c0_172 = arith.constant 0 : index
    %c0_173 = arith.constant 0 : index
    %157 = vector.load %arg2[%c5_171, %c0_172, %c0_173] : memref<8x48x352xf32, #tpu.memory_space<vmem>>, vector<1x48x352xf32>
    %158 = vector.shape_cast %157 : vector<1x48x352xf32> to vector<48x352xf32>
    %cst_174 = arith.constant dense<0.000000e+00> : vector<88x352xf32>
    %159 = tpu.matmul %156, %158, %cst_174 {dimension_numbers = #tpu.dot_dimension_numbers<[1], [0], [0], [1], [0, 0, 1, 1], [], []>} : vector<88x48xf32>, vector<48x352xf32>, vector<88x352xf32> -> vector<88x352xf32>
    %160 = arith.addf %133, %159 : vector<88x352xf32>
    %c0_175 = arith.constant 0 : index
    %c6_176 = arith.constant 6 : index
    %c0_177 = arith.constant 0 : index
    %161 = vector.load %arg1[%c0_175, %c6_176, %c0_177] : memref<8x48x48xf32, #tpu.memory_space<vmem>>, vector<8x1x48xf32>
    %162 = vector.shape_cast %161 : vector<8x1x48xf32> to vector<8x48xf32>
    %c0_178 = arith.constant 0 : index
    %c10_179 = arith.constant 10 : index
    %c0_180 = arith.constant 0 : index
    %163 = vector.load %arg1[%c0_178, %c10_179, %c0_180] : memref<8x48x48xf32, #tpu.memory_space<vmem>>, vector<8x1x48xf32>
    %164 = vector.shape_cast %163 : vector<8x1x48xf32> to vector<8x48xf32>
    %c0_181 = arith.constant 0 : index
    %c14_182 = arith.constant 14 : index
    %c0_183 = arith.constant 0 : index
    %165 = vector.load %arg1[%c0_181, %c14_182, %c0_183] : memref<8x48x48xf32, #tpu.memory_space<vmem>>, vector<8x1x48xf32>
    %166 = vector.shape_cast %165 : vector<8x1x48xf32> to vector<8x48xf32>
    %c0_184 = arith.constant 0 : index
    %c18_185 = arith.constant 18 : index
    %c0_186 = arith.constant 0 : index
    %167 = vector.load %arg1[%c0_184, %c18_185, %c0_186] : memref<8x48x48xf32, #tpu.memory_space<vmem>>, vector<8x1x48xf32>
    %168 = vector.shape_cast %167 : vector<8x1x48xf32> to vector<8x48xf32>
    %c0_187 = arith.constant 0 : index
    %c22_188 = arith.constant 22 : index
    %c0_189 = arith.constant 0 : index
    %169 = vector.load %arg1[%c0_187, %c22_188, %c0_189] : memref<8x48x48xf32, #tpu.memory_space<vmem>>, vector<8x1x48xf32>
    %170 = vector.shape_cast %169 : vector<8x1x48xf32> to vector<8x48xf32>
    %c0_190 = arith.constant 0 : index
    %c26_191 = arith.constant 26 : index
    %c0_192 = arith.constant 0 : index
    %171 = vector.load %arg1[%c0_190, %c26_191, %c0_192] : memref<8x48x48xf32, #tpu.memory_space<vmem>>, vector<8x1x48xf32>
    %172 = vector.shape_cast %171 : vector<8x1x48xf32> to vector<8x48xf32>
    %c0_193 = arith.constant 0 : index
    %c30_194 = arith.constant 30 : index
    %c0_195 = arith.constant 0 : index
    %173 = vector.load %arg1[%c0_193, %c30_194, %c0_195] : memref<8x48x48xf32, #tpu.memory_space<vmem>>, vector<8x1x48xf32>
    %174 = vector.shape_cast %173 : vector<8x1x48xf32> to vector<8x48xf32>
    %c0_196 = arith.constant 0 : index
    %c34_197 = arith.constant 34 : index
    %c0_198 = arith.constant 0 : index
    %175 = vector.load %arg1[%c0_196, %c34_197, %c0_198] : memref<8x48x48xf32, #tpu.memory_space<vmem>>, vector<8x1x48xf32>
    %176 = vector.shape_cast %175 : vector<8x1x48xf32> to vector<8x48xf32>
    %c0_199 = arith.constant 0 : index
    %c38_200 = arith.constant 38 : index
    %c0_201 = arith.constant 0 : index
    %177 = vector.load %arg1[%c0_199, %c38_200, %c0_201] : memref<8x48x48xf32, #tpu.memory_space<vmem>>, vector<8x1x48xf32>
    %178 = vector.shape_cast %177 : vector<8x1x48xf32> to vector<8x48xf32>
    %c0_202 = arith.constant 0 : index
    %c42_203 = arith.constant 42 : index
    %c0_204 = arith.constant 0 : index
    %179 = vector.load %arg1[%c0_202, %c42_203, %c0_204] : memref<8x48x48xf32, #tpu.memory_space<vmem>>, vector<8x1x48xf32>
    %180 = vector.shape_cast %179 : vector<8x1x48xf32> to vector<8x48xf32>
    %c0_205 = arith.constant 0 : index
    %c46 = arith.constant 46 : index
    %c0_206 = arith.constant 0 : index
    %181 = vector.load %arg1[%c0_205, %c46, %c0_206] : memref<8x48x48xf32, #tpu.memory_space<vmem>>, vector<8x1x48xf32>
    %182 = vector.shape_cast %181 : vector<8x1x48xf32> to vector<8x48xf32>
    %183 = tpu.concatenate %162, %164, %166, %168, %170, %172, %174, %176, %178, %180, %182 in 0 : vector<8x48xf32>, vector<8x48xf32>, vector<8x48xf32>, vector<8x48xf32>, vector<8x48xf32>, vector<8x48xf32>, vector<8x48xf32>, vector<8x48xf32>, vector<8x48xf32>, vector<8x48xf32>, vector<8x48xf32> -> vector<88x48xf32>
    %c6_207 = arith.constant 6 : index
    %c0_208 = arith.constant 0 : index
    %c0_209 = arith.constant 0 : index
    %184 = vector.load %arg2[%c6_207, %c0_208, %c0_209] : memref<8x48x352xf32, #tpu.memory_space<vmem>>, vector<1x48x352xf32>
    %185 = vector.shape_cast %184 : vector<1x48x352xf32> to vector<48x352xf32>
    %cst_210 = arith.constant dense<0.000000e+00> : vector<88x352xf32>
    %186 = tpu.matmul %183, %185, %cst_210 {dimension_numbers = #tpu.dot_dimension_numbers<[1], [0], [0], [1], [0, 0, 1, 1], [], []>} : vector<88x48xf32>, vector<48x352xf32>, vector<88x352xf32> -> vector<88x352xf32>
    %187 = arith.addf %160, %186 : vector<88x352xf32>
    %c0_211 = arith.constant 0 : index
    %c7_212 = arith.constant 7 : index
    %c0_213 = arith.constant 0 : index
    %188 = vector.load %arg1[%c0_211, %c7_212, %c0_213] : memref<8x48x48xf32, #tpu.memory_space<vmem>>, vector<8x1x48xf32>
    %189 = vector.shape_cast %188 : vector<8x1x48xf32> to vector<8x48xf32>
    %c0_214 = arith.constant 0 : index
    %c11_215 = arith.constant 11 : index
    %c0_216 = arith.constant 0 : index
    %190 = vector.load %arg1[%c0_214, %c11_215, %c0_216] : memref<8x48x48xf32, #tpu.memory_space<vmem>>, vector<8x1x48xf32>
    %191 = vector.shape_cast %190 : vector<8x1x48xf32> to vector<8x48xf32>
    %c0_217 = arith.constant 0 : index
    %c15_218 = arith.constant 15 : index
    %c0_219 = arith.constant 0 : index
    %192 = vector.load %arg1[%c0_217, %c15_218, %c0_219] : memref<8x48x48xf32, #tpu.memory_space<vmem>>, vector<8x1x48xf32>
    %193 = vector.shape_cast %192 : vector<8x1x48xf32> to vector<8x48xf32>
    %c0_220 = arith.constant 0 : index
    %c19_221 = arith.constant 19 : index
    %c0_222 = arith.constant 0 : index
    %194 = vector.load %arg1[%c0_220, %c19_221, %c0_222] : memref<8x48x48xf32, #tpu.memory_space<vmem>>, vector<8x1x48xf32>
    %195 = vector.shape_cast %194 : vector<8x1x48xf32> to vector<8x48xf32>
    %c0_223 = arith.constant 0 : index
    %c23_224 = arith.constant 23 : index
    %c0_225 = arith.constant 0 : index
    %196 = vector.load %arg1[%c0_223, %c23_224, %c0_225] : memref<8x48x48xf32, #tpu.memory_space<vmem>>, vector<8x1x48xf32>
    %197 = vector.shape_cast %196 : vector<8x1x48xf32> to vector<8x48xf32>
    %c0_226 = arith.constant 0 : index
    %c27_227 = arith.constant 27 : index
    %c0_228 = arith.constant 0 : index
    %198 = vector.load %arg1[%c0_226, %c27_227, %c0_228] : memref<8x48x48xf32, #tpu.memory_space<vmem>>, vector<8x1x48xf32>
    %199 = vector.shape_cast %198 : vector<8x1x48xf32> to vector<8x48xf32>
    %c0_229 = arith.constant 0 : index
    %c31_230 = arith.constant 31 : index
    %c0_231 = arith.constant 0 : index
    %200 = vector.load %arg1[%c0_229, %c31_230, %c0_231] : memref<8x48x48xf32, #tpu.memory_space<vmem>>, vector<8x1x48xf32>
    %201 = vector.shape_cast %200 : vector<8x1x48xf32> to vector<8x48xf32>
    %c0_232 = arith.constant 0 : index
    %c35_233 = arith.constant 35 : index
    %c0_234 = arith.constant 0 : index
    %202 = vector.load %arg1[%c0_232, %c35_233, %c0_234] : memref<8x48x48xf32, #tpu.memory_space<vmem>>, vector<8x1x48xf32>
    %203 = vector.shape_cast %202 : vector<8x1x48xf32> to vector<8x48xf32>
    %c0_235 = arith.constant 0 : index
    %c39_236 = arith.constant 39 : index
    %c0_237 = arith.constant 0 : index
    %204 = vector.load %arg1[%c0_235, %c39_236, %c0_237] : memref<8x48x48xf32, #tpu.memory_space<vmem>>, vector<8x1x48xf32>
    %205 = vector.shape_cast %204 : vector<8x1x48xf32> to vector<8x48xf32>
    %c0_238 = arith.constant 0 : index
    %c43_239 = arith.constant 43 : index
    %c0_240 = arith.constant 0 : index
    %206 = vector.load %arg1[%c0_238, %c43_239, %c0_240] : memref<8x48x48xf32, #tpu.memory_space<vmem>>, vector<8x1x48xf32>
    %207 = vector.shape_cast %206 : vector<8x1x48xf32> to vector<8x48xf32>
    %c0_241 = arith.constant 0 : index
    %c47 = arith.constant 47 : index
    %c0_242 = arith.constant 0 : index
    %208 = vector.load %arg1[%c0_241, %c47, %c0_242] : memref<8x48x48xf32, #tpu.memory_space<vmem>>, vector<8x1x48xf32>
    %209 = vector.shape_cast %208 : vector<8x1x48xf32> to vector<8x48xf32>
    %210 = tpu.concatenate %189, %191, %193, %195, %197, %199, %201, %203, %205, %207, %209 in 0 : vector<8x48xf32>, vector<8x48xf32>, vector<8x48xf32>, vector<8x48xf32>, vector<8x48xf32>, vector<8x48xf32>, vector<8x48xf32>, vector<8x48xf32>, vector<8x48xf32>, vector<8x48xf32>, vector<8x48xf32> -> vector<88x48xf32>
    %c7_243 = arith.constant 7 : index
    %c0_244 = arith.constant 0 : index
    %c0_245 = arith.constant 0 : index
    %211 = vector.load %arg2[%c7_243, %c0_244, %c0_245] : memref<8x48x352xf32, #tpu.memory_space<vmem>>, vector<1x48x352xf32>
    %212 = vector.shape_cast %211 : vector<1x48x352xf32> to vector<48x352xf32>
    %cst_246 = arith.constant dense<0.000000e+00> : vector<88x352xf32>
    %213 = tpu.matmul %210, %212, %cst_246 {dimension_numbers = #tpu.dot_dimension_numbers<[1], [0], [0], [1], [0, 0, 1, 1], [], []>} : vector<88x48xf32>, vector<48x352xf32>, vector<88x352xf32> -> vector<88x352xf32>
    %214 = arith.addf %187, %213 : vector<88x352xf32>
    %c0_247 = arith.constant 0 : index
    %c0_248 = arith.constant 0 : index
    %215 = vector.load %arg3[%c0_247, %c0_248] : memref<1x352xf32, #tpu.memory_space<vmem>>, vector<1x352xf32>
    %216 = vector.broadcast %215 : vector<1x352xf32> to vector<88x352xf32>
    %217 = arith.addf %214, %216 : vector<88x352xf32>
    %cst_249 = arith.constant 0.000000e+00 : f32
    %218 = vector.broadcast %cst_249 : f32 to vector<88x352xf32>
    %219 = arith.maximumf %217, %218 : vector<88x352xf32>
    %220 = vector.extract_strided_slice %219 {offsets = [0, 0], sizes = [8, 352], strides = [1, 1]} : vector<88x352xf32> to vector<8x352xf32>
    %221 = vector.extract_strided_slice %219 {offsets = [16, 0], sizes = [8, 352], strides = [1, 1]} : vector<88x352xf32> to vector<8x352xf32>
    %222 = vector.extract_strided_slice %219 {offsets = [32, 0], sizes = [8, 352], strides = [1, 1]} : vector<88x352xf32> to vector<8x352xf32>
    %223 = vector.extract_strided_slice %219 {offsets = [48, 0], sizes = [8, 352], strides = [1, 1]} : vector<88x352xf32> to vector<8x352xf32>
    %224 = tpu.concatenate %220, %221, %222, %223 in 0 : vector<8x352xf32>, vector<8x352xf32>, vector<8x352xf32>, vector<8x352xf32> -> vector<32x352xf32>
    %c0_250 = arith.constant 0 : index
    %c0_251 = arith.constant 0 : index
    %c0_252 = arith.constant 0 : index
    %225 = vector.load %arg4[%c0_250, %c0_251, %c0_252] : memref<4x352x256xf32, #tpu.memory_space<vmem>>, vector<1x352x256xf32>
    %226 = vector.shape_cast %225 : vector<1x352x256xf32> to vector<352x256xf32>
    %cst_253 = arith.constant dense<0.000000e+00> : vector<32x256xf32>
    %227 = tpu.matmul %224, %226, %cst_253 {dimension_numbers = #tpu.dot_dimension_numbers<[1], [0], [0], [1], [0, 0, 1, 1], [], []>} : vector<32x352xf32>, vector<352x256xf32>, vector<32x256xf32> -> vector<32x256xf32>
    %228 = vector.extract_strided_slice %219 {offsets = [8, 0], sizes = [8, 352], strides = [1, 1]} : vector<88x352xf32> to vector<8x352xf32>
    %229 = vector.extract_strided_slice %219 {offsets = [24, 0], sizes = [8, 352], strides = [1, 1]} : vector<88x352xf32> to vector<8x352xf32>
    %230 = vector.extract_strided_slice %219 {offsets = [40, 0], sizes = [8, 352], strides = [1, 1]} : vector<88x352xf32> to vector<8x352xf32>
    %231 = vector.extract_strided_slice %219 {offsets = [56, 0], sizes = [8, 352], strides = [1, 1]} : vector<88x352xf32> to vector<8x352xf32>
    %232 = tpu.concatenate %228, %229, %230, %231 in 0 : vector<8x352xf32>, vector<8x352xf32>, vector<8x352xf32>, vector<8x352xf32> -> vector<32x352xf32>
    %c1_254 = arith.constant 1 : index
    %c0_255 = arith.constant 0 : index
    %c0_256 = arith.constant 0 : index
    %233 = vector.load %arg4[%c1_254, %c0_255, %c0_256] : memref<4x352x256xf32, #tpu.memory_space<vmem>>, vector<1x352x256xf32>
    %234 = vector.shape_cast %233 : vector<1x352x256xf32> to vector<352x256xf32>
    %cst_257 = arith.constant dense<0.000000e+00> : vector<32x256xf32>
    %235 = tpu.matmul %232, %234, %cst_257 {dimension_numbers = #tpu.dot_dimension_numbers<[1], [0], [0], [1], [0, 0, 1, 1], [], []>} : vector<32x352xf32>, vector<352x256xf32>, vector<32x256xf32> -> vector<32x256xf32>
    %236 = arith.addf %227, %235 : vector<32x256xf32>
    %237 = vector.extract_strided_slice %219 {offsets = [16, 0], sizes = [8, 352], strides = [1, 1]} : vector<88x352xf32> to vector<8x352xf32>
    %238 = vector.extract_strided_slice %219 {offsets = [32, 0], sizes = [8, 352], strides = [1, 1]} : vector<88x352xf32> to vector<8x352xf32>
    %239 = vector.extract_strided_slice %219 {offsets = [48, 0], sizes = [8, 352], strides = [1, 1]} : vector<88x352xf32> to vector<8x352xf32>
    %240 = vector.extract_strided_slice %219 {offsets = [64, 0], sizes = [8, 352], strides = [1, 1]} : vector<88x352xf32> to vector<8x352xf32>
    %241 = tpu.concatenate %237, %238, %239, %240 in 0 : vector<8x352xf32>, vector<8x352xf32>, vector<8x352xf32>, vector<8x352xf32> -> vector<32x352xf32>
    %c2_258 = arith.constant 2 : index
    %c0_259 = arith.constant 0 : index
    %c0_260 = arith.constant 0 : index
    %242 = vector.load %arg4[%c2_258, %c0_259, %c0_260] : memref<4x352x256xf32, #tpu.memory_space<vmem>>, vector<1x352x256xf32>
    %243 = vector.shape_cast %242 : vector<1x352x256xf32> to vector<352x256xf32>
    %cst_261 = arith.constant dense<0.000000e+00> : vector<32x256xf32>
    %244 = tpu.matmul %241, %243, %cst_261 {dimension_numbers = #tpu.dot_dimension_numbers<[1], [0], [0], [1], [0, 0, 1, 1], [], []>} : vector<32x352xf32>, vector<352x256xf32>, vector<32x256xf32> -> vector<32x256xf32>
    %245 = arith.addf %236, %244 : vector<32x256xf32>
    %246 = vector.extract_strided_slice %219 {offsets = [24, 0], sizes = [8, 352], strides = [1, 1]} : vector<88x352xf32> to vector<8x352xf32>
    %247 = vector.extract_strided_slice %219 {offsets = [40, 0], sizes = [8, 352], strides = [1, 1]} : vector<88x352xf32> to vector<8x352xf32>
    %248 = vector.extract_strided_slice %219 {offsets = [56, 0], sizes = [8, 352], strides = [1, 1]} : vector<88x352xf32> to vector<8x352xf32>
    %249 = vector.extract_strided_slice %219 {offsets = [72, 0], sizes = [8, 352], strides = [1, 1]} : vector<88x352xf32> to vector<8x352xf32>
    %250 = tpu.concatenate %246, %247, %248, %249 in 0 : vector<8x352xf32>, vector<8x352xf32>, vector<8x352xf32>, vector<8x352xf32> -> vector<32x352xf32>
    %c3_262 = arith.constant 3 : index
    %c0_263 = arith.constant 0 : index
    %c0_264 = arith.constant 0 : index
    %251 = vector.load %arg4[%c3_262, %c0_263, %c0_264] : memref<4x352x256xf32, #tpu.memory_space<vmem>>, vector<1x352x256xf32>
    %252 = vector.shape_cast %251 : vector<1x352x256xf32> to vector<352x256xf32>
    %cst_265 = arith.constant dense<0.000000e+00> : vector<32x256xf32>
    %253 = tpu.matmul %250, %252, %cst_265 {dimension_numbers = #tpu.dot_dimension_numbers<[1], [0], [0], [1], [0, 0, 1, 1], [], []>} : vector<32x352xf32>, vector<352x256xf32>, vector<32x256xf32> -> vector<32x256xf32>
    %254 = arith.addf %245, %253 : vector<32x256xf32>
    %c0_266 = arith.constant 0 : index
    %c0_267 = arith.constant 0 : index
    %255 = vector.load %arg5[%c0_266, %c0_267] : memref<1x256xf32, #tpu.memory_space<vmem>>, vector<1x256xf32>
    %256 = vector.broadcast %255 : vector<1x256xf32> to vector<32x256xf32>
    %257 = arith.addf %254, %256 : vector<32x256xf32>
    %cst_268 = arith.constant 0.000000e+00 : f32
    %258 = vector.broadcast %cst_268 : f32 to vector<32x256xf32>
    %259 = arith.maximumf %257, %258 : vector<32x256xf32>
    %260 = vector.extract_strided_slice %259 {offsets = [0, 0], sizes = [8, 256], strides = [1, 1]} : vector<32x256xf32> to vector<8x256xf32>
    %261 = vector.extract_strided_slice %259 {offsets = [8, 0], sizes = [8, 256], strides = [1, 1]} : vector<32x256xf32> to vector<8x256xf32>
    %262 = tpu.concatenate %260, %261 in 0 : vector<8x256xf32>, vector<8x256xf32> -> vector<16x256xf32>
    %c0_269 = arith.constant 0 : index
    %c0_270 = arith.constant 0 : index
    %c0_271 = arith.constant 0 : index
    %263 = vector.load %arg6[%c0_269, %c0_270, %c0_271] : memref<3x256x128xf32, #tpu.memory_space<vmem>>, vector<1x256x128xf32>
    %264 = vector.shape_cast %263 : vector<1x256x128xf32> to vector<256x128xf32>
    %cst_272 = arith.constant dense<0.000000e+00> : vector<16x128xf32>
    %265 = tpu.matmul %262, %264, %cst_272 {dimension_numbers = #tpu.dot_dimension_numbers<[1], [0], [0], [1], [0, 0, 1, 1], [], []>} : vector<16x256xf32>, vector<256x128xf32>, vector<16x128xf32> -> vector<16x128xf32>
    %266 = vector.extract_strided_slice %259 {offsets = [8, 0], sizes = [8, 256], strides = [1, 1]} : vector<32x256xf32> to vector<8x256xf32>
    %267 = vector.extract_strided_slice %259 {offsets = [16, 0], sizes = [8, 256], strides = [1, 1]} : vector<32x256xf32> to vector<8x256xf32>
    %268 = tpu.concatenate %266, %267 in 0 : vector<8x256xf32>, vector<8x256xf32> -> vector<16x256xf32>
    %c1_273 = arith.constant 1 : index
    %c0_274 = arith.constant 0 : index
    %c0_275 = arith.constant 0 : index
    %269 = vector.load %arg6[%c1_273, %c0_274, %c0_275] : memref<3x256x128xf32, #tpu.memory_space<vmem>>, vector<1x256x128xf32>
    %270 = vector.shape_cast %269 : vector<1x256x128xf32> to vector<256x128xf32>
    %cst_276 = arith.constant dense<0.000000e+00> : vector<16x128xf32>
    %271 = tpu.matmul %268, %270, %cst_276 {dimension_numbers = #tpu.dot_dimension_numbers<[1], [0], [0], [1], [0, 0, 1, 1], [], []>} : vector<16x256xf32>, vector<256x128xf32>, vector<16x128xf32> -> vector<16x128xf32>
    %272 = arith.addf %265, %271 : vector<16x128xf32>
    %273 = vector.extract_strided_slice %259 {offsets = [16, 0], sizes = [8, 256], strides = [1, 1]} : vector<32x256xf32> to vector<8x256xf32>
    %274 = vector.extract_strided_slice %259 {offsets = [24, 0], sizes = [8, 256], strides = [1, 1]} : vector<32x256xf32> to vector<8x256xf32>
    %275 = tpu.concatenate %273, %274 in 0 : vector<8x256xf32>, vector<8x256xf32> -> vector<16x256xf32>
    %c2_277 = arith.constant 2 : index
    %c0_278 = arith.constant 0 : index
    %c0_279 = arith.constant 0 : index
    %276 = vector.load %arg6[%c2_277, %c0_278, %c0_279] : memref<3x256x128xf32, #tpu.memory_space<vmem>>, vector<1x256x128xf32>
    %277 = vector.shape_cast %276 : vector<1x256x128xf32> to vector<256x128xf32>
    %cst_280 = arith.constant dense<0.000000e+00> : vector<16x128xf32>
    %278 = tpu.matmul %275, %277, %cst_280 {dimension_numbers = #tpu.dot_dimension_numbers<[1], [0], [0], [1], [0, 0, 1, 1], [], []>} : vector<16x256xf32>, vector<256x128xf32>, vector<16x128xf32> -> vector<16x128xf32>
    %279 = arith.addf %272, %278 : vector<16x128xf32>
    %c0_281 = arith.constant 0 : index
    %c0_282 = arith.constant 0 : index
    %280 = vector.load %arg7[%c0_281, %c0_282] : memref<1x128xf32, #tpu.memory_space<vmem>>, vector<1x128xf32>
    %281 = vector.broadcast %280 : vector<1x128xf32> to vector<16x128xf32>
    %282 = arith.addf %279, %281 : vector<16x128xf32>
    %cst_283 = arith.constant 0.000000e+00 : f32
    %283 = vector.broadcast %cst_283 : f32 to vector<16x128xf32>
    %284 = arith.maximumf %282, %283 : vector<16x128xf32>
    %285 = vector.extract_strided_slice %284 {offsets = [0, 0], sizes = [8, 128], strides = [1, 1]} : vector<16x128xf32> to vector<8x128xf32>
    %286 = vector.extract_strided_slice %284 {offsets = [8, 0], sizes = [8, 128], strides = [1, 1]} : vector<16x128xf32> to vector<8x128xf32>
    %287 = tpu.concatenate %285, %286 in 1 : vector<8x128xf32>, vector<8x128xf32> -> vector<8x256xf32>
    %c0_284 = arith.constant 0 : index
    %c0_285 = arith.constant 0 : index
    %288 = vector.load %arg8[%c0_284, %c0_285] : memref<256x512xf32, #tpu.memory_space<vmem>>, vector<256x512xf32>
    %cst_286 = arith.constant dense<0.000000e+00> : vector<8x512xf32>
    %289 = tpu.matmul %287, %288, %cst_286 {dimension_numbers = #tpu.dot_dimension_numbers<[1], [0], [0], [1], [0, 0, 1, 1], [], []>} : vector<8x256xf32>, vector<256x512xf32>, vector<8x512xf32> -> vector<8x512xf32>
    %c0_287 = arith.constant 0 : index
    %c0_288 = arith.constant 0 : index
    %290 = vector.load %arg9[%c0_287, %c0_288] : memref<1x512xf32, #tpu.memory_space<vmem>>, vector<1x512xf32>
    %291 = vector.broadcast %290 : vector<1x512xf32> to vector<8x512xf32>
    %292 = arith.addf %289, %291 : vector<8x512xf32>
    %cst_289 = arith.constant 0.000000e+00 : f32
    %293 = vector.broadcast %cst_289 : f32 to vector<8x512xf32>
    %294 = arith.maximumf %292, %293 : vector<8x512xf32>
    %c0_290 = arith.constant 0 : index
    %c0_291 = arith.constant 0 : index
    %295 = vector.load %arg10[%c0_290, %c0_291] : memref<512x128xf32, #tpu.memory_space<vmem>>, vector<512x128xf32>
    %cst_292 = arith.constant dense<0.000000e+00> : vector<8x128xf32>
    %296 = tpu.matmul %294, %295, %cst_292 {dimension_numbers = #tpu.dot_dimension_numbers<[1], [0], [0], [1], [0, 0, 1, 1], [], []>} : vector<8x512xf32>, vector<512x128xf32>, vector<8x128xf32> -> vector<8x128xf32>
    %c0_293 = arith.constant 0 : index
    %c0_294 = arith.constant 0 : index
    %297 = vector.load %arg11[%c0_293, %c0_294] : memref<1x128xf32, #tpu.memory_space<vmem>>, vector<1x128xf32>
    %298 = vector.broadcast %297 : vector<1x128xf32> to vector<8x128xf32>
    %299 = arith.addf %296, %298 : vector<8x128xf32>
    %c0_295 = arith.constant 0 : index
    %c0_296 = arith.constant 0 : index
    %300 = vector.load %arg12[%c0_295, %c0_296] : memref<8x128xf32, #tpu.memory_space<vmem>>, vector<8x128xf32>
    tpu.vector_store %arg12[%c0_295, %c0_296], %299 {strides = array<i32>} : memref<8x128xf32, #tpu.memory_space<vmem>>, vector<8x128xf32>,
    return
  }
  func.func @transform_0(%arg0: i32) -> (i32, i32, i32) {
    %c0_i32 = arith.constant 0 : i32
    %c0_i32_0 = arith.constant 0 : i32
    %c0_i32_1 = arith.constant 0 : i32
    return %arg0, %c0_i32, %c0_i32_0 : i32, i32, i32
  }
  func.func @transform_1(%arg0: i32) -> (i32, i32, i32) {
    %c0_i32 = arith.constant 0 : i32
    %c0_i32_0 = arith.constant 0 : i32
    %c0_i32_1 = arith.constant 0 : i32
    %c0_i32_2 = arith.constant 0 : i32
    return %c0_i32, %c0_i32_0, %c0_i32_1 : i32, i32, i32
  }
  func.func @transform_2(%arg0: i32) -> (i32, i32) {
    %c0_i32 = arith.constant 0 : i32
    %c0_i32_0 = arith.constant 0 : i32
    %c0_i32_1 = arith.constant 0 : i32
    return %c0_i32, %c0_i32_0 : i32, i32
  }
  func.func @transform_3(%arg0: i32) -> (i32, i32, i32) {
    %c0_i32 = arith.constant 0 : i32
    %c0_i32_0 = arith.constant 0 : i32
    %c0_i32_1 = arith.constant 0 : i32
    %c0_i32_2 = arith.constant 0 : i32
    return %c0_i32, %c0_i32_0, %c0_i32_1 : i32, i32, i32
  }
  func.func @transform_4(%arg0: i32) -> (i32, i32) {
    %c0_i32 = arith.constant 0 : i32
    %c0_i32_0 = arith.constant 0 : i32
    %c0_i32_1 = arith.constant 0 : i32
    return %c0_i32, %c0_i32_0 : i32, i32
  }
  func.func @transform_5(%arg0: i32) -> (i32, i32, i32) {
    %c0_i32 = arith.constant 0 : i32
    %c0_i32_0 = arith.constant 0 : i32
    %c0_i32_1 = arith.constant 0 : i32
    %c0_i32_2 = arith.constant 0 : i32
    return %c0_i32, %c0_i32_0, %c0_i32_1 : i32, i32, i32
  }
  func.func @transform_6(%arg0: i32) -> (i32, i32) {
    %c0_i32 = arith.constant 0 : i32
    %c0_i32_0 = arith.constant 0 : i32
    %c0_i32_1 = arith.constant 0 : i32
    return %c0_i32, %c0_i32_0 : i32, i32
  }
  func.func @transform_7(%arg0: i32) -> (i32, i32) {
    %c0_i32 = arith.constant 0 : i32
    %c0_i32_0 = arith.constant 0 : i32
    %c0_i32_1 = arith.constant 0 : i32
    return %c0_i32, %c0_i32_0 : i32, i32
  }
  func.func @transform_8(%arg0: i32) -> (i32, i32) {
    %c0_i32 = arith.constant 0 : i32
    %c0_i32_0 = arith.constant 0 : i32
    %c0_i32_1 = arith.constant 0 : i32
    return %c0_i32, %c0_i32_0 : i32, i32
  }
  func.func @transform_9(%arg0: i32) -> (i32, i32) {
    %c0_i32 = arith.constant 0 : i32
    %c0_i32_0 = arith.constant 0 : i32
    %c0_i32_1 = arith.constant 0 : i32
    return %c0_i32, %c0_i32_0 : i32, i32
  }
  func.func @transform_10(%arg0: i32) -> (i32, i32) {
    %c0_i32 = arith.constant 0 : i32
    %c0_i32_0 = arith.constant 0 : i32
    %c0_i32_1 = arith.constant 0 : i32
    return %c0_i32, %c0_i32_0 : i32, i32
  }
  func.func @transform_11(%arg0: i32) -> (i32, i32) {
    %c0_i32 = arith.constant 0 : i32
    %c0_i32_0 = arith.constant 0 : i32
    return %arg0, %c0_i32 : i32, i32
  }
}

</mosaic_0001>

<llo_original>
// kernel: deep_q_network_forward.1
$region0: #{deep_q_network_forward.1}
  #allocation0 [shape = 'u32[]', space=smem, size = 0x4, offset = 0x4, fixed_abs, tag = 'smem constant byte address 0x4 - core index']
  #allocation1 [shape = 'u32[144,128]{1,0:T(1,128)}', space=vmem, size = 0x12000, scoped, tag = 'internal scratch']
  %s0 = inlined_call_operand.vmem [shape: f32[8,48,48], index: 0, kind: input, shape index: {}]
  %s1 = inlined_call_operand.hbm [shape: f32[8,48,352], index: 1, kind: input, shape index: {}]
  %s2 = inlined_call_operand.hbm [shape: f32[1,352], index: 2, kind: input, shape index: {}]
  %s3 = inlined_call_operand.hbm [shape: f32[4,352,256], index: 3, kind: input, shape index: {}]
  %s4 = inlined_call_operand.hbm [shape: f32[1,256], index: 4, kind: input, shape index: {}]
  %s5 = inlined_call_operand.hbm [shape: f32[3,256,128], index: 5, kind: input, shape index: {}]
  %s6 = inlined_call_operand.hbm [shape: f32[1,128], index: 6, kind: input, shape index: {}]
  %s7 = inlined_call_operand.hbm [shape: f32[256,512], index: 7, kind: input, shape index: {}]
  %s8 = inlined_call_operand.hbm [shape: f32[1,512], index: 8, kind: input, shape index: {}]
  %s9 = inlined_call_operand.hbm [shape: f32[512,128], index: 9, kind: input, shape index: {}]
  %s10 = inlined_call_operand.hbm [shape: f32[1,128], index: 10, kind: input, shape index: {}]
  %s11 = inlined_call_operand.vmem [shape: f32[8,128], index: 11, kind: output, shape index: {}]
  %s12 = sld [smem:[#allocation0]]
  $region94: #{deep_q_network_forward.1} parent=0
    _
  %s14 = ssub.s32 1, %s12
  %s15 = scalar_select 0, %s14, %s12
  $region1: #{deep_q_network_forward.1} parent=0
    #allocation2 [shape = 'u8[589824]{0}', space=vmem, size = 0x90000, scoped, tag = 'input window, operand 1, single buffered']
    #allocation3 [shape = 's32[1]{0}', space=sflag, size = 0x4, scoped, tag = 'scoped memory for deep_q_network_forward.1']
    #allocation4 [shape = 'u8[1536]{0}', space=vmem, size = 0x800, scoped, tag = 'input window, operand 2, single buffered']
    #allocation5 [shape = 's32[1]{0}', space=sflag, size = 0x4, scoped, tag = 'scoped memory for deep_q_network_forward.1']
    #allocation6 [shape = 'u8[1441792]{0}', space=vmem, size = 0x160000, scoped, tag = 'input window, operand 3, single buffered']
    #allocation7 [shape = 'u8[1024]{0}', space=vmem, size = 0x400, scoped, tag = 'input window, operand 4, single buffered']
    #allocation8 [shape = 's32[1]{0}', space=sflag, size = 0x4, scoped, tag = 'scoped memory for deep_q_network_forward.1']
    #allocation9 [shape = 'u8[393216]{0}', space=vmem, size = 0x60000, scoped, tag = 'input window, operand 5, single buffered']
    #allocation10 [shape = 'u8[512]{0}', space=vmem, size = 0x400, scoped, tag = 'input window, operand 6, single buffered']
    #allocation11 [shape = 's32[1]{0}', space=sflag, size = 0x4, scoped, tag = 'scoped memory for deep_q_network_forward.1']
    #allocation12 [shape = 'u8[524288]{0}', space=vmem, size = 0x80000, scoped, tag = 'input window, operand 7, single buffered']
    #allocation13 [shape = 'u8[2048]{0}', space=vmem, size = 0x800, scoped, tag = 'input window, operand 8, single buffered']
    #allocation14 [shape = 's32[1]{0}', space=sflag, size = 0x4, scoped, tag = 'scoped memory for deep_q_network_forward.1']
    #allocation15 [shape = 'u8[262144]{0}', space=vmem, size = 0x40000, scoped, tag = 'input window, operand 9, single buffered']
    #allocation16 [shape = 'u8[512]{0}', space=vmem, size = 0x400, scoped, tag = 'input window, operand 10, single buffered']
    #allocation17 [shape = 's32[1]{0}', space=sflag, size = 0x4, scoped, tag = 'scoped memory for deep_q_network_forward.1']
    %16 = vsyncpa [#allocation3], 0
    %17 = vsyncpa [#allocation5], 0
    %18 = vsyncpa [#allocation8], 0
    %19 = vsyncpa [#allocation11], 0
    %20 = vsyncpa [#allocation14], 0
    %21 = vsyncpa [#allocation17], 0
    // Predicated region
    $region2: #{deep_q_network_forward.1} parent=1 // pred_check
      _
    $region3: #{deep_q_network_forward.1} parent=1 // pred_check_branch
      %23 = sbr.rel (0) target = $region5
    $region4: #{deep_q_network_forward.1} parent=1 // pred_region
      _
    $region5: #{deep_q_network_forward.1} parent=1 // pred_fallthru
      _
    // Predicated region
    $region6: #{deep_q_network_forward.1} parent=1 // pred_check
      _
    $region7: #{deep_q_network_forward.1} parent=1 // pred_check_branch
      %25 = sbr.rel (0) target = $region9
    $region8: #{deep_q_network_forward.1} parent=1 // pred_region
      %s27 = ssub.s32 18432, 18432
      %28 = vsyncadd [#allocation3], %s27
      %s29 = sshll.u32 [#allocation2], 4
      %s30 = int_to_ptr.vmem [resolvable:$true] %s29
      %35 = dma.hbm_to_vmem [thread:$0]  %s1, 18432, %s30, [#allocation3], 384, 384, 24
    $region9: #{deep_q_network_forward.1} parent=1 // pred_fallthru
      _
    // Predicated region
    $region10: #{deep_q_network_forward.1} parent=1 // pred_check
      _
    $region11: #{deep_q_network_forward.1} parent=1 // pred_check_branch
      %37 = sbr.rel (0) target = $region13
    $region12: #{deep_q_network_forward.1} parent=1 // pred_region
      %s39 = ssub.s32 48, 48
      %40 = vsyncadd [#allocation5], %s39
      %s42 = sshll.u32 [#allocation4], 4
      %s43 = int_to_ptr.vmem [resolvable:$true] %s42
      %45 = dma.hbm_to_vmem [thread:$0]  %s2, 48, %s43, [#allocation5]
    $region13: #{deep_q_network_forward.1} parent=1 // pred_fallthru
      _
    // Predicated region
    $region14: #{deep_q_network_forward.1} parent=1 // pred_check
      _
    $region15: #{deep_q_network_forward.1} parent=1 // pred_check_branch
      %47 = sbr.rel (0) target = $region17
    $region16: #{deep_q_network_forward.1} parent=1 // pred_region
      %s49 = ssub.s32 45056, 45056
      %50 = vsyncadd [#allocation5], %s49
      %s51 = sshll.u32 [#allocation6], 4
      %s52 = int_to_ptr.vmem [resolvable:$true] %s51
      %57 = dma.hbm_to_vmem [thread:$0]  %s3, 45056, %s52, [#allocation5], 256, 256, 16
    $region17: #{deep_q_network_forward.1} parent=1 // pred_fallthru
      _
    // Predicated region
    $region18: #{deep_q_network_forward.1} parent=1 // pred_check
      _
    $region19: #{deep_q_network_forward.1} parent=1 // pred_check_branch
      %59 = sbr.rel (0) target = $region21
    $region20: #{deep_q_network_forward.1} parent=1 // pred_region
      %s61 = ssub.s32 32, 32
      %62 = vsyncadd [#allocation8], %s61
      %s64 = sshll.u32 [#allocation7], 4
      %s65 = int_to_ptr.vmem [resolvable:$true] %s64
      %67 = dma.hbm_to_vmem [thread:$0]  %s4, 32, %s65, [#allocation8]
    $region21: #{deep_q_network_forward.1} parent=1 // pred_fallthru
      _
    // Predicated region
    $region22: #{deep_q_network_forward.1} parent=1 // pred_check
      _
    $region23: #{deep_q_network_forward.1} parent=1 // pred_check_branch
      %69 = sbr.rel (0) target = $region25
    $region24: #{deep_q_network_forward.1} parent=1 // pred_region
      %s71 = ssub.s32 12288, 12288
      %72 = vsyncadd [#allocation8], %s71
      %s73 = sshll.u32 [#allocation9], 4
      %s74 = int_to_ptr.vmem [resolvable:$true] %s73
      %79 = dma.hbm_to_vmem [thread:$0]  %s5, 12288, %s74, [#allocation8], 128, 128, 8
    $region25: #{deep_q_network_forward.1} parent=1 // pred_fallthru
      _
    // Predicated region
    $region26: #{deep_q_network_forward.1} parent=1 // pred_check
      _
    $region27: #{deep_q_network_forward.1} parent=1 // pred_check_branch
      %81 = sbr.rel (0) target = $region29
    $region28: #{deep_q_network_forward.1} parent=1 // pred_region
      %s83 = ssub.s32 16, 16
      %84 = vsyncadd [#allocation11], %s83
      %s86 = sshll.u32 [#allocation10], 4
      %s87 = int_to_ptr.vmem [resolvable:$true] %s86
      %89 = dma.hbm_to_vmem [thread:$0]  %s6, 16, %s87, [#allocation11]
    $region29: #{deep_q_network_forward.1} parent=1 // pred_fallthru
      _
    // Predicated region
    $region30: #{deep_q_network_forward.1} parent=1 // pred_check
      _
    $region31: #{deep_q_network_forward.1} parent=1 // pred_check_branch
      %91 = sbr.rel (0) target = $region33
    $region32: #{deep_q_network_forward.1} parent=1 // pred_region
      %s93 = ssub.s32 16384, 16384
      %94 = vsyncadd [#allocation11], %s93
      %s95 = sshll.u32 [#allocation12], 4
      %s96 = int_to_ptr.vmem [resolvable:$true] %s95
      %101 = dma.hbm_to_vmem [thread:$0]  %s7, 16384, %s96, [#allocation11], 512, 512, 32
    $region33: #{deep_q_network_forward.1} parent=1 // pred_fallthru
      _
    // Predicated region
    $region34: #{deep_q_network_forward.1} parent=1 // pred_check
      _
    $region35: #{deep_q_network_forward.1} parent=1 // pred_check_branch
      %103 = sbr.rel (0) target = $region37
    $region36: #{deep_q_network_forward.1} parent=1 // pred_region
      %s105 = ssub.s32 64, 64
      %106 = vsyncadd [#allocation14], %s105
      %s108 = sshll.u32 [#allocation13], 4
      %s109 = int_to_ptr.vmem [resolvable:$true] %s108
      %111 = dma.hbm_to_vmem [thread:$0]  %s8, 64, %s109, [#allocation14]
    $region37: #{deep_q_network_forward.1} parent=1 // pred_fallthru
      _
    // Predicated region
    $region38: #{deep_q_network_forward.1} parent=1 // pred_check
      _
    $region39: #{deep_q_network_forward.1} parent=1 // pred_check_branch
      %113 = sbr.rel (0) target = $region41
    $region40: #{deep_q_network_forward.1} parent=1 // pred_region
      %s115 = ssub.s32 8192, 8192
      %116 = vsyncadd [#allocation14], %s115
      %s117 = sshll.u32 [#allocation15], 4
      %s118 = int_to_ptr.vmem [resolvable:$true] %s117
      %123 = dma.hbm_to_vmem [thread:$0]  %s9, 8192, %s118, [#allocation14], 128, 128, 8
    $region41: #{deep_q_network_forward.1} parent=1 // pred_fallthru
      _
    // Predicated region
    $region42: #{deep_q_network_forward.1} parent=1 // pred_check
      _
    $region43: #{deep_q_network_forward.1} parent=1 // pred_check_branch
      %125 = sbr.rel (0) target = $region45
    $region44: #{deep_q_network_forward.1} parent=1 // pred_region
      %s127 = ssub.s32 16, 16
      %128 = vsyncadd [#allocation17], %s127
      %s130 = sshll.u32 [#allocation16], 4
      %s131 = int_to_ptr.vmem [resolvable:$true] %s130
      %133 = dma.hbm_to_vmem [thread:$0]  %s10, 16, %s131, [#allocation17]
    $region45: #{deep_q_network_forward.1} parent=1 // pred_fallthru
      _
    // Predicated region
    $region46: #{deep_q_network_forward.1} parent=1 // pred_check
      _
    $region47: #{deep_q_network_forward.1} parent=1 // pred_check_branch
      %135 = sbr.rel (0) target = $region49
    $region48: #{deep_q_network_forward.1} parent=1 // pred_region
      %136 = dma.done [#allocation3], 18432
    $region49: #{deep_q_network_forward.1} parent=1 // pred_fallthru
      _
    // Predicated region
    $region50: #{deep_q_network_forward.1} parent=1 // pred_check
      _
    $region51: #{deep_q_network_forward.1} parent=1 // pred_check_branch
      %138 = sbr.rel (0) target = $region53
    $region52: #{deep_q_network_forward.1} parent=1 // pred_region
      %139 = dma.done [#allocation5], 48
    $region53: #{deep_q_network_forward.1} parent=1 // pred_fallthru
      _
    // Predicated region
    $region54: #{deep_q_network_forward.1} parent=1 // pred_check
      _
    $region55: #{deep_q_network_forward.1} parent=1 // pred_check_branch
      %141 = sbr.rel (0) target = $region57
    $region56: #{deep_q_network_forward.1} parent=1 // pred_region
      %142 = dma.done [#allocation5], 45056
    $region57: #{deep_q_network_forward.1} parent=1 // pred_fallthru
      _
    // Predicated region
    $region58: #{deep_q_network_forward.1} parent=1 // pred_check
      _
    $region59: #{deep_q_network_forward.1} parent=1 // pred_check_branch
      %144 = sbr.rel (0) target = $region61
    $region60: #{deep_q_network_forward.1} parent=1 // pred_region
      %145 = dma.done [#allocation8], 32
    $region61: #{deep_q_network_forward.1} parent=1 // pred_fallthru
      _
    // Predicated region
    $region62: #{deep_q_network_forward.1} parent=1 // pred_check
      _
    $region63: #{deep_q_network_forward.1} parent=1 // pred_check_branch
      %147 = sbr.rel (0) target = $region65
    $region64: #{deep_q_network_forward.1} parent=1 // pred_region
      %148 = dma.done [#allocation8], 12288
    $region65: #{deep_q_network_forward.1} parent=1 // pred_fallthru
      _
    // Predicated region
    $region66: #{deep_q_network_forward.1} parent=1 // pred_check
      _
    $region67: #{deep_q_network_forward.1} parent=1 // pred_check_branch
      %150 = sbr.rel (0) target = $region69
    $region68: #{deep_q_network_forward.1} parent=1 // pred_region
      %151 = dma.done [#allocation11], 16
    $region69: #{deep_q_network_forward.1} parent=1 // pred_fallthru
      _
    // Predicated region
    $region70: #{deep_q_network_forward.1} parent=1 // pred_check
      _
    $region71: #{deep_q_network_forward.1} parent=1 // pred_check_branch
      %153 = sbr.rel (0) target = $region73
    $region72: #{deep_q_network_forward.1} parent=1 // pred_region
      %154 = dma.done [#allocation11], 16384
    $region73: #{deep_q_network_forward.1} parent=1 // pred_fallthru
      _
    // Predicated region
    $region74: #{deep_q_network_forward.1} parent=1 // pred_check
      _
    $region75: #{deep_q_network_forward.1} parent=1 // pred_check_branch
      %156 = sbr.rel (0) target = $region77
    $region76: #{deep_q_network_forward.1} parent=1 // pred_region
      %157 = dma.done [#allocation14], 64
    $region77: #{deep_q_network_forward.1} parent=1 // pred_fallthru
      _
    // Predicated region
    $region78: #{deep_q_network_forward.1} parent=1 // pred_check
      _
    $region79: #{deep_q_network_forward.1} parent=1 // pred_check_branch
      %159 = sbr.rel (0) target = $region81
    $region80: #{deep_q_network_forward.1} parent=1 // pred_region
      %160 = dma.done [#allocation14], 8192
    $region81: #{deep_q_network_forward.1} parent=1 // pred_fallthru
      _
    // Predicated region
    $region82: #{deep_q_network_forward.1} parent=1 // pred_check
      _
    $region83: #{deep_q_network_forward.1} parent=1 // pred_check_branch
      %162 = sbr.rel (0) target = $region85
    $region84: #{deep_q_network_forward.1} parent=1 // pred_region
      %163 = dma.done [#allocation17], 16
    $region85: #{deep_q_network_forward.1} parent=1 // pred_fallthru
      _
    %v164 = vld [vmem:[%s0] sm:$0x1]
    %v165 = vld [vmem:[%s0 + $0x30] sm:$0x1]
    %v166 = vld [vmem:[%s0 + $0x60] sm:$0x1]
    %v167 = vld [vmem:[%s0 + $0x90] sm:$0x1]
    %v168 = vld [vmem:[%s0 + $0xc0] sm:$0x1]
    %v169 = vld [vmem:[%s0 + $0xf0] sm:$0x1]
    %v170 = vld [vmem:[%s0 + $0x120] sm:$0x1]
    %v171 = vld [vmem:[%s0 + $0x150] sm:$0x1]
    %v172 = vld [vmem:[%s0 + $0x4] sm:$0x1]
    %v173 = vld [vmem:[%s0 + $0x34] sm:$0x1]
    %v174 = vld [vmem:[%s0 + $0x64] sm:$0x1]
    %v175 = vld [vmem:[%s0 + $0x94] sm:$0x1]
    %v176 = vld [vmem:[%s0 + $0xc4] sm:$0x1]
    %v177 = vld [vmem:[%s0 + $0xf4] sm:$0x1]
    %v178 = vld [vmem:[%s0 + $0x124] sm:$0x1]
    %v179 = vld [vmem:[%s0 + $0x154] sm:$0x1]
    %v180 = vld [vmem:[%s0 + $0x8] sm:$0x1]
    %v181 = vld [vmem:[%s0 + $0x38] sm:$0x1]
    %v182 = vld [vmem:[%s0 + $0x68] sm:$0x1]
    %v183 = vld [vmem:[%s0 + $0x98] sm:$0x1]
    %v184 = vld [vmem:[%s0 + $0xc8] sm:$0x1]
    %v185 = vld [vmem:[%s0 + $0xf8] sm:$0x1]
    %v186 = vld [vmem:[%s0 + $0x128] sm:$0x1]
    %v187 = vld [vmem:[%s0 + $0x158] sm:$0x1]
    %v188 = vld [vmem:[%s0 + $0xc] sm:$0x1]
    %v189 = vld [vmem:[%s0 + $0x3c] sm:$0x1]
    %v190 = vld [vmem:[%s0 + $0x6c] sm:$0x1]
    %v191 = vld [vmem:[%s0 + $0x9c] sm:$0x1]
    %v192 = vld [vmem:[%s0 + $0xcc] sm:$0x1]
    %v193 = vld [vmem:[%s0 + $0xfc] sm:$0x1]
    %v194 = vld [vmem:[%s0 + $0x12c] sm:$0x1]
    %v195 = vld [vmem:[%s0 + $0x15c] sm:$0x1]
    %v196 = vld [vmem:[%s0 + $0x10] sm:$0x1]
    %v197 = vld [vmem:[%s0 + $0x40] sm:$0x1]
    %v198 = vld [vmem:[%s0 + $0x70] sm:$0x1]
    %v199 = vld [vmem:[%s0 + $0xa0] sm:$0x1]
    %v200 = vld [vmem:[%s0 + $0xd0] sm:$0x1]
    %v201 = vld [vmem:[%s0 + $0x100] sm:$0x1]
    %v202 = vld [vmem:[%s0 + $0x130] sm:$0x1]
    %v203 = vld [vmem:[%s0 + $0x160] sm:$0x1]
    %v204 = vld [vmem:[%s0 + $0x14] sm:$0x1]
    %v205 = vld [vmem:[%s0 + $0x44] sm:$0x1]
    %v206 = vld [vmem:[%s0 + $0x74] sm:$0x1]
    %v207 = vld [vmem:[%s0 + $0xa4] sm:$0x1]
    %v208 = vld [vmem:[%s0 + $0xd4] sm:$0x1]
    %v209 = vld [vmem:[%s0 + $0x104] sm:$0x1]
    %v210 = vld [vmem:[%s0 + $0x134] sm:$0x1]
    %v211 = vld [vmem:[%s0 + $0x164] sm:$0x1]
    %v212 = vld [vmem:[%s0 + $0x18] sm:$0x1]
    %v213 = vld [vmem:[%s0 + $0x48] sm:$0x1]
    %v214 = vld [vmem:[%s0 + $0x78] sm:$0x1]
    %v215 = vld [vmem:[%s0 + $0xa8] sm:$0x1]
    %v216 = vld [vmem:[%s0 + $0xd8] sm:$0x1]
    %v217 = vld [vmem:[%s0 + $0x108] sm:$0x1]
    %v218 = vld [vmem:[%s0 + $0x138] sm:$0x1]
    %v219 = vld [vmem:[%s0 + $0x168] sm:$0x1]
    %v220 = vld [vmem:[%s0 + $0x1c] sm:$0x1]
    %v221 = vld [vmem:[%s0 + $0x4c] sm:$0x1]
    %v222 = vld [vmem:[%s0 + $0x7c] sm:$0x1]
    %v223 = vld [vmem:[%s0 + $0xac] sm:$0x1]
    %v224 = vld [vmem:[%s0 + $0xdc] sm:$0x1]
    %v225 = vld [vmem:[%s0 + $0x10c] sm:$0x1]
    %v226 = vld [vmem:[%s0 + $0x13c] sm:$0x1]
    %v227 = vld [vmem:[%s0 + $0x16c] sm:$0x1]
    %v228 = vld [vmem:[%s0 + $0x20] sm:$0x1]
    %v229 = vld [vmem:[%s0 + $0x50] sm:$0x1]
    %v230 = vld [vmem:[%s0 + $0x80] sm:$0x1]
    %v231 = vld [vmem:[%s0 + $0xb0] sm:$0x1]
    %v232 = vld [vmem:[%s0 + $0xe0] sm:$0x1]
    %v233 = vld [vmem:[%s0 + $0x110] sm:$0x1]
    %v234 = vld [vmem:[%s0 + $0x140] sm:$0x1]
    %v235 = vld [vmem:[%s0 + $0x170] sm:$0x1]
    %v236 = vld [vmem:[%s0 + $0x24] sm:$0x1]
    %v237 = vld [vmem:[%s0 + $0x54] sm:$0x1]
    %v238 = vld [vmem:[%s0 + $0x84] sm:$0x1]
    %v239 = vld [vmem:[%s0 + $0xb4] sm:$0x1]
    %v240 = vld [vmem:[%s0 + $0xe4] sm:$0x1]
    %v241 = vld [vmem:[%s0 + $0x114] sm:$0x1]
    %v242 = vld [vmem:[%s0 + $0x144] sm:$0x1]
    %v243 = vld [vmem:[%s0 + $0x174] sm:$0x1]
    %v244 = vld [vmem:[%s0 + $0x28] sm:$0x1]
    %v245 = vld [vmem:[%s0 + $0x58] sm:$0x1]
    %v246 = vld [vmem:[%s0 + $0x88] sm:$0x1]
    %v247 = vld [vmem:[%s0 + $0xb8] sm:$0x1]
    %v248 = vld [vmem:[%s0 + $0xe8] sm:$0x1]
    %v249 = vld [vmem:[%s0 + $0x118] sm:$0x1]
    %v250 = vld [vmem:[%s0 + $0x148] sm:$0x1]
    %v251 = vld [vmem:[%s0 + $0x178] sm:$0x1]
    %v260 = vrot.slane %v165, 7
    %vm261 = vcmask 1041409
    %v262 = vsel %vm261, %v260, %v164
    %v263 = vrot.slane %v166, 6
    %vm264 = vcmask 1042434
    %v265 = vsel %vm264, %v263, %v262
    %v266 = vrot.slane %v167, 5
    %vm267 = vcmask 1043459
    %v268 = vsel %vm267, %v266, %v265
    %v269 = vrot.slane %v168, 4
    %vm270 = vcmask 1044484
    %v271 = vsel %vm270, %v269, %v268
    %v272 = vrot.slane %v169, 3
    %vm273 = vcmask 1045509
    %v274 = vsel %vm273, %v272, %v271
    %v275 = vrot.slane %v170, 2
    %vm276 = vcmask 1046534
    %v277 = vsel %vm276, %v275, %v274
    %v278 = vrot.slane %v171, 1
    %vm279 = vcmask 1047559
    %v280 = vsel %vm279, %v278, %v277
    %v289 = vrot.slane %v173, 7
    %v290 = vsel %vm261, %v289, %v172
    %v291 = vrot.slane %v174, 6
    %v292 = vsel %vm264, %v291, %v290
    %v293 = vrot.slane %v175, 5
    %v294 = vsel %vm267, %v293, %v292
    %v295 = vrot.slane %v176, 4
    %v296 = vsel %vm270, %v295, %v294
    %v297 = vrot.slane %v177, 3
    %v298 = vsel %vm273, %v297, %v296
    %v299 = vrot.slane %v178, 2
    %v300 = vsel %vm276, %v299, %v298
    %v301 = vrot.slane %v179, 1
    %v302 = vsel %vm279, %v301, %v300
    %v311 = vrot.slane %v181, 7
    %v312 = vsel %vm261, %v311, %v180
    %v313 = vrot.slane %v182, 6
    %v314 = vsel %vm264, %v313, %v312
    %v315 = vrot.slane %v183, 5
    %v316 = vsel %vm267, %v315, %v314
    %v317 = vrot.slane %v184, 4
    %v318 = vsel %vm270, %v317, %v316
    %v319 = vrot.slane %v185, 3
    %v320 = vsel %vm273, %v319, %v318
    %v321 = vrot.slane %v186, 2
    %v322 = vsel %vm276, %v321, %v320
    %v323 = vrot.slane %v187, 1
    %v324 = vsel %vm279, %v323, %v322
    %v333 = vrot.slane %v189, 7
    %v334 = vsel %vm261, %v333, %v188
    %v335 = vrot.slane %v190, 6
    %v336 = vsel %vm264, %v335, %v334
    %v337 = vrot.slane %v191, 5
    %v338 = vsel %vm267, %v337, %v336
    %v339 = vrot.slane %v192, 4
    %v340 = vsel %vm270, %v339, %v338
    %v341 = vrot.slane %v193, 3
    %v342 = vsel %vm273, %v341, %v340
    %v343 = vrot.slane %v194, 2
    %v344 = vsel %vm276, %v343, %v342
    %v345 = vrot.slane %v195, 1
    %v346 = vsel %vm279, %v345, %v344
    %v355 = vrot.slane %v197, 7
    %v356 = vsel %vm261, %v355, %v196
    %v357 = vrot.slane %v198, 6
    %v358 = vsel %vm264, %v357, %v356
    %v359 = vrot.slane %v199, 5
    %v360 = vsel %vm267, %v359, %v358
    %v361 = vrot.slane %v200, 4
    %v362 = vsel %vm270, %v361, %v360
    %v363 = vrot.slane %v201, 3
    %v364 = vsel %vm273, %v363, %v362
    %v365 = vrot.slane %v202, 2
    %v366 = vsel %vm276, %v365, %v364
    %v367 = vrot.slane %v203, 1
    %v368 = vsel %vm279, %v367, %v366
    %v377 = vrot.slane %v205, 7
    %v378 = vsel %vm261, %v377, %v204
    %v379 = vrot.slane %v206, 6
    %v380 = vsel %vm264, %v379, %v378
    %v381 = vrot.slane %v207, 5
    %v382 = vsel %vm267, %v381, %v380
    %v383 = vrot.slane %v208, 4
    %v384 = vsel %vm270, %v383, %v382
    %v385 = vrot.slane %v209, 3
    %v386 = vsel %vm273, %v385, %v384
    %v387 = vrot.slane %v210, 2
    %v388 = vsel %vm276, %v387, %v386
    %v389 = vrot.slane %v211, 1
    %v390 = vsel %vm279, %v389, %v388
    %v399 = vrot.slane %v213, 7
    %v400 = vsel %vm261, %v399, %v212
    %v401 = vrot.slane %v214, 6
    %v402 = vsel %vm264, %v401, %v400
    %v403 = vrot.slane %v215, 5
    %v404 = vsel %vm267, %v403, %v402
    %v405 = vrot.slane %v216, 4
    %v406 = vsel %vm270, %v405, %v404
    %v407 = vrot.slane %v217, 3
    %v408 = vsel %vm273, %v407, %v406
    %v409 = vrot.slane %v218, 2
    %v410 = vsel %vm276, %v409, %v408
    %v411 = vrot.slane %v219, 1
    %v412 = vsel %vm279, %v411, %v410
    %v421 = vrot.slane %v221, 7
    %v422 = vsel %vm261, %v421, %v220
    %v423 = vrot.slane %v222, 6
    %v424 = vsel %vm264, %v423, %v422
    %v425 = vrot.slane %v223, 5
    %v426 = vsel %vm267, %v425, %v424
    %v427 = vrot.slane %v224, 4
    %v428 = vsel %vm270, %v427, %v426
    %v429 = vrot.slane %v225, 3
    %v430 = vsel %vm273, %v429, %v428
    %v431 = vrot.slane %v226, 2
    %v432 = vsel %vm276, %v431, %v430
    %v433 = vrot.slane %v227, 1
    %v434 = vsel %vm279, %v433, %v432
    %v443 = vrot.slane %v229, 7
    %v444 = vsel %vm261, %v443, %v228
    %v445 = vrot.slane %v230, 6
    %v446 = vsel %vm264, %v445, %v444
    %v447 = vrot.slane %v231, 5
    %v448 = vsel %vm267, %v447, %v446
    %v449 = vrot.slane %v232, 4
    %v450 = vsel %vm270, %v449, %v448
    %v451 = vrot.slane %v233, 3
    %v452 = vsel %vm273, %v451, %v450
    %v453 = vrot.slane %v234, 2
    %v454 = vsel %vm276, %v453, %v452
    %v455 = vrot.slane %v235, 1
    %v456 = vsel %vm279, %v455, %v454
    %v465 = vrot.slane %v237, 7
    %v466 = vsel %vm261, %v465, %v236
    %v467 = vrot.slane %v238, 6
    %v468 = vsel %vm264, %v467, %v466
    %v469 = vrot.slane %v239, 5
    %v470 = vsel %vm267, %v469, %v468
    %v471 = vrot.slane %v240, 4
    %v472 = vsel %vm270, %v471, %v470
    %v473 = vrot.slane %v241, 3
    %v474 = vsel %vm273, %v473, %v472
    %v475 = vrot.slane %v242, 2
    %v476 = vsel %vm276, %v475, %v474
    %v477 = vrot.slane %v243, 1
    %v478 = vsel %vm279, %v477, %v476
    %v487 = vrot.slane %v245, 7
    %v488 = vsel %vm261, %v487, %v244
    %v489 = vrot.slane %v246, 6
    %v490 = vsel %vm264, %v489, %v488
    %v491 = vrot.slane %v247, 5
    %v492 = vsel %vm267, %v491, %v490
    %v493 = vrot.slane %v248, 4
    %v494 = vsel %vm270, %v493, %v492
    %v495 = vrot.slane %v249, 3
    %v496 = vsel %vm273, %v495, %v494
    %v497 = vrot.slane %v250, 2
    %v498 = vsel %vm276, %v497, %v496
    %v499 = vrot.slane %v251, 1
    %v500 = vsel %vm279, %v499, %v498
    %v501 = vld [vmem:[#allocation2] sm:$0xff]
    %v502 = vld [vmem:[#allocation2 + $0x8] sm:$0xff]
    %v503 = vld [vmem:[#allocation2 + $0x10] sm:$0xff]
    %v504 = vld [vmem:[#allocation2 + $0x18] sm:$0xff]
    %v505 = vld [vmem:[#allocation2 + $0x20] sm:$0xff]
    %v506 = vld [vmem:[#allocation2 + $0x28] sm:$0xff]
    %v507 = vld [vmem:[#allocation2 + $0x30] sm:$0xff]
    %v508 = vld [vmem:[#allocation2 + $0x38] sm:$0xff]
    %v509 = vld [vmem:[#allocation2 + $0x40] sm:$0xff]
    %v510 = vld [vmem:[#allocation2 + $0x48] sm:$0xff]
    %v511 = vld [vmem:[#allocation2 + $0x50] sm:$0xff]
    %v512 = vld [vmem:[#allocation2 + $0x58] sm:$0xff]
    %v513 = vld [vmem:[#allocation2 + $0x60] sm:$0xff]
    %v514 = vld [vmem:[#allocation2 + $0x68] sm:$0xff]
    %v515 = vld [vmem:[#allocation2 + $0x70] sm:$0xff]
    %v516 = vld [vmem:[#allocation2 + $0x78] sm:$0xff]
    %v517 = vld [vmem:[#allocation2 + $0x80] sm:$0xff]
    %v518 = vld [vmem:[#allocation2 + $0x88] sm:$0xff]
    %v519 = vld [vmem:[%s0 + $0x1] sm:$0x1]
    %v520 = vld [vmem:[%s0 + $0x31] sm:$0x1]
    %v521 = vld [vmem:[%s0 + $0x61] sm:$0x1]
    %v522 = vld [vmem:[%s0 + $0x91] sm:$0x1]
    %v523 = vld [vmem:[%s0 + $0xc1] sm:$0x1]
    %v524 = vld [vmem:[%s0 + $0xf1] sm:$0x1]
    %v525 = vld [vmem:[%s0 + $0x121] sm:$0x1]
    %v526 = vld [vmem:[%s0 + $0x151] sm:$0x1]
    %v527 = vld [vmem:[%s0 + $0x5] sm:$0x1]
    %v528 = vld [vmem:[%s0 + $0x35] sm:$0x1]
    %v529 = vld [vmem:[%s0 + $0x65] sm:$0x1]
    %v530 = vld [vmem:[%s0 + $0x95] sm:$0x1]
    %v531 = vld [vmem:[%s0 + $0xc5] sm:$0x1]
    %v532 = vld [vmem:[%s0 + $0xf5] sm:$0x1]
    %v533 = vld [vmem:[%s0 + $0x125] sm:$0x1]
    %v534 = vld [vmem:[%s0 + $0x155] sm:$0x1]
    %v535 = vld [vmem:[%s0 + $0x9] sm:$0x1]
    %v536 = vld [vmem:[%s0 + $0x39] sm:$0x1]
    %v537 = vld [vmem:[%s0 + $0x69] sm:$0x1]
    %v538 = vld [vmem:[%s0 + $0x99] sm:$0x1]
    %v539 = vld [vmem:[%s0 + $0xc9] sm:$0x1]
    %v540 = vld [vmem:[%s0 + $0xf9] sm:$0x1]
    %v541 = vld [vmem:[%s0 + $0x129] sm:$0x1]
    %v542 = vld [vmem:[%s0 + $0x159] sm:$0x1]
    %v543 = vld [vmem:[%s0 + $0xd] sm:$0x1]
    %v544 = vld [vmem:[%s0 + $0x3d] sm:$0x1]
    %v545 = vld [vmem:[%s0 + $0x6d] sm:$0x1]
    %v546 = vld [vmem:[%s0 + $0x9d] sm:$0x1]
    %v547 = vld [vmem:[%s0 + $0xcd] sm:$0x1]
    %v548 = vld [vmem:[%s0 + $0xfd] sm:$0x1]
    %v549 = vld [vmem:[%s0 + $0x12d] sm:$0x1]
    %v550 = vld [vmem:[%s0 + $0x15d] sm:$0x1]
    %v551 = vld [vmem:[%s0 + $0x11] sm:$0x1]
    %v552 = vld [vmem:[%s0 + $0x41] sm:$0x1]
    %v553 = vld [vmem:[%s0 + $0x71] sm:$0x1]
    %v554 = vld [vmem:[%s0 + $0xa1] sm:$0x1]
    %v555 = vld [vmem:[%s0 + $0xd1] sm:$0x1]
    %v556 = vld [vmem:[%s0 + $0x101] sm:$0x1]
    %v557 = vld [vmem:[%s0 + $0x131] sm:$0x1]
    %v558 = vld [vmem:[%s0 + $0x161] sm:$0x1]
    %v559 = vld [vmem:[%s0 + $0x15] sm:$0x1]
    %v560 = vld [vmem:[%s0 + $0x45] sm:$0x1]
    %v561 = vld [vmem:[%s0 + $0x75] sm:$0x1]
    %v562 = vld [vmem:[%s0 + $0xa5] sm:$0x1]
    %v563 = vld [vmem:[%s0 + $0xd5] sm:$0x1]
    %v564 = vld [vmem:[%s0 + $0x105] sm:$0x1]
    %v565 = vld [vmem:[%s0 + $0x135] sm:$0x1]
    %v566 = vld [vmem:[%s0 + $0x165] sm:$0x1]
    %v567 = vld [vmem:[%s0 + $0x19] sm:$0x1]
    %v568 = vld [vmem:[%s0 + $0x49] sm:$0x1]
    %v569 = vld [vmem:[%s0 + $0x79] sm:$0x1]
    %v570 = vld [vmem:[%s0 + $0xa9] sm:$0x1]
    %v571 = vld [vmem:[%s0 + $0xd9] sm:$0x1]
    %v572 = vld [vmem:[%s0 + $0x109] sm:$0x1]
    %v573 = vld [vmem:[%s0 + $0x139] sm:$0x1]
    %v574 = vld [vmem:[%s0 + $0x169] sm:$0x1]
    %v575 = vld [vmem:[%s0 + $0x1d] sm:$0x1]
    %v576 = vld [vmem:[%s0 + $0x4d] sm:$0x1]
    %v577 = vld [vmem:[%s0 + $0x7d] sm:$0x1]
    %v578 = vld [vmem:[%s0 + $0xad] sm:$0x1]
    %v579 = vld [vmem:[%s0 + $0xdd] sm:$0x1]
    %v580 = vld [vmem:[%s0 + $0x10d] sm:$0x1]
    %v581 = vld [vmem:[%s0 + $0x13d] sm:$0x1]
    %v582 = vld [vmem:[%s0 + $0x16d] sm:$0x1]
    %v583 = vld [vmem:[%s0 + $0x21] sm:$0x1]
    %v584 = vld [vmem:[%s0 + $0x51] sm:$0x1]
    %v585 = vld [vmem:[%s0 + $0x81] sm:$0x1]
    %v586 = vld [vmem:[%s0 + $0xb1] sm:$0x1]
    %v587 = vld [vmem:[%s0 + $0xe1] sm:$0x1]
    %v588 = vld [vmem:[%s0 + $0x111] sm:$0x1]
    %v589 = vld [vmem:[%s0 + $0x141] sm:$0x1]
    %v590 = vld [vmem:[%s0 + $0x171] sm:$0x1]
    %v591 = vld [vmem:[%s0 + $0x25] sm:$0x1]
    %v592 = vld [vmem:[%s0 + $0x55] sm:$0x1]
    %v593 = vld [vmem:[%s0 + $0x85] sm:$0x1]
    %v594 = vld [vmem:[%s0 + $0xb5] sm:$0x1]
    %v595 = vld [vmem:[%s0 + $0xe5] sm:$0x1]
    %v596 = vld [vmem:[%s0 + $0x115] sm:$0x1]
    %v597 = vld [vmem:[%s0 + $0x145] sm:$0x1]
    %v598 = vld [vmem:[%s0 + $0x175] sm:$0x1]
    %v599 = vld [vmem:[%s0 + $0x29] sm:$0x1]
    %v600 = vld [vmem:[%s0 + $0x59] sm:$0x1]
    %v601 = vld [vmem:[%s0 + $0x89] sm:$0x1]
    %v602 = vld [vmem:[%s0 + $0xb9] sm:$0x1]
    %v603 = vld [vmem:[%s0 + $0xe9] sm:$0x1]
    %v604 = vld [vmem:[%s0 + $0x119] sm:$0x1]
    %v605 = vld [vmem:[%s0 + $0x149] sm:$0x1]
    %v606 = vld [vmem:[%s0 + $0x179] sm:$0x1]
    %v615 = vrot.slane %v520, 7
    %v616 = vsel %vm261, %v615, %v519
    %v617 = vrot.slane %v521, 6
    %v618 = vsel %vm264, %v617, %v616
    %v619 = vrot.slane %v522, 5
    %v620 = vsel %vm267, %v619, %v618
    %v621 = vrot.slane %v523, 4
    %v622 = vsel %vm270, %v621, %v620
    %v623 = vrot.slane %v524, 3
    %v624 = vsel %vm273, %v623, %v622
    %v625 = vrot.slane %v525, 2
    %v626 = vsel %vm276, %v625, %v624
    %v627 = vrot.slane %v526, 1
    %v628 = vsel %vm279, %v627, %v626
    %v637 = vrot.slane %v528, 7
    %v638 = vsel %vm261, %v637, %v527
    %v639 = vrot.slane %v529, 6
    %v640 = vsel %vm264, %v639, %v638
    %v641 = vrot.slane %v530, 5
    %v642 = vsel %vm267, %v641, %v640
    %v643 = vrot.slane %v531, 4
    %v644 = vsel %vm270, %v643, %v642
    %v645 = vrot.slane %v532, 3
    %v646 = vsel %vm273, %v645, %v644
    %v647 = vrot.slane %v533, 2
    %v648 = vsel %vm276, %v647, %v646
    %v649 = vrot.slane %v534, 1
    %v650 = vsel %vm279, %v649, %v648
    %v659 = vrot.slane %v536, 7
    %v660 = vsel %vm261, %v659, %v535
    %v661 = vrot.slane %v537, 6
    %v662 = vsel %vm264, %v661, %v660
    %v663 = vrot.slane %v538, 5
    %v664 = vsel %vm267, %v663, %v662
    %v665 = vrot.slane %v539, 4
    %v666 = vsel %vm270, %v665, %v664
    %v667 = vrot.slane %v540, 3
    %v668 = vsel %vm273, %v667, %v666
    %v669 = vrot.slane %v541, 2
    %v670 = vsel %vm276, %v669, %v668
    %v671 = vrot.slane %v542, 1
    %v672 = vsel %vm279, %v671, %v670
    %v681 = vrot.slane %v544, 7
    %v682 = vsel %vm261, %v681, %v543
    %v683 = vrot.slane %v545, 6
    %v684 = vsel %vm264, %v683, %v682
    %v685 = vrot.slane %v546, 5
    %v686 = vsel %vm267, %v685, %v684
    %v687 = vrot.slane %v547, 4
    %v688 = vsel %vm270, %v687, %v686
    %v689 = vrot.slane %v548, 3
    %v690 = vsel %vm273, %v689, %v688
    %v691 = vrot.slane %v549, 2
    %v692 = vsel %vm276, %v691, %v690
    %v693 = vrot.slane %v550, 1
    %v694 = vsel %vm279, %v693, %v692
    %v703 = vrot.slane %v552, 7
    %v704 = vsel %vm261, %v703, %v551
    %v705 = vrot.slane %v553, 6
    %v706 = vsel %vm264, %v705, %v704
    %v707 = vrot.slane %v554, 5
    %v708 = vsel %vm267, %v707, %v706
    %v709 = vrot.slane %v555, 4
    %v710 = vsel %vm270, %v709, %v708
    %v711 = vrot.slane %v556, 3
    %v712 = vsel %vm273, %v711, %v710
    %v713 = vrot.slane %v557, 2
    %v714 = vsel %vm276, %v713, %v712
    %v715 = vrot.slane %v558, 1
    %v716 = vsel %vm279, %v715, %v714
    %v725 = vrot.slane %v560, 7
    %v726 = vsel %vm261, %v725, %v559
    %v727 = vrot.slane %v561, 6
    %v728 = vsel %vm264, %v727, %v726
    %v729 = vrot.slane %v562, 5
    %v730 = vsel %vm267, %v729, %v728
    %v731 = vrot.slane %v563, 4
    %v732 = vsel %vm270, %v731, %v730
    %v733 = vrot.slane %v564, 3
    %v734 = vsel %vm273, %v733, %v732
    %v735 = vrot.slane %v565, 2
    %v736 = vsel %vm276, %v735, %v734
    %v737 = vrot.slane %v566, 1
    %v738 = vsel %vm279, %v737, %v736
    %v747 = vrot.slane %v568, 7
    %v748 = vsel %vm261, %v747, %v567
    %v749 = vrot.slane %v569, 6
    %v750 = vsel %vm264, %v749, %v748
    %v751 = vrot.slane %v570, 5
    %v752 = vsel %vm267, %v751, %v750
    %v753 = vrot.slane %v571, 4
    %v754 = vsel %vm270, %v753, %v752
    %v755 = vrot.slane %v572, 3
    %v756 = vsel %vm273, %v755, %v754
    %v757 = vrot.slane %v573, 2
    %v758 = vsel %vm276, %v757, %v756
    %v759 = vrot.slane %v574, 1
    %v760 = vsel %vm279, %v759, %v758
    %v769 = vrot.slane %v576, 7
    %v770 = vsel %vm261, %v769, %v575
    %v771 = vrot.slane %v577, 6
    %v772 = vsel %vm264, %v771, %v770
    %v773 = vrot.slane %v578, 5
    %v774 = vsel %vm267, %v773, %v772
    %v775 = vrot.slane %v579, 4
    %v776 = vsel %vm270, %v775, %v774
    %v777 = vrot.slane %v580, 3
    %v778 = vsel %vm273, %v777, %v776
    %v779 = vrot.slane %v581, 2
    %v780 = vsel %vm276, %v779, %v778
    %v781 = vrot.slane %v582, 1
    %v782 = vsel %vm279, %v781, %v780
    %v791 = vrot.slane %v584, 7
    %v792 = vsel %vm261, %v791, %v583
    %v793 = vrot.slane %v585, 6
    %v794 = vsel %vm264, %v793, %v792
    %v795 = vrot.slane %v586, 5
    %v796 = vsel %vm267, %v795, %v794
    %v797 = vrot.slane %v587, 4
    %v798 = vsel %vm270, %v797, %v796
    %v799 = vrot.slane %v588, 3
    %v800 = vsel %vm273, %v799, %v798
    %v801 = vrot.slane %v589, 2
    %v802 = vsel %vm276, %v801, %v800
    %v803 = vrot.slane %v590, 1
    %v804 = vsel %vm279, %v803, %v802
    %v813 = vrot.slane %v592, 7
    %v814 = vsel %vm261, %v813, %v591
    %v815 = vrot.slane %v593, 6
    %v816 = vsel %vm264, %v815, %v814
    %v817 = vrot.slane %v594, 5
    %v818 = vsel %vm267, %v817, %v816
    %v819 = vrot.slane %v595, 4
    %v820 = vsel %vm270, %v819, %v818
    %v821 = vrot.slane %v596, 3
    %v822 = vsel %vm273, %v821, %v820
    %v823 = vrot.slane %v597, 2
    %v824 = vsel %vm276, %v823, %v822
    %v825 = vrot.slane %v598, 1
    %v826 = vsel %vm279, %v825, %v824
    %v835 = vrot.slane %v600, 7
    %v836 = vsel %vm261, %v835, %v599
    %v837 = vrot.slane %v601, 6
    %v838 = vsel %vm264, %v837, %v836
    %v839 = vrot.slane %v602, 5
    %v840 = vsel %vm267, %v839, %v838
    %v841 = vrot.slane %v603, 4
    %v842 = vsel %vm270, %v841, %v840
    %v843 = vrot.slane %v604, 3
    %v844 = vsel %vm273, %v843, %v842
    %v845 = vrot.slane %v605, 2
    %v846 = vsel %vm276, %v845, %v844
    %v847 = vrot.slane %v606, 1
    %v848 = vsel %vm279, %v847, %v846
    %s849 = scalar_lea.vmem [#allocation2], 144
    %v850 = vld [vmem:[%s849] sm:$0xff]
    %v851 = vld [vmem:[%s849 + $0x8] sm:$0xff]
    %v852 = vld [vmem:[%s849 + $0x10] sm:$0xff]
    %v853 = vld [vmem:[%s849 + $0x18] sm:$0xff]
    %v854 = vld [vmem:[%s849 + $0x20] sm:$0xff]
    %v855 = vld [vmem:[%s849 + $0x28] sm:$0xff]
    %v856 = vld [vmem:[%s849 + $0x30] sm:$0xff]
    %v857 = vld [vmem:[%s849 + $0x38] sm:$0xff]
    %v858 = vld [vmem:[%s849 + $0x40] sm:$0xff]
    %v859 = vld [vmem:[%s849 + $0x48] sm:$0xff]
    %v860 = vld [vmem:[%s849 + $0x50] sm:$0xff]
    %v861 = vld [vmem:[%s849 + $0x58] sm:$0xff]
    %v862 = vld [vmem:[%s849 + $0x60] sm:$0xff]
    %v863 = vld [vmem:[%s849 + $0x68] sm:$0xff]
    %v864 = vld [vmem:[%s849 + $0x70] sm:$0xff]
    %v865 = vld [vmem:[%s849 + $0x78] sm:$0xff]
    %v866 = vld [vmem:[%s849 + $0x80] sm:$0xff]
    %v867 = vld [vmem:[%s849 + $0x88] sm:$0xff]
    %vm868 = vcmask 392192
    %v869 = vsel %vm868, %v628, 0
    %v871 = vsel %vm868, %v650, 0
    %v873 = vsel %vm868, %v672, 0
    %v875 = vsel %vm868, %v694, 0
    %v877 = vsel %vm868, %v716, 0
    %v879 = vsel %vm868, %v738, 0
    %v881 = vsel %vm868, %v760, 0
    %v883 = vsel %vm868, %v782, 0
    %v885 = vsel %vm868, %v804, 0
    %v887 = vsel %vm868, %v826, 0
    %v889 = vsel %vm868, %v848, 0
    %891 = vmatprep.subr.mxu0 %v851
    %892 = vmatpush1.msra.mxu0 %v850
    %893 = vmatprep.subr.mxu0 %v854
    %894 = vmatpush1.msra.mxu0 %v853
    %895 = vmatprep.subr.mxu0 %v857
    %896 = vmatpush1.msra.mxu0 %v856
    %897 = vmatprep.subr.mxu0 %v860
    %898 = vmatpush1.msra.mxu0 %v859
    %899 = vmatprep.subr.mxu0 %v863
    %900 = vmatpush1.msra.mxu0 %v862
    %901 = vmatprep.subr.mxu0 %v866
    %902 = vmatpush1.msra.mxu0 %v865
    %903 = vmatprep.subr.mxu0 0.0
    %904 = vmatpush1.msra.mxu0 0.0
    %905 = vmatprep.subr.mxu0 0.0
    %906 = vmatpush1.msra.mxu0 0.0
    %907 = vmatprep.subr.mxu0 0.0
    %908 = vmatpush1.msra.mxu0 0.0
    %909 = vmatprep.subr.mxu0 0.0
    %910 = vmatpush1.msra.mxu0 0.0
    %911 = vmatprep.subr.mxu0 0.0
    %912 = vmatpush1.msra.mxu0 0.0
    %913 = vmatprep.subr.mxu0 0.0
    %914 = vmatpush1.msra.mxu0 0.0
    %915 = vmatprep.subr.mxu0 0.0
    %916 = vmatpush1.msra.mxu0 0.0
    %917 = vmatprep.subr.mxu0 0.0
    %918 = vmatpush1.msra.mxu0 0.0
    %919 = vmatprep.subr.mxu0 0.0
    %920 = vmatpush1.msra.mxu0 0.0
    %921 = vmatprep.subr.mxu0 0.0
    %922 = vmatpush1.msra.mxu0 0.0
    %923 = vmatprep.subr.mxu0 0.0
    %924 = vmatpush1.msra.mxu0 0.0
    %925 = vmatprep.subr.mxu0 0.0
    %926 = vmatpush1.msra.mxu0 0.0
    %927 = vmatprep.subr.mxu0 0.0
    %928 = vmatpush1.msra.mxu0 0.0
    %929 = vmatprep.subr.mxu0 0.0
    %930 = vmatpush1.msra.mxu0 0.0
    %931 = vmatprep.subr.mxu0 0.0
    %932 = vmatpush1.msra.mxu0 0.0
    %933 = vmatprep.subr.mxu0 0.0
    %934 = vmatpush1.msra.mxu0 0.0
    %935 = vmatprep.subr.mxu0 0.0
    %936 = vmatpush1.msra.mxu0 0.0
    %937 = vmatprep.subr.mxu0 0.0
    %938 = vmatpush1.msra.mxu0 0.0
    %939 = vmatprep.subr.mxu0 0.0
    %940 = vmatpush1.msra.mxu0 0.0
    %941 = vmatprep.subr.mxu0 0.0
    %942 = vmatpush1.msra.mxu0 0.0
    %943 = vmatprep.subr.mxu0 0.0
    %944 = vmatpush1.msra.mxu0 0.0
    %945 = vmatprep.subr.mxu0 0.0
    %946 = vmatpush1.msra.mxu0 0.0
    %947 = vmatprep.subr.mxu0 0.0
    %948 = vmatpush1.msra.mxu0 0.0
    %949 = vmatprep.subr.mxu0 0.0
    %950 = vmatpush1.msra.mxu0 0.0
    %951 = vmatprep.subr.mxu0 0.0
    %952 = vmatpush1.msra.mxu0 0.0
    %953 = vmatprep.subr.mxu0 0.0
    %954 = vmatpush1.msra.mxu0 0.0
    %955 = vmatprep.mubr.f32.mxu0 0.0
    %956 = vmatmul.mubr.f32.gmra.mrb[0].mxu0 %v869
    %v957 = vpop.f32.mrb[0].mxu0
    %v958 = vadd.f32 0.0, %v957
    %v959 = vpop.f32.mrb[0].mxu0
    %v960 = vadd.f32 0.0, %v959
    %961 = vmatprep.mubr.f32.mxu0 0.0
    %962 = vmatmul.mubr.f32.gmra.mrb[0].mxu0 %v871
    %v963 = vpop.f32.mrb[0].mxu0
    %v964 = vadd.f32 0.0, %v963
    %v965 = vpop.f32.mrb[0].mxu0
    %v966 = vadd.f32 0.0, %v965
    %967 = vmatprep.mubr.f32.mxu0 0.0
    %968 = vmatmul.mubr.f32.gmra.mrb[0].mxu0 %v873
    %v969 = vpop.f32.mrb[0].mxu0
    %v970 = vadd.f32 0.0, %v969
    %v971 = vpop.f32.mrb[0].mxu0
    %v972 = vadd.f32 0.0, %v971
    %973 = vmatprep.mubr.f32.mxu0 0.0
    %974 = vmatmul.mubr.f32.gmra.mrb[0].mxu0 %v875
    %v975 = vpop.f32.mrb[0].mxu0
    %v976 = vadd.f32 0.0, %v975
    %v977 = vpop.f32.mrb[0].mxu0
    %v978 = vadd.f32 0.0, %v977
    %979 = vmatprep.mubr.f32.mxu0 0.0
    %980 = vmatmul.mubr.f32.gmra.mrb[0].mxu0 %v877
    %v981 = vpop.f32.mrb[0].mxu0
    %v982 = vadd.f32 0.0, %v981
    %v983 = vpop.f32.mrb[0].mxu0
    %v984 = vadd.f32 0.0, %v983
    %985 = vmatprep.mubr.f32.mxu0 0.0
    %986 = vmatmul.mubr.f32.gmra.mrb[0].mxu0 %v879
    %v987 = vpop.f32.mrb[0].mxu0
    %v988 = vadd.f32 0.0, %v987
    %v989 = vpop.f32.mrb[0].mxu0
    %v990 = vadd.f32 0.0, %v989
    %991 = vmatprep.mubr.f32.mxu0 0.0
    %992 = vmatmul.mubr.f32.gmra.mrb[0].mxu0 %v881
    %v993 = vpop.f32.mrb[0].mxu0
    %v994 = vadd.f32 0.0, %v993
    %v995 = vpop.f32.mrb[0].mxu0
    %v996 = vadd.f32 0.0, %v995
    %997 = vmatprep.mubr.f32.mxu0 0.0
    %998 = vmatmul.mubr.f32.gmra.mrb[0].mxu0 %v883
    %v999 = vpop.f32.mrb[0].mxu0
    %v1000 = vadd.f32 0.0, %v999
    %v1001 = vpop.f32.mrb[0].mxu0
    %v1002 = vadd.f32 0.0, %v1001
    %1003 = vmatprep.mubr.f32.mxu0 0.0
    %1004 = vmatmul.mubr.f32.gmra.mrb[0].mxu0 %v885
    %v1005 = vpop.f32.mrb[0].mxu0
    %v1006 = vadd.f32 0.0, %v1005
    %v1007 = vpop.f32.mrb[0].mxu0
    %v1008 = vadd.f32 0.0, %v1007
    %1009 = vmatprep.mubr.f32.mxu0 0.0
    %1010 = vmatmul.mubr.f32.gmra.mrb[0].mxu0 %v887
    %v1011 = vpop.f32.mrb[0].mxu0
    %v1012 = vadd.f32 0.0, %v1011
    %v1013 = vpop.f32.mrb[0].mxu0
    %v1014 = vadd.f32 0.0, %v1013
    %1015 = vmatprep.mubr.f32.mxu0 0.0
    %1016 = vmatmul.mubr.f32.gmra.mrb[0].mxu0 %v889
    %v1017 = vpop.f32.mrb[0].mxu0
    %v1018 = vpop.f32.mrb[0].mxu0
    %1019 = vdwg.mxu0
    %1020 = vmatprep.subr.mxu0 0.0
    %1021 = vmatpush1.msra.mxu0 %v852
    %1022 = vmatprep.subr.mxu0 0.0
    %1023 = vmatpush1.msra.mxu0 %v855
    %1024 = vmatprep.subr.mxu0 0.0
    %1025 = vmatpush1.msra.mxu0 %v858
    %1026 = vmatprep.subr.mxu0 0.0
    %1027 = vmatpush1.msra.mxu0 %v861
    %1028 = vmatprep.subr.mxu0 0.0
    %1029 = vmatpush1.msra.mxu0 %v864
    %1030 = vmatprep.subr.mxu0 0.0
    %1031 = vmatpush1.msra.mxu0 %v867
    %1032 = vmatprep.subr.mxu0 0.0
    %1033 = vmatpush1.msra.mxu0 0.0
    %1034 = vmatprep.subr.mxu0 0.0
    %1035 = vmatpush1.msra.mxu0 0.0
    %1036 = vmatprep.subr.mxu0 0.0
    %1037 = vmatpush1.msra.mxu0 0.0
    %1038 = vmatprep.subr.mxu0 0.0
    %1039 = vmatpush1.msra.mxu0 0.0
    %1040 = vmatprep.subr.mxu0 0.0
    %1041 = vmatpush1.msra.mxu0 0.0
    %1042 = vmatprep.subr.mxu0 0.0
    %1043 = vmatpush1.msra.mxu0 0.0
    %1044 = vmatprep.subr.mxu0 0.0
    %1045 = vmatpush1.msra.mxu0 0.0
    %1046 = vmatprep.subr.mxu0 0.0
    %1047 = vmatpush1.msra.mxu0 0.0
    %1048 = vmatprep.subr.mxu0 0.0
    %1049 = vmatpush1.msra.mxu0 0.0
    %1050 = vmatprep.subr.mxu0 0.0
    %1051 = vmatpush1.msra.mxu0 0.0
    %1052 = vmatprep.subr.mxu0 0.0
    %1053 = vmatpush1.msra.mxu0 0.0
    %1054 = vmatprep.subr.mxu0 0.0
    %1055 = vmatpush1.msra.mxu0 0.0
    %1056 = vmatprep.subr.mxu0 0.0
    %1057 = vmatpush1.msra.mxu0 0.0
    %1058 = vmatprep.subr.mxu0 0.0
    %1059 = vmatpush1.msra.mxu0 0.0
    %1060 = vmatprep.subr.mxu0 0.0
    %1061 = vmatpush1.msra.mxu0 0.0
    %1062 = vmatprep.subr.mxu0 0.0
    %1063 = vmatpush1.msra.mxu0 0.0
    %1064 = vmatprep.subr.mxu0 0.0
    %1065 = vmatpush1.msra.mxu0 0.0
    %1066 = vmatprep.subr.mxu0 0.0
    %1067 = vmatpush1.msra.mxu0 0.0
    %1068 = vmatprep.subr.mxu0 0.0
    %1069 = vmatpush1.msra.mxu0 0.0
    %1070 = vmatprep.subr.mxu0 0.0
    %1071 = vmatpush1.msra.mxu0 0.0
    %1072 = vmatprep.subr.mxu0 0.0
    %1073 = vmatpush1.msra.mxu0 0.0
    %1074 = vmatprep.subr.mxu0 0.0
    %1075 = vmatpush1.msra.mxu0 0.0
    %1076 = vmatprep.subr.mxu0 0.0
    %1077 = vmatpush1.msra.mxu0 0.0
    %1078 = vmatprep.subr.mxu0 0.0
    %1079 = vmatpush1.msra.mxu0 0.0
    %1080 = vmatprep.subr.mxu0 0.0
    %1081 = vmatpush1.msra.mxu0 0.0
    %1082 = vmatprep.subr.mxu0 0.0
    %1083 = vmatpush1.msra.mxu0 0.0
    %1084 = vmatprep.mubr.f32.mxu0 0.0
    %1085 = vmatmul.mubr.f32.gmra.mrb[0].mxu0 %v869
    %v1086 = vpop.f32.mrb[0].mxu0
    %v1087 = vadd.f32 0.0, %v1086
    %v1088 = vpop.f32.mrb[0].mxu0
    %1089 = vmatprep.mubr.f32.mxu0 0.0
    %1090 = vmatmul.mubr.f32.gmra.mrb[0].mxu0 %v871
    %v1091 = vpop.f32.mrb[0].mxu0
    %v1092 = vadd.f32 0.0, %v1091
    %v1093 = vpop.f32.mrb[0].mxu0
    %1094 = vmatprep.mubr.f32.mxu0 0.0
    %1095 = vmatmul.mubr.f32.gmra.mrb[0].mxu0 %v873
    %v1096 = vpop.f32.mrb[0].mxu0
    %v1097 = vadd.f32 0.0, %v1096
    %v1098 = vpop.f32.mrb[0].mxu0
    %1099 = vmatprep.mubr.f32.mxu0 0.0
    %1100 = vmatmul.mubr.f32.gmra.mrb[0].mxu0 %v875
    %v1101 = vpop.f32.mrb[0].mxu0
    %v1102 = vadd.f32 0.0, %v1101
    %v1103 = vpop.f32.mrb[0].mxu0
    %1104 = vmatprep.mubr.f32.mxu0 0.0
    %1105 = vmatmul.mubr.f32.gmra.mrb[0].mxu0 %v877
    %v1106 = vpop.f32.mrb[0].mxu0
    %v1107 = vadd.f32 0.0, %v1106
    %v1108 = vpop.f32.mrb[0].mxu0
    %1109 = vmatprep.mubr.f32.mxu0 0.0
    %1110 = vmatmul.mubr.f32.gmra.mrb[0].mxu0 %v879
    %v1111 = vpop.f32.mrb[0].mxu0
    %v1112 = vadd.f32 0.0, %v1111
    %v1113 = vpop.f32.mrb[0].mxu0
    %1114 = vmatprep.mubr.f32.mxu0 0.0
    %1115 = vmatmul.mubr.f32.gmra.mrb[0].mxu0 %v881
    %v1116 = vpop.f32.mrb[0].mxu0
    %v1117 = vadd.f32 0.0, %v1116
    %v1118 = vpop.f32.mrb[0].mxu0
    %1119 = vmatprep.mubr.f32.mxu0 0.0
    %1120 = vmatmul.mubr.f32.gmra.mrb[0].mxu0 %v883
    %v1121 = vpop.f32.mrb[0].mxu0
    %v1122 = vadd.f32 0.0, %v1121
    %v1123 = vpop.f32.mrb[0].mxu0
    %1124 = vmatprep.mubr.f32.mxu0 0.0
    %1125 = vmatmul.mubr.f32.gmra.mrb[0].mxu0 %v885
    %v1126 = vpop.f32.mrb[0].mxu0
    %v1127 = vadd.f32 0.0, %v1126
    %v1128 = vpop.f32.mrb[0].mxu0
    %1129 = vmatprep.mubr.f32.mxu0 0.0
    %1130 = vmatmul.mubr.f32.gmra.mrb[0].mxu0 %v887
    %v1131 = vpop.f32.mrb[0].mxu0
    %v1132 = vadd.f32 0.0, %v1131
    %v1133 = vpop.f32.mrb[0].mxu0
    %1134 = vmatprep.mubr.f32.mxu0 0.0
    %1135 = vmatmul.mubr.f32.gmra.mrb[0].mxu0 %v889
    %v1136 = vpop.f32.mrb[0].mxu0
    %v1137 = vpop.f32.mrb[0].mxu0
    %1138 = vdwg.mxu0
    %v1139 = vsel %vm868, %v280, 0
    %v1141 = vsel %vm868, %v302, 0
    %v1143 = vsel %vm868, %v324, 0
    %v1145 = vsel %vm868, %v346, 0
    %v1147 = vsel %vm868, %v368, 0
    %v1149 = vsel %vm868, %v390, 0
    %v1151 = vsel %vm868, %v412, 0
    %v1153 = vsel %vm868, %v434, 0
    %v1155 = vsel %vm868, %v456, 0
    %v1157 = vsel %vm868, %v478, 0
    %v1159 = vsel %vm868, %v500, 0
    %1161 = vmatprep.subr.mxu0 %v502
    %1162 = vmatpush1.msra.mxu0 %v501
    %1163 = vmatprep.subr.mxu0 %v505
    %1164 = vmatpush1.msra.mxu0 %v504
    %1165 = vmatprep.subr.mxu0 %v508
    %1166 = vmatpush1.msra.mxu0 %v507
    %1167 = vmatprep.subr.mxu0 %v511
    %1168 = vmatpush1.msra.mxu0 %v510
    %1169 = vmatprep.subr.mxu0 %v514
    %1170 = vmatpush1.msra.mxu0 %v513
    %1171 = vmatprep.subr.mxu0 %v517
    %1172 = vmatpush1.msra.mxu0 %v516
    %1173 = vmatprep.subr.mxu0 0.0
    %1174 = vmatpush1.msra.mxu0 0.0
    %1175 = vmatprep.subr.mxu0 0.0
    %1176 = vmatpush1.msra.mxu0 0.0
    %1177 = vmatprep.subr.mxu0 0.0
    %1178 = vmatpush1.msra.mxu0 0.0
    %1179 = vmatprep.subr.mxu0 0.0
    %1180 = vmatpush1.msra.mxu0 0.0
    %1181 = vmatprep.subr.mxu0 0.0
    %1182 = vmatpush1.msra.mxu0 0.0
    %1183 = vmatprep.subr.mxu0 0.0
    %1184 = vmatpush1.msra.mxu0 0.0
    %1185 = vmatprep.subr.mxu0 0.0
    %1186 = vmatpush1.msra.mxu0 0.0
    %1187 = vmatprep.subr.mxu0 0.0
    %1188 = vmatpush1.msra.mxu0 0.0
    %1189 = vmatprep.subr.mxu0 0.0
    %1190 = vmatpush1.msra.mxu0 0.0
    %1191 = vmatprep.subr.mxu0 0.0
    %1192 = vmatpush1.msra.mxu0 0.0
    %1193 = vmatprep.subr.mxu0 0.0
    %1194 = vmatpush1.msra.mxu0 0.0
    %1195 = vmatprep.subr.mxu0 0.0
    %1196 = vmatpush1.msra.mxu0 0.0
    %1197 = vmatprep.subr.mxu0 0.0
    %1198 = vmatpush1.msra.mxu0 0.0
    %1199 = vmatprep.subr.mxu0 0.0
    %1200 = vmatpush1.msra.mxu0 0.0
    %1201 = vmatprep.subr.mxu0 0.0
    %1202 = vmatpush1.msra.mxu0 0.0
    %1203 = vmatprep.subr.mxu0 0.0
    %1204 = vmatpush1.msra.mxu0 0.0
    %1205 = vmatprep.subr.mxu0 0.0
    %1206 = vmatpush1.msra.mxu0 0.0
    %1207 = vmatprep.subr.mxu0 0.0
    %1208 = vmatpush1.msra.mxu0 0.0
    %1209 = vmatprep.subr.mxu0 0.0
    %1210 = vmatpush1.msra.mxu0 0.0
    %1211 = vmatprep.subr.mxu0 0.0
    %1212 = vmatpush1.msra.mxu0 0.0
    %1213 = vmatprep.subr.mxu0 0.0
    %1214 = vmatpush1.msra.mxu0 0.0
    %1215 = vmatprep.subr.mxu0 0.0
    %1216 = vmatpush1.msra.mxu0 0.0
    %1217 = vmatprep.subr.mxu0 0.0
    %1218 = vmatpush1.msra.mxu0 0.0
    %1219 = vmatprep.subr.mxu0 0.0
    %1220 = vmatpush1.msra.mxu0 0.0
    %1221 = vmatprep.subr.mxu0 0.0
    %1222 = vmatpush1.msra.mxu0 0.0
    %1223 = vmatprep.subr.mxu0 0.0
    %1224 = vmatpush1.msra.mxu0 0.0
    %1225 = vmatprep.mubr.f32.mxu0 0.0
    %1226 = vmatmul.mubr.f32.gmra.mrb[0].mxu0 %v1139
    %v1227 = vpop.f32.mrb[0].mxu0
    %v1228 = vadd.f32 %v958, %v1227
    %v1229 = vpop.f32.mrb[0].mxu0
    %v1230 = vadd.f32 %v960, %v1229
    %1231 = vmatprep.mubr.f32.mxu0 0.0
    %1232 = vmatmul.mubr.f32.gmra.mrb[0].mxu0 %v1141
    %v1233 = vpop.f32.mrb[0].mxu0
    %v1234 = vadd.f32 %v964, %v1233
    %v1235 = vpop.f32.mrb[0].mxu0
    %v1236 = vadd.f32 %v966, %v1235
    %1237 = vmatprep.mubr.f32.mxu0 0.0
    %1238 = vmatmul.mubr.f32.gmra.mrb[0].mxu0 %v1143
    %v1239 = vpop.f32.mrb[0].mxu0
    %v1240 = vadd.f32 %v970, %v1239
    %v1241 = vpop.f32.mrb[0].mxu0
    %v1242 = vadd.f32 %v972, %v1241
    %1243 = vmatprep.mubr.f32.mxu0 0.0
    %1244 = vmatmul.mubr.f32.gmra.mrb[0].mxu0 %v1145
    %v1245 = vpop.f32.mrb[0].mxu0
    %v1246 = vadd.f32 %v976, %v1245
    %v1247 = vpop.f32.mrb[0].mxu0
    %v1248 = vadd.f32 %v978, %v1247
    %1249 = vmatprep.mubr.f32.mxu0 0.0
    %1250 = vmatmul.mubr.f32.gmra.mrb[0].mxu0 %v1147
    %v1251 = vpop.f32.mrb[0].mxu0
    %v1252 = vadd.f32 %v982, %v1251
    %v1253 = vpop.f32.mrb[0].mxu0
    %v1254 = vadd.f32 %v984, %v1253
    %1255 = vmatprep.mubr.f32.mxu0 0.0
    %1256 = vmatmul.mubr.f32.gmra.mrb[0].mxu0 %v1149
    %v1257 = vpop.f32.mrb[0].mxu0
    %v1258 = vadd.f32 %v988, %v1257
    %v1259 = vpop.f32.mrb[0].mxu0
    %v1260 = vadd.f32 %v990, %v1259
    %1261 = vmatprep.mubr.f32.mxu0 0.0
    %1262 = vmatmul.mubr.f32.gmra.mrb[0].mxu0 %v1151
    %v1263 = vpop.f32.mrb[0].mxu0
    %v1264 = vadd.f32 %v994, %v1263
    %v1265 = vpop.f32.mrb[0].mxu0
    %v1266 = vadd.f32 %v996, %v1265
    %1267 = vmatprep.mubr.f32.mxu0 0.0
    %1268 = vmatmul.mubr.f32.gmra.mrb[0].mxu0 %v1153
    %v1269 = vpop.f32.mrb[0].mxu0
    %v1270 = vadd.f32 %v1000, %v1269
    %v1271 = vpop.f32.mrb[0].mxu0
    %v1272 = vadd.f32 %v1002, %v1271
    %1273 = vmatprep.mubr.f32.mxu0 0.0
    %1274 = vmatmul.mubr.f32.gmra.mrb[0].mxu0 %v1155
    %v1275 = vpop.f32.mrb[0].mxu0
    %v1276 = vadd.f32 %v1006, %v1275
    %v1277 = vpop.f32.mrb[0].mxu0
    %v1278 = vadd.f32 %v1008, %v1277
    %1279 = vmatprep.mubr.f32.mxu0 0.0
    %1280 = vmatmul.mubr.f32.gmra.mrb[0].mxu0 %v1157
    %v1281 = vpop.f32.mrb[0].mxu0
    %v1282 = vadd.f32 %v1012, %v1281
    %v1283 = vpop.f32.mrb[0].mxu0
    %v1284 = vadd.f32 %v1014, %v1283
    %1285 = vmatprep.mubr.f32.mxu0 0.0
    %1286 = vmatmul.mubr.f32.gmra.mrb[0].mxu0 %v1159
    %v1287 = vpop.f32.mrb[0].mxu0
    %v1288 = vpop.f32.mrb[0].mxu0
    %1289 = vdwg.mxu0
    %1290 = vmatprep.subr.mxu0 0.0
    %1291 = vmatpush1.msra.mxu0 %v503
    %1292 = vmatprep.subr.mxu0 0.0
    %1293 = vmatpush1.msra.mxu0 %v506
    %1294 = vmatprep.subr.mxu0 0.0
    %1295 = vmatpush1.msra.mxu0 %v509
    %1296 = vmatprep.subr.mxu0 0.0
    %1297 = vmatpush1.msra.mxu0 %v512
    %1298 = vmatprep.subr.mxu0 0.0
    %1299 = vmatpush1.msra.mxu0 %v515
    %1300 = vmatprep.subr.mxu0 0.0
    %1301 = vmatpush1.msra.mxu0 %v518
    %1302 = vmatprep.subr.mxu0 0.0
    %1303 = vmatpush1.msra.mxu0 0.0
    %1304 = vmatprep.subr.mxu0 0.0
    %1305 = vmatpush1.msra.mxu0 0.0
    %1306 = vmatprep.subr.mxu0 0.0
    %1307 = vmatpush1.msra.mxu0 0.0
    %1308 = vmatprep.subr.mxu0 0.0
    %1309 = vmatpush1.msra.mxu0 0.0
    %1310 = vmatprep.subr.mxu0 0.0
    %1311 = vmatpush1.msra.mxu0 0.0
    %1312 = vmatprep.subr.mxu0 0.0
    %1313 = vmatpush1.msra.mxu0 0.0
    %1314 = vmatprep.subr.mxu0 0.0
    %1315 = vmatpush1.msra.mxu0 0.0
    %1316 = vmatprep.subr.mxu0 0.0
    %1317 = vmatpush1.msra.mxu0 0.0
    %1318 = vmatprep.subr.mxu0 0.0
    %1319 = vmatpush1.msra.mxu0 0.0
    %1320 = vmatprep.subr.mxu0 0.0
    %1321 = vmatpush1.msra.mxu0 0.0
    %1322 = vmatprep.subr.mxu0 0.0
    %1323 = vmatpush1.msra.mxu0 0.0
    %1324 = vmatprep.subr.mxu0 0.0
    %1325 = vmatpush1.msra.mxu0 0.0
    %1326 = vmatprep.subr.mxu0 0.0
    %1327 = vmatpush1.msra.mxu0 0.0
    %1328 = vmatprep.subr.mxu0 0.0
    %1329 = vmatpush1.msra.mxu0 0.0
    %1330 = vmatprep.subr.mxu0 0.0
    %1331 = vmatpush1.msra.mxu0 0.0
    %1332 = vmatprep.subr.mxu0 0.0
    %1333 = vmatpush1.msra.mxu0 0.0
    %1334 = vmatprep.subr.mxu0 0.0
    %1335 = vmatpush1.msra.mxu0 0.0
    %1336 = vmatprep.subr.mxu0 0.0
    %1337 = vmatpush1.msra.mxu0 0.0
    %1338 = vmatprep.subr.mxu0 0.0
    %1339 = vmatpush1.msra.mxu0 0.0
    %1340 = vmatprep.subr.mxu0 0.0
    %1341 = vmatpush1.msra.mxu0 0.0
    %1342 = vmatprep.subr.mxu0 0.0
    %1343 = vmatpush1.msra.mxu0 0.0
    %1344 = vmatprep.subr.mxu0 0.0
    %1345 = vmatpush1.msra.mxu0 0.0
    %1346 = vmatprep.subr.mxu0 0.0
    %1347 = vmatpush1.msra.mxu0 0.0
    %1348 = vmatprep.subr.mxu0 0.0
    %1349 = vmatpush1.msra.mxu0 0.0
    %1350 = vmatprep.subr.mxu0 0.0
    %1351 = vmatpush1.msra.mxu0 0.0
    %1352 = vmatprep.subr.mxu0 0.0
    %1353 = vmatpush1.msra.mxu0 0.0
    %1354 = vmatprep.mubr.f32.mxu0 0.0
    %1355 = vmatmul.mubr.f32.gmra.mrb[0].mxu0 %v1139
    %v1356 = vpop.f32.mrb[0].mxu0
    %v1357 = vadd.f32 %v1087, %v1356
    %v1358 = vpop.f32.mrb[0].mxu0
    %1359 = vmatprep.mubr.f32.mxu0 0.0
    %1360 = vmatmul.mubr.f32.gmra.mrb[0].mxu0 %v1141
    %v1361 = vpop.f32.mrb[0].mxu0
    %v1362 = vadd.f32 %v1092, %v1361
    %v1363 = vpop.f32.mrb[0].mxu0
    %1364 = vmatprep.mubr.f32.mxu0 0.0
    %1365 = vmatmul.mubr.f32.gmra.mrb[0].mxu0 %v1143
    %v1366 = vpop.f32.mrb[0].mxu0
    %v1367 = vadd.f32 %v1097, %v1366
    %v1368 = vpop.f32.mrb[0].mxu0
    %1369 = vmatprep.mubr.f32.mxu0 0.0
    %1370 = vmatmul.mubr.f32.gmra.mrb[0].mxu0 %v1145
    %v1371 = vpop.f32.mrb[0].mxu0
    %v1372 = vadd.f32 %v1102, %v1371
    %v1373 = vpop.f32.mrb[0].mxu0
    %1374 = vmatprep.mubr.f32.mxu0 0.0
    %1375 = vmatmul.mubr.f32.gmra.mrb[0].mxu0 %v1147
    %v1376 = vpop.f32.mrb[0].mxu0
    %v1377 = vadd.f32 %v1107, %v1376
    %v1378 = vpop.f32.mrb[0].mxu0
    %1379 = vmatprep.mubr.f32.mxu0 0.0
    %1380 = vmatmul.mubr.f32.gmra.mrb[0].mxu0 %v1149
    %v1381 = vpop.f32.mrb[0].mxu0
    %v1382 = vadd.f32 %v1112, %v1381
    %v1383 = vpop.f32.mrb[0].mxu0
    %1384 = vmatprep.mubr.f32.mxu0 0.0
    %1385 = vmatmul.mubr.f32.gmra.mrb[0].mxu0 %v1151
    %v1386 = vpop.f32.mrb[0].mxu0
    %v1387 = vadd.f32 %v1117, %v1386
    %v1388 = vpop.f32.mrb[0].mxu0
    %1389 = vmatprep.mubr.f32.mxu0 0.0
    %1390 = vmatmul.mubr.f32.gmra.mrb[0].mxu0 %v1153
    %v1391 = vpop.f32.mrb[0].mxu0
    %v1392 = vadd.f32 %v1122, %v1391
    %v1393 = vpop.f32.mrb[0].mxu0
    %1394 = vmatprep.mubr.f32.mxu0 0.0
    %1395 = vmatmul.mubr.f32.gmra.mrb[0].mxu0 %v1155
    %v1396 = vpop.f32.mrb[0].mxu0
    %v1397 = vadd.f32 %v1127, %v1396
    %v1398 = vpop.f32.mrb[0].mxu0
    %1399 = vmatprep.mubr.f32.mxu0 0.0
    %1400 = vmatmul.mubr.f32.gmra.mrb[0].mxu0 %v1157
    %v1401 = vpop.f32.mrb[0].mxu0
    %v1402 = vadd.f32 %v1132, %v1401
    %v1403 = vpop.f32.mrb[0].mxu0
    %1404 = vmatprep.mubr.f32.mxu0 0.0
    %1405 = vmatmul.mubr.f32.gmra.mrb[0].mxu0 %v1159
    %v1406 = vpop.f32.mrb[0].mxu0
    %v1407 = vpop.f32.mrb[0].mxu0
    %1408 = vdwg.mxu0
    %v1409 = vld [vmem:[%s0 + $0x2] sm:$0x1]
    %v1410 = vld [vmem:[%s0 + $0x32] sm:$0x1]
    %v1411 = vld [vmem:[%s0 + $0x62] sm:$0x1]
    %v1412 = vld [vmem:[%s0 + $0x92] sm:$0x1]
    %v1413 = vld [vmem:[%s0 + $0xc2] sm:$0x1]
    %v1414 = vld [vmem:[%s0 + $0xf2] sm:$0x1]
    %v1415 = vld [vmem:[%s0 + $0x122] sm:$0x1]
    %v1416 = vld [vmem:[%s0 + $0x152] sm:$0x1]
    %v1417 = vld [vmem:[%s0 + $0x6] sm:$0x1]
    %v1418 = vld [vmem:[%s0 + $0x36] sm:$0x1]
    %v1419 = vld [vmem:[%s0 + $0x66] sm:$0x1]
    %v1420 = vld [vmem:[%s0 + $0x96] sm:$0x1]
    %v1421 = vld [vmem:[%s0 + $0xc6] sm:$0x1]
    %v1422 = vld [vmem:[%s0 + $0xf6] sm:$0x1]
    %v1423 = vld [vmem:[%s0 + $0x126] sm:$0x1]
    %v1424 = vld [vmem:[%s0 + $0x156] sm:$0x1]
    %v1425 = vld [vmem:[%s0 + $0xa] sm:$0x1]
    %v1426 = vld [vmem:[%s0 + $0x3a] sm:$0x1]
    %v1427 = vld [vmem:[%s0 + $0x6a] sm:$0x1]
    %v1428 = vld [vmem:[%s0 + $0x9a] sm:$0x1]
    %v1429 = vld [vmem:[%s0 + $0xca] sm:$0x1]
    %v1430 = vld [vmem:[%s0 + $0xfa] sm:$0x1]
    %v1431 = vld [vmem:[%s0 + $0x12a] sm:$0x1]
    %v1432 = vld [vmem:[%s0 + $0x15a] sm:$0x1]
    %v1433 = vld [vmem:[%s0 + $0xe] sm:$0x1]
    %v1434 = vld [vmem:[%s0 + $0x3e] sm:$0x1]
    %v1435 = vld [vmem:[%s0 + $0x6e] sm:$0x1]
    %v1436 = vld [vmem:[%s0 + $0x9e] sm:$0x1]
    %v1437 = vld [vmem:[%s0 + $0xce] sm:$0x1]
    %v1438 = vld [vmem:[%s0 + $0xfe] sm:$0x1]
    %v1439 = vld [vmem:[%s0 + $0x12e] sm:$0x1]
    %v1440 = vld [vmem:[%s0 + $0x15e] sm:$0x1]
    %v1441 = vld [vmem:[%s0 + $0x12] sm:$0x1]
    %v1442 = vld [vmem:[%s0 + $0x42] sm:$0x1]
    %v1443 = vld [vmem:[%s0 + $0x72] sm:$0x1]
    %v1444 = vld [vmem:[%s0 + $0xa2] sm:$0x1]
    %v1445 = vld [vmem:[%s0 + $0xd2] sm:$0x1]
    %v1446 = vld [vmem:[%s0 + $0x102] sm:$0x1]
    %v1447 = vld [vmem:[%s0 + $0x132] sm:$0x1]
    %v1448 = vld [vmem:[%s0 + $0x162] sm:$0x1]
    %v1449 = vld [vmem:[%s0 + $0x16] sm:$0x1]
    %v1450 = vld [vmem:[%s0 + $0x46] sm:$0x1]
    %v1451 = vld [vmem:[%s0 + $0x76] sm:$0x1]
    %v1452 = vld [vmem:[%s0 + $0xa6] sm:$0x1]
    %v1453 = vld [vmem:[%s0 + $0xd6] sm:$0x1]
    %v1454 = vld [vmem:[%s0 + $0x106] sm:$0x1]
    %v1455 = vld [vmem:[%s0 + $0x136] sm:$0x1]
    %v1456 = vld [vmem:[%s0 + $0x166] sm:$0x1]
    %v1457 = vld [vmem:[%s0 + $0x1a] sm:$0x1]
    %v1458 = vld [vmem:[%s0 + $0x4a] sm:$0x1]
    %v1459 = vld [vmem:[%s0 + $0x7a] sm:$0x1]
    %v1460 = vld [vmem:[%s0 + $0xaa] sm:$0x1]
    %v1461 = vld [vmem:[%s0 + $0xda] sm:$0x1]
    %v1462 = vld [vmem:[%s0 + $0x10a] sm:$0x1]
    %v1463 = vld [vmem:[%s0 + $0x13a] sm:$0x1]
    %v1464 = vld [vmem:[%s0 + $0x16a] sm:$0x1]
    %v1465 = vld [vmem:[%s0 + $0x1e] sm:$0x1]
    %v1466 = vld [vmem:[%s0 + $0x4e] sm:$0x1]
    %v1467 = vld [vmem:[%s0 + $0x7e] sm:$0x1]
    %v1468 = vld [vmem:[%s0 + $0xae] sm:$0x1]
    %v1469 = vld [vmem:[%s0 + $0xde] sm:$0x1]
    %v1470 = vld [vmem:[%s0 + $0x10e] sm:$0x1]
    %v1471 = vld [vmem:[%s0 + $0x13e] sm:$0x1]
    %v1472 = vld [vmem:[%s0 + $0x16e] sm:$0x1]
    %v1473 = vld [vmem:[%s0 + $0x22] sm:$0x1]
    %v1474 = vld [vmem:[%s0 + $0x52] sm:$0x1]
    %v1475 = vld [vmem:[%s0 + $0x82] sm:$0x1]
    %v1476 = vld [vmem:[%s0 + $0xb2] sm:$0x1]
    %v1477 = vld [vmem:[%s0 + $0xe2] sm:$0x1]
    %v1478 = vld [vmem:[%s0 + $0x112] sm:$0x1]
    %v1479 = vld [vmem:[%s0 + $0x142] sm:$0x1]
    %v1480 = vld [vmem:[%s0 + $0x172] sm:$0x1]
    %v1481 = vld [vmem:[%s0 + $0x26] sm:$0x1]
    %v1482 = vld [vmem:[%s0 + $0x56] sm:$0x1]
    %v1483 = vld [vmem:[%s0 + $0x86] sm:$0x1]
    %v1484 = vld [vmem:[%s0 + $0xb6] sm:$0x1]
    %v1485 = vld [vmem:[%s0 + $0xe6] sm:$0x1]
    %v1486 = vld [vmem:[%s0 + $0x116] sm:$0x1]
    %v1487 = vld [vmem:[%s0 + $0x146] sm:$0x1]
    %v1488 = vld [vmem:[%s0 + $0x176] sm:$0x1]
    %v1489 = vld [vmem:[%s0 + $0x2a] sm:$0x1]
    %v1490 = vld [vmem:[%s0 + $0x5a] sm:$0x1]
    %v1491 = vld [vmem:[%s0 + $0x8a] sm:$0x1]
    %v1492 = vld [vmem:[%s0 + $0xba] sm:$0x1]
    %v1493 = vld [vmem:[%s0 + $0xea] sm:$0x1]
    %v1494 = vld [vmem:[%s0 + $0x11a] sm:$0x1]
    %v1495 = vld [vmem:[%s0 + $0x14a] sm:$0x1]
    %v1496 = vld [vmem:[%s0 + $0x17a] sm:$0x1]
    %v1505 = vrot.slane %v1410, 7
    %v1506 = vsel %vm261, %v1505, %v1409
    %v1507 = vrot.slane %v1411, 6
    %v1508 = vsel %vm264, %v1507, %v1506
    %v1509 = vrot.slane %v1412, 5
    %v1510 = vsel %vm267, %v1509, %v1508
    %v1511 = vrot.slane %v1413, 4
    %v1512 = vsel %vm270, %v1511, %v1510
    %v1513 = vrot.slane %v1414, 3
    %v1514 = vsel %vm273, %v1513, %v1512
    %v1515 = vrot.slane %v1415, 2
    %v1516 = vsel %vm276, %v1515, %v1514
    %v1517 = vrot.slane %v1416, 1
    %v1518 = vsel %vm279, %v1517, %v1516
    %v1527 = vrot.slane %v1418, 7
    %v1528 = vsel %vm261, %v1527, %v1417
    %v1529 = vrot.slane %v1419, 6
    %v1530 = vsel %vm264, %v1529, %v1528
    %v1531 = vrot.slane %v1420, 5
    %v1532 = vsel %vm267, %v1531, %v1530
    %v1533 = vrot.slane %v1421, 4
    %v1534 = vsel %vm270, %v1533, %v1532
    %v1535 = vrot.slane %v1422, 3
    %v1536 = vsel %vm273, %v1535, %v1534
    %v1537 = vrot.slane %v1423, 2
    %v1538 = vsel %vm276, %v1537, %v1536
    %v1539 = vrot.slane %v1424, 1
    %v1540 = vsel %vm279, %v1539, %v1538
    %v1549 = vrot.slane %v1426, 7
    %v1550 = vsel %vm261, %v1549, %v1425
    %v1551 = vrot.slane %v1427, 6
    %v1552 = vsel %vm264, %v1551, %v1550
    %v1553 = vrot.slane %v1428, 5
    %v1554 = vsel %vm267, %v1553, %v1552
    %v1555 = vrot.slane %v1429, 4
    %v1556 = vsel %vm270, %v1555, %v1554
    %v1557 = vrot.slane %v1430, 3
    %v1558 = vsel %vm273, %v1557, %v1556
    %v1559 = vrot.slane %v1431, 2
    %v1560 = vsel %vm276, %v1559, %v1558
    %v1561 = vrot.slane %v1432, 1
    %v1562 = vsel %vm279, %v1561, %v1560
    %v1571 = vrot.slane %v1434, 7
    %v1572 = vsel %vm261, %v1571, %v1433
    %v1573 = vrot.slane %v1435, 6
    %v1574 = vsel %vm264, %v1573, %v1572
    %v1575 = vrot.slane %v1436, 5
    %v1576 = vsel %vm267, %v1575, %v1574
    %v1577 = vrot.slane %v1437, 4
    %v1578 = vsel %vm270, %v1577, %v1576
    %v1579 = vrot.slane %v1438, 3
    %v1580 = vsel %vm273, %v1579, %v1578
    %v1581 = vrot.slane %v1439, 2
    %v1582 = vsel %vm276, %v1581, %v1580
    %v1583 = vrot.slane %v1440, 1
    %v1584 = vsel %vm279, %v1583, %v1582
    %v1593 = vrot.slane %v1442, 7
    %v1594 = vsel %vm261, %v1593, %v1441
    %v1595 = vrot.slane %v1443, 6
    %v1596 = vsel %vm264, %v1595, %v1594
    %v1597 = vrot.slane %v1444, 5
    %v1598 = vsel %vm267, %v1597, %v1596
    %v1599 = vrot.slane %v1445, 4
    %v1600 = vsel %vm270, %v1599, %v1598
    %v1601 = vrot.slane %v1446, 3
    %v1602 = vsel %vm273, %v1601, %v1600
    %v1603 = vrot.slane %v1447, 2
    %v1604 = vsel %vm276, %v1603, %v1602
    %v1605 = vrot.slane %v1448, 1
    %v1606 = vsel %vm279, %v1605, %v1604
    %v1615 = vrot.slane %v1450, 7
    %v1616 = vsel %vm261, %v1615, %v1449
    %v1617 = vrot.slane %v1451, 6
    %v1618 = vsel %vm264, %v1617, %v1616
    %v1619 = vrot.slane %v1452, 5
    %v1620 = vsel %vm267, %v1619, %v1618
    %v1621 = vrot.slane %v1453, 4
    %v1622 = vsel %vm270, %v1621, %v1620
    %v1623 = vrot.slane %v1454, 3
    %v1624 = vsel %vm273, %v1623, %v1622
    %v1625 = vrot.slane %v1455, 2
    %v1626 = vsel %vm276, %v1625, %v1624
    %v1627 = vrot.slane %v1456, 1
    %v1628 = vsel %vm279, %v1627, %v1626
    %v1637 = vrot.slane %v1458, 7
    %v1638 = vsel %vm261, %v1637, %v1457
    %v1639 = vrot.slane %v1459, 6
    %v1640 = vsel %vm264, %v1639, %v1638
    %v1641 = vrot.slane %v1460, 5
    %v1642 = vsel %vm267, %v1641, %v1640
    %v1643 = vrot.slane %v1461, 4
    %v1644 = vsel %vm270, %v1643, %v1642
    %v1645 = vrot.slane %v1462, 3
    %v1646 = vsel %vm273, %v1645, %v1644
    %v1647 = vrot.slane %v1463, 2
    %v1648 = vsel %vm276, %v1647, %v1646
    %v1649 = vrot.slane %v1464, 1
    %v1650 = vsel %vm279, %v1649, %v1648
    %v1659 = vrot.slane %v1466, 7
    %v1660 = vsel %vm261, %v1659, %v1465
    %v1661 = vrot.slane %v1467, 6
    %v1662 = vsel %vm264, %v1661, %v1660
    %v1663 = vrot.slane %v1468, 5
    %v1664 = vsel %vm267, %v1663, %v1662
    %v1665 = vrot.slane %v1469, 4
    %v1666 = vsel %vm270, %v1665, %v1664
    %v1667 = vrot.slane %v1470, 3
    %v1668 = vsel %vm273, %v1667, %v1666
    %v1669 = vrot.slane %v1471, 2
    %v1670 = vsel %vm276, %v1669, %v1668
    %v1671 = vrot.slane %v1472, 1
    %v1672 = vsel %vm279, %v1671, %v1670
    %v1681 = vrot.slane %v1474, 7
    %v1682 = vsel %vm261, %v1681, %v1473
    %v1683 = vrot.slane %v1475, 6
    %v1684 = vsel %vm264, %v1683, %v1682
    %v1685 = vrot.slane %v1476, 5
    %v1686 = vsel %vm267, %v1685, %v1684
    %v1687 = vrot.slane %v1477, 4
    %v1688 = vsel %vm270, %v1687, %v1686
    %v1689 = vrot.slane %v1478, 3
    %v1690 = vsel %vm273, %v1689, %v1688
    %v1691 = vrot.slane %v1479, 2
    %v1692 = vsel %vm276, %v1691, %v1690
    %v1693 = vrot.slane %v1480, 1
    %v1694 = vsel %vm279, %v1693, %v1692
    %v1703 = vrot.slane %v1482, 7
    %v1704 = vsel %vm261, %v1703, %v1481
    %v1705 = vrot.slane %v1483, 6
    %v1706 = vsel %vm264, %v1705, %v1704
    %v1707 = vrot.slane %v1484, 5
    %v1708 = vsel %vm267, %v1707, %v1706
    %v1709 = vrot.slane %v1485, 4
    %v1710 = vsel %vm270, %v1709, %v1708
    %v1711 = vrot.slane %v1486, 3
    %v1712 = vsel %vm273, %v1711, %v1710
    %v1713 = vrot.slane %v1487, 2
    %v1714 = vsel %vm276, %v1713, %v1712
    %v1715 = vrot.slane %v1488, 1
    %v1716 = vsel %vm279, %v1715, %v1714
    %v1725 = vrot.slane %v1490, 7
    %v1726 = vsel %vm261, %v1725, %v1489
    %v1727 = vrot.slane %v1491, 6
    %v1728 = vsel %vm264, %v1727, %v1726
    %v1729 = vrot.slane %v1492, 5
    %v1730 = vsel %vm267, %v1729, %v1728
    %v1731 = vrot.slane %v1493, 4
    %v1732 = vsel %vm270, %v1731, %v1730
    %v1733 = vrot.slane %v1494, 3
    %v1734 = vsel %vm273, %v1733, %v1732
    %v1735 = vrot.slane %v1495, 2
    %v1736 = vsel %vm276, %v1735, %v1734
    %v1737 = vrot.slane %v1496, 1
    %v1738 = vsel %vm279, %v1737, %v1736
    %s1739 = scalar_lea.vmem [#allocation2], 288
    %v1740 = vld [vmem:[%s1739] sm:$0xff]
    %v1741 = vld [vmem:[%s1739 + $0x8] sm:$0xff]
    %v1742 = vld [vmem:[%s1739 + $0x10] sm:$0xff]
    %v1743 = vld [vmem:[%s1739 + $0x18] sm:$0xff]
    %v1744 = vld [vmem:[%s1739 + $0x20] sm:$0xff]
    %v1745 = vld [vmem:[%s1739 + $0x28] sm:$0xff]
    %v1746 = vld [vmem:[%s1739 + $0x30] sm:$0xff]
    %v1747 = vld [vmem:[%s1739 + $0x38] sm:$0xff]
    %v1748 = vld [vmem:[%s1739 + $0x40] sm:$0xff]
    %v1749 = vld [vmem:[%s1739 + $0x48] sm:$0xff]
    %v1750 = vld [vmem:[%s1739 + $0x50] sm:$0xff]
    %v1751 = vld [vmem:[%s1739 + $0x58] sm:$0xff]
    %v1752 = vld [vmem:[%s1739 + $0x60] sm:$0xff]
    %v1753 = vld [vmem:[%s1739 + $0x68] sm:$0xff]
    %v1754 = vld [vmem:[%s1739 + $0x70] sm:$0xff]
    %v1755 = vld [vmem:[%s1739 + $0x78] sm:$0xff]
    %v1756 = vld [vmem:[%s1739 + $0x80] sm:$0xff]
    %v1757 = vld [vmem:[%s1739 + $0x88] sm:$0xff]
    %v1758 = vsel %vm868, %v1518, 0
    %v1760 = vsel %vm868, %v1540, 0
    %v1762 = vsel %vm868, %v1562, 0
    %v1764 = vsel %vm868, %v1584, 0
    %v1766 = vsel %vm868, %v1606, 0
    %v1768 = vsel %vm868, %v1628, 0
    %v1770 = vsel %vm868, %v1650, 0
    %v1772 = vsel %vm868, %v1672, 0
    %v1774 = vsel %vm868, %v1694, 0
    %v1776 = vsel %vm868, %v1716, 0
    %v1778 = vsel %vm868, %v1738, 0
    %1780 = vmatprep.subr.mxu0 %v1741
    %1781 = vmatpush1.msra.mxu0 %v1740
    %1782 = vmatprep.subr.mxu0 %v1744
    %1783 = vmatpush1.msra.mxu0 %v1743
    %1784 = vmatprep.subr.mxu0 %v1747
    %1785 = vmatpush1.msra.mxu0 %v1746
    %1786 = vmatprep.subr.mxu0 %v1750
    %1787 = vmatpush1.msra.mxu0 %v1749
    %1788 = vmatprep.subr.mxu0 %v1753
    %1789 = vmatpush1.msra.mxu0 %v1752
    %1790 = vmatprep.subr.mxu0 %v1756
    %1791 = vmatpush1.msra.mxu0 %v1755
    %1792 = vmatprep.subr.mxu0 0.0
    %1793 = vmatpush1.msra.mxu0 0.0
    %1794 = vmatprep.subr.mxu0 0.0
    %1795 = vmatpush1.msra.mxu0 0.0
    %1796 = vmatprep.subr.mxu0 0.0
    %1797 = vmatpush1.msra.mxu0 0.0
    %1798 = vmatprep.subr.mxu0 0.0
    %1799 = vmatpush1.msra.mxu0 0.0
    %1800 = vmatprep.subr.mxu0 0.0
    %1801 = vmatpush1.msra.mxu0 0.0
    %1802 = vmatprep.subr.mxu0 0.0
    %1803 = vmatpush1.msra.mxu0 0.0
    %1804 = vmatprep.subr.mxu0 0.0
    %1805 = vmatpush1.msra.mxu0 0.0
    %1806 = vmatprep.subr.mxu0 0.0
    %1807 = vmatpush1.msra.mxu0 0.0
    %1808 = vmatprep.subr.mxu0 0.0
    %1809 = vmatpush1.msra.mxu0 0.0
    %1810 = vmatprep.subr.mxu0 0.0
    %1811 = vmatpush1.msra.mxu0 0.0
    %1812 = vmatprep.subr.mxu0 0.0
    %1813 = vmatpush1.msra.mxu0 0.0
    %1814 = vmatprep.subr.mxu0 0.0
    %1815 = vmatpush1.msra.mxu0 0.0
    %1816 = vmatprep.subr.mxu0 0.0
    %1817 = vmatpush1.msra.mxu0 0.0
    %1818 = vmatprep.subr.mxu0 0.0
    %1819 = vmatpush1.msra.mxu0 0.0
    %1820 = vmatprep.subr.mxu0 0.0
    %1821 = vmatpush1.msra.mxu0 0.0
    %1822 = vmatprep.subr.mxu0 0.0
    %1823 = vmatpush1.msra.mxu0 0.0
    %1824 = vmatprep.subr.mxu0 0.0
    %1825 = vmatpush1.msra.mxu0 0.0
    %1826 = vmatprep.subr.mxu0 0.0
    %1827 = vmatpush1.msra.mxu0 0.0
    %1828 = vmatprep.subr.mxu0 0.0
    %1829 = vmatpush1.msra.mxu0 0.0
    %1830 = vmatprep.subr.mxu0 0.0
    %1831 = vmatpush1.msra.mxu0 0.0
    %1832 = vmatprep.subr.mxu0 0.0
    %1833 = vmatpush1.msra.mxu0 0.0
    %1834 = vmatprep.subr.mxu0 0.0
    %1835 = vmatpush1.msra.mxu0 0.0
    %1836 = vmatprep.subr.mxu0 0.0
    %1837 = vmatpush1.msra.mxu0 0.0
    %1838 = vmatprep.subr.mxu0 0.0
    %1839 = vmatpush1.msra.mxu0 0.0
    %1840 = vmatprep.subr.mxu0 0.0
    %1841 = vmatpush1.msra.mxu0 0.0
    %1842 = vmatprep.subr.mxu0 0.0
    %1843 = vmatpush1.msra.mxu0 0.0
    %1844 = vmatprep.mubr.f32.mxu0 0.0
    %1845 = vmatmul.mubr.f32.gmra.mrb[0].mxu0 %v1758
    %v1846 = vpop.f32.mrb[0].mxu0
    %v1847 = vadd.f32 0.0, %v1846
    %v1848 = vpop.f32.mrb[0].mxu0
    %v1849 = vadd.f32 0.0, %v1848
    %1850 = vmatprep.mubr.f32.mxu0 0.0
    %1851 = vmatmul.mubr.f32.gmra.mrb[0].mxu0 %v1760
    %v1852 = vpop.f32.mrb[0].mxu0
    %v1853 = vadd.f32 0.0, %v1852
    %v1854 = vpop.f32.mrb[0].mxu0
    %v1855 = vadd.f32 0.0, %v1854
    %1856 = vmatprep.mubr.f32.mxu0 0.0
    %1857 = vmatmul.mubr.f32.gmra.mrb[0].mxu0 %v1762
    %v1858 = vpop.f32.mrb[0].mxu0
    %v1859 = vadd.f32 0.0, %v1858
    %v1860 = vpop.f32.mrb[0].mxu0
    %v1861 = vadd.f32 0.0, %v1860
    %1862 = vmatprep.mubr.f32.mxu0 0.0
    %1863 = vmatmul.mubr.f32.gmra.mrb[0].mxu0 %v1764
    %v1864 = vpop.f32.mrb[0].mxu0
    %v1865 = vadd.f32 0.0, %v1864
    %v1866 = vpop.f32.mrb[0].mxu0
    %v1867 = vadd.f32 0.0, %v1866
    %1868 = vmatprep.mubr.f32.mxu0 0.0
    %1869 = vmatmul.mubr.f32.gmra.mrb[0].mxu0 %v1766
    %v1870 = vpop.f32.mrb[0].mxu0
    %v1871 = vadd.f32 0.0, %v1870
    %v1872 = vpop.f32.mrb[0].mxu0
    %v1873 = vadd.f32 0.0, %v1872
    %1874 = vmatprep.mubr.f32.mxu0 0.0
    %1875 = vmatmul.mubr.f32.gmra.mrb[0].mxu0 %v1768
    %v1876 = vpop.f32.mrb[0].mxu0
    %v1877 = vadd.f32 0.0, %v1876
    %v1878 = vpop.f32.mrb[0].mxu0
    %v1879 = vadd.f32 0.0, %v1878
    %1880 = vmatprep.mubr.f32.mxu0 0.0
    %1881 = vmatmul.mubr.f32.gmra.mrb[0].mxu0 %v1770
    %v1882 = vpop.f32.mrb[0].mxu0
    %v1883 = vadd.f32 0.0, %v1882
    %v1884 = vpop.f32.mrb[0].mxu0
    %v1885 = vadd.f32 0.0, %v1884
    %1886 = vmatprep.mubr.f32.mxu0 0.0
    %1887 = vmatmul.mubr.f32.gmra.mrb[0].mxu0 %v1772
    %v1888 = vpop.f32.mrb[0].mxu0
    %v1889 = vadd.f32 0.0, %v1888
    %v1890 = vpop.f32.mrb[0].mxu0
    %v1891 = vadd.f32 0.0, %v1890
    %1892 = vmatprep.mubr.f32.mxu0 0.0
    %1893 = vmatmul.mubr.f32.gmra.mrb[0].mxu0 %v1774
    %v1894 = vpop.f32.mrb[0].mxu0
    %v1895 = vadd.f32 0.0, %v1894
    %v1896 = vpop.f32.mrb[0].mxu0
    %v1897 = vadd.f32 0.0, %v1896
    %1898 = vmatprep.mubr.f32.mxu0 0.0
    %1899 = vmatmul.mubr.f32.gmra.mrb[0].mxu0 %v1776
    %v1900 = vpop.f32.mrb[0].mxu0
    %v1901 = vadd.f32 0.0, %v1900
    %v1902 = vpop.f32.mrb[0].mxu0
    %v1903 = vadd.f32 0.0, %v1902
    %1904 = vmatprep.mubr.f32.mxu0 0.0
    %1905 = vmatmul.mubr.f32.gmra.mrb[0].mxu0 %v1778
    %v1906 = vpop.f32.mrb[0].mxu0
    %v1907 = vpop.f32.mrb[0].mxu0
    %1908 = vdwg.mxu0
    %1909 = vmatprep.subr.mxu0 0.0
    %1910 = vmatpush1.msra.mxu0 %v1742
    %1911 = vmatprep.subr.mxu0 0.0
    %1912 = vmatpush1.msra.mxu0 %v1745
    %1913 = vmatprep.subr.mxu0 0.0
    %1914 = vmatpush1.msra.mxu0 %v1748
    %1915 = vmatprep.subr.mxu0 0.0
    %1916 = vmatpush1.msra.mxu0 %v1751
    %1917 = vmatprep.subr.mxu0 0.0
    %1918 = vmatpush1.msra.mxu0 %v1754
    %1919 = vmatprep.subr.mxu0 0.0
    %1920 = vmatpush1.msra.mxu0 %v1757
    %1921 = vmatprep.subr.mxu0 0.0
    %1922 = vmatpush1.msra.mxu0 0.0
    %1923 = vmatprep.subr.mxu0 0.0
    %1924 = vmatpush1.msra.mxu0 0.0
    %1925 = vmatprep.subr.mxu0 0.0
    %1926 = vmatpush1.msra.mxu0 0.0
    %1927 = vmatprep.subr.mxu0 0.0
    %1928 = vmatpush1.msra.mxu0 0.0
    %1929 = vmatprep.subr.mxu0 0.0
    %1930 = vmatpush1.msra.mxu0 0.0
    %1931 = vmatprep.subr.mxu0 0.0
    %1932 = vmatpush1.msra.mxu0 0.0
    %1933 = vmatprep.subr.mxu0 0.0
    %1934 = vmatpush1.msra.mxu0 0.0
    %1935 = vmatprep.subr.mxu0 0.0
    %1936 = vmatpush1.msra.mxu0 0.0
    %1937 = vmatprep.subr.mxu0 0.0
    %1938 = vmatpush1.msra.mxu0 0.0
    %1939 = vmatprep.subr.mxu0 0.0
    %1940 = vmatpush1.msra.mxu0 0.0
    %1941 = vmatprep.subr.mxu0 0.0
    %1942 = vmatpush1.msra.mxu0 0.0
    %1943 = vmatprep.subr.mxu0 0.0
    %1944 = vmatpush1.msra.mxu0 0.0
    %1945 = vmatprep.subr.mxu0 0.0
    %1946 = vmatpush1.msra.mxu0 0.0
    %1947 = vmatprep.subr.mxu0 0.0
    %1948 = vmatpush1.msra.mxu0 0.0
    %1949 = vmatprep.subr.mxu0 0.0
    %1950 = vmatpush1.msra.mxu0 0.0
    %1951 = vmatprep.subr.mxu0 0.0
    %1952 = vmatpush1.msra.mxu0 0.0
    %1953 = vmatprep.subr.mxu0 0.0
    %1954 = vmatpush1.msra.mxu0 0.0
    %1955 = vmatprep.subr.mxu0 0.0
    %1956 = vmatpush1.msra.mxu0 0.0
    %1957 = vmatprep.subr.mxu0 0.0
    %1958 = vmatpush1.msra.mxu0 0.0
    %1959 = vmatprep.subr.mxu0 0.0
    %1960 = vmatpush1.msra.mxu0 0.0
    %1961 = vmatprep.subr.mxu0 0.0
    %1962 = vmatpush1.msra.mxu0 0.0
    %1963 = vmatprep.subr.mxu0 0.0
    %1964 = vmatpush1.msra.mxu0 0.0
    %1965 = vmatprep.subr.mxu0 0.0
    %1966 = vmatpush1.msra.mxu0 0.0
    %1967 = vmatprep.subr.mxu0 0.0
    %1968 = vmatpush1.msra.mxu0 0.0
    %1969 = vmatprep.subr.mxu0 0.0
    %1970 = vmatpush1.msra.mxu0 0.0
    %1971 = vmatprep.subr.mxu0 0.0
    %1972 = vmatpush1.msra.mxu0 0.0
    %1973 = vmatprep.mubr.f32.mxu0 0.0
    %1974 = vmatmul.mubr.f32.gmra.mrb[0].mxu0 %v1758
    %v1975 = vpop.f32.mrb[0].mxu0
    %v1976 = vadd.f32 0.0, %v1975
    %v1977 = vpop.f32.mrb[0].mxu0
    %1978 = vmatprep.mubr.f32.mxu0 0.0
    %1979 = vmatmul.mubr.f32.gmra.mrb[0].mxu0 %v1760
    %v1980 = vpop.f32.mrb[0].mxu0
    %v1981 = vadd.f32 0.0, %v1980
    %v1982 = vpop.f32.mrb[0].mxu0
    %1983 = vmatprep.mubr.f32.mxu0 0.0
    %1984 = vmatmul.mubr.f32.gmra.mrb[0].mxu0 %v1762
    %v1985 = vpop.f32.mrb[0].mxu0
    %v1986 = vadd.f32 0.0, %v1985
    %v1987 = vpop.f32.mrb[0].mxu0
    %1988 = vmatprep.mubr.f32.mxu0 0.0
    %1989 = vmatmul.mubr.f32.gmra.mrb[0].mxu0 %v1764
    %v1990 = vpop.f32.mrb[0].mxu0
    %v1991 = vadd.f32 0.0, %v1990
    %v1992 = vpop.f32.mrb[0].mxu0
    %1993 = vmatprep.mubr.f32.mxu0 0.0
    %1994 = vmatmul.mubr.f32.gmra.mrb[0].mxu0 %v1766
    %v1995 = vpop.f32.mrb[0].mxu0
    %v1996 = vadd.f32 0.0, %v1995
    %v1997 = vpop.f32.mrb[0].mxu0
    %1998 = vmatprep.mubr.f32.mxu0 0.0
    %1999 = vmatmul.mubr.f32.gmra.mrb[0].mxu0 %v1768
    %v2000 = vpop.f32.mrb[0].mxu0
    %v2001 = vadd.f32 0.0, %v2000
    %v2002 = vpop.f32.mrb[0].mxu0
    %2003 = vmatprep.mubr.f32.mxu0 0.0
    %2004 = vmatmul.mubr.f32.gmra.mrb[0].mxu0 %v1770
    %v2005 = vpop.f32.mrb[0].mxu0
    %v2006 = vadd.f32 0.0, %v2005
    %v2007 = vpop.f32.mrb[0].mxu0
    %2008 = vmatprep.mubr.f32.mxu0 0.0
    %2009 = vmatmul.mubr.f32.gmra.mrb[0].mxu0 %v1772
    %v2010 = vpop.f32.mrb[0].mxu0
    %v2011 = vadd.f32 0.0, %v2010
    %v2012 = vpop.f32.mrb[0].mxu0
    %2013 = vmatprep.mubr.f32.mxu0 0.0
    %2014 = vmatmul.mubr.f32.gmra.mrb[0].mxu0 %v1774
    %v2015 = vpop.f32.mrb[0].mxu0
    %v2016 = vadd.f32 0.0, %v2015
    %v2017 = vpop.f32.mrb[0].mxu0
    %2018 = vmatprep.mubr.f32.mxu0 0.0
    %2019 = vmatmul.mubr.f32.gmra.mrb[0].mxu0 %v1776
    %v2020 = vpop.f32.mrb[0].mxu0
    %v2021 = vadd.f32 0.0, %v2020
    %v2022 = vpop.f32.mrb[0].mxu0
    %2023 = vmatprep.mubr.f32.mxu0 0.0
    %2024 = vmatmul.mubr.f32.gmra.mrb[0].mxu0 %v1778
    %v2025 = vpop.f32.mrb[0].mxu0
    %v2026 = vpop.f32.mrb[0].mxu0
    %2027 = vdwg.mxu0
    %v2028 = vadd.f32 %v1228, %v1847
    %v2029 = vadd.f32 %v1230, %v1849
    %v2030 = vadd.f32 %v1357, %v1976
    %v2031 = vadd.f32 %v1234, %v1853
    %v2032 = vadd.f32 %v1236, %v1855
    %v2033 = vadd.f32 %v1362, %v1981
    %v2034 = vadd.f32 %v1240, %v1859
    %v2035 = vadd.f32 %v1242, %v1861
    %v2036 = vadd.f32 %v1367, %v1986
    %v2037 = vadd.f32 %v1246, %v1865
    %v2038 = vadd.f32 %v1248, %v1867
    %v2039 = vadd.f32 %v1372, %v1991
    %v2040 = vadd.f32 %v1252, %v1871
    %v2041 = vadd.f32 %v1254, %v1873
    %v2042 = vadd.f32 %v1377, %v1996
    %v2043 = vadd.f32 %v1258, %v1877
    %v2044 = vadd.f32 %v1260, %v1879
    %v2045 = vadd.f32 %v1382, %v2001
    %v2046 = vadd.f32 %v1264, %v1883
    %v2047 = vadd.f32 %v1266, %v1885
    %v2048 = vadd.f32 %v1387, %v2006
    %v2049 = vadd.f32 %v1270, %v1889
    %v2050 = vadd.f32 %v1272, %v1891
    %v2051 = vadd.f32 %v1392, %v2011
    %v2052 = vadd.f32 %v1276, %v1895
    %v2053 = vadd.f32 %v1278, %v1897
    %v2054 = vadd.f32 %v1397, %v2016
    %v2055 = vadd.f32 %v1282, %v1901
    %v2056 = vadd.f32 %v1284, %v1903
    %v2057 = vadd.f32 %v1402, %v2021
    %v2058 = vld [vmem:[%s0 + $0x3] sm:$0x1]
    %v2059 = vld [vmem:[%s0 + $0x33] sm:$0x1]
    %v2060 = vld [vmem:[%s0 + $0x63] sm:$0x1]
    %v2061 = vld [vmem:[%s0 + $0x93] sm:$0x1]
    %v2062 = vld [vmem:[%s0 + $0xc3] sm:$0x1]
    %v2063 = vld [vmem:[%s0 + $0xf3] sm:$0x1]
    %v2064 = vld [vmem:[%s0 + $0x123] sm:$0x1]
    %v2065 = vld [vmem:[%s0 + $0x153] sm:$0x1]
    %v2066 = vld [vmem:[%s0 + $0x7] sm:$0x1]
    %v2067 = vld [vmem:[%s0 + $0x37] sm:$0x1]
    %v2068 = vld [vmem:[%s0 + $0x67] sm:$0x1]
    %v2069 = vld [vmem:[%s0 + $0x97] sm:$0x1]
    %v2070 = vld [vmem:[%s0 + $0xc7] sm:$0x1]
    %v2071 = vld [vmem:[%s0 + $0xf7] sm:$0x1]
    %v2072 = vld [vmem:[%s0 + $0x127] sm:$0x1]
    %v2073 = vld [vmem:[%s0 + $0x157] sm:$0x1]
    %v2074 = vld [vmem:[%s0 + $0xb] sm:$0x1]
    %v2075 = vld [vmem:[%s0 + $0x3b] sm:$0x1]
    %v2076 = vld [vmem:[%s0 + $0x6b] sm:$0x1]
    %v2077 = vld [vmem:[%s0 + $0x9b] sm:$0x1]
    %v2078 = vld [vmem:[%s0 + $0xcb] sm:$0x1]
    %v2079 = vld [vmem:[%s0 + $0xfb] sm:$0x1]
    %v2080 = vld [vmem:[%s0 + $0x12b] sm:$0x1]
    %v2081 = vld [vmem:[%s0 + $0x15b] sm:$0x1]
    %v2082 = vld [vmem:[%s0 + $0xf] sm:$0x1]
    %v2083 = vld [vmem:[%s0 + $0x3f] sm:$0x1]
    %v2084 = vld [vmem:[%s0 + $0x6f] sm:$0x1]
    %v2085 = vld [vmem:[%s0 + $0x9f] sm:$0x1]
    %v2086 = vld [vmem:[%s0 + $0xcf] sm:$0x1]
    %v2087 = vld [vmem:[%s0 + $0xff] sm:$0x1]
    %v2088 = vld [vmem:[%s0 + $0x12f] sm:$0x1]
    %v2089 = vld [vmem:[%s0 + $0x15f] sm:$0x1]
    %v2090 = vld [vmem:[%s0 + $0x13] sm:$0x1]
    %v2091 = vld [vmem:[%s0 + $0x43] sm:$0x1]
    %v2092 = vld [vmem:[%s0 + $0x73] sm:$0x1]
    %v2093 = vld [vmem:[%s0 + $0xa3] sm:$0x1]
    %v2094 = vld [vmem:[%s0 + $0xd3] sm:$0x1]
    %v2095 = vld [vmem:[%s0 + $0x103] sm:$0x1]
    %v2096 = vld [vmem:[%s0 + $0x133] sm:$0x1]
    %v2097 = vld [vmem:[%s0 + $0x163] sm:$0x1]
    %v2098 = vld [vmem:[%s0 + $0x17] sm:$0x1]
    %v2099 = vld [vmem:[%s0 + $0x47] sm:$0x1]
    %v2100 = vld [vmem:[%s0 + $0x77] sm:$0x1]
    %v2101 = vld [vmem:[%s0 + $0xa7] sm:$0x1]
    %v2102 = vld [vmem:[%s0 + $0xd7] sm:$0x1]
    %v2103 = vld [vmem:[%s0 + $0x107] sm:$0x1]
    %v2104 = vld [vmem:[%s0 + $0x137] sm:$0x1]
    %v2105 = vld [vmem:[%s0 + $0x167] sm:$0x1]
    %v2106 = vld [vmem:[%s0 + $0x1b] sm:$0x1]
    %v2107 = vld [vmem:[%s0 + $0x4b] sm:$0x1]
    %v2108 = vld [vmem:[%s0 + $0x7b] sm:$0x1]
    %v2109 = vld [vmem:[%s0 + $0xab] sm:$0x1]
    %v2110 = vld [vmem:[%s0 + $0xdb] sm:$0x1]
    %v2111 = vld [vmem:[%s0 + $0x10b] sm:$0x1]
    %v2112 = vld [vmem:[%s0 + $0x13b] sm:$0x1]
    %v2113 = vld [vmem:[%s0 + $0x16b] sm:$0x1]
    %v2114 = vld [vmem:[%s0 + $0x1f] sm:$0x1]
    %v2115 = vld [vmem:[%s0 + $0x4f] sm:$0x1]
    %v2116 = vld [vmem:[%s0 + $0x7f] sm:$0x1]
    %v2117 = vld [vmem:[%s0 + $0xaf] sm:$0x1]
    %v2118 = vld [vmem:[%s0 + $0xdf] sm:$0x1]
    %v2119 = vld [vmem:[%s0 + $0x10f] sm:$0x1]
    %v2120 = vld [vmem:[%s0 + $0x13f] sm:$0x1]
    %v2121 = vld [vmem:[%s0 + $0x16f] sm:$0x1]
    %v2122 = vld [vmem:[%s0 + $0x23] sm:$0x1]
    %v2123 = vld [vmem:[%s0 + $0x53] sm:$0x1]
    %v2124 = vld [vmem:[%s0 + $0x83] sm:$0x1]
    %v2125 = vld [vmem:[%s0 + $0xb3] sm:$0x1]
    %v2126 = vld [vmem:[%s0 + $0xe3] sm:$0x1]
    %v2127 = vld [vmem:[%s0 + $0x113] sm:$0x1]
    %v2128 = vld [vmem:[%s0 + $0x143] sm:$0x1]
    %v2129 = vld [vmem:[%s0 + $0x173] sm:$0x1]
    %v2130 = vld [vmem:[%s0 + $0x27] sm:$0x1]
    %v2131 = vld [vmem:[%s0 + $0x57] sm:$0x1]
    %v2132 = vld [vmem:[%s0 + $0x87] sm:$0x1]
    %v2133 = vld [vmem:[%s0 + $0xb7] sm:$0x1]
    %v2134 = vld [vmem:[%s0 + $0xe7] sm:$0x1]
    %v2135 = vld [vmem:[%s0 + $0x117] sm:$0x1]
    %v2136 = vld [vmem:[%s0 + $0x147] sm:$0x1]
    %v2137 = vld [vmem:[%s0 + $0x177] sm:$0x1]
    %v2138 = vld [vmem:[%s0 + $0x2b] sm:$0x1]
    %v2139 = vld [vmem:[%s0 + $0x5b] sm:$0x1]
    %v2140 = vld [vmem:[%s0 + $0x8b] sm:$0x1]
    %v2141 = vld [vmem:[%s0 + $0xbb] sm:$0x1]
    %v2142 = vld [vmem:[%s0 + $0xeb] sm:$0x1]
    %v2143 = vld [vmem:[%s0 + $0x11b] sm:$0x1]
    %v2144 = vld [vmem:[%s0 + $0x14b] sm:$0x1]
    %v2145 = vld [vmem:[%s0 + $0x17b] sm:$0x1]
    %v2154 = vrot.slane %v2059, 7
    %v2155 = vsel %vm261, %v2154, %v2058
    %v2156 = vrot.slane %v2060, 6
    %v2157 = vsel %vm264, %v2156, %v2155
    %v2158 = vrot.slane %v2061, 5
    %v2159 = vsel %vm267, %v2158, %v2157
    %v2160 = vrot.slane %v2062, 4
    %v2161 = vsel %vm270, %v2160, %v2159
    %v2162 = vrot.slane %v2063, 3
    %v2163 = vsel %vm273, %v2162, %v2161
    %v2164 = vrot.slane %v2064, 2
    %v2165 = vsel %vm276, %v2164, %v2163
    %v2166 = vrot.slane %v2065, 1
    %v2167 = vsel %vm279, %v2166, %v2165
    %v2176 = vrot.slane %v2067, 7
    %v2177 = vsel %vm261, %v2176, %v2066
    %v2178 = vrot.slane %v2068, 6
    %v2179 = vsel %vm264, %v2178, %v2177
    %v2180 = vrot.slane %v2069, 5
    %v2181 = vsel %vm267, %v2180, %v2179
    %v2182 = vrot.slane %v2070, 4
    %v2183 = vsel %vm270, %v2182, %v2181
    %v2184 = vrot.slane %v2071, 3
    %v2185 = vsel %vm273, %v2184, %v2183
    %v2186 = vrot.slane %v2072, 2
    %v2187 = vsel %vm276, %v2186, %v2185
    %v2188 = vrot.slane %v2073, 1
    %v2189 = vsel %vm279, %v2188, %v2187
    %v2198 = vrot.slane %v2075, 7
    %v2199 = vsel %vm261, %v2198, %v2074
    %v2200 = vrot.slane %v2076, 6
    %v2201 = vsel %vm264, %v2200, %v2199
    %v2202 = vrot.slane %v2077, 5
    %v2203 = vsel %vm267, %v2202, %v2201
    %v2204 = vrot.slane %v2078, 4
    %v2205 = vsel %vm270, %v2204, %v2203
    %v2206 = vrot.slane %v2079, 3
    %v2207 = vsel %vm273, %v2206, %v2205
    %v2208 = vrot.slane %v2080, 2
    %v2209 = vsel %vm276, %v2208, %v2207
    %v2210 = vrot.slane %v2081, 1
    %v2211 = vsel %vm279, %v2210, %v2209
    %v2220 = vrot.slane %v2083, 7
    %v2221 = vsel %vm261, %v2220, %v2082
    %v2222 = vrot.slane %v2084, 6
    %v2223 = vsel %vm264, %v2222, %v2221
    %v2224 = vrot.slane %v2085, 5
    %v2225 = vsel %vm267, %v2224, %v2223
    %v2226 = vrot.slane %v2086, 4
    %v2227 = vsel %vm270, %v2226, %v2225
    %v2228 = vrot.slane %v2087, 3
    %v2229 = vsel %vm273, %v2228, %v2227
    %v2230 = vrot.slane %v2088, 2
    %v2231 = vsel %vm276, %v2230, %v2229
    %v2232 = vrot.slane %v2089, 1
    %v2233 = vsel %vm279, %v2232, %v2231
    %v2242 = vrot.slane %v2091, 7
    %v2243 = vsel %vm261, %v2242, %v2090
    %v2244 = vrot.slane %v2092, 6
    %v2245 = vsel %vm264, %v2244, %v2243
    %v2246 = vrot.slane %v2093, 5
    %v2247 = vsel %vm267, %v2246, %v2245
    %v2248 = vrot.slane %v2094, 4
    %v2249 = vsel %vm270, %v2248, %v2247
    %v2250 = vrot.slane %v2095, 3
    %v2251 = vsel %vm273, %v2250, %v2249
    %v2252 = vrot.slane %v2096, 2
    %v2253 = vsel %vm276, %v2252, %v2251
    %v2254 = vrot.slane %v2097, 1
    %v2255 = vsel %vm279, %v2254, %v2253
    %v2264 = vrot.slane %v2099, 7
    %v2265 = vsel %vm261, %v2264, %v2098
    %v2266 = vrot.slane %v2100, 6
    %v2267 = vsel %vm264, %v2266, %v2265
    %v2268 = vrot.slane %v2101, 5
    %v2269 = vsel %vm267, %v2268, %v2267
    %v2270 = vrot.slane %v2102, 4
    %v2271 = vsel %vm270, %v2270, %v2269
    %v2272 = vrot.slane %v2103, 3
    %v2273 = vsel %vm273, %v2272, %v2271
    %v2274 = vrot.slane %v2104, 2
    %v2275 = vsel %vm276, %v2274, %v2273
    %v2276 = vrot.slane %v2105, 1
    %v2277 = vsel %vm279, %v2276, %v2275
    %v2286 = vrot.slane %v2107, 7
    %v2287 = vsel %vm261, %v2286, %v2106
    %v2288 = vrot.slane %v2108, 6
    %v2289 = vsel %vm264, %v2288, %v2287
    %v2290 = vrot.slane %v2109, 5
    %v2291 = vsel %vm267, %v2290, %v2289
    %v2292 = vrot.slane %v2110, 4
    %v2293 = vsel %vm270, %v2292, %v2291
    %v2294 = vrot.slane %v2111, 3
    %v2295 = vsel %vm273, %v2294, %v2293
    %v2296 = vrot.slane %v2112, 2
    %v2297 = vsel %vm276, %v2296, %v2295
    %v2298 = vrot.slane %v2113, 1
    %v2299 = vsel %vm279, %v2298, %v2297
    %v2308 = vrot.slane %v2115, 7
    %v2309 = vsel %vm261, %v2308, %v2114
    %v2310 = vrot.slane %v2116, 6
    %v2311 = vsel %vm264, %v2310, %v2309
    %v2312 = vrot.slane %v2117, 5
    %v2313 = vsel %vm267, %v2312, %v2311
    %v2314 = vrot.slane %v2118, 4
    %v2315 = vsel %vm270, %v2314, %v2313
    %v2316 = vrot.slane %v2119, 3
    %v2317 = vsel %vm273, %v2316, %v2315
    %v2318 = vrot.slane %v2120, 2
    %v2319 = vsel %vm276, %v2318, %v2317
    %v2320 = vrot.slane %v2121, 1
    %v2321 = vsel %vm279, %v2320, %v2319
    %v2330 = vrot.slane %v2123, 7
    %v2331 = vsel %vm261, %v2330, %v2122
    %v2332 = vrot.slane %v2124, 6
    %v2333 = vsel %vm264, %v2332, %v2331
    %v2334 = vrot.slane %v2125, 5
    %v2335 = vsel %vm267, %v2334, %v2333
    %v2336 = vrot.slane %v2126, 4
    %v2337 = vsel %vm270, %v2336, %v2335
    %v2338 = vrot.slane %v2127, 3
    %v2339 = vsel %vm273, %v2338, %v2337
    %v2340 = vrot.slane %v2128, 2
    %v2341 = vsel %vm276, %v2340, %v2339
    %v2342 = vrot.slane %v2129, 1
    %v2343 = vsel %vm279, %v2342, %v2341
    %v2352 = vrot.slane %v2131, 7
    %v2353 = vsel %vm261, %v2352, %v2130
    %v2354 = vrot.slane %v2132, 6
    %v2355 = vsel %vm264, %v2354, %v2353
    %v2356 = vrot.slane %v2133, 5
    %v2357 = vsel %vm267, %v2356, %v2355
    %v2358 = vrot.slane %v2134, 4
    %v2359 = vsel %vm270, %v2358, %v2357
    %v2360 = vrot.slane %v2135, 3
    %v2361 = vsel %vm273, %v2360, %v2359
    %v2362 = vrot.slane %v2136, 2
    %v2363 = vsel %vm276, %v2362, %v2361
    %v2364 = vrot.slane %v2137, 1
    %v2365 = vsel %vm279, %v2364, %v2363
    %v2374 = vrot.slane %v2139, 7
    %v2375 = vsel %vm261, %v2374, %v2138
    %v2376 = vrot.slane %v2140, 6
    %v2377 = vsel %vm264, %v2376, %v2375
    %v2378 = vrot.slane %v2141, 5
    %v2379 = vsel %vm267, %v2378, %v2377
    %v2380 = vrot.slane %v2142, 4
    %v2381 = vsel %vm270, %v2380, %v2379
    %v2382 = vrot.slane %v2143, 3
    %v2383 = vsel %vm273, %v2382, %v2381
    %v2384 = vrot.slane %v2144, 2
    %v2385 = vsel %vm276, %v2384, %v2383
    %v2386 = vrot.slane %v2145, 1
    %v2387 = vsel %vm279, %v2386, %v2385
    %s2388 = scalar_lea.vmem [#allocation2], 432
    %v2389 = vld [vmem:[%s2388] sm:$0xff]
    %v2390 = vld [vmem:[%s2388 + $0x8] sm:$0xff]
    %v2391 = vld [vmem:[%s2388 + $0x10] sm:$0xff]
    %v2392 = vld [vmem:[%s2388 + $0x18] sm:$0xff]
    %v2393 = vld [vmem:[%s2388 + $0x20] sm:$0xff]
    %v2394 = vld [vmem:[%s2388 + $0x28] sm:$0xff]
    %v2395 = vld [vmem:[%s2388 + $0x30] sm:$0xff]
    %v2396 = vld [vmem:[%s2388 + $0x38] sm:$0xff]
    %v2397 = vld [vmem:[%s2388 + $0x40] sm:$0xff]
    %v2398 = vld [vmem:[%s2388 + $0x48] sm:$0xff]
    %v2399 = vld [vmem:[%s2388 + $0x50] sm:$0xff]
    %v2400 = vld [vmem:[%s2388 + $0x58] sm:$0xff]
    %v2401 = vld [vmem:[%s2388 + $0x60] sm:$0xff]
    %v2402 = vld [vmem:[%s2388 + $0x68] sm:$0xff]
    %v2403 = vld [vmem:[%s2388 + $0x70] sm:$0xff]
    %v2404 = vld [vmem:[%s2388 + $0x78] sm:$0xff]
    %v2405 = vld [vmem:[%s2388 + $0x80] sm:$0xff]
    %v2406 = vld [vmem:[%s2388 + $0x88] sm:$0xff]
    %v2407 = vsel %vm868, %v2167, 0
    %v2409 = vsel %vm868, %v2189, 0
    %v2411 = vsel %vm868, %v2211, 0
    %v2413 = vsel %vm868, %v2233, 0
    %v2415 = vsel %vm868, %v2255, 0
    %v2417 = vsel %vm868, %v2277, 0
    %v2419 = vsel %vm868, %v2299, 0
    %v2421 = vsel %vm868, %v2321, 0
    %v2423 = vsel %vm868, %v2343, 0
    %v2425 = vsel %vm868, %v2365, 0
    %v2427 = vsel %vm868, %v2387, 0
    %2429 = vmatprep.subr.mxu0 %v2390
    %2430 = vmatpush1.msra.mxu0 %v2389
    %2431 = vmatprep.subr.mxu0 %v2393
    %2432 = vmatpush1.msra.mxu0 %v2392
    %2433 = vmatprep.subr.mxu0 %v2396
    %2434 = vmatpush1.msra.mxu0 %v2395
    %2435 = vmatprep.subr.mxu0 %v2399
    %2436 = vmatpush1.msra.mxu0 %v2398
    %2437 = vmatprep.subr.mxu0 %v2402
    %2438 = vmatpush1.msra.mxu0 %v2401
    %2439 = vmatprep.subr.mxu0 %v2405
    %2440 = vmatpush1.msra.mxu0 %v2404
    %2441 = vmatprep.subr.mxu0 0.0
    %2442 = vmatpush1.msra.mxu0 0.0
    %2443 = vmatprep.subr.mxu0 0.0
    %2444 = vmatpush1.msra.mxu0 0.0
    %2445 = vmatprep.subr.mxu0 0.0
    %2446 = vmatpush1.msra.mxu0 0.0
    %2447 = vmatprep.subr.mxu0 0.0
    %2448 = vmatpush1.msra.mxu0 0.0
    %2449 = vmatprep.subr.mxu0 0.0
    %2450 = vmatpush1.msra.mxu0 0.0
    %2451 = vmatprep.subr.mxu0 0.0
    %2452 = vmatpush1.msra.mxu0 0.0
    %2453 = vmatprep.subr.mxu0 0.0
    %2454 = vmatpush1.msra.mxu0 0.0
    %2455 = vmatprep.subr.mxu0 0.0
    %2456 = vmatpush1.msra.mxu0 0.0
    %2457 = vmatprep.subr.mxu0 0.0
    %2458 = vmatpush1.msra.mxu0 0.0
    %2459 = vmatprep.subr.mxu0 0.0
    %2460 = vmatpush1.msra.mxu0 0.0
    %2461 = vmatprep.subr.mxu0 0.0
    %2462 = vmatpush1.msra.mxu0 0.0
    %2463 = vmatprep.subr.mxu0 0.0
    %2464 = vmatpush1.msra.mxu0 0.0
    %2465 = vmatprep.subr.mxu0 0.0
    %2466 = vmatpush1.msra.mxu0 0.0
    %2467 = vmatprep.subr.mxu0 0.0
    %2468 = vmatpush1.msra.mxu0 0.0
    %2469 = vmatprep.subr.mxu0 0.0
    %2470 = vmatpush1.msra.mxu0 0.0
    %2471 = vmatprep.subr.mxu0 0.0
    %2472 = vmatpush1.msra.mxu0 0.0
    %2473 = vmatprep.subr.mxu0 0.0
    %2474 = vmatpush1.msra.mxu0 0.0
    %2475 = vmatprep.subr.mxu0 0.0
    %2476 = vmatpush1.msra.mxu0 0.0
    %2477 = vmatprep.subr.mxu0 0.0
    %2478 = vmatpush1.msra.mxu0 0.0
    %2479 = vmatprep.subr.mxu0 0.0
    %2480 = vmatpush1.msra.mxu0 0.0
    %2481 = vmatprep.subr.mxu0 0.0
    %2482 = vmatpush1.msra.mxu0 0.0
    %2483 = vmatprep.subr.mxu0 0.0
    %2484 = vmatpush1.msra.mxu0 0.0
    %2485 = vmatprep.subr.mxu0 0.0
    %2486 = vmatpush1.msra.mxu0 0.0
    %2487 = vmatprep.subr.mxu0 0.0
    %2488 = vmatpush1.msra.mxu0 0.0
    %2489 = vmatprep.subr.mxu0 0.0
    %2490 = vmatpush1.msra.mxu0 0.0
    %2491 = vmatprep.subr.mxu0 0.0
    %2492 = vmatpush1.msra.mxu0 0.0
    %2493 = vmatprep.mubr.f32.mxu0 0.0
    %2494 = vmatmul.mubr.f32.gmra.mrb[0].mxu0 %v2407
    %v2495 = vpop.f32.mrb[0].mxu0
    %v2496 = vadd.f32 0.0, %v2495
    %v2497 = vpop.f32.mrb[0].mxu0
    %v2498 = vadd.f32 0.0, %v2497
    %2499 = vmatprep.mubr.f32.mxu0 0.0
    %2500 = vmatmul.mubr.f32.gmra.mrb[0].mxu0 %v2409
    %v2501 = vpop.f32.mrb[0].mxu0
    %v2502 = vadd.f32 0.0, %v2501
    %v2503 = vpop.f32.mrb[0].mxu0
    %v2504 = vadd.f32 0.0, %v2503
    %2505 = vmatprep.mubr.f32.mxu0 0.0
    %2506 = vmatmul.mubr.f32.gmra.mrb[0].mxu0 %v2411
    %v2507 = vpop.f32.mrb[0].mxu0
    %v2508 = vadd.f32 0.0, %v2507
    %v2509 = vpop.f32.mrb[0].mxu0
    %v2510 = vadd.f32 0.0, %v2509
    %2511 = vmatprep.mubr.f32.mxu0 0.0
    %2512 = vmatmul.mubr.f32.gmra.mrb[0].mxu0 %v2413
    %v2513 = vpop.f32.mrb[0].mxu0
    %v2514 = vadd.f32 0.0, %v2513
    %v2515 = vpop.f32.mrb[0].mxu0
    %v2516 = vadd.f32 0.0, %v2515
    %2517 = vmatprep.mubr.f32.mxu0 0.0
    %2518 = vmatmul.mubr.f32.gmra.mrb[0].mxu0 %v2415
    %v2519 = vpop.f32.mrb[0].mxu0
    %v2520 = vadd.f32 0.0, %v2519
    %v2521 = vpop.f32.mrb[0].mxu0
    %v2522 = vadd.f32 0.0, %v2521
    %2523 = vmatprep.mubr.f32.mxu0 0.0
    %2524 = vmatmul.mubr.f32.gmra.mrb[0].mxu0 %v2417
    %v2525 = vpop.f32.mrb[0].mxu0
    %v2526 = vadd.f32 0.0, %v2525
    %v2527 = vpop.f32.mrb[0].mxu0
    %v2528 = vadd.f32 0.0, %v2527
    %2529 = vmatprep.mubr.f32.mxu0 0.0
    %2530 = vmatmul.mubr.f32.gmra.mrb[0].mxu0 %v2419
    %v2531 = vpop.f32.mrb[0].mxu0
    %v2532 = vadd.f32 0.0, %v2531
    %v2533 = vpop.f32.mrb[0].mxu0
    %v2534 = vadd.f32 0.0, %v2533
    %2535 = vmatprep.mubr.f32.mxu0 0.0
    %2536 = vmatmul.mubr.f32.gmra.mrb[0].mxu0 %v2421
    %v2537 = vpop.f32.mrb[0].mxu0
    %v2538 = vadd.f32 0.0, %v2537
    %v2539 = vpop.f32.mrb[0].mxu0
    %v2540 = vadd.f32 0.0, %v2539
    %2541 = vmatprep.mubr.f32.mxu0 0.0
    %2542 = vmatmul.mubr.f32.gmra.mrb[0].mxu0 %v2423
    %v2543 = vpop.f32.mrb[0].mxu0
    %v2544 = vadd.f32 0.0, %v2543
    %v2545 = vpop.f32.mrb[0].mxu0
    %v2546 = vadd.f32 0.0, %v2545
    %2547 = vmatprep.mubr.f32.mxu0 0.0
    %2548 = vmatmul.mubr.f32.gmra.mrb[0].mxu0 %v2425
    %v2549 = vpop.f32.mrb[0].mxu0
    %v2550 = vadd.f32 0.0, %v2549
    %v2551 = vpop.f32.mrb[0].mxu0
    %v2552 = vadd.f32 0.0, %v2551
    %2553 = vmatprep.mubr.f32.mxu0 0.0
    %2554 = vmatmul.mubr.f32.gmra.mrb[0].mxu0 %v2427
    %v2555 = vpop.f32.mrb[0].mxu0
    %v2556 = vpop.f32.mrb[0].mxu0
    %2557 = vdwg.mxu0
    %2558 = vmatprep.subr.mxu0 0.0
    %2559 = vmatpush1.msra.mxu0 %v2391
    %2560 = vmatprep.subr.mxu0 0.0
    %2561 = vmatpush1.msra.mxu0 %v2394
    %2562 = vmatprep.subr.mxu0 0.0
    %2563 = vmatpush1.msra.mxu0 %v2397
    %2564 = vmatprep.subr.mxu0 0.0
    %2565 = vmatpush1.msra.mxu0 %v2400
    %2566 = vmatprep.subr.mxu0 0.0
    %2567 = vmatpush1.msra.mxu0 %v2403
    %2568 = vmatprep.subr.mxu0 0.0
    %2569 = vmatpush1.msra.mxu0 %v2406
    %2570 = vmatprep.subr.mxu0 0.0
    %2571 = vmatpush1.msra.mxu0 0.0
    %2572 = vmatprep.subr.mxu0 0.0
    %2573 = vmatpush1.msra.mxu0 0.0
    %2574 = vmatprep.subr.mxu0 0.0
    %2575 = vmatpush1.msra.mxu0 0.0
    %2576 = vmatprep.subr.mxu0 0.0
    %2577 = vmatpush1.msra.mxu0 0.0
    %2578 = vmatprep.subr.mxu0 0.0
    %2579 = vmatpush1.msra.mxu0 0.0
    %2580 = vmatprep.subr.mxu0 0.0
    %2581 = vmatpush1.msra.mxu0 0.0
    %2582 = vmatprep.subr.mxu0 0.0
    %2583 = vmatpush1.msra.mxu0 0.0
    %2584 = vmatprep.subr.mxu0 0.0
    %2585 = vmatpush1.msra.mxu0 0.0
    %2586 = vmatprep.subr.mxu0 0.0
    %2587 = vmatpush1.msra.mxu0 0.0
    %2588 = vmatprep.subr.mxu0 0.0
    %2589 = vmatpush1.msra.mxu0 0.0
    %2590 = vmatprep.subr.mxu0 0.0
    %2591 = vmatpush1.msra.mxu0 0.0
    %2592 = vmatprep.subr.mxu0 0.0
    %2593 = vmatpush1.msra.mxu0 0.0
    %2594 = vmatprep.subr.mxu0 0.0
    %2595 = vmatpush1.msra.mxu0 0.0
    %2596 = vmatprep.subr.mxu0 0.0
    %2597 = vmatpush1.msra.mxu0 0.0
    %2598 = vmatprep.subr.mxu0 0.0
    %2599 = vmatpush1.msra.mxu0 0.0
    %2600 = vmatprep.subr.mxu0 0.0
    %2601 = vmatpush1.msra.mxu0 0.0
    %2602 = vmatprep.subr.mxu0 0.0
    %2603 = vmatpush1.msra.mxu0 0.0
    %2604 = vmatprep.subr.mxu0 0.0
    %2605 = vmatpush1.msra.mxu0 0.0
    %2606 = vmatprep.subr.mxu0 0.0
    %2607 = vmatpush1.msra.mxu0 0.0
    %2608 = vmatprep.subr.mxu0 0.0
    %2609 = vmatpush1.msra.mxu0 0.0
    %2610 = vmatprep.subr.mxu0 0.0
    %2611 = vmatpush1.msra.mxu0 0.0
    %2612 = vmatprep.subr.mxu0 0.0
    %2613 = vmatpush1.msra.mxu0 0.0
    %2614 = vmatprep.subr.mxu0 0.0
    %2615 = vmatpush1.msra.mxu0 0.0
    %2616 = vmatprep.subr.mxu0 0.0
    %2617 = vmatpush1.msra.mxu0 0.0
    %2618 = vmatprep.subr.mxu0 0.0
    %2619 = vmatpush1.msra.mxu0 0.0
    %2620 = vmatprep.subr.mxu0 0.0
    %2621 = vmatpush1.msra.mxu0 0.0
    %2622 = vmatprep.mubr.f32.mxu0 0.0
    %2623 = vmatmul.mubr.f32.gmra.mrb[0].mxu0 %v2407
    %v2624 = vpop.f32.mrb[0].mxu0
    %v2625 = vadd.f32 0.0, %v2624
    %v2626 = vpop.f32.mrb[0].mxu0
    %2627 = vmatprep.mubr.f32.mxu0 0.0
    %2628 = vmatmul.mubr.f32.gmra.mrb[0].mxu0 %v2409
    %v2629 = vpop.f32.mrb[0].mxu0
    %v2630 = vadd.f32 0.0, %v2629
    %v2631 = vpop.f32.mrb[0].mxu0
    %2632 = vmatprep.mubr.f32.mxu0 0.0
    %2633 = vmatmul.mubr.f32.gmra.mrb[0].mxu0 %v2411
    %v2634 = vpop.f32.mrb[0].mxu0
    %v2635 = vadd.f32 0.0, %v2634
    %v2636 = vpop.f32.mrb[0].mxu0
    %2637 = vmatprep.mubr.f32.mxu0 0.0
    %2638 = vmatmul.mubr.f32.gmra.mrb[0].mxu0 %v2413
    %v2639 = vpop.f32.mrb[0].mxu0
    %v2640 = vadd.f32 0.0, %v2639
    %v2641 = vpop.f32.mrb[0].mxu0
    %2642 = vmatprep.mubr.f32.mxu0 0.0
    %2643 = vmatmul.mubr.f32.gmra.mrb[0].mxu0 %v2415
    %v2644 = vpop.f32.mrb[0].mxu0
    %v2645 = vadd.f32 0.0, %v2644
    %v2646 = vpop.f32.mrb[0].mxu0
    %2647 = vmatprep.mubr.f32.mxu0 0.0
    %2648 = vmatmul.mubr.f32.gmra.mrb[0].mxu0 %v2417
    %v2649 = vpop.f32.mrb[0].mxu0
    %v2650 = vadd.f32 0.0, %v2649
    %v2651 = vpop.f32.mrb[0].mxu0
    %2652 = vmatprep.mubr.f32.mxu0 0.0
    %2653 = vmatmul.mubr.f32.gmra.mrb[0].mxu0 %v2419
    %v2654 = vpop.f32.mrb[0].mxu0
    %v2655 = vadd.f32 0.0, %v2654
    %v2656 = vpop.f32.mrb[0].mxu0
    %2657 = vmatprep.mubr.f32.mxu0 0.0
    %2658 = vmatmul.mubr.f32.gmra.mrb[0].mxu0 %v2421
    %v2659 = vpop.f32.mrb[0].mxu0
    %v2660 = vadd.f32 0.0, %v2659
    %v2661 = vpop.f32.mrb[0].mxu0
    %2662 = vmatprep.mubr.f32.mxu0 0.0
    %2663 = vmatmul.mubr.f32.gmra.mrb[0].mxu0 %v2423
    %v2664 = vpop.f32.mrb[0].mxu0
    %v2665 = vadd.f32 0.0, %v2664
    %v2666 = vpop.f32.mrb[0].mxu0
    %2667 = vmatprep.mubr.f32.mxu0 0.0
    %2668 = vmatmul.mubr.f32.gmra.mrb[0].mxu0 %v2425
    %v2669 = vpop.f32.mrb[0].mxu0
    %v2670 = vadd.f32 0.0, %v2669
    %v2671 = vpop.f32.mrb[0].mxu0
    %2672 = vmatprep.mubr.f32.mxu0 0.0
    %2673 = vmatmul.mubr.f32.gmra.mrb[0].mxu0 %v2427
    %v2674 = vpop.f32.mrb[0].mxu0
    %v2675 = vpop.f32.mrb[0].mxu0
    %2676 = vdwg.mxu0
    %v2677 = vadd.f32 %v2028, %v2496
    %v2678 = vadd.f32 %v2029, %v2498
    %v2679 = vadd.f32 %v2030, %v2625
    %v2680 = vadd.f32 %v2031, %v2502
    %v2681 = vadd.f32 %v2032, %v2504
    %v2682 = vadd.f32 %v2033, %v2630
    %v2683 = vadd.f32 %v2034, %v2508
    %v2684 = vadd.f32 %v2035, %v2510
    %v2685 = vadd.f32 %v2036, %v2635
    %v2686 = vadd.f32 %v2037, %v2514
    %v2687 = vadd.f32 %v2038, %v2516
    %v2688 = vadd.f32 %v2039, %v2640
    %v2689 = vadd.f32 %v2040, %v2520
    %v2690 = vadd.f32 %v2041, %v2522
    %v2691 = vadd.f32 %v2042, %v2645
    %v2692 = vadd.f32 %v2043, %v2526
    %v2693 = vadd.f32 %v2044, %v2528
    %v2694 = vadd.f32 %v2045, %v2650
    %v2695 = vadd.f32 %v2046, %v2532
    %v2696 = vadd.f32 %v2047, %v2534
    %v2697 = vadd.f32 %v2048, %v2655
    %v2698 = vadd.f32 %v2049, %v2538
    %v2699 = vadd.f32 %v2050, %v2540
    %v2700 = vadd.f32 %v2051, %v2660
    %v2701 = vadd.f32 %v2052, %v2544
    %v2702 = vadd.f32 %v2053, %v2546
    %v2703 = vadd.f32 %v2054, %v2665
    %v2704 = vadd.f32 %v2055, %v2550
    %v2705 = vadd.f32 %v2056, %v2552
    %v2706 = vadd.f32 %v2057, %v2670
    %v2707 = vld [vmem:[%s0 + $0x2c] sm:$0x1]
    %v2708 = vld [vmem:[%s0 + $0x5c] sm:$0x1]
    %v2709 = vld [vmem:[%s0 + $0x8c] sm:$0x1]
    %v2710 = vld [vmem:[%s0 + $0xbc] sm:$0x1]
    %v2711 = vld [vmem:[%s0 + $0xec] sm:$0x1]
    %v2712 = vld [vmem:[%s0 + $0x11c] sm:$0x1]
    %v2713 = vld [vmem:[%s0 + $0x14c] sm:$0x1]
    %v2714 = vld [vmem:[%s0 + $0x17c] sm:$0x1]
    %v2723 = vrot.slane %v2708, 7
    %v2724 = vsel %vm261, %v2723, %v2707
    %v2725 = vrot.slane %v2709, 6
    %v2726 = vsel %vm264, %v2725, %v2724
    %v2727 = vrot.slane %v2710, 5
    %v2728 = vsel %vm267, %v2727, %v2726
    %v2729 = vrot.slane %v2711, 4
    %v2730 = vsel %vm270, %v2729, %v2728
    %v2731 = vrot.slane %v2712, 3
    %v2732 = vsel %vm273, %v2731, %v2730
    %v2733 = vrot.slane %v2713, 2
    %v2734 = vsel %vm276, %v2733, %v2732
    %v2735 = vrot.slane %v2714, 1
    %v2736 = vsel %vm279, %v2735, %v2734
    %s2737 = scalar_lea.vmem [#allocation2], 576
    %v2738 = vld [vmem:[%s2737] sm:$0xff]
    %v2739 = vld [vmem:[%s2737 + $0x8] sm:$0xff]
    %v2740 = vld [vmem:[%s2737 + $0x10] sm:$0xff]
    %v2741 = vld [vmem:[%s2737 + $0x18] sm:$0xff]
    %v2742 = vld [vmem:[%s2737 + $0x20] sm:$0xff]
    %v2743 = vld [vmem:[%s2737 + $0x28] sm:$0xff]
    %v2744 = vld [vmem:[%s2737 + $0x30] sm:$0xff]
    %v2745 = vld [vmem:[%s2737 + $0x38] sm:$0xff]
    %v2746 = vld [vmem:[%s2737 + $0x40] sm:$0xff]
    %v2747 = vld [vmem:[%s2737 + $0x48] sm:$0xff]
    %v2748 = vld [vmem:[%s2737 + $0x50] sm:$0xff]
    %v2749 = vld [vmem:[%s2737 + $0x58] sm:$0xff]
    %v2750 = vld [vmem:[%s2737 + $0x60] sm:$0xff]
    %v2751 = vld [vmem:[%s2737 + $0x68] sm:$0xff]
    %v2752 = vld [vmem:[%s2737 + $0x70] sm:$0xff]
    %v2753 = vld [vmem:[%s2737 + $0x78] sm:$0xff]
    %v2754 = vld [vmem:[%s2737 + $0x80] sm:$0xff]
    %v2755 = vld [vmem:[%s2737 + $0x88] sm:$0xff]
    %v2756 = vsel %vm868, %v2736, 0
    %2758 = vmatprep.subr.mxu0 %v2739
    %2759 = vmatpush1.msra.mxu0 %v2738
    %2760 = vmatprep.subr.mxu0 %v2742
    %2761 = vmatpush1.msra.mxu0 %v2741
    %2762 = vmatprep.subr.mxu0 %v2745
    %2763 = vmatpush1.msra.mxu0 %v2744
    %2764 = vmatprep.subr.mxu0 %v2748
    %2765 = vmatpush1.msra.mxu0 %v2747
    %2766 = vmatprep.subr.mxu0 %v2751
    %2767 = vmatpush1.msra.mxu0 %v2750
    %2768 = vmatprep.subr.mxu0 %v2754
    %2769 = vmatpush1.msra.mxu0 %v2753
    %2770 = vmatprep.subr.mxu0 0.0
    %2771 = vmatpush1.msra.mxu0 0.0
    %2772 = vmatprep.subr.mxu0 0.0
    %2773 = vmatpush1.msra.mxu0 0.0
    %2774 = vmatprep.subr.mxu0 0.0
    %2775 = vmatpush1.msra.mxu0 0.0
    %2776 = vmatprep.subr.mxu0 0.0
    %2777 = vmatpush1.msra.mxu0 0.0
    %2778 = vmatprep.subr.mxu0 0.0
    %2779 = vmatpush1.msra.mxu0 0.0
    %2780 = vmatprep.subr.mxu0 0.0
    %2781 = vmatpush1.msra.mxu0 0.0
    %2782 = vmatprep.subr.mxu0 0.0
    %2783 = vmatpush1.msra.mxu0 0.0
    %2784 = vmatprep.subr.mxu0 0.0
    %2785 = vmatpush1.msra.mxu0 0.0
    %2786 = vmatprep.subr.mxu0 0.0
    %2787 = vmatpush1.msra.mxu0 0.0
    %2788 = vmatprep.subr.mxu0 0.0
    %2789 = vmatpush1.msra.mxu0 0.0
    %2790 = vmatprep.subr.mxu0 0.0
    %2791 = vmatpush1.msra.mxu0 0.0
    %2792 = vmatprep.subr.mxu0 0.0
    %2793 = vmatpush1.msra.mxu0 0.0
    %2794 = vmatprep.subr.mxu0 0.0
    %2795 = vmatpush1.msra.mxu0 0.0
    %2796 = vmatprep.subr.mxu0 0.0
    %2797 = vmatpush1.msra.mxu0 0.0
    %2798 = vmatprep.subr.mxu0 0.0
    %2799 = vmatpush1.msra.mxu0 0.0
    %2800 = vmatprep.subr.mxu0 0.0
    %2801 = vmatpush1.msra.mxu0 0.0
    %2802 = vmatprep.subr.mxu0 0.0
    %2803 = vmatpush1.msra.mxu0 0.0
    %2804 = vmatprep.subr.mxu0 0.0
    %2805 = vmatpush1.msra.mxu0 0.0
    %2806 = vmatprep.subr.mxu0 0.0
    %2807 = vmatpush1.msra.mxu0 0.0
    %2808 = vmatprep.subr.mxu0 0.0
    %2809 = vmatpush1.msra.mxu0 0.0
    %2810 = vmatprep.subr.mxu0 0.0
    %2811 = vmatpush1.msra.mxu0 0.0
    %2812 = vmatprep.subr.mxu0 0.0
    %2813 = vmatpush1.msra.mxu0 0.0
    %2814 = vmatprep.subr.mxu0 0.0
    %2815 = vmatpush1.msra.mxu0 0.0
    %2816 = vmatprep.subr.mxu0 0.0
    %2817 = vmatpush1.msra.mxu0 0.0
    %2818 = vmatprep.subr.mxu0 0.0
    %2819 = vmatpush1.msra.mxu0 0.0
    %2820 = vmatprep.subr.mxu0 0.0
    %2821 = vmatpush1.msra.mxu0 0.0
    %2822 = vmatprep.mubr.f32.mxu0 0.0
    %2823 = vmatmul.mubr.f32.gmra.mrb[0].mxu0 %v1141
    %v2824 = vpop.f32.mrb[0].mxu0
    %v2825 = vadd.f32 0.0, %v2824
    %v2826 = vpop.f32.mrb[0].mxu0
    %v2827 = vadd.f32 0.0, %v2826
    %2828 = vmatprep.mubr.f32.mxu0 0.0
    %2829 = vmatmul.mubr.f32.gmra.mrb[0].mxu0 %v1143
    %v2830 = vpop.f32.mrb[0].mxu0
    %v2831 = vadd.f32 0.0, %v2830
    %v2832 = vpop.f32.mrb[0].mxu0
    %v2833 = vadd.f32 0.0, %v2832
    %2834 = vmatprep.mubr.f32.mxu0 0.0
    %2835 = vmatmul.mubr.f32.gmra.mrb[0].mxu0 %v1145
    %v2836 = vpop.f32.mrb[0].mxu0
    %v2837 = vadd.f32 0.0, %v2836
    %v2838 = vpop.f32.mrb[0].mxu0
    %v2839 = vadd.f32 0.0, %v2838
    %2840 = vmatprep.mubr.f32.mxu0 0.0
    %2841 = vmatmul.mubr.f32.gmra.mrb[0].mxu0 %v1147
    %v2842 = vpop.f32.mrb[0].mxu0
    %v2843 = vadd.f32 0.0, %v2842
    %v2844 = vpop.f32.mrb[0].mxu0
    %v2845 = vadd.f32 0.0, %v2844
    %2846 = vmatprep.mubr.f32.mxu0 0.0
    %2847 = vmatmul.mubr.f32.gmra.mrb[0].mxu0 %v1149
    %v2848 = vpop.f32.mrb[0].mxu0
    %v2849 = vadd.f32 0.0, %v2848
    %v2850 = vpop.f32.mrb[0].mxu0
    %v2851 = vadd.f32 0.0, %v2850
    %2852 = vmatprep.mubr.f32.mxu0 0.0
    %2853 = vmatmul.mubr.f32.gmra.mrb[0].mxu0 %v1151
    %v2854 = vpop.f32.mrb[0].mxu0
    %v2855 = vadd.f32 0.0, %v2854
    %v2856 = vpop.f32.mrb[0].mxu0
    %v2857 = vadd.f32 0.0, %v2856
    %2858 = vmatprep.mubr.f32.mxu0 0.0
    %2859 = vmatmul.mubr.f32.gmra.mrb[0].mxu0 %v1153
    %v2860 = vpop.f32.mrb[0].mxu0
    %v2861 = vadd.f32 0.0, %v2860
    %v2862 = vpop.f32.mrb[0].mxu0
    %v2863 = vadd.f32 0.0, %v2862
    %2864 = vmatprep.mubr.f32.mxu0 0.0
    %2865 = vmatmul.mubr.f32.gmra.mrb[0].mxu0 %v1155
    %v2866 = vpop.f32.mrb[0].mxu0
    %v2867 = vadd.f32 0.0, %v2866
    %v2868 = vpop.f32.mrb[0].mxu0
    %v2869 = vadd.f32 0.0, %v2868
    %2870 = vmatprep.mubr.f32.mxu0 0.0
    %2871 = vmatmul.mubr.f32.gmra.mrb[0].mxu0 %v1157
    %v2872 = vpop.f32.mrb[0].mxu0
    %v2873 = vadd.f32 0.0, %v2872
    %v2874 = vpop.f32.mrb[0].mxu0
    %v2875 = vadd.f32 0.0, %v2874
    %2876 = vmatprep.mubr.f32.mxu0 0.0
    %2877 = vmatmul.mubr.f32.gmra.mrb[0].mxu0 %v1159
    %v2878 = vpop.f32.mrb[0].mxu0
    %v2879 = vadd.f32 0.0, %v2878
    %v2880 = vpop.f32.mrb[0].mxu0
    %v2881 = vadd.f32 0.0, %v2880
    %2882 = vmatprep.mubr.f32.mxu0 0.0
    %2883 = vmatmul.mubr.f32.gmra.mrb[0].mxu0 %v2756
    %v2884 = vpop.f32.mrb[0].mxu0
    %v2885 = vpop.f32.mrb[0].mxu0
    %2886 = vdwg.mxu0
    %2887 = vmatprep.subr.mxu0 0.0
    %2888 = vmatpush1.msra.mxu0 %v2740
    %2889 = vmatprep.subr.mxu0 0.0
    %2890 = vmatpush1.msra.mxu0 %v2743
    %2891 = vmatprep.subr.mxu0 0.0
    %2892 = vmatpush1.msra.mxu0 %v2746
    %2893 = vmatprep.subr.mxu0 0.0
    %2894 = vmatpush1.msra.mxu0 %v2749
    %2895 = vmatprep.subr.mxu0 0.0
    %2896 = vmatpush1.msra.mxu0 %v2752
    %2897 = vmatprep.subr.mxu0 0.0
    %2898 = vmatpush1.msra.mxu0 %v2755
    %2899 = vmatprep.subr.mxu0 0.0
    %2900 = vmatpush1.msra.mxu0 0.0
    %2901 = vmatprep.subr.mxu0 0.0
    %2902 = vmatpush1.msra.mxu0 0.0
    %2903 = vmatprep.subr.mxu0 0.0
    %2904 = vmatpush1.msra.mxu0 0.0
    %2905 = vmatprep.subr.mxu0 0.0
    %2906 = vmatpush1.msra.mxu0 0.0
    %2907 = vmatprep.subr.mxu0 0.0
    %2908 = vmatpush1.msra.mxu0 0.0
    %2909 = vmatprep.subr.mxu0 0.0
    %2910 = vmatpush1.msra.mxu0 0.0
    %2911 = vmatprep.subr.mxu0 0.0
    %2912 = vmatpush1.msra.mxu0 0.0
    %2913 = vmatprep.subr.mxu0 0.0
    %2914 = vmatpush1.msra.mxu0 0.0
    %2915 = vmatprep.subr.mxu0 0.0
    %2916 = vmatpush1.msra.mxu0 0.0
    %2917 = vmatprep.subr.mxu0 0.0
    %2918 = vmatpush1.msra.mxu0 0.0
    %2919 = vmatprep.subr.mxu0 0.0
    %2920 = vmatpush1.msra.mxu0 0.0
    %2921 = vmatprep.subr.mxu0 0.0
    %2922 = vmatpush1.msra.mxu0 0.0
    %2923 = vmatprep.subr.mxu0 0.0
    %2924 = vmatpush1.msra.mxu0 0.0
    %2925 = vmatprep.subr.mxu0 0.0
    %2926 = vmatpush1.msra.mxu0 0.0
    %2927 = vmatprep.subr.mxu0 0.0
    %2928 = vmatpush1.msra.mxu0 0.0
    %2929 = vmatprep.subr.mxu0 0.0
    %2930 = vmatpush1.msra.mxu0 0.0
    %2931 = vmatprep.subr.mxu0 0.0
    %2932 = vmatpush1.msra.mxu0 0.0
    %2933 = vmatprep.subr.mxu0 0.0
    %2934 = vmatpush1.msra.mxu0 0.0
    %2935 = vmatprep.subr.mxu0 0.0
    %2936 = vmatpush1.msra.mxu0 0.0
    %2937 = vmatprep.subr.mxu0 0.0
    %2938 = vmatpush1.msra.mxu0 0.0
    %2939 = vmatprep.subr.mxu0 0.0
    %2940 = vmatpush1.msra.mxu0 0.0
    %2941 = vmatprep.subr.mxu0 0.0
    %2942 = vmatpush1.msra.mxu0 0.0
    %2943 = vmatprep.subr.mxu0 0.0
    %2944 = vmatpush1.msra.mxu0 0.0
    %2945 = vmatprep.subr.mxu0 0.0
    %2946 = vmatpush1.msra.mxu0 0.0
    %2947 = vmatprep.subr.mxu0 0.0
    %2948 = vmatpush1.msra.mxu0 0.0
    %2949 = vmatprep.subr.mxu0 0.0
    %2950 = vmatpush1.msra.mxu0 0.0
    %2951 = vmatprep.mubr.f32.mxu0 0.0
    %2952 = vmatmul.mubr.f32.gmra.mrb[0].mxu0 %v1141
    %v2953 = vpop.f32.mrb[0].mxu0
    %v2954 = vadd.f32 0.0, %v2953
    %v2955 = vpop.f32.mrb[0].mxu0
    %2956 = vmatprep.mubr.f32.mxu0 0.0
    %2957 = vmatmul.mubr.f32.gmra.mrb[0].mxu0 %v1143
    %v2958 = vpop.f32.mrb[0].mxu0
    %v2959 = vadd.f32 0.0, %v2958
    %v2960 = vpop.f32.mrb[0].mxu0
    %2961 = vmatprep.mubr.f32.mxu0 0.0
    %2962 = vmatmul.mubr.f32.gmra.mrb[0].mxu0 %v1145
    %v2963 = vpop.f32.mrb[0].mxu0
    %v2964 = vadd.f32 0.0, %v2963
    %v2965 = vpop.f32.mrb[0].mxu0
    %2966 = vmatprep.mubr.f32.mxu0 0.0
    %2967 = vmatmul.mubr.f32.gmra.mrb[0].mxu0 %v1147
    %v2968 = vpop.f32.mrb[0].mxu0
    %v2969 = vadd.f32 0.0, %v2968
    %v2970 = vpop.f32.mrb[0].mxu0
    %2971 = vmatprep.mubr.f32.mxu0 0.0
    %2972 = vmatmul.mubr.f32.gmra.mrb[0].mxu0 %v1149
    %v2973 = vpop.f32.mrb[0].mxu0
    %v2974 = vadd.f32 0.0, %v2973
    %v2975 = vpop.f32.mrb[0].mxu0
    %2976 = vmatprep.mubr.f32.mxu0 0.0
    %2977 = vmatmul.mubr.f32.gmra.mrb[0].mxu0 %v1151
    %v2978 = vpop.f32.mrb[0].mxu0
    %v2979 = vadd.f32 0.0, %v2978
    %v2980 = vpop.f32.mrb[0].mxu0
    %2981 = vmatprep.mubr.f32.mxu0 0.0
    %2982 = vmatmul.mubr.f32.gmra.mrb[0].mxu0 %v1153
    %v2983 = vpop.f32.mrb[0].mxu0
    %v2984 = vadd.f32 0.0, %v2983
    %v2985 = vpop.f32.mrb[0].mxu0
    %2986 = vmatprep.mubr.f32.mxu0 0.0
    %2987 = vmatmul.mubr.f32.gmra.mrb[0].mxu0 %v1155
    %v2988 = vpop.f32.mrb[0].mxu0
    %v2989 = vadd.f32 0.0, %v2988
    %v2990 = vpop.f32.mrb[0].mxu0
    %2991 = vmatprep.mubr.f32.mxu0 0.0
    %2992 = vmatmul.mubr.f32.gmra.mrb[0].mxu0 %v1157
    %v2993 = vpop.f32.mrb[0].mxu0
    %v2994 = vadd.f32 0.0, %v2993
    %v2995 = vpop.f32.mrb[0].mxu0
    %2996 = vmatprep.mubr.f32.mxu0 0.0
    %2997 = vmatmul.mubr.f32.gmra.mrb[0].mxu0 %v1159
    %v2998 = vpop.f32.mrb[0].mxu0
    %v2999 = vadd.f32 0.0, %v2998
    %v3000 = vpop.f32.mrb[0].mxu0
    %3001 = vmatprep.mubr.f32.mxu0 0.0
    %3002 = vmatmul.mubr.f32.gmra.mrb[0].mxu0 %v2756
    %v3003 = vpop.f32.mrb[0].mxu0
    %v3004 = vpop.f32.mrb[0].mxu0
    %3005 = vdwg.mxu0
    %v3006 = vadd.f32 %v2677, %v2825
    %v3007 = vadd.f32 %v2678, %v2827
    %v3008 = vadd.f32 %v2679, %v2954
    %v3009 = vadd.f32 %v2680, %v2831
    %v3010 = vadd.f32 %v2681, %v2833
    %v3011 = vadd.f32 %v2682, %v2959
    %v3012 = vadd.f32 %v2683, %v2837
    %v3013 = vadd.f32 %v2684, %v2839
    %v3014 = vadd.f32 %v2685, %v2964
    %v3015 = vadd.f32 %v2686, %v2843
    %v3016 = vadd.f32 %v2687, %v2845
    %v3017 = vadd.f32 %v2688, %v2969
    %v3018 = vadd.f32 %v2689, %v2849
    %v3019 = vadd.f32 %v2690, %v2851
    %v3020 = vadd.f32 %v2691, %v2974
    %v3021 = vadd.f32 %v2692, %v2855
    %v3022 = vadd.f32 %v2693, %v2857
    %v3023 = vadd.f32 %v2694, %v2979
    %v3024 = vadd.f32 %v2695, %v2861
    %v3025 = vadd.f32 %v2696, %v2863
    %v3026 = vadd.f32 %v2697, %v2984
    %v3027 = vadd.f32 %v2698, %v2867
    %v3028 = vadd.f32 %v2699, %v2869
    %v3029 = vadd.f32 %v2700, %v2989
    %v3030 = vadd.f32 %v2701, %v2873
    %v3031 = vadd.f32 %v2702, %v2875
    %v3032 = vadd.f32 %v2703, %v2994
    %v3033 = vadd.f32 %v2704, %v2879
    %v3034 = vadd.f32 %v2705, %v2881
    %v3035 = vadd.f32 %v2706, %v2999
    %v3036 = vld [vmem:[%s0 + $0x2d] sm:$0x1]
    %v3037 = vld [vmem:[%s0 + $0x5d] sm:$0x1]
    %v3038 = vld [vmem:[%s0 + $0x8d] sm:$0x1]
    %v3039 = vld [vmem:[%s0 + $0xbd] sm:$0x1]
    %v3040 = vld [vmem:[%s0 + $0xed] sm:$0x1]
    %v3041 = vld [vmem:[%s0 + $0x11d] sm:$0x1]
    %v3042 = vld [vmem:[%s0 + $0x14d] sm:$0x1]
    %v3043 = vld [vmem:[%s0 + $0x17d] sm:$0x1]
    %v3052 = vrot.slane %v3037, 7
    %v3053 = vsel %vm261, %v3052, %v3036
    %v3054 = vrot.slane %v3038, 6
    %v3055 = vsel %vm264, %v3054, %v3053
    %v3056 = vrot.slane %v3039, 5
    %v3057 = vsel %vm267, %v3056, %v3055
    %v3058 = vrot.slane %v3040, 4
    %v3059 = vsel %vm270, %v3058, %v3057
    %v3060 = vrot.slane %v3041, 3
    %v3061 = vsel %vm273, %v3060, %v3059
    %v3062 = vrot.slane %v3042, 2
    %v3063 = vsel %vm276, %v3062, %v3061
    %v3064 = vrot.slane %v3043, 1
    %v3065 = vsel %vm279, %v3064, %v3063
    %s3066 = scalar_lea.vmem [#allocation2], 720
    %v3067 = vld [vmem:[%s3066] sm:$0xff]
    %v3068 = vld [vmem:[%s3066 + $0x8] sm:$0xff]
    %v3069 = vld [vmem:[%s3066 + $0x10] sm:$0xff]
    %v3070 = vld [vmem:[%s3066 + $0x18] sm:$0xff]
    %v3071 = vld [vmem:[%s3066 + $0x20] sm:$0xff]
    %v3072 = vld [vmem:[%s3066 + $0x28] sm:$0xff]
    %v3073 = vld [vmem:[%s3066 + $0x30] sm:$0xff]
    %v3074 = vld [vmem:[%s3066 + $0x38] sm:$0xff]
    %v3075 = vld [vmem:[%s3066 + $0x40] sm:$0xff]
    %v3076 = vld [vmem:[%s3066 + $0x48] sm:$0xff]
    %v3077 = vld [vmem:[%s3066 + $0x50] sm:$0xff]
    %v3078 = vld [vmem:[%s3066 + $0x58] sm:$0xff]
    %v3079 = vld [vmem:[%s3066 + $0x60] sm:$0xff]
    %v3080 = vld [vmem:[%s3066 + $0x68] sm:$0xff]
    %v3081 = vld [vmem:[%s3066 + $0x70] sm:$0xff]
    %v3082 = vld [vmem:[%s3066 + $0x78] sm:$0xff]
    %v3083 = vld [vmem:[%s3066 + $0x80] sm:$0xff]
    %v3084 = vld [vmem:[%s3066 + $0x88] sm:$0xff]
    %v3085 = vsel %vm868, %v3065, 0
    %3087 = vmatprep.subr.mxu0 %v3068
    %3088 = vmatpush1.msra.mxu0 %v3067
    %3089 = vmatprep.subr.mxu0 %v3071
    %3090 = vmatpush1.msra.mxu0 %v3070
    %3091 = vmatprep.subr.mxu0 %v3074
    %3092 = vmatpush1.msra.mxu0 %v3073
    %3093 = vmatprep.subr.mxu0 %v3077
    %3094 = vmatpush1.msra.mxu0 %v3076
    %3095 = vmatprep.subr.mxu0 %v3080
    %3096 = vmatpush1.msra.mxu0 %v3079
    %3097 = vmatprep.subr.mxu0 %v3083
    %3098 = vmatpush1.msra.mxu0 %v3082
    %3099 = vmatprep.subr.mxu0 0.0
    %3100 = vmatpush1.msra.mxu0 0.0
    %3101 = vmatprep.subr.mxu0 0.0
    %3102 = vmatpush1.msra.mxu0 0.0
    %3103 = vmatprep.subr.mxu0 0.0
    %3104 = vmatpush1.msra.mxu0 0.0
    %3105 = vmatprep.subr.mxu0 0.0
    %3106 = vmatpush1.msra.mxu0 0.0
    %3107 = vmatprep.subr.mxu0 0.0
    %3108 = vmatpush1.msra.mxu0 0.0
    %3109 = vmatprep.subr.mxu0 0.0
    %3110 = vmatpush1.msra.mxu0 0.0
    %3111 = vmatprep.subr.mxu0 0.0
    %3112 = vmatpush1.msra.mxu0 0.0
    %3113 = vmatprep.subr.mxu0 0.0
    %3114 = vmatpush1.msra.mxu0 0.0
    %3115 = vmatprep.subr.mxu0 0.0
    %3116 = vmatpush1.msra.mxu0 0.0
    %3117 = vmatprep.subr.mxu0 0.0
    %3118 = vmatpush1.msra.mxu0 0.0
    %3119 = vmatprep.subr.mxu0 0.0
    %3120 = vmatpush1.msra.mxu0 0.0
    %3121 = vmatprep.subr.mxu0 0.0
    %3122 = vmatpush1.msra.mxu0 0.0
    %3123 = vmatprep.subr.mxu0 0.0
    %3124 = vmatpush1.msra.mxu0 0.0
    %3125 = vmatprep.subr.mxu0 0.0
    %3126 = vmatpush1.msra.mxu0 0.0
    %3127 = vmatprep.subr.mxu0 0.0
    %3128 = vmatpush1.msra.mxu0 0.0
    %3129 = vmatprep.subr.mxu0 0.0
    %3130 = vmatpush1.msra.mxu0 0.0
    %3131 = vmatprep.subr.mxu0 0.0
    %3132 = vmatpush1.msra.mxu0 0.0
    %3133 = vmatprep.subr.mxu0 0.0
    %3134 = vmatpush1.msra.mxu0 0.0
    %3135 = vmatprep.subr.mxu0 0.0
    %3136 = vmatpush1.msra.mxu0 0.0
    %3137 = vmatprep.subr.mxu0 0.0
    %3138 = vmatpush1.msra.mxu0 0.0
    %3139 = vmatprep.subr.mxu0 0.0
    %3140 = vmatpush1.msra.mxu0 0.0
    %3141 = vmatprep.subr.mxu0 0.0
    %3142 = vmatpush1.msra.mxu0 0.0
    %3143 = vmatprep.subr.mxu0 0.0
    %3144 = vmatpush1.msra.mxu0 0.0
    %3145 = vmatprep.subr.mxu0 0.0
    %3146 = vmatpush1.msra.mxu0 0.0
    %3147 = vmatprep.subr.mxu0 0.0
    %3148 = vmatpush1.msra.mxu0 0.0
    %3149 = vmatprep.subr.mxu0 0.0
    %3150 = vmatpush1.msra.mxu0 0.0
    %3151 = vmatprep.mubr.f32.mxu0 0.0
    %3152 = vmatmul.mubr.f32.gmra.mrb[0].mxu0 %v871
    %v3153 = vpop.f32.mrb[0].mxu0
    %v3154 = vadd.f32 0.0, %v3153
    %v3155 = vpop.f32.mrb[0].mxu0
    %v3156 = vadd.f32 0.0, %v3155
    %3157 = vmatprep.mubr.f32.mxu0 0.0
    %3158 = vmatmul.mubr.f32.gmra.mrb[0].mxu0 %v873
    %v3159 = vpop.f32.mrb[0].mxu0
    %v3160 = vadd.f32 0.0, %v3159
    %v3161 = vpop.f32.mrb[0].mxu0
    %v3162 = vadd.f32 0.0, %v3161
    %3163 = vmatprep.mubr.f32.mxu0 0.0
    %3164 = vmatmul.mubr.f32.gmra.mrb[0].mxu0 %v875
    %v3165 = vpop.f32.mrb[0].mxu0
    %v3166 = vadd.f32 0.0, %v3165
    %v3167 = vpop.f32.mrb[0].mxu0
    %v3168 = vadd.f32 0.0, %v3167
    %3169 = vmatprep.mubr.f32.mxu0 0.0
    %3170 = vmatmul.mubr.f32.gmra.mrb[0].mxu0 %v877
    %v3171 = vpop.f32.mrb[0].mxu0
    %v3172 = vadd.f32 0.0, %v3171
    %v3173 = vpop.f32.mrb[0].mxu0
    %v3174 = vadd.f32 0.0, %v3173
    %3175 = vmatprep.mubr.f32.mxu0 0.0
    %3176 = vmatmul.mubr.f32.gmra.mrb[0].mxu0 %v879
    %v3177 = vpop.f32.mrb[0].mxu0
    %v3178 = vadd.f32 0.0, %v3177
    %v3179 = vpop.f32.mrb[0].mxu0
    %v3180 = vadd.f32 0.0, %v3179
    %3181 = vmatprep.mubr.f32.mxu0 0.0
    %3182 = vmatmul.mubr.f32.gmra.mrb[0].mxu0 %v881
    %v3183 = vpop.f32.mrb[0].mxu0
    %v3184 = vadd.f32 0.0, %v3183
    %v3185 = vpop.f32.mrb[0].mxu0
    %v3186 = vadd.f32 0.0, %v3185
    %3187 = vmatprep.mubr.f32.mxu0 0.0
    %3188 = vmatmul.mubr.f32.gmra.mrb[0].mxu0 %v883
    %v3189 = vpop.f32.mrb[0].mxu0
    %v3190 = vadd.f32 0.0, %v3189
    %v3191 = vpop.f32.mrb[0].mxu0
    %v3192 = vadd.f32 0.0, %v3191
    %3193 = vmatprep.mubr.f32.mxu0 0.0
    %3194 = vmatmul.mubr.f32.gmra.mrb[0].mxu0 %v885
    %v3195 = vpop.f32.mrb[0].mxu0
    %v3196 = vadd.f32 0.0, %v3195
    %v3197 = vpop.f32.mrb[0].mxu0
    %v3198 = vadd.f32 0.0, %v3197
    %3199 = vmatprep.mubr.f32.mxu0 0.0
    %3200 = vmatmul.mubr.f32.gmra.mrb[0].mxu0 %v887
    %v3201 = vpop.f32.mrb[0].mxu0
    %v3202 = vadd.f32 0.0, %v3201
    %v3203 = vpop.f32.mrb[0].mxu0
    %v3204 = vadd.f32 0.0, %v3203
    %3205 = vmatprep.mubr.f32.mxu0 0.0
    %3206 = vmatmul.mubr.f32.gmra.mrb[0].mxu0 %v889
    %v3207 = vpop.f32.mrb[0].mxu0
    %v3208 = vadd.f32 0.0, %v3207
    %v3209 = vpop.f32.mrb[0].mxu0
    %v3210 = vadd.f32 0.0, %v3209
    %3211 = vmatprep.mubr.f32.mxu0 0.0
    %3212 = vmatmul.mubr.f32.gmra.mrb[0].mxu0 %v3085
    %v3213 = vpop.f32.mrb[0].mxu0
    %v3214 = vpop.f32.mrb[0].mxu0
    %3215 = vdwg.mxu0
    %3216 = vmatprep.subr.mxu0 0.0
    %3217 = vmatpush1.msra.mxu0 %v3069
    %3218 = vmatprep.subr.mxu0 0.0
    %3219 = vmatpush1.msra.mxu0 %v3072
    %3220 = vmatprep.subr.mxu0 0.0
    %3221 = vmatpush1.msra.mxu0 %v3075
    %3222 = vmatprep.subr.mxu0 0.0
    %3223 = vmatpush1.msra.mxu0 %v3078
    %3224 = vmatprep.subr.mxu0 0.0
    %3225 = vmatpush1.msra.mxu0 %v3081
    %3226 = vmatprep.subr.mxu0 0.0
    %3227 = vmatpush1.msra.mxu0 %v3084
    %3228 = vmatprep.subr.mxu0 0.0
    %3229 = vmatpush1.msra.mxu0 0.0
    %3230 = vmatprep.subr.mxu0 0.0
    %3231 = vmatpush1.msra.mxu0 0.0
    %3232 = vmatprep.subr.mxu0 0.0
    %3233 = vmatpush1.msra.mxu0 0.0
    %3234 = vmatprep.subr.mxu0 0.0
    %3235 = vmatpush1.msra.mxu0 0.0
    %3236 = vmatprep.subr.mxu0 0.0
    %3237 = vmatpush1.msra.mxu0 0.0
    %3238 = vmatprep.subr.mxu0 0.0
    %3239 = vmatpush1.msra.mxu0 0.0
    %3240 = vmatprep.subr.mxu0 0.0
    %3241 = vmatpush1.msra.mxu0 0.0
    %3242 = vmatprep.subr.mxu0 0.0
    %3243 = vmatpush1.msra.mxu0 0.0
    %3244 = vmatprep.subr.mxu0 0.0
    %3245 = vmatpush1.msra.mxu0 0.0
    %3246 = vmatprep.subr.mxu0 0.0
    %3247 = vmatpush1.msra.mxu0 0.0
    %3248 = vmatprep.subr.mxu0 0.0
    %3249 = vmatpush1.msra.mxu0 0.0
    %3250 = vmatprep.subr.mxu0 0.0
    %3251 = vmatpush1.msra.mxu0 0.0
    %3252 = vmatprep.subr.mxu0 0.0
    %3253 = vmatpush1.msra.mxu0 0.0
    %3254 = vmatprep.subr.mxu0 0.0
    %3255 = vmatpush1.msra.mxu0 0.0
    %3256 = vmatprep.subr.mxu0 0.0
    %3257 = vmatpush1.msra.mxu0 0.0
    %3258 = vmatprep.subr.mxu0 0.0
    %3259 = vmatpush1.msra.mxu0 0.0
    %3260 = vmatprep.subr.mxu0 0.0
    %3261 = vmatpush1.msra.mxu0 0.0
    %3262 = vmatprep.subr.mxu0 0.0
    %3263 = vmatpush1.msra.mxu0 0.0
    %3264 = vmatprep.subr.mxu0 0.0
    %3265 = vmatpush1.msra.mxu0 0.0
    %3266 = vmatprep.subr.mxu0 0.0
    %3267 = vmatpush1.msra.mxu0 0.0
    %3268 = vmatprep.subr.mxu0 0.0
    %3269 = vmatpush1.msra.mxu0 0.0
    %3270 = vmatprep.subr.mxu0 0.0
    %3271 = vmatpush1.msra.mxu0 0.0
    %3272 = vmatprep.subr.mxu0 0.0
    %3273 = vmatpush1.msra.mxu0 0.0
    %3274 = vmatprep.subr.mxu0 0.0
    %3275 = vmatpush1.msra.mxu0 0.0
    %3276 = vmatprep.subr.mxu0 0.0
    %3277 = vmatpush1.msra.mxu0 0.0
    %3278 = vmatprep.subr.mxu0 0.0
    %3279 = vmatpush1.msra.mxu0 0.0
    %3280 = vmatprep.mubr.f32.mxu0 0.0
    %3281 = vmatmul.mubr.f32.gmra.mrb[0].mxu0 %v871
    %v3282 = vpop.f32.mrb[0].mxu0
    %v3283 = vadd.f32 0.0, %v3282
    %v3284 = vpop.f32.mrb[0].mxu0
    %3285 = vmatprep.mubr.f32.mxu0 0.0
    %3286 = vmatmul.mubr.f32.gmra.mrb[0].mxu0 %v873
    %v3287 = vpop.f32.mrb[0].mxu0
    %v3288 = vadd.f32 0.0, %v3287
    %v3289 = vpop.f32.mrb[0].mxu0
    %3290 = vmatprep.mubr.f32.mxu0 0.0
    %3291 = vmatmul.mubr.f32.gmra.mrb[0].mxu0 %v875
    %v3292 = vpop.f32.mrb[0].mxu0
    %v3293 = vadd.f32 0.0, %v3292
    %v3294 = vpop.f32.mrb[0].mxu0
    %3295 = vmatprep.mubr.f32.mxu0 0.0
    %3296 = vmatmul.mubr.f32.gmra.mrb[0].mxu0 %v877
    %v3297 = vpop.f32.mrb[0].mxu0
    %v3298 = vadd.f32 0.0, %v3297
    %v3299 = vpop.f32.mrb[0].mxu0
    %3300 = vmatprep.mubr.f32.mxu0 0.0
    %3301 = vmatmul.mubr.f32.gmra.mrb[0].mxu0 %v879
    %v3302 = vpop.f32.mrb[0].mxu0
    %v3303 = vadd.f32 0.0, %v3302
    %v3304 = vpop.f32.mrb[0].mxu0
    %3305 = vmatprep.mubr.f32.mxu0 0.0
    %3306 = vmatmul.mubr.f32.gmra.mrb[0].mxu0 %v881
    %v3307 = vpop.f32.mrb[0].mxu0
    %v3308 = vadd.f32 0.0, %v3307
    %v3309 = vpop.f32.mrb[0].mxu0
    %3310 = vmatprep.mubr.f32.mxu0 0.0
    %3311 = vmatmul.mubr.f32.gmra.mrb[0].mxu0 %v883
    %v3312 = vpop.f32.mrb[0].mxu0
    %v3313 = vadd.f32 0.0, %v3312
    %v3314 = vpop.f32.mrb[0].mxu0
    %3315 = vmatprep.mubr.f32.mxu0 0.0
    %3316 = vmatmul.mubr.f32.gmra.mrb[0].mxu0 %v885
    %v3317 = vpop.f32.mrb[0].mxu0
    %v3318 = vadd.f32 0.0, %v3317
    %v3319 = vpop.f32.mrb[0].mxu0
    %3320 = vmatprep.mubr.f32.mxu0 0.0
    %3321 = vmatmul.mubr.f32.gmra.mrb[0].mxu0 %v887
    %v3322 = vpop.f32.mrb[0].mxu0
    %v3323 = vadd.f32 0.0, %v3322
    %v3324 = vpop.f32.mrb[0].mxu0
    %3325 = vmatprep.mubr.f32.mxu0 0.0
    %3326 = vmatmul.mubr.f32.gmra.mrb[0].mxu0 %v889
    %v3327 = vpop.f32.mrb[0].mxu0
    %v3328 = vadd.f32 0.0, %v3327
    %v3329 = vpop.f32.mrb[0].mxu0
    %3330 = vmatprep.mubr.f32.mxu0 0.0
    %3331 = vmatmul.mubr.f32.gmra.mrb[0].mxu0 %v3085
    %v3332 = vpop.f32.mrb[0].mxu0
    %v3333 = vpop.f32.mrb[0].mxu0
    %3334 = vdwg.mxu0
    %v3335 = vadd.f32 %v3006, %v3154
    %v3336 = vadd.f32 %v3007, %v3156
    %v3337 = vadd.f32 %v3008, %v3283
    %v3338 = vadd.f32 %v3009, %v3160
    %v3339 = vadd.f32 %v3010, %v3162
    %v3340 = vadd.f32 %v3011, %v3288
    %v3341 = vadd.f32 %v3012, %v3166
    %v3342 = vadd.f32 %v3013, %v3168
    %v3343 = vadd.f32 %v3014, %v3293
    %v3344 = vadd.f32 %v3015, %v3172
    %v3345 = vadd.f32 %v3016, %v3174
    %v3346 = vadd.f32 %v3017, %v3298
    %v3347 = vadd.f32 %v3018, %v3178
    %v3348 = vadd.f32 %v3019, %v3180
    %v3349 = vadd.f32 %v3020, %v3303
    %v3350 = vadd.f32 %v3021, %v3184
    %v3351 = vadd.f32 %v3022, %v3186
    %v3352 = vadd.f32 %v3023, %v3308
    %v3353 = vadd.f32 %v3024, %v3190
    %v3354 = vadd.f32 %v3025, %v3192
    %v3355 = vadd.f32 %v3026, %v3313
    %v3356 = vadd.f32 %v3027, %v3196
    %v3357 = vadd.f32 %v3028, %v3198
    %v3358 = vadd.f32 %v3029, %v3318
    %v3359 = vadd.f32 %v3030, %v3202
    %v3360 = vadd.f32 %v3031, %v3204
    %v3361 = vadd.f32 %v3032, %v3323
    %v3362 = vadd.f32 %v3033, %v3208
    %v3363 = vadd.f32 %v3034, %v3210
    %v3364 = vadd.f32 %v3035, %v3328
    %v3365 = vld [vmem:[%s0 + $0x2e] sm:$0x1]
    %v3366 = vld [vmem:[%s0 + $0x5e] sm:$0x1]
    %v3367 = vld [vmem:[%s0 + $0x8e] sm:$0x1]
    %v3368 = vld [vmem:[%s0 + $0xbe] sm:$0x1]
    %v3369 = vld [vmem:[%s0 + $0xee] sm:$0x1]
    %v3370 = vld [vmem:[%s0 + $0x11e] sm:$0x1]
    %v3371 = vld [vmem:[%s0 + $0x14e] sm:$0x1]
    %v3372 = vld [vmem:[%s0 + $0x17e] sm:$0x1]
    %v3381 = vrot.slane %v3366, 7
    %v3382 = vsel %vm261, %v3381, %v3365
    %v3383 = vrot.slane %v3367, 6
    %v3384 = vsel %vm264, %v3383, %v3382
    %v3385 = vrot.slane %v3368, 5
    %v3386 = vsel %vm267, %v3385, %v3384
    %v3387 = vrot.slane %v3369, 4
    %v3388 = vsel %vm270, %v3387, %v3386
    %v3389 = vrot.slane %v3370, 3
    %v3390 = vsel %vm273, %v3389, %v3388
    %v3391 = vrot.slane %v3371, 2
    %v3392 = vsel %vm276, %v3391, %v3390
    %v3393 = vrot.slane %v3372, 1
    %v3394 = vsel %vm279, %v3393, %v3392
    %s3395 = scalar_lea.vmem [#allocation2], 864
    %v3396 = vld [vmem:[%s3395] sm:$0xff]
    %v3397 = vld [vmem:[%s3395 + $0x8] sm:$0xff]
    %v3398 = vld [vmem:[%s3395 + $0x10] sm:$0xff]
    %v3399 = vld [vmem:[%s3395 + $0x18] sm:$0xff]
    %v3400 = vld [vmem:[%s3395 + $0x20] sm:$0xff]
    %v3401 = vld [vmem:[%s3395 + $0x28] sm:$0xff]
    %v3402 = vld [vmem:[%s3395 + $0x30] sm:$0xff]
    %v3403 = vld [vmem:[%s3395 + $0x38] sm:$0xff]
    %v3404 = vld [vmem:[%s3395 + $0x40] sm:$0xff]
    %v3405 = vld [vmem:[%s3395 + $0x48] sm:$0xff]
    %v3406 = vld [vmem:[%s3395 + $0x50] sm:$0xff]
    %v3407 = vld [vmem:[%s3395 + $0x58] sm:$0xff]
    %v3408 = vld [vmem:[%s3395 + $0x60] sm:$0xff]
    %v3409 = vld [vmem:[%s3395 + $0x68] sm:$0xff]
    %v3410 = vld [vmem:[%s3395 + $0x70] sm:$0xff]
    %v3411 = vld [vmem:[%s3395 + $0x78] sm:$0xff]
    %v3412 = vld [vmem:[%s3395 + $0x80] sm:$0xff]
    %v3413 = vld [vmem:[%s3395 + $0x88] sm:$0xff]
    %v3414 = vsel %vm868, %v3394, 0
    %3416 = vmatprep.subr.mxu0 %v3397
    %3417 = vmatpush1.msra.mxu0 %v3396
    %3418 = vmatprep.subr.mxu0 %v3400
    %3419 = vmatpush1.msra.mxu0 %v3399
    %3420 = vmatprep.subr.mxu0 %v3403
    %3421 = vmatpush1.msra.mxu0 %v3402
    %3422 = vmatprep.subr.mxu0 %v3406
    %3423 = vmatpush1.msra.mxu0 %v3405
    %3424 = vmatprep.subr.mxu0 %v3409
    %3425 = vmatpush1.msra.mxu0 %v3408
    %3426 = vmatprep.subr.mxu0 %v3412
    %3427 = vmatpush1.msra.mxu0 %v3411
    %3428 = vmatprep.subr.mxu0 0.0
    %3429 = vmatpush1.msra.mxu0 0.0
    %3430 = vmatprep.subr.mxu0 0.0
    %3431 = vmatpush1.msra.mxu0 0.0
    %3432 = vmatprep.subr.mxu0 0.0
    %3433 = vmatpush1.msra.mxu0 0.0
    %3434 = vmatprep.subr.mxu0 0.0
    %3435 = vmatpush1.msra.mxu0 0.0
    %3436 = vmatprep.subr.mxu0 0.0
    %3437 = vmatpush1.msra.mxu0 0.0
    %3438 = vmatprep.subr.mxu0 0.0
    %3439 = vmatpush1.msra.mxu0 0.0
    %3440 = vmatprep.subr.mxu0 0.0
    %3441 = vmatpush1.msra.mxu0 0.0
    %3442 = vmatprep.subr.mxu0 0.0
    %3443 = vmatpush1.msra.mxu0 0.0
    %3444 = vmatprep.subr.mxu0 0.0
    %3445 = vmatpush1.msra.mxu0 0.0
    %3446 = vmatprep.subr.mxu0 0.0
    %3447 = vmatpush1.msra.mxu0 0.0
    %3448 = vmatprep.subr.mxu0 0.0
    %3449 = vmatpush1.msra.mxu0 0.0
    %3450 = vmatprep.subr.mxu0 0.0
    %3451 = vmatpush1.msra.mxu0 0.0
    %3452 = vmatprep.subr.mxu0 0.0
    %3453 = vmatpush1.msra.mxu0 0.0
    %3454 = vmatprep.subr.mxu0 0.0
    %3455 = vmatpush1.msra.mxu0 0.0
    %3456 = vmatprep.subr.mxu0 0.0
    %3457 = vmatpush1.msra.mxu0 0.0
    %3458 = vmatprep.subr.mxu0 0.0
    %3459 = vmatpush1.msra.mxu0 0.0
    %3460 = vmatprep.subr.mxu0 0.0
    %3461 = vmatpush1.msra.mxu0 0.0
    %3462 = vmatprep.subr.mxu0 0.0
    %3463 = vmatpush1.msra.mxu0 0.0
    %3464 = vmatprep.subr.mxu0 0.0
    %3465 = vmatpush1.msra.mxu0 0.0
    %3466 = vmatprep.subr.mxu0 0.0
    %3467 = vmatpush1.msra.mxu0 0.0
    %3468 = vmatprep.subr.mxu0 0.0
    %3469 = vmatpush1.msra.mxu0 0.0
    %3470 = vmatprep.subr.mxu0 0.0
    %3471 = vmatpush1.msra.mxu0 0.0
    %3472 = vmatprep.subr.mxu0 0.0
    %3473 = vmatpush1.msra.mxu0 0.0
    %3474 = vmatprep.subr.mxu0 0.0
    %3475 = vmatpush1.msra.mxu0 0.0
    %3476 = vmatprep.subr.mxu0 0.0
    %3477 = vmatpush1.msra.mxu0 0.0
    %3478 = vmatprep.subr.mxu0 0.0
    %3479 = vmatpush1.msra.mxu0 0.0
    %3480 = vmatprep.mubr.f32.mxu0 0.0
    %3481 = vmatmul.mubr.f32.gmra.mrb[0].mxu0 %v1760
    %v3482 = vpop.f32.mrb[0].mxu0
    %v3483 = vadd.f32 0.0, %v3482
    %v3484 = vpop.f32.mrb[0].mxu0
    %v3485 = vadd.f32 0.0, %v3484
    %3486 = vmatprep.mubr.f32.mxu0 0.0
    %3487 = vmatmul.mubr.f32.gmra.mrb[0].mxu0 %v1762
    %v3488 = vpop.f32.mrb[0].mxu0
    %v3489 = vadd.f32 0.0, %v3488
    %v3490 = vpop.f32.mrb[0].mxu0
    %v3491 = vadd.f32 0.0, %v3490
    %3492 = vmatprep.mubr.f32.mxu0 0.0
    %3493 = vmatmul.mubr.f32.gmra.mrb[0].mxu0 %v1764
    %v3494 = vpop.f32.mrb[0].mxu0
    %v3495 = vadd.f32 0.0, %v3494
    %v3496 = vpop.f32.mrb[0].mxu0
    %v3497 = vadd.f32 0.0, %v3496
    %3498 = vmatprep.mubr.f32.mxu0 0.0
    %3499 = vmatmul.mubr.f32.gmra.mrb[0].mxu0 %v1766
    %v3500 = vpop.f32.mrb[0].mxu0
    %v3501 = vadd.f32 0.0, %v3500
    %v3502 = vpop.f32.mrb[0].mxu0
    %v3503 = vadd.f32 0.0, %v3502
    %3504 = vmatprep.mubr.f32.mxu0 0.0
    %3505 = vmatmul.mubr.f32.gmra.mrb[0].mxu0 %v1768
    %v3506 = vpop.f32.mrb[0].mxu0
    %v3507 = vadd.f32 0.0, %v3506
    %v3508 = vpop.f32.mrb[0].mxu0
    %v3509 = vadd.f32 0.0, %v3508
    %3510 = vmatprep.mubr.f32.mxu0 0.0
    %3511 = vmatmul.mubr.f32.gmra.mrb[0].mxu0 %v1770
    %v3512 = vpop.f32.mrb[0].mxu0
    %v3513 = vadd.f32 0.0, %v3512
    %v3514 = vpop.f32.mrb[0].mxu0
    %v3515 = vadd.f32 0.0, %v3514
    %3516 = vmatprep.mubr.f32.mxu0 0.0
    %3517 = vmatmul.mubr.f32.gmra.mrb[0].mxu0 %v1772
    %v3518 = vpop.f32.mrb[0].mxu0
    %v3519 = vadd.f32 0.0, %v3518
    %v3520 = vpop.f32.mrb[0].mxu0
    %v3521 = vadd.f32 0.0, %v3520
    %3522 = vmatprep.mubr.f32.mxu0 0.0
    %3523 = vmatmul.mubr.f32.gmra.mrb[0].mxu0 %v1774
    %v3524 = vpop.f32.mrb[0].mxu0
    %v3525 = vadd.f32 0.0, %v3524
    %v3526 = vpop.f32.mrb[0].mxu0
    %v3527 = vadd.f32 0.0, %v3526
    %3528 = vmatprep.mubr.f32.mxu0 0.0
    %3529 = vmatmul.mubr.f32.gmra.mrb[0].mxu0 %v1776
    %v3530 = vpop.f32.mrb[0].mxu0
    %v3531 = vadd.f32 0.0, %v3530
    %v3532 = vpop.f32.mrb[0].mxu0
    %v3533 = vadd.f32 0.0, %v3532
    %3534 = vmatprep.mubr.f32.mxu0 0.0
    %3535 = vmatmul.mubr.f32.gmra.mrb[0].mxu0 %v1778
    %v3536 = vpop.f32.mrb[0].mxu0
    %v3537 = vadd.f32 0.0, %v3536
    %v3538 = vpop.f32.mrb[0].mxu0
    %v3539 = vadd.f32 0.0, %v3538
    %3540 = vmatprep.mubr.f32.mxu0 0.0
    %3541 = vmatmul.mubr.f32.gmra.mrb[0].mxu0 %v3414
    %v3542 = vpop.f32.mrb[0].mxu0
    %v3543 = vpop.f32.mrb[0].mxu0
    %3544 = vdwg.mxu0
    %3545 = vmatprep.subr.mxu0 0.0
    %3546 = vmatpush1.msra.mxu0 %v3398
    %3547 = vmatprep.subr.mxu0 0.0
    %3548 = vmatpush1.msra.mxu0 %v3401
    %3549 = vmatprep.subr.mxu0 0.0
    %3550 = vmatpush1.msra.mxu0 %v3404
    %3551 = vmatprep.subr.mxu0 0.0
    %3552 = vmatpush1.msra.mxu0 %v3407
    %3553 = vmatprep.subr.mxu0 0.0
    %3554 = vmatpush1.msra.mxu0 %v3410
    %3555 = vmatprep.subr.mxu0 0.0
    %3556 = vmatpush1.msra.mxu0 %v3413
    %3557 = vmatprep.subr.mxu0 0.0
    %3558 = vmatpush1.msra.mxu0 0.0
    %3559 = vmatprep.subr.mxu0 0.0
    %3560 = vmatpush1.msra.mxu0 0.0
    %3561 = vmatprep.subr.mxu0 0.0
    %3562 = vmatpush1.msra.mxu0 0.0
    %3563 = vmatprep.subr.mxu0 0.0
    %3564 = vmatpush1.msra.mxu0 0.0
    %3565 = vmatprep.subr.mxu0 0.0
    %3566 = vmatpush1.msra.mxu0 0.0
    %3567 = vmatprep.subr.mxu0 0.0
    %3568 = vmatpush1.msra.mxu0 0.0
    %3569 = vmatprep.subr.mxu0 0.0
    %3570 = vmatpush1.msra.mxu0 0.0
    %3571 = vmatprep.subr.mxu0 0.0
    %3572 = vmatpush1.msra.mxu0 0.0
    %3573 = vmatprep.subr.mxu0 0.0
    %3574 = vmatpush1.msra.mxu0 0.0
    %3575 = vmatprep.subr.mxu0 0.0
    %3576 = vmatpush1.msra.mxu0 0.0
    %3577 = vmatprep.subr.mxu0 0.0
    %3578 = vmatpush1.msra.mxu0 0.0
    %3579 = vmatprep.subr.mxu0 0.0
    %3580 = vmatpush1.msra.mxu0 0.0
    %3581 = vmatprep.subr.mxu0 0.0
    %3582 = vmatpush1.msra.mxu0 0.0
    %3583 = vmatprep.subr.mxu0 0.0
    %3584 = vmatpush1.msra.mxu0 0.0
    %3585 = vmatprep.subr.mxu0 0.0
    %3586 = vmatpush1.msra.mxu0 0.0
    %3587 = vmatprep.subr.mxu0 0.0
    %3588 = vmatpush1.msra.mxu0 0.0
    %3589 = vmatprep.subr.mxu0 0.0
    %3590 = vmatpush1.msra.mxu0 0.0
    %3591 = vmatprep.subr.mxu0 0.0
    %3592 = vmatpush1.msra.mxu0 0.0
    %3593 = vmatprep.subr.mxu0 0.0
    %3594 = vmatpush1.msra.mxu0 0.0
    %3595 = vmatprep.subr.mxu0 0.0
    %3596 = vmatpush1.msra.mxu0 0.0
    %3597 = vmatprep.subr.mxu0 0.0
    %3598 = vmatpush1.msra.mxu0 0.0
    %3599 = vmatprep.subr.mxu0 0.0
    %3600 = vmatpush1.msra.mxu0 0.0
    %3601 = vmatprep.subr.mxu0 0.0
    %3602 = vmatpush1.msra.mxu0 0.0
    %3603 = vmatprep.subr.mxu0 0.0
    %3604 = vmatpush1.msra.mxu0 0.0
    %3605 = vmatprep.subr.mxu0 0.0
    %3606 = vmatpush1.msra.mxu0 0.0
    %3607 = vmatprep.subr.mxu0 0.0
    %3608 = vmatpush1.msra.mxu0 0.0
    %3609 = vmatprep.mubr.f32.mxu0 0.0
    %3610 = vmatmul.mubr.f32.gmra.mrb[0].mxu0 %v1760
    %v3611 = vpop.f32.mrb[0].mxu0
    %v3612 = vadd.f32 0.0, %v3611
    %v3613 = vpop.f32.mrb[0].mxu0
    %3614 = vmatprep.mubr.f32.mxu0 0.0
    %3615 = vmatmul.mubr.f32.gmra.mrb[0].mxu0 %v1762
    %v3616 = vpop.f32.mrb[0].mxu0
    %v3617 = vadd.f32 0.0, %v3616
    %v3618 = vpop.f32.mrb[0].mxu0
    %3619 = vmatprep.mubr.f32.mxu0 0.0
    %3620 = vmatmul.mubr.f32.gmra.mrb[0].mxu0 %v1764
    %v3621 = vpop.f32.mrb[0].mxu0
    %v3622 = vadd.f32 0.0, %v3621
    %v3623 = vpop.f32.mrb[0].mxu0
    %3624 = vmatprep.mubr.f32.mxu0 0.0
    %3625 = vmatmul.mubr.f32.gmra.mrb[0].mxu0 %v1766
    %v3626 = vpop.f32.mrb[0].mxu0
    %v3627 = vadd.f32 0.0, %v3626
    %v3628 = vpop.f32.mrb[0].mxu0
    %3629 = vmatprep.mubr.f32.mxu0 0.0
    %3630 = vmatmul.mubr.f32.gmra.mrb[0].mxu0 %v1768
    %v3631 = vpop.f32.mrb[0].mxu0
    %v3632 = vadd.f32 0.0, %v3631
    %v3633 = vpop.f32.mrb[0].mxu0
    %3634 = vmatprep.mubr.f32.mxu0 0.0
    %3635 = vmatmul.mubr.f32.gmra.mrb[0].mxu0 %v1770
    %v3636 = vpop.f32.mrb[0].mxu0
    %v3637 = vadd.f32 0.0, %v3636
    %v3638 = vpop.f32.mrb[0].mxu0
    %3639 = vmatprep.mubr.f32.mxu0 0.0
    %3640 = vmatmul.mubr.f32.gmra.mrb[0].mxu0 %v1772
    %v3641 = vpop.f32.mrb[0].mxu0
    %v3642 = vadd.f32 0.0, %v3641
    %v3643 = vpop.f32.mrb[0].mxu0
    %3644 = vmatprep.mubr.f32.mxu0 0.0
    %3645 = vmatmul.mubr.f32.gmra.mrb[0].mxu0 %v1774
    %v3646 = vpop.f32.mrb[0].mxu0
    %v3647 = vadd.f32 0.0, %v3646
    %v3648 = vpop.f32.mrb[0].mxu0
    %3649 = vmatprep.mubr.f32.mxu0 0.0
    %3650 = vmatmul.mubr.f32.gmra.mrb[0].mxu0 %v1776
    %v3651 = vpop.f32.mrb[0].mxu0
    %v3652 = vadd.f32 0.0, %v3651
    %v3653 = vpop.f32.mrb[0].mxu0
    %3654 = vmatprep.mubr.f32.mxu0 0.0
    %3655 = vmatmul.mubr.f32.gmra.mrb[0].mxu0 %v1778
    %v3656 = vpop.f32.mrb[0].mxu0
    %v3657 = vadd.f32 0.0, %v3656
    %v3658 = vpop.f32.mrb[0].mxu0
    %3659 = vmatprep.mubr.f32.mxu0 0.0
    %3660 = vmatmul.mubr.f32.gmra.mrb[0].mxu0 %v3414
    %v3661 = vpop.f32.mrb[0].mxu0
    %v3662 = vpop.f32.mrb[0].mxu0
    %3663 = vdwg.mxu0
    %v3664 = vadd.f32 %v3335, %v3483
    %v3665 = vadd.f32 %v3336, %v3485
    %v3666 = vadd.f32 %v3337, %v3612
    %v3667 = vadd.f32 %v3338, %v3489
    %v3668 = vadd.f32 %v3339, %v3491
    %v3669 = vadd.f32 %v3340, %v3617
    %v3670 = vadd.f32 %v3341, %v3495
    %v3671 = vadd.f32 %v3342, %v3497
    %v3672 = vadd.f32 %v3343, %v3622
    %v3673 = vadd.f32 %v3344, %v3501
    %v3674 = vadd.f32 %v3345, %v3503
    %v3675 = vadd.f32 %v3346, %v3627
    %v3676 = vadd.f32 %v3347, %v3507
    %v3677 = vadd.f32 %v3348, %v3509
    %v3678 = vadd.f32 %v3349, %v3632
    %v3679 = vadd.f32 %v3350, %v3513
    %v3680 = vadd.f32 %v3351, %v3515
    %v3681 = vadd.f32 %v3352, %v3637
    %v3682 = vadd.f32 %v3353, %v3519
    %v3683 = vadd.f32 %v3354, %v3521
    %v3684 = vadd.f32 %v3355, %v3642
    %v3685 = vadd.f32 %v3356, %v3525
    %v3686 = vadd.f32 %v3357, %v3527
    %v3687 = vadd.f32 %v3358, %v3647
    %v3688 = vadd.f32 %v3359, %v3531
    %v3689 = vadd.f32 %v3360, %v3533
    %v3690 = vadd.f32 %v3361, %v3652
    %v3691 = vadd.f32 %v3362, %v3537
    %v3692 = vadd.f32 %v3363, %v3539
    %v3693 = vadd.f32 %v3364, %v3657
    %v3694 = vld [vmem:[%s0 + $0x2f] sm:$0x1]
    %v3695 = vld [vmem:[%s0 + $0x5f] sm:$0x1]
    %v3696 = vld [vmem:[%s0 + $0x8f] sm:$0x1]
    %v3697 = vld [vmem:[%s0 + $0xbf] sm:$0x1]
    %v3698 = vld [vmem:[%s0 + $0xef] sm:$0x1]
    %v3699 = vld [vmem:[%s0 + $0x11f] sm:$0x1]
    %v3700 = vld [vmem:[%s0 + $0x14f] sm:$0x1]
    %v3701 = vld [vmem:[%s0 + $0x17f] sm:$0x1]
    %v3710 = vrot.slane %v3695, 7
    %v3711 = vsel %vm261, %v3710, %v3694
    %v3712 = vrot.slane %v3696, 6
    %v3713 = vsel %vm264, %v3712, %v3711
    %v3714 = vrot.slane %v3697, 5
    %v3715 = vsel %vm267, %v3714, %v3713
    %v3716 = vrot.slane %v3698, 4
    %v3717 = vsel %vm270, %v3716, %v3715
    %v3718 = vrot.slane %v3699, 3
    %v3719 = vsel %vm273, %v3718, %v3717
    %v3720 = vrot.slane %v3700, 2
    %v3721 = vsel %vm276, %v3720, %v3719
    %v3722 = vrot.slane %v3701, 1
    %v3723 = vsel %vm279, %v3722, %v3721
    %s3724 = scalar_lea.vmem [#allocation2], 1008
    %v3725 = vld [vmem:[%s3724] sm:$0xff]
    %v3726 = vld [vmem:[%s3724 + $0x8] sm:$0xff]
    %v3727 = vld [vmem:[%s3724 + $0x10] sm:$0xff]
    %v3728 = vld [vmem:[%s3724 + $0x18] sm:$0xff]
    %v3729 = vld [vmem:[%s3724 + $0x20] sm:$0xff]
    %v3730 = vld [vmem:[%s3724 + $0x28] sm:$0xff]
    %v3731 = vld [vmem:[%s3724 + $0x30] sm:$0xff]
    %v3732 = vld [vmem:[%s3724 + $0x38] sm:$0xff]
    %v3733 = vld [vmem:[%s3724 + $0x40] sm:$0xff]
    %v3734 = vld [vmem:[%s3724 + $0x48] sm:$0xff]
    %v3735 = vld [vmem:[%s3724 + $0x50] sm:$0xff]
    %v3736 = vld [vmem:[%s3724 + $0x58] sm:$0xff]
    %v3737 = vld [vmem:[%s3724 + $0x60] sm:$0xff]
    %v3738 = vld [vmem:[%s3724 + $0x68] sm:$0xff]
    %v3739 = vld [vmem:[%s3724 + $0x70] sm:$0xff]
    %v3740 = vld [vmem:[%s3724 + $0x78] sm:$0xff]
    %v3741 = vld [vmem:[%s3724 + $0x80] sm:$0xff]
    %v3742 = vld [vmem:[%s3724 + $0x88] sm:$0xff]
    %v3743 = vsel %vm868, %v3723, 0
    %3745 = vmatprep.subr.mxu0 %v3726
    %3746 = vmatpush1.msra.mxu0 %v3725
    %3747 = vmatprep.subr.mxu0 %v3729
    %3748 = vmatpush1.msra.mxu0 %v3728
    %3749 = vmatprep.subr.mxu0 %v3732
    %3750 = vmatpush1.msra.mxu0 %v3731
    %3751 = vmatprep.subr.mxu0 %v3735
    %3752 = vmatpush1.msra.mxu0 %v3734
    %3753 = vmatprep.subr.mxu0 %v3738
    %3754 = vmatpush1.msra.mxu0 %v3737
    %3755 = vmatprep.subr.mxu0 %v3741
    %3756 = vmatpush1.msra.mxu0 %v3740
    %3757 = vmatprep.subr.mxu0 0.0
    %3758 = vmatpush1.msra.mxu0 0.0
    %3759 = vmatprep.subr.mxu0 0.0
    %3760 = vmatpush1.msra.mxu0 0.0
    %3761 = vmatprep.subr.mxu0 0.0
    %3762 = vmatpush1.msra.mxu0 0.0
    %3763 = vmatprep.subr.mxu0 0.0
    %3764 = vmatpush1.msra.mxu0 0.0
    %3765 = vmatprep.subr.mxu0 0.0
    %3766 = vmatpush1.msra.mxu0 0.0
    %3767 = vmatprep.subr.mxu0 0.0
    %3768 = vmatpush1.msra.mxu0 0.0
    %3769 = vmatprep.subr.mxu0 0.0
    %3770 = vmatpush1.msra.mxu0 0.0
    %3771 = vmatprep.subr.mxu0 0.0
    %3772 = vmatpush1.msra.mxu0 0.0
    %3773 = vmatprep.subr.mxu0 0.0
    %3774 = vmatpush1.msra.mxu0 0.0
    %3775 = vmatprep.subr.mxu0 0.0
    %3776 = vmatpush1.msra.mxu0 0.0
    %3777 = vmatprep.subr.mxu0 0.0
    %3778 = vmatpush1.msra.mxu0 0.0
    %3779 = vmatprep.subr.mxu0 0.0
    %3780 = vmatpush1.msra.mxu0 0.0
    %3781 = vmatprep.subr.mxu0 0.0
    %3782 = vmatpush1.msra.mxu0 0.0
    %3783 = vmatprep.subr.mxu0 0.0
    %3784 = vmatpush1.msra.mxu0 0.0
    %3785 = vmatprep.subr.mxu0 0.0
    %3786 = vmatpush1.msra.mxu0 0.0
    %3787 = vmatprep.subr.mxu0 0.0
    %3788 = vmatpush1.msra.mxu0 0.0
    %3789 = vmatprep.subr.mxu0 0.0
    %3790 = vmatpush1.msra.mxu0 0.0
    %3791 = vmatprep.subr.mxu0 0.0
    %3792 = vmatpush1.msra.mxu0 0.0
    %3793 = vmatprep.subr.mxu0 0.0
    %3794 = vmatpush1.msra.mxu0 0.0
    %3795 = vmatprep.subr.mxu0 0.0
    %3796 = vmatpush1.msra.mxu0 0.0
    %3797 = vmatprep.subr.mxu0 0.0
    %3798 = vmatpush1.msra.mxu0 0.0
    %3799 = vmatprep.subr.mxu0 0.0
    %3800 = vmatpush1.msra.mxu0 0.0
    %3801 = vmatprep.subr.mxu0 0.0
    %3802 = vmatpush1.msra.mxu0 0.0
    %3803 = vmatprep.subr.mxu0 0.0
    %3804 = vmatpush1.msra.mxu0 0.0
    %3805 = vmatprep.subr.mxu0 0.0
    %3806 = vmatpush1.msra.mxu0 0.0
    %3807 = vmatprep.subr.mxu0 0.0
    %3808 = vmatpush1.msra.mxu0 0.0
    %3809 = vmatprep.mubr.f32.mxu0 0.0
    %3810 = vmatmul.mubr.f32.gmra.mrb[0].mxu0 %v2409
    %v3811 = vpop.f32.mrb[0].mxu0
    %v3812 = vadd.f32 0.0, %v3811
    %v3813 = vpop.f32.mrb[0].mxu0
    %v3814 = vadd.f32 0.0, %v3813
    %3815 = vmatprep.mubr.f32.mxu0 0.0
    %3816 = vmatmul.mubr.f32.gmra.mrb[0].mxu0 %v2411
    %v3817 = vpop.f32.mrb[0].mxu0
    %v3818 = vadd.f32 0.0, %v3817
    %v3819 = vpop.f32.mrb[0].mxu0
    %v3820 = vadd.f32 0.0, %v3819
    %3821 = vmatprep.mubr.f32.mxu0 0.0
    %3822 = vmatmul.mubr.f32.gmra.mrb[0].mxu0 %v2413
    %v3823 = vpop.f32.mrb[0].mxu0
    %v3824 = vadd.f32 0.0, %v3823
    %v3825 = vpop.f32.mrb[0].mxu0
    %v3826 = vadd.f32 0.0, %v3825
    %3827 = vmatprep.mubr.f32.mxu0 0.0
    %3828 = vmatmul.mubr.f32.gmra.mrb[0].mxu0 %v2415
    %v3829 = vpop.f32.mrb[0].mxu0
    %v3830 = vadd.f32 0.0, %v3829
    %v3831 = vpop.f32.mrb[0].mxu0
    %v3832 = vadd.f32 0.0, %v3831
    %3833 = vmatprep.mubr.f32.mxu0 0.0
    %3834 = vmatmul.mubr.f32.gmra.mrb[0].mxu0 %v2417
    %v3835 = vpop.f32.mrb[0].mxu0
    %v3836 = vadd.f32 0.0, %v3835
    %v3837 = vpop.f32.mrb[0].mxu0
    %v3838 = vadd.f32 0.0, %v3837
    %3839 = vmatprep.mubr.f32.mxu0 0.0
    %3840 = vmatmul.mubr.f32.gmra.mrb[0].mxu0 %v2419
    %v3841 = vpop.f32.mrb[0].mxu0
    %v3842 = vadd.f32 0.0, %v3841
    %v3843 = vpop.f32.mrb[0].mxu0
    %v3844 = vadd.f32 0.0, %v3843
    %3845 = vmatprep.mubr.f32.mxu0 0.0
    %3846 = vmatmul.mubr.f32.gmra.mrb[0].mxu0 %v2421
    %v3847 = vpop.f32.mrb[0].mxu0
    %v3848 = vadd.f32 0.0, %v3847
    %v3849 = vpop.f32.mrb[0].mxu0
    %v3850 = vadd.f32 0.0, %v3849
    %3851 = vmatprep.mubr.f32.mxu0 0.0
    %3852 = vmatmul.mubr.f32.gmra.mrb[0].mxu0 %v2423
    %v3853 = vpop.f32.mrb[0].mxu0
    %v3854 = vadd.f32 0.0, %v3853
    %v3855 = vpop.f32.mrb[0].mxu0
    %v3856 = vadd.f32 0.0, %v3855
    %3857 = vmatprep.mubr.f32.mxu0 0.0
    %3858 = vmatmul.mubr.f32.gmra.mrb[0].mxu0 %v2425
    %v3859 = vpop.f32.mrb[0].mxu0
    %v3860 = vadd.f32 0.0, %v3859
    %v3861 = vpop.f32.mrb[0].mxu0
    %v3862 = vadd.f32 0.0, %v3861
    %3863 = vmatprep.mubr.f32.mxu0 0.0
    %3864 = vmatmul.mubr.f32.gmra.mrb[0].mxu0 %v2427
    %v3865 = vpop.f32.mrb[0].mxu0
    %v3866 = vadd.f32 0.0, %v3865
    %v3867 = vpop.f32.mrb[0].mxu0
    %v3868 = vadd.f32 0.0, %v3867
    %3869 = vmatprep.mubr.f32.mxu0 0.0
    %3870 = vmatmul.mubr.f32.gmra.mrb[0].mxu0 %v3743
    %v3871 = vpop.f32.mrb[0].mxu0
    %v3872 = vpop.f32.mrb[0].mxu0
    %3873 = vdwg.mxu0
    %3874 = vmatprep.subr.mxu0 0.0
    %3875 = vmatpush1.msra.mxu0 %v3727
    %3876 = vmatprep.subr.mxu0 0.0
    %3877 = vmatpush1.msra.mxu0 %v3730
    %3878 = vmatprep.subr.mxu0 0.0
    %3879 = vmatpush1.msra.mxu0 %v3733
    %3880 = vmatprep.subr.mxu0 0.0
    %3881 = vmatpush1.msra.mxu0 %v3736
    %3882 = vmatprep.subr.mxu0 0.0
    %3883 = vmatpush1.msra.mxu0 %v3739
    %3884 = vmatprep.subr.mxu0 0.0
    %3885 = vmatpush1.msra.mxu0 %v3742
    %3886 = vmatprep.subr.mxu0 0.0
    %3887 = vmatpush1.msra.mxu0 0.0
    %3888 = vmatprep.subr.mxu0 0.0
    %3889 = vmatpush1.msra.mxu0 0.0
    %3890 = vmatprep.subr.mxu0 0.0
    %3891 = vmatpush1.msra.mxu0 0.0
    %3892 = vmatprep.subr.mxu0 0.0
    %3893 = vmatpush1.msra.mxu0 0.0
    %3894 = vmatprep.subr.mxu0 0.0
    %3895 = vmatpush1.msra.mxu0 0.0
    %3896 = vmatprep.subr.mxu0 0.0
    %3897 = vmatpush1.msra.mxu0 0.0
    %3898 = vmatprep.subr.mxu0 0.0
    %3899 = vmatpush1.msra.mxu0 0.0
    %3900 = vmatprep.subr.mxu0 0.0
    %3901 = vmatpush1.msra.mxu0 0.0
    %3902 = vmatprep.subr.mxu0 0.0
    %3903 = vmatpush1.msra.mxu0 0.0
    %3904 = vmatprep.subr.mxu0 0.0
    %3905 = vmatpush1.msra.mxu0 0.0
    %3906 = vmatprep.subr.mxu0 0.0
    %3907 = vmatpush1.msra.mxu0 0.0
    %3908 = vmatprep.subr.mxu0 0.0
    %3909 = vmatpush1.msra.mxu0 0.0
    %3910 = vmatprep.subr.mxu0 0.0
    %3911 = vmatpush1.msra.mxu0 0.0
    %3912 = vmatprep.subr.mxu0 0.0
    %3913 = vmatpush1.msra.mxu0 0.0
    %3914 = vmatprep.subr.mxu0 0.0
    %3915 = vmatpush1.msra.mxu0 0.0
    %3916 = vmatprep.subr.mxu0 0.0
    %3917 = vmatpush1.msra.mxu0 0.0
    %3918 = vmatprep.subr.mxu0 0.0
    %3919 = vmatpush1.msra.mxu0 0.0
    %3920 = vmatprep.subr.mxu0 0.0
    %3921 = vmatpush1.msra.mxu0 0.0
    %3922 = vmatprep.subr.mxu0 0.0
    %3923 = vmatpush1.msra.mxu0 0.0
    %3924 = vmatprep.subr.mxu0 0.0
    %3925 = vmatpush1.msra.mxu0 0.0
    %3926 = vmatprep.subr.mxu0 0.0
    %3927 = vmatpush1.msra.mxu0 0.0
    %3928 = vmatprep.subr.mxu0 0.0
    %3929 = vmatpush1.msra.mxu0 0.0
    %3930 = vmatprep.subr.mxu0 0.0
    %3931 = vmatpush1.msra.mxu0 0.0
    %3932 = vmatprep.subr.mxu0 0.0
    %3933 = vmatpush1.msra.mxu0 0.0
    %3934 = vmatprep.subr.mxu0 0.0
    %3935 = vmatpush1.msra.mxu0 0.0
    %3936 = vmatprep.subr.mxu0 0.0
    %3937 = vmatpush1.msra.mxu0 0.0
    %3938 = vmatprep.mubr.f32.mxu0 0.0
    %3939 = vmatmul.mubr.f32.gmra.mrb[0].mxu0 %v2409
    %v3940 = vpop.f32.mrb[0].mxu0
    %v3941 = vadd.f32 0.0, %v3940
    %v3942 = vpop.f32.mrb[0].mxu0
    %3943 = vmatprep.mubr.f32.mxu0 0.0
    %3944 = vmatmul.mubr.f32.gmra.mrb[0].mxu0 %v2411
    %v3945 = vpop.f32.mrb[0].mxu0
    %v3946 = vadd.f32 0.0, %v3945
    %v3947 = vpop.f32.mrb[0].mxu0
    %3948 = vmatprep.mubr.f32.mxu0 0.0
    %3949 = vmatmul.mubr.f32.gmra.mrb[0].mxu0 %v2413
    %v3950 = vpop.f32.mrb[0].mxu0
    %v3951 = vadd.f32 0.0, %v3950
    %v3952 = vpop.f32.mrb[0].mxu0
    %3953 = vmatprep.mubr.f32.mxu0 0.0
    %3954 = vmatmul.mubr.f32.gmra.mrb[0].mxu0 %v2415
    %v3955 = vpop.f32.mrb[0].mxu0
    %v3956 = vadd.f32 0.0, %v3955
    %v3957 = vpop.f32.mrb[0].mxu0
    %3958 = vmatprep.mubr.f32.mxu0 0.0
    %3959 = vmatmul.mubr.f32.gmra.mrb[0].mxu0 %v2417
    %v3960 = vpop.f32.mrb[0].mxu0
    %v3961 = vadd.f32 0.0, %v3960
    %v3962 = vpop.f32.mrb[0].mxu0
    %3963 = vmatprep.mubr.f32.mxu0 0.0
    %3964 = vmatmul.mubr.f32.gmra.mrb[0].mxu0 %v2419
    %v3965 = vpop.f32.mrb[0].mxu0
    %v3966 = vadd.f32 0.0, %v3965
    %v3967 = vpop.f32.mrb[0].mxu0
    %3968 = vmatprep.mubr.f32.mxu0 0.0
    %3969 = vmatmul.mubr.f32.gmra.mrb[0].mxu0 %v2421
    %v3970 = vpop.f32.mrb[0].mxu0
    %v3971 = vadd.f32 0.0, %v3970
    %v3972 = vpop.f32.mrb[0].mxu0
    %3973 = vmatprep.mubr.f32.mxu0 0.0
    %3974 = vmatmul.mubr.f32.gmra.mrb[0].mxu0 %v2423
    %v3975 = vpop.f32.mrb[0].mxu0
    %v3976 = vadd.f32 0.0, %v3975
    %v3977 = vpop.f32.mrb[0].mxu0
    %3978 = vmatprep.mubr.f32.mxu0 0.0
    %3979 = vmatmul.mubr.f32.gmra.mrb[0].mxu0 %v2425
    %v3980 = vpop.f32.mrb[0].mxu0
    %v3981 = vadd.f32 0.0, %v3980
    %v3982 = vpop.f32.mrb[0].mxu0
    %3983 = vmatprep.mubr.f32.mxu0 0.0
    %3984 = vmatmul.mubr.f32.gmra.mrb[0].mxu0 %v2427
    %v3985 = vpop.f32.mrb[0].mxu0
    %v3986 = vadd.f32 0.0, %v3985
    %v3987 = vpop.f32.mrb[0].mxu0
    %3988 = vmatprep.mubr.f32.mxu0 0.0
    %3989 = vmatmul.mubr.f32.gmra.mrb[0].mxu0 %v3743
    %v3990 = vpop.f32.mrb[0].mxu0
    %v3991 = vpop.f32.mrb[0].mxu0
    %3992 = vdwg.mxu0
    %v3993 = vadd.f32 %v3664, %v3812
    %v3994 = vadd.f32 %v3665, %v3814
    %v3995 = vadd.f32 %v3666, %v3941
    %v3996 = vadd.f32 %v3667, %v3818
    %v3997 = vadd.f32 %v3668, %v3820
    %v3998 = vadd.f32 %v3669, %v3946
    %v3999 = vadd.f32 %v3670, %v3824
    %v4000 = vadd.f32 %v3671, %v3826
    %v4001 = vadd.f32 %v3672, %v3951
    %v4002 = vadd.f32 %v3673, %v3830
    %v4003 = vadd.f32 %v3674, %v3832
    %v4004 = vadd.f32 %v3675, %v3956
    %v4005 = vadd.f32 %v3676, %v3836
    %v4006 = vadd.f32 %v3677, %v3838
    %v4007 = vadd.f32 %v3678, %v3961
    %v4008 = vadd.f32 %v3679, %v3842
    %v4009 = vadd.f32 %v3680, %v3844
    %v4010 = vadd.f32 %v3681, %v3966
    %v4011 = vadd.f32 %v3682, %v3848
    %v4012 = vadd.f32 %v3683, %v3850
    %v4013 = vadd.f32 %v3684, %v3971
    %v4014 = vadd.f32 %v3685, %v3854
    %v4015 = vadd.f32 %v3686, %v3856
    %v4016 = vadd.f32 %v3687, %v3976
    %v4017 = vadd.f32 %v3688, %v3860
    %v4018 = vadd.f32 %v3689, %v3862
    %v4019 = vadd.f32 %v3690, %v3981
    %v4020 = vadd.f32 %v3691, %v3866
    %v4021 = vadd.f32 %v3692, %v3868
    %v4022 = vadd.f32 %v3693, %v3986
    %v4023 = vld [vmem:[#allocation4] sm:$0x7]
    %v4025 = vlaneseq
    %v4026 = vshrl.u32 %v4025, 7
    %v4027 = vsub.s32 0, %v4026
    %v4028 = vrot.slane %v4023, %v4027
    %v4029 = vlaneseq
    %v4030 = vshrl.u32 %v4029, 7
    %v4031 = vsub.s32 1, %v4030
    %v4032 = vrot.slane %v4023, %v4031
    %v4033 = vlaneseq
    %v4034 = vshrl.u32 %v4033, 7
    %v4035 = vsub.s32 2, %v4034
    %v4036 = vrot.slane %v4023, %v4035
    %v4040 = vadd.f32 %v3993, %v4028
    %v4041 = vadd.f32 %v3994, %v4032
    %v4042 = vadd.f32 %v3995, %v4036
    %v4043 = vadd.f32 %v3996, %v4028
    %v4044 = vadd.f32 %v3997, %v4032
    %v4045 = vadd.f32 %v3998, %v4036
    %v4046 = vadd.f32 %v3999, %v4028
    %v4047 = vadd.f32 %v4000, %v4032
    %v4048 = vadd.f32 %v4001, %v4036
    %v4049 = vadd.f32 %v4002, %v4028
    %v4050 = vadd.f32 %v4003, %v4032
    %v4051 = vadd.f32 %v4004, %v4036
    %v4052 = vadd.f32 %v4005, %v4028
    %v4053 = vadd.f32 %v4006, %v4032
    %v4054 = vadd.f32 %v4007, %v4036
    %v4055 = vadd.f32 %v4008, %v4028
    %v4056 = vadd.f32 %v4009, %v4032
    %v4057 = vadd.f32 %v4010, %v4036
    %v4058 = vadd.f32 %v4011, %v4028
    %v4059 = vadd.f32 %v4012, %v4032
    %v4060 = vadd.f32 %v4013, %v4036
    %v4061 = vadd.f32 %v4014, %v4028
    %v4062 = vadd.f32 %v4015, %v4032
    %v4063 = vadd.f32 %v4016, %v4036
    %v4064 = vadd.f32 %v4017, %v4028
    %v4065 = vadd.f32 %v4018, %v4032
    %v4066 = vadd.f32 %v4019, %v4036
    %v4067 = vadd.f32 %v4020, %v4028
    %v4068 = vadd.f32 %v4021, %v4032
    %v4069 = vadd.f32 %v4022, %v4036
    %v4070 = vmax.f32 %v4040, 0.0
    %v4071 = vmax.f32 %v4041, 0.0
    %v4072 = vmax.f32 %v4042, 0.0
    %v4073 = vmax.f32 %v4043, 0.0
    %v4074 = vmax.f32 %v4044, 0.0
    %v4075 = vmax.f32 %v4045, 0.0
    %v4076 = vmax.f32 %v4046, 0.0
    %v4077 = vmax.f32 %v4047, 0.0
    %v4078 = vmax.f32 %v4048, 0.0
    %v4079 = vmax.f32 %v4049, 0.0
    %v4080 = vmax.f32 %v4050, 0.0
    %v4081 = vmax.f32 %v4051, 0.0
    %v4082 = vmax.f32 %v4052, 0.0
    %v4083 = vmax.f32 %v4053, 0.0
    %v4084 = vmax.f32 %v4054, 0.0
    %v4085 = vmax.f32 %v4055, 0.0
    %v4086 = vmax.f32 %v4056, 0.0
    %v4087 = vmax.f32 %v4057, 0.0
    %v4088 = vmax.f32 %v4058, 0.0
    %v4089 = vmax.f32 %v4059, 0.0
    %v4090 = vmax.f32 %v4060, 0.0
    %v4091 = vmax.f32 %v4061, 0.0
    %v4092 = vmax.f32 %v4062, 0.0
    %v4093 = vmax.f32 %v4063, 0.0
    %v4094 = vmax.f32 %v4064, 0.0
    %v4095 = vmax.f32 %v4065, 0.0
    %v4096 = vmax.f32 %v4066, 0.0
    %v4097 = vmax.f32 %v4067, 0.0
    %v4098 = vmax.f32 %v4068, 0.0
    %v4099 = vmax.f32 %v4069, 0.0
    %v4100 = vld [vmem:[#allocation6] sm:$0xff]
    %v4101 = vld [vmem:[#allocation6 + $0x8] sm:$0xff]
    %v4102 = vld [vmem:[#allocation6 + $0x10] sm:$0xff]
    %v4103 = vld [vmem:[#allocation6 + $0x18] sm:$0xff]
    %v4104 = vld [vmem:[#allocation6 + $0x20] sm:$0xff]
    %v4105 = vld [vmem:[#allocation6 + $0x28] sm:$0xff]
    %v4106 = vld [vmem:[#allocation6 + $0x30] sm:$0xff]
    %v4107 = vld [vmem:[#allocation6 + $0x38] sm:$0xff]
    %v4108 = vld [vmem:[#allocation6 + $0x40] sm:$0xff]
    %v4109 = vld [vmem:[#allocation6 + $0x48] sm:$0xff]
    %v4110 = vld [vmem:[#allocation6 + $0x50] sm:$0xff]
    %v4111 = vld [vmem:[#allocation6 + $0x58] sm:$0xff]
    %v4112 = vld [vmem:[#allocation6 + $0x60] sm:$0xff]
    %v4113 = vld [vmem:[#allocation6 + $0x68] sm:$0xff]
    %v4114 = vld [vmem:[#allocation6 + $0x70] sm:$0xff]
    %v4115 = vld [vmem:[#allocation6 + $0x78] sm:$0xff]
    %v4116 = vld [vmem:[#allocation6 + $0x80] sm:$0xff]
    %v4117 = vld [vmem:[#allocation6 + $0x88] sm:$0xff]
    %v4118 = vld [vmem:[#allocation6 + $0x90] sm:$0xff]
    %v4119 = vld [vmem:[#allocation6 + $0x98] sm:$0xff]
    %v4120 = vld [vmem:[#allocation6 + $0xa0] sm:$0xff]
    %v4121 = vld [vmem:[#allocation6 + $0xa8] sm:$0xff]
    %v4122 = vld [vmem:[#allocation6 + $0xb0] sm:$0xff]
    %v4123 = vld [vmem:[#allocation6 + $0xb8] sm:$0xff]
    %v4124 = vld [vmem:[#allocation6 + $0xc0] sm:$0xff]
    %v4125 = vld [vmem:[#allocation6 + $0xc8] sm:$0xff]
    %v4126 = vld [vmem:[#allocation6 + $0xd0] sm:$0xff]
    %v4127 = vld [vmem:[#allocation6 + $0xd8] sm:$0xff]
    %v4128 = vld [vmem:[#allocation6 + $0xe0] sm:$0xff]
    %v4129 = vld [vmem:[#allocation6 + $0xe8] sm:$0xff]
    %v4130 = vld [vmem:[#allocation6 + $0xf0] sm:$0xff]
    %v4131 = vld [vmem:[#allocation6 + $0xf8] sm:$0xff]
    %v4132 = vld [vmem:[#allocation6 + $0x100] sm:$0xff]
    %v4133 = vld [vmem:[#allocation6 + $0x108] sm:$0xff]
    %v4134 = vld [vmem:[#allocation6 + $0x110] sm:$0xff]
    %v4135 = vld [vmem:[#allocation6 + $0x118] sm:$0xff]
    %v4136 = vld [vmem:[#allocation6 + $0x120] sm:$0xff]
    %v4137 = vld [vmem:[#allocation6 + $0x128] sm:$0xff]
    %v4138 = vld [vmem:[#allocation6 + $0x130] sm:$0xff]
    %v4139 = vld [vmem:[#allocation6 + $0x138] sm:$0xff]
    %v4140 = vld [vmem:[#allocation6 + $0x140] sm:$0xff]
    %v4141 = vld [vmem:[#allocation6 + $0x148] sm:$0xff]
    %v4142 = vld [vmem:[#allocation6 + $0x150] sm:$0xff]
    %v4143 = vld [vmem:[#allocation6 + $0x158] sm:$0xff]
    %v4144 = vld [vmem:[#allocation6 + $0x160] sm:$0xff]
    %v4145 = vld [vmem:[#allocation6 + $0x168] sm:$0xff]
    %v4146 = vld [vmem:[#allocation6 + $0x170] sm:$0xff]
    %v4147 = vld [vmem:[#allocation6 + $0x178] sm:$0xff]
    %v4148 = vld [vmem:[#allocation6 + $0x180] sm:$0xff]
    %v4149 = vld [vmem:[#allocation6 + $0x188] sm:$0xff]
    %v4150 = vld [vmem:[#allocation6 + $0x190] sm:$0xff]
    %v4151 = vld [vmem:[#allocation6 + $0x198] sm:$0xff]
    %v4152 = vld [vmem:[#allocation6 + $0x1a0] sm:$0xff]
    %v4153 = vld [vmem:[#allocation6 + $0x1a8] sm:$0xff]
    %v4154 = vld [vmem:[#allocation6 + $0x1b0] sm:$0xff]
    %v4155 = vld [vmem:[#allocation6 + $0x1b8] sm:$0xff]
    %v4156 = vld [vmem:[#allocation6 + $0x1c0] sm:$0xff]
    %v4157 = vld [vmem:[#allocation6 + $0x1c8] sm:$0xff]
    %v4158 = vld [vmem:[#allocation6 + $0x1d0] sm:$0xff]
    %v4159 = vld [vmem:[#allocation6 + $0x1d8] sm:$0xff]
    %v4160 = vld [vmem:[#allocation6 + $0x1e0] sm:$0xff]
    %v4161 = vld [vmem:[#allocation6 + $0x1e8] sm:$0xff]
    %v4162 = vld [vmem:[#allocation6 + $0x1f0] sm:$0xff]
    %v4163 = vld [vmem:[#allocation6 + $0x1f8] sm:$0xff]
    %v4164 = vld [vmem:[#allocation6 + $0x200] sm:$0xff]
    %v4165 = vld [vmem:[#allocation6 + $0x208] sm:$0xff]
    %v4166 = vld [vmem:[#allocation6 + $0x210] sm:$0xff]
    %v4167 = vld [vmem:[#allocation6 + $0x218] sm:$0xff]
    %v4168 = vld [vmem:[#allocation6 + $0x220] sm:$0xff]
    %v4169 = vld [vmem:[#allocation6 + $0x228] sm:$0xff]
    %v4170 = vld [vmem:[#allocation6 + $0x230] sm:$0xff]
    %v4171 = vld [vmem:[#allocation6 + $0x238] sm:$0xff]
    %v4172 = vld [vmem:[#allocation6 + $0x240] sm:$0xff]
    %v4173 = vld [vmem:[#allocation6 + $0x248] sm:$0xff]
    %v4174 = vld [vmem:[#allocation6 + $0x250] sm:$0xff]
    %v4175 = vld [vmem:[#allocation6 + $0x258] sm:$0xff]
    %v4176 = vld [vmem:[#allocation6 + $0x260] sm:$0xff]
    %v4177 = vld [vmem:[#allocation6 + $0x268] sm:$0xff]
    %v4178 = vld [vmem:[#allocation6 + $0x270] sm:$0xff]
    %v4179 = vld [vmem:[#allocation6 + $0x278] sm:$0xff]
    %v4180 = vld [vmem:[#allocation6 + $0x280] sm:$0xff]
    %v4181 = vld [vmem:[#allocation6 + $0x288] sm:$0xff]
    %v4182 = vld [vmem:[#allocation6 + $0x290] sm:$0xff]
    %v4183 = vld [vmem:[#allocation6 + $0x298] sm:$0xff]
    %v4184 = vld [vmem:[#allocation6 + $0x2a0] sm:$0xff]
    %v4185 = vld [vmem:[#allocation6 + $0x2a8] sm:$0xff]
    %v4186 = vld [vmem:[#allocation6 + $0x2b0] sm:$0xff]
    %v4187 = vld [vmem:[#allocation6 + $0x2b8] sm:$0xff]
    %s4188 = scalar_lea.vmem [#allocation6], 704
    %v4189 = vld [vmem:[%s4188] sm:$0xff]
    %v4190 = vld [vmem:[%s4188 + $0x8] sm:$0xff]
    %v4191 = vld [vmem:[%s4188 + $0x10] sm:$0xff]
    %v4192 = vld [vmem:[%s4188 + $0x18] sm:$0xff]
    %v4193 = vld [vmem:[%s4188 + $0x20] sm:$0xff]
    %v4194 = vld [vmem:[%s4188 + $0x28] sm:$0xff]
    %v4195 = vld [vmem:[%s4188 + $0x30] sm:$0xff]
    %v4196 = vld [vmem:[%s4188 + $0x38] sm:$0xff]
    %v4197 = vld [vmem:[%s4188 + $0x40] sm:$0xff]
    %v4198 = vld [vmem:[%s4188 + $0x48] sm:$0xff]
    %v4199 = vld [vmem:[%s4188 + $0x50] sm:$0xff]
    %v4200 = vld [vmem:[%s4188 + $0x58] sm:$0xff]
    %v4201 = vld [vmem:[%s4188 + $0x60] sm:$0xff]
    %v4202 = vld [vmem:[%s4188 + $0x68] sm:$0xff]
    %v4203 = vld [vmem:[%s4188 + $0x70] sm:$0xff]
    %v4204 = vld [vmem:[%s4188 + $0x78] sm:$0xff]
    %v4205 = vld [vmem:[%s4188 + $0x80] sm:$0xff]
    %v4206 = vld [vmem:[%s4188 + $0x88] sm:$0xff]
    %v4207 = vld [vmem:[%s4188 + $0x90] sm:$0xff]
    %v4208 = vld [vmem:[%s4188 + $0x98] sm:$0xff]
    %v4209 = vld [vmem:[%s4188 + $0xa0] sm:$0xff]
    %v4210 = vld [vmem:[%s4188 + $0xa8] sm:$0xff]
    %v4211 = vld [vmem:[%s4188 + $0xb0] sm:$0xff]
    %v4212 = vld [vmem:[%s4188 + $0xb8] sm:$0xff]
    %v4213 = vld [vmem:[%s4188 + $0xc0] sm:$0xff]
    %v4214 = vld [vmem:[%s4188 + $0xc8] sm:$0xff]
    %v4215 = vld [vmem:[%s4188 + $0xd0] sm:$0xff]
    %v4216 = vld [vmem:[%s4188 + $0xd8] sm:$0xff]
    %v4217 = vld [vmem:[%s4188 + $0xe0] sm:$0xff]
    %v4218 = vld [vmem:[%s4188 + $0xe8] sm:$0xff]
    %v4219 = vld [vmem:[%s4188 + $0xf0] sm:$0xff]
    %v4220 = vld [vmem:[%s4188 + $0xf8] sm:$0xff]
    %v4221 = vld [vmem:[%s4188 + $0x100] sm:$0xff]
    %v4222 = vld [vmem:[%s4188 + $0x108] sm:$0xff]
    %v4223 = vld [vmem:[%s4188 + $0x110] sm:$0xff]
    %v4224 = vld [vmem:[%s4188 + $0x118] sm:$0xff]
    %v4225 = vld [vmem:[%s4188 + $0x120] sm:$0xff]
    %v4226 = vld [vmem:[%s4188 + $0x128] sm:$0xff]
    %v4227 = vld [vmem:[%s4188 + $0x130] sm:$0xff]
    %v4228 = vld [vmem:[%s4188 + $0x138] sm:$0xff]
    %v4229 = vld [vmem:[%s4188 + $0x140] sm:$0xff]
    %v4230 = vld [vmem:[%s4188 + $0x148] sm:$0xff]
    %v4231 = vld [vmem:[%s4188 + $0x150] sm:$0xff]
    %v4232 = vld [vmem:[%s4188 + $0x158] sm:$0xff]
    %v4233 = vld [vmem:[%s4188 + $0x160] sm:$0xff]
    %v4234 = vld [vmem:[%s4188 + $0x168] sm:$0xff]
    %v4235 = vld [vmem:[%s4188 + $0x170] sm:$0xff]
    %v4236 = vld [vmem:[%s4188 + $0x178] sm:$0xff]
    %v4237 = vld [vmem:[%s4188 + $0x180] sm:$0xff]
    %v4238 = vld [vmem:[%s4188 + $0x188] sm:$0xff]
    %v4239 = vld [vmem:[%s4188 + $0x190] sm:$0xff]
    %v4240 = vld [vmem:[%s4188 + $0x198] sm:$0xff]
    %v4241 = vld [vmem:[%s4188 + $0x1a0] sm:$0xff]
    %v4242 = vld [vmem:[%s4188 + $0x1a8] sm:$0xff]
    %v4243 = vld [vmem:[%s4188 + $0x1b0] sm:$0xff]
    %v4244 = vld [vmem:[%s4188 + $0x1b8] sm:$0xff]
    %v4245 = vld [vmem:[%s4188 + $0x1c0] sm:$0xff]
    %v4246 = vld [vmem:[%s4188 + $0x1c8] sm:$0xff]
    %v4247 = vld [vmem:[%s4188 + $0x1d0] sm:$0xff]
    %v4248 = vld [vmem:[%s4188 + $0x1d8] sm:$0xff]
    %v4249 = vld [vmem:[%s4188 + $0x1e0] sm:$0xff]
    %v4250 = vld [vmem:[%s4188 + $0x1e8] sm:$0xff]
    %v4251 = vld [vmem:[%s4188 + $0x1f0] sm:$0xff]
    %v4252 = vld [vmem:[%s4188 + $0x1f8] sm:$0xff]
    %v4253 = vld [vmem:[%s4188 + $0x200] sm:$0xff]
    %v4254 = vld [vmem:[%s4188 + $0x208] sm:$0xff]
    %v4255 = vld [vmem:[%s4188 + $0x210] sm:$0xff]
    %v4256 = vld [vmem:[%s4188 + $0x218] sm:$0xff]
    %v4257 = vld [vmem:[%s4188 + $0x220] sm:$0xff]
    %v4258 = vld [vmem:[%s4188 + $0x228] sm:$0xff]
    %v4259 = vld [vmem:[%s4188 + $0x230] sm:$0xff]
    %v4260 = vld [vmem:[%s4188 + $0x238] sm:$0xff]
    %v4261 = vld [vmem:[%s4188 + $0x240] sm:$0xff]
    %v4262 = vld [vmem:[%s4188 + $0x248] sm:$0xff]
    %v4263 = vld [vmem:[%s4188 + $0x250] sm:$0xff]
    %v4264 = vld [vmem:[%s4188 + $0x258] sm:$0xff]
    %v4265 = vld [vmem:[%s4188 + $0x260] sm:$0xff]
    %v4266 = vld [vmem:[%s4188 + $0x268] sm:$0xff]
    %v4267 = vld [vmem:[%s4188 + $0x270] sm:$0xff]
    %v4268 = vld [vmem:[%s4188 + $0x278] sm:$0xff]
    %v4269 = vld [vmem:[%s4188 + $0x280] sm:$0xff]
    %v4270 = vld [vmem:[%s4188 + $0x288] sm:$0xff]
    %v4271 = vld [vmem:[%s4188 + $0x290] sm:$0xff]
    %v4272 = vld [vmem:[%s4188 + $0x298] sm:$0xff]
    %v4273 = vld [vmem:[%s4188 + $0x2a0] sm:$0xff]
    %v4274 = vld [vmem:[%s4188 + $0x2a8] sm:$0xff]
    %v4275 = vld [vmem:[%s4188 + $0x2b0] sm:$0xff]
    %v4276 = vld [vmem:[%s4188 + $0x2b8] sm:$0xff]
    %vm4277 = vcmask 785408
    %v4279 = vsel %vm4277, %v4075, 0
    %v4282 = vsel %vm4277, %v4081, 0
    %v4285 = vsel %vm4277, %v4087, 0
    %v4288 = vsel %vm4277, %v4093, 0
    %4290 = vmatprep.subr.mxu0 %v4190
    %4291 = vmatpush1.msra.mxu0 %v4189
    %4292 = vmatprep.subr.mxu0 %v4192
    %4293 = vmatpush1.msra.mxu0 %v4191
    %4294 = vmatprep.subr.mxu0 %v4194
    %4295 = vmatpush1.msra.mxu0 %v4193
    %4296 = vmatprep.subr.mxu0 %v4196
    %4297 = vmatpush1.msra.mxu0 %v4195
    %4298 = vmatprep.subr.mxu0 %v4198
    %4299 = vmatpush1.msra.mxu0 %v4197
    %4300 = vmatprep.subr.mxu0 %v4200
    %4301 = vmatpush1.msra.mxu0 %v4199
    %4302 = vmatprep.subr.mxu0 %v4202
    %4303 = vmatpush1.msra.mxu0 %v4201
    %4304 = vmatprep.subr.mxu0 %v4204
    %4305 = vmatpush1.msra.mxu0 %v4203
    %4306 = vmatprep.subr.mxu0 %v4206
    %4307 = vmatpush1.msra.mxu0 %v4205
    %4308 = vmatprep.subr.mxu0 %v4208
    %4309 = vmatpush1.msra.mxu0 %v4207
    %4310 = vmatprep.subr.mxu0 %v4210
    %4311 = vmatpush1.msra.mxu0 %v4209
    %4312 = vmatprep.subr.mxu0 %v4212
    %4313 = vmatpush1.msra.mxu0 %v4211
    %4314 = vmatprep.subr.mxu0 %v4214
    %4315 = vmatpush1.msra.mxu0 %v4213
    %4316 = vmatprep.subr.mxu0 %v4216
    %4317 = vmatpush1.msra.mxu0 %v4215
    %4318 = vmatprep.subr.mxu0 %v4218
    %4319 = vmatpush1.msra.mxu0 %v4217
    %4320 = vmatprep.subr.mxu0 %v4220
    %4321 = vmatpush1.msra.mxu0 %v4219
    %4322 = vmatprep.subr.mxu0 %v4222
    %4323 = vmatpush1.msra.mxu0 %v4221
    %4324 = vmatprep.subr.mxu0 %v4224
    %4325 = vmatpush1.msra.mxu0 %v4223
    %4326 = vmatprep.subr.mxu0 %v4226
    %4327 = vmatpush1.msra.mxu0 %v4225
    %4328 = vmatprep.subr.mxu0 %v4228
    %4329 = vmatpush1.msra.mxu0 %v4227
    %4330 = vmatprep.subr.mxu0 %v4230
    %4331 = vmatpush1.msra.mxu0 %v4229
    %4332 = vmatprep.subr.mxu0 %v4232
    %4333 = vmatpush1.msra.mxu0 %v4231
    %4334 = vmatprep.subr.mxu0 %v4234
    %4335 = vmatpush1.msra.mxu0 %v4233
    %4336 = vmatprep.subr.mxu0 %v4236
    %4337 = vmatpush1.msra.mxu0 %v4235
    %4338 = vmatprep.subr.mxu0 %v4238
    %4339 = vmatpush1.msra.mxu0 %v4237
    %4340 = vmatprep.subr.mxu0 %v4240
    %4341 = vmatpush1.msra.mxu0 %v4239
    %4342 = vmatprep.subr.mxu0 %v4242
    %4343 = vmatpush1.msra.mxu0 %v4241
    %4344 = vmatprep.subr.mxu0 %v4244
    %4345 = vmatpush1.msra.mxu0 %v4243
    %4346 = vmatprep.subr.mxu0 %v4246
    %4347 = vmatpush1.msra.mxu0 %v4245
    %4348 = vmatprep.subr.mxu0 %v4248
    %4349 = vmatpush1.msra.mxu0 %v4247
    %4350 = vmatprep.subr.mxu0 %v4250
    %4351 = vmatpush1.msra.mxu0 %v4249
    %4352 = vmatprep.subr.mxu0 %v4252
    %4353 = vmatpush1.msra.mxu0 %v4251
    %4354 = vmatprep.mubr.f32.mxu0 %v4074
    %4355 = vmatmul.mubr.f32.gmra.mrb[0].mxu0 %v4073
    %v4356 = vpop.f32.mrb[0].mxu0
    %v4357 = vadd.f32 0.0, %v4356
    %v4358 = vpop.f32.mrb[0].mxu0
    %v4359 = vadd.f32 0.0, %v4358
    %4360 = vmatprep.mubr.f32.mxu0 %v4080
    %4361 = vmatmul.mubr.f32.gmra.mrb[0].mxu0 %v4079
    %v4362 = vpop.f32.mrb[0].mxu0
    %v4363 = vadd.f32 0.0, %v4362
    %v4364 = vpop.f32.mrb[0].mxu0
    %v4365 = vadd.f32 0.0, %v4364
    %4366 = vmatprep.mubr.f32.mxu0 %v4086
    %4367 = vmatmul.mubr.f32.gmra.mrb[0].mxu0 %v4085
    %v4368 = vpop.f32.mrb[0].mxu0
    %v4369 = vadd.f32 0.0, %v4368
    %v4370 = vpop.f32.mrb[0].mxu0
    %v4371 = vadd.f32 0.0, %v4370
    %4372 = vmatprep.mubr.f32.mxu0 %v4092
    %4373 = vmatmul.mubr.f32.gmra.mrb[0].mxu0 %v4091
    %v4374 = vpop.f32.mrb[0].mxu0
    %v4375 = vadd.f32 0.0, %v4374
    %v4376 = vpop.f32.mrb[0].mxu0
    %v4377 = vadd.f32 0.0, %v4376
    %4378 = vdwg.mxu0
    %4379 = vmatprep.subr.mxu0 %v4254
    %4380 = vmatpush1.msra.mxu0 %v4253
    %4381 = vmatprep.subr.mxu0 %v4256
    %4382 = vmatpush1.msra.mxu0 %v4255
    %4383 = vmatprep.subr.mxu0 %v4258
    %4384 = vmatpush1.msra.mxu0 %v4257
    %4385 = vmatprep.subr.mxu0 %v4260
    %4386 = vmatpush1.msra.mxu0 %v4259
    %4387 = vmatprep.subr.mxu0 %v4262
    %4388 = vmatpush1.msra.mxu0 %v4261
    %4389 = vmatprep.subr.mxu0 %v4264
    %4390 = vmatpush1.msra.mxu0 %v4263
    %4391 = vmatprep.subr.mxu0 %v4266
    %4392 = vmatpush1.msra.mxu0 %v4265
    %4393 = vmatprep.subr.mxu0 %v4268
    %4394 = vmatpush1.msra.mxu0 %v4267
    %4395 = vmatprep.subr.mxu0 %v4270
    %4396 = vmatpush1.msra.mxu0 %v4269
    %4397 = vmatprep.subr.mxu0 %v4272
    %4398 = vmatpush1.msra.mxu0 %v4271
    %4399 = vmatprep.subr.mxu0 %v4274
    %4400 = vmatpush1.msra.mxu0 %v4273
    %4401 = vmatprep.subr.mxu0 %v4276
    %4402 = vmatpush1.msra.mxu0 %v4275
    %4403 = vmatprep.subr.mxu0 0.0
    %4404 = vmatpush1.msra.mxu0 0.0
    %4405 = vmatprep.subr.mxu0 0.0
    %4406 = vmatpush1.msra.mxu0 0.0
    %4407 = vmatprep.subr.mxu0 0.0
    %4408 = vmatpush1.msra.mxu0 0.0
    %4409 = vmatprep.subr.mxu0 0.0
    %4410 = vmatpush1.msra.mxu0 0.0
    %4411 = vmatprep.subr.mxu0 0.0
    %4412 = vmatpush1.msra.mxu0 0.0
    %4413 = vmatprep.subr.mxu0 0.0
    %4414 = vmatpush1.msra.mxu0 0.0
    %4415 = vmatprep.subr.mxu0 0.0
    %4416 = vmatpush1.msra.mxu0 0.0
    %4417 = vmatprep.subr.mxu0 0.0
    %4418 = vmatpush1.msra.mxu0 0.0
    %4419 = vmatprep.subr.mxu0 0.0
    %4420 = vmatpush1.msra.mxu0 0.0
    %4421 = vmatprep.subr.mxu0 0.0
    %4422 = vmatpush1.msra.mxu0 0.0
    %4423 = vmatprep.subr.mxu0 0.0
    %4424 = vmatpush1.msra.mxu0 0.0
    %4425 = vmatprep.subr.mxu0 0.0
    %4426 = vmatpush1.msra.mxu0 0.0
    %4427 = vmatprep.subr.mxu0 0.0
    %4428 = vmatpush1.msra.mxu0 0.0
    %4429 = vmatprep.subr.mxu0 0.0
    %4430 = vmatpush1.msra.mxu0 0.0
    %4431 = vmatprep.subr.mxu0 0.0
    %4432 = vmatpush1.msra.mxu0 0.0
    %4433 = vmatprep.subr.mxu0 0.0
    %4434 = vmatpush1.msra.mxu0 0.0
    %4435 = vmatprep.subr.mxu0 0.0
    %4436 = vmatpush1.msra.mxu0 0.0
    %4437 = vmatprep.subr.mxu0 0.0
    %4438 = vmatpush1.msra.mxu0 0.0
    %4439 = vmatprep.subr.mxu0 0.0
    %4440 = vmatpush1.msra.mxu0 0.0
    %4441 = vmatprep.subr.mxu0 0.0
    %4442 = vmatpush1.msra.mxu0 0.0
    %4443 = vmatprep.mubr.f32.mxu0 0.0
    %4444 = vmatmul.mubr.f32.gmra.mrb[0].mxu0 %v4279
    %v4445 = vpop.f32.mrb[0].mxu0
    %v4446 = vadd.f32 %v4357, %v4445
    %v4447 = vpop.f32.mrb[0].mxu0
    %v4448 = vadd.f32 %v4359, %v4447
    %4449 = vmatprep.mubr.f32.mxu0 0.0
    %4450 = vmatmul.mubr.f32.gmra.mrb[0].mxu0 %v4282
    %v4451 = vpop.f32.mrb[0].mxu0
    %v4452 = vadd.f32 %v4363, %v4451
    %v4453 = vpop.f32.mrb[0].mxu0
    %v4454 = vadd.f32 %v4365, %v4453
    %4455 = vmatprep.mubr.f32.mxu0 0.0
    %4456 = vmatmul.mubr.f32.gmra.mrb[0].mxu0 %v4285
    %v4457 = vpop.f32.mrb[0].mxu0
    %v4458 = vadd.f32 %v4369, %v4457
    %v4459 = vpop.f32.mrb[0].mxu0
    %v4460 = vadd.f32 %v4371, %v4459
    %4461 = vmatprep.mubr.f32.mxu0 0.0
    %4462 = vmatmul.mubr.f32.gmra.mrb[0].mxu0 %v4288
    %v4463 = vpop.f32.mrb[0].mxu0
    %v4464 = vadd.f32 %v4375, %v4463
    %v4465 = vpop.f32.mrb[0].mxu0
    %v4466 = vadd.f32 %v4377, %v4465
    %4467 = vdwg.mxu0
    %v4469 = vsel %vm4277, %v4072, 0
    %v4472 = vsel %vm4277, %v4078, 0
    %v4475 = vsel %vm4277, %v4084, 0
    %v4478 = vsel %vm4277, %v4090, 0
    %4480 = vmatprep.subr.mxu0 %v4101
    %4481 = vmatpush1.msra.mxu0 %v4100
    %4482 = vmatprep.subr.mxu0 %v4103
    %4483 = vmatpush1.msra.mxu0 %v4102
    %4484 = vmatprep.subr.mxu0 %v4105
    %4485 = vmatpush1.msra.mxu0 %v4104
    %4486 = vmatprep.subr.mxu0 %v4107
    %4487 = vmatpush1.msra.mxu0 %v4106
    %4488 = vmatprep.subr.mxu0 %v4109
    %4489 = vmatpush1.msra.mxu0 %v4108
    %4490 = vmatprep.subr.mxu0 %v4111
    %4491 = vmatpush1.msra.mxu0 %v4110
    %4492 = vmatprep.subr.mxu0 %v4113
    %4493 = vmatpush1.msra.mxu0 %v4112
    %4494 = vmatprep.subr.mxu0 %v4115
    %4495 = vmatpush1.msra.mxu0 %v4114
    %4496 = vmatprep.subr.mxu0 %v4117
    %4497 = vmatpush1.msra.mxu0 %v4116
    %4498 = vmatprep.subr.mxu0 %v4119
    %4499 = vmatpush1.msra.mxu0 %v4118
    %4500 = vmatprep.subr.mxu0 %v4121
    %4501 = vmatpush1.msra.mxu0 %v4120
    %4502 = vmatprep.subr.mxu0 %v4123
    %4503 = vmatpush1.msra.mxu0 %v4122
    %4504 = vmatprep.subr.mxu0 %v4125
    %4505 = vmatpush1.msra.mxu0 %v4124
    %4506 = vmatprep.subr.mxu0 %v4127
    %4507 = vmatpush1.msra.mxu0 %v4126
    %4508 = vmatprep.subr.mxu0 %v4129
    %4509 = vmatpush1.msra.mxu0 %v4128
    %4510 = vmatprep.subr.mxu0 %v4131
    %4511 = vmatpush1.msra.mxu0 %v4130
    %4512 = vmatprep.subr.mxu0 %v4133
    %4513 = vmatpush1.msra.mxu0 %v4132
    %4514 = vmatprep.subr.mxu0 %v4135
    %4515 = vmatpush1.msra.mxu0 %v4134
    %4516 = vmatprep.subr.mxu0 %v4137
    %4517 = vmatpush1.msra.mxu0 %v4136
    %4518 = vmatprep.subr.mxu0 %v4139
    %4519 = vmatpush1.msra.mxu0 %v4138
    %4520 = vmatprep.subr.mxu0 %v4141
    %4521 = vmatpush1.msra.mxu0 %v4140
    %4522 = vmatprep.subr.mxu0 %v4143
    %4523 = vmatpush1.msra.mxu0 %v4142
    %4524 = vmatprep.subr.mxu0 %v4145
    %4525 = vmatpush1.msra.mxu0 %v4144
    %4526 = vmatprep.subr.mxu0 %v4147
    %4527 = vmatpush1.msra.mxu0 %v4146
    %4528 = vmatprep.subr.mxu0 %v4149
    %4529 = vmatpush1.msra.mxu0 %v4148
    %4530 = vmatprep.subr.mxu0 %v4151
    %4531 = vmatpush1.msra.mxu0 %v4150
    %4532 = vmatprep.subr.mxu0 %v4153
    %4533 = vmatpush1.msra.mxu0 %v4152
    %4534 = vmatprep.subr.mxu0 %v4155
    %4535 = vmatpush1.msra.mxu0 %v4154
    %4536 = vmatprep.subr.mxu0 %v4157
    %4537 = vmatpush1.msra.mxu0 %v4156
    %4538 = vmatprep.subr.mxu0 %v4159
    %4539 = vmatpush1.msra.mxu0 %v4158
    %4540 = vmatprep.subr.mxu0 %v4161
    %4541 = vmatpush1.msra.mxu0 %v4160
    %4542 = vmatprep.subr.mxu0 %v4163
    %4543 = vmatpush1.msra.mxu0 %v4162
    %4544 = vmatprep.mubr.f32.mxu0 %v4071
    %4545 = vmatmul.mubr.f32.gmra.mrb[0].mxu0 %v4070
    %v4546 = vpop.f32.mrb[0].mxu0
    %v4547 = vadd.f32 %v4446, %v4546
    %v4548 = vpop.f32.mrb[0].mxu0
    %v4549 = vadd.f32 %v4448, %v4548
    %4550 = vmatprep.mubr.f32.mxu0 %v4077
    %4551 = vmatmul.mubr.f32.gmra.mrb[0].mxu0 %v4076
    %v4552 = vpop.f32.mrb[0].mxu0
    %v4553 = vadd.f32 %v4452, %v4552
    %v4554 = vpop.f32.mrb[0].mxu0
    %v4555 = vadd.f32 %v4454, %v4554
    %4556 = vmatprep.mubr.f32.mxu0 %v4083
    %4557 = vmatmul.mubr.f32.gmra.mrb[0].mxu0 %v4082
    %v4558 = vpop.f32.mrb[0].mxu0
    %v4559 = vadd.f32 %v4458, %v4558
    %v4560 = vpop.f32.mrb[0].mxu0
    %v4561 = vadd.f32 %v4460, %v4560
    %4562 = vmatprep.mubr.f32.mxu0 %v4089
    %4563 = vmatmul.mubr.f32.gmra.mrb[0].mxu0 %v4088
    %v4564 = vpop.f32.mrb[0].mxu0
    %v4565 = vadd.f32 %v4464, %v4564
    %v4566 = vpop.f32.mrb[0].mxu0
    %v4567 = vadd.f32 %v4466, %v4566
    %4568 = vdwg.mxu0
    %4569 = vmatprep.subr.mxu0 %v4165
    %4570 = vmatpush1.msra.mxu0 %v4164
    %4571 = vmatprep.subr.mxu0 %v4167
    %4572 = vmatpush1.msra.mxu0 %v4166
    %4573 = vmatprep.subr.mxu0 %v4169
    %4574 = vmatpush1.msra.mxu0 %v4168
    %4575 = vmatprep.subr.mxu0 %v4171
    %4576 = vmatpush1.msra.mxu0 %v4170
    %4577 = vmatprep.subr.mxu0 %v4173
    %4578 = vmatpush1.msra.mxu0 %v4172
    %4579 = vmatprep.subr.mxu0 %v4175
    %4580 = vmatpush1.msra.mxu0 %v4174
    %4581 = vmatprep.subr.mxu0 %v4177
    %4582 = vmatpush1.msra.mxu0 %v4176
    %4583 = vmatprep.subr.mxu0 %v4179
    %4584 = vmatpush1.msra.mxu0 %v4178
    %4585 = vmatprep.subr.mxu0 %v4181
    %4586 = vmatpush1.msra.mxu0 %v4180
    %4587 = vmatprep.subr.mxu0 %v4183
    %4588 = vmatpush1.msra.mxu0 %v4182
    %4589 = vmatprep.subr.mxu0 %v4185
    %4590 = vmatpush1.msra.mxu0 %v4184
    %4591 = vmatprep.subr.mxu0 %v4187
    %4592 = vmatpush1.msra.mxu0 %v4186
    %4593 = vmatprep.subr.mxu0 0.0
    %4594 = vmatpush1.msra.mxu0 0.0
    %4595 = vmatprep.subr.mxu0 0.0
    %4596 = vmatpush1.msra.mxu0 0.0
    %4597 = vmatprep.subr.mxu0 0.0
    %4598 = vmatpush1.msra.mxu0 0.0
    %4599 = vmatprep.subr.mxu0 0.0
    %4600 = vmatpush1.msra.mxu0 0.0
    %4601 = vmatprep.subr.mxu0 0.0
    %4602 = vmatpush1.msra.mxu0 0.0
    %4603 = vmatprep.subr.mxu0 0.0
    %4604 = vmatpush1.msra.mxu0 0.0
    %4605 = vmatprep.subr.mxu0 0.0
    %4606 = vmatpush1.msra.mxu0 0.0
    %4607 = vmatprep.subr.mxu0 0.0
    %4608 = vmatpush1.msra.mxu0 0.0
    %4609 = vmatprep.subr.mxu0 0.0
    %4610 = vmatpush1.msra.mxu0 0.0
    %4611 = vmatprep.subr.mxu0 0.0
    %4612 = vmatpush1.msra.mxu0 0.0
    %4613 = vmatprep.subr.mxu0 0.0
    %4614 = vmatpush1.msra.mxu0 0.0
    %4615 = vmatprep.subr.mxu0 0.0
    %4616 = vmatpush1.msra.mxu0 0.0
    %4617 = vmatprep.subr.mxu0 0.0
    %4618 = vmatpush1.msra.mxu0 0.0
    %4619 = vmatprep.subr.mxu0 0.0
    %4620 = vmatpush1.msra.mxu0 0.0
    %4621 = vmatprep.subr.mxu0 0.0
    %4622 = vmatpush1.msra.mxu0 0.0
    %4623 = vmatprep.subr.mxu0 0.0
    %4624 = vmatpush1.msra.mxu0 0.0
    %4625 = vmatprep.subr.mxu0 0.0
    %4626 = vmatpush1.msra.mxu0 0.0
    %4627 = vmatprep.subr.mxu0 0.0
    %4628 = vmatpush1.msra.mxu0 0.0
    %4629 = vmatprep.subr.mxu0 0.0
    %4630 = vmatpush1.msra.mxu0 0.0
    %4631 = vmatprep.subr.mxu0 0.0
    %4632 = vmatpush1.msra.mxu0 0.0
    %4633 = vmatprep.mubr.f32.mxu0 0.0
    %4634 = vmatmul.mubr.f32.gmra.mrb[0].mxu0 %v4469
    %v4635 = vpop.f32.mrb[0].mxu0
    %v4636 = vadd.f32 %v4547, %v4635
    %v4637 = vpop.f32.mrb[0].mxu0
    %v4638 = vadd.f32 %v4549, %v4637
    %4639 = vmatprep.mubr.f32.mxu0 0.0
    %4640 = vmatmul.mubr.f32.gmra.mrb[0].mxu0 %v4472
    %v4641 = vpop.f32.mrb[0].mxu0
    %v4642 = vadd.f32 %v4553, %v4641
    %v4643 = vpop.f32.mrb[0].mxu0
    %v4644 = vadd.f32 %v4555, %v4643
    %4645 = vmatprep.mubr.f32.mxu0 0.0
    %4646 = vmatmul.mubr.f32.gmra.mrb[0].mxu0 %v4475
    %v4647 = vpop.f32.mrb[0].mxu0
    %v4648 = vadd.f32 %v4559, %v4647
    %v4649 = vpop.f32.mrb[0].mxu0
    %v4650 = vadd.f32 %v4561, %v4649
    %4651 = vmatprep.mubr.f32.mxu0 0.0
    %4652 = vmatmul.mubr.f32.gmra.mrb[0].mxu0 %v4478
    %v4653 = vpop.f32.mrb[0].mxu0
    %v4654 = vadd.f32 %v4565, %v4653
    %v4655 = vpop.f32.mrb[0].mxu0
    %v4656 = vadd.f32 %v4567, %v4655
    %4657 = vdwg.mxu0
    %s4658 = scalar_lea.vmem [#allocation6], 1408
    %v4659 = vld [vmem:[%s4658] sm:$0xff]
    %v4660 = vld [vmem:[%s4658 + $0x8] sm:$0xff]
    %v4661 = vld [vmem:[%s4658 + $0x10] sm:$0xff]
    %v4662 = vld [vmem:[%s4658 + $0x18] sm:$0xff]
    %v4663 = vld [vmem:[%s4658 + $0x20] sm:$0xff]
    %v4664 = vld [vmem:[%s4658 + $0x28] sm:$0xff]
    %v4665 = vld [vmem:[%s4658 + $0x30] sm:$0xff]
    %v4666 = vld [vmem:[%s4658 + $0x38] sm:$0xff]
    %v4667 = vld [vmem:[%s4658 + $0x40] sm:$0xff]
    %v4668 = vld [vmem:[%s4658 + $0x48] sm:$0xff]
    %v4669 = vld [vmem:[%s4658 + $0x50] sm:$0xff]
    %v4670 = vld [vmem:[%s4658 + $0x58] sm:$0xff]
    %v4671 = vld [vmem:[%s4658 + $0x60] sm:$0xff]
    %v4672 = vld [vmem:[%s4658 + $0x68] sm:$0xff]
    %v4673 = vld [vmem:[%s4658 + $0x70] sm:$0xff]
    %v4674 = vld [vmem:[%s4658 + $0x78] sm:$0xff]
    %v4675 = vld [vmem:[%s4658 + $0x80] sm:$0xff]
    %v4676 = vld [vmem:[%s4658 + $0x88] sm:$0xff]
    %v4677 = vld [vmem:[%s4658 + $0x90] sm:$0xff]
    %v4678 = vld [vmem:[%s4658 + $0x98] sm:$0xff]
    %v4679 = vld [vmem:[%s4658 + $0xa0] sm:$0xff]
    %v4680 = vld [vmem:[%s4658 + $0xa8] sm:$0xff]
    %v4681 = vld [vmem:[%s4658 + $0xb0] sm:$0xff]
    %v4682 = vld [vmem:[%s4658 + $0xb8] sm:$0xff]
    %v4683 = vld [vmem:[%s4658 + $0xc0] sm:$0xff]
    %v4684 = vld [vmem:[%s4658 + $0xc8] sm:$0xff]
    %v4685 = vld [vmem:[%s4658 + $0xd0] sm:$0xff]
    %v4686 = vld [vmem:[%s4658 + $0xd8] sm:$0xff]
    %v4687 = vld [vmem:[%s4658 + $0xe0] sm:$0xff]
    %v4688 = vld [vmem:[%s4658 + $0xe8] sm:$0xff]
    %v4689 = vld [vmem:[%s4658 + $0xf0] sm:$0xff]
    %v4690 = vld [vmem:[%s4658 + $0xf8] sm:$0xff]
    %v4691 = vld [vmem:[%s4658 + $0x100] sm:$0xff]
    %v4692 = vld [vmem:[%s4658 + $0x108] sm:$0xff]
    %v4693 = vld [vmem:[%s4658 + $0x110] sm:$0xff]
    %v4694 = vld [vmem:[%s4658 + $0x118] sm:$0xff]
    %v4695 = vld [vmem:[%s4658 + $0x120] sm:$0xff]
    %v4696 = vld [vmem:[%s4658 + $0x128] sm:$0xff]
    %v4697 = vld [vmem:[%s4658 + $0x130] sm:$0xff]
    %v4698 = vld [vmem:[%s4658 + $0x138] sm:$0xff]
    %v4699 = vld [vmem:[%s4658 + $0x140] sm:$0xff]
    %v4700 = vld [vmem:[%s4658 + $0x148] sm:$0xff]
    %v4701 = vld [vmem:[%s4658 + $0x150] sm:$0xff]
    %v4702 = vld [vmem:[%s4658 + $0x158] sm:$0xff]
    %v4703 = vld [vmem:[%s4658 + $0x160] sm:$0xff]
    %v4704 = vld [vmem:[%s4658 + $0x168] sm:$0xff]
    %v4705 = vld [vmem:[%s4658 + $0x170] sm:$0xff]
    %v4706 = vld [vmem:[%s4658 + $0x178] sm:$0xff]
    %v4707 = vld [vmem:[%s4658 + $0x180] sm:$0xff]
    %v4708 = vld [vmem:[%s4658 + $0x188] sm:$0xff]
    %v4709 = vld [vmem:[%s4658 + $0x190] sm:$0xff]
    %v4710 = vld [vmem:[%s4658 + $0x198] sm:$0xff]
    %v4711 = vld [vmem:[%s4658 + $0x1a0] sm:$0xff]
    %v4712 = vld [vmem:[%s4658 + $0x1a8] sm:$0xff]
    %v4713 = vld [vmem:[%s4658 + $0x1b0] sm:$0xff]
    %v4714 = vld [vmem:[%s4658 + $0x1b8] sm:$0xff]
    %v4715 = vld [vmem:[%s4658 + $0x1c0] sm:$0xff]
    %v4716 = vld [vmem:[%s4658 + $0x1c8] sm:$0xff]
    %v4717 = vld [vmem:[%s4658 + $0x1d0] sm:$0xff]
    %v4718 = vld [vmem:[%s4658 + $0x1d8] sm:$0xff]
    %v4719 = vld [vmem:[%s4658 + $0x1e0] sm:$0xff]
    %v4720 = vld [vmem:[%s4658 + $0x1e8] sm:$0xff]
    %v4721 = vld [vmem:[%s4658 + $0x1f0] sm:$0xff]
    %v4722 = vld [vmem:[%s4658 + $0x1f8] sm:$0xff]
    %v4723 = vld [vmem:[%s4658 + $0x200] sm:$0xff]
    %v4724 = vld [vmem:[%s4658 + $0x208] sm:$0xff]
    %v4725 = vld [vmem:[%s4658 + $0x210] sm:$0xff]
    %v4726 = vld [vmem:[%s4658 + $0x218] sm:$0xff]
    %v4727 = vld [vmem:[%s4658 + $0x220] sm:$0xff]
    %v4728 = vld [vmem:[%s4658 + $0x228] sm:$0xff]
    %v4729 = vld [vmem:[%s4658 + $0x230] sm:$0xff]
    %v4730 = vld [vmem:[%s4658 + $0x238] sm:$0xff]
    %v4731 = vld [vmem:[%s4658 + $0x240] sm:$0xff]
    %v4732 = vld [vmem:[%s4658 + $0x248] sm:$0xff]
    %v4733 = vld [vmem:[%s4658 + $0x250] sm:$0xff]
    %v4734 = vld [vmem:[%s4658 + $0x258] sm:$0xff]
    %v4735 = vld [vmem:[%s4658 + $0x260] sm:$0xff]
    %v4736 = vld [vmem:[%s4658 + $0x268] sm:$0xff]
    %v4737 = vld [vmem:[%s4658 + $0x270] sm:$0xff]
    %v4738 = vld [vmem:[%s4658 + $0x278] sm:$0xff]
    %v4739 = vld [vmem:[%s4658 + $0x280] sm:$0xff]
    %v4740 = vld [vmem:[%s4658 + $0x288] sm:$0xff]
    %v4741 = vld [vmem:[%s4658 + $0x290] sm:$0xff]
    %v4742 = vld [vmem:[%s4658 + $0x298] sm:$0xff]
    %v4743 = vld [vmem:[%s4658 + $0x2a0] sm:$0xff]
    %v4744 = vld [vmem:[%s4658 + $0x2a8] sm:$0xff]
    %v4745 = vld [vmem:[%s4658 + $0x2b0] sm:$0xff]
    %v4746 = vld [vmem:[%s4658 + $0x2b8] sm:$0xff]
    %v4748 = vsel %vm4277, %v4096, 0
    %4750 = vmatprep.subr.mxu0 %v4660
    %4751 = vmatpush1.msra.mxu0 %v4659
    %4752 = vmatprep.subr.mxu0 %v4662
    %4753 = vmatpush1.msra.mxu0 %v4661
    %4754 = vmatprep.subr.mxu0 %v4664
    %4755 = vmatpush1.msra.mxu0 %v4663
    %4756 = vmatprep.subr.mxu0 %v4666
    %4757 = vmatpush1.msra.mxu0 %v4665
    %4758 = vmatprep.subr.mxu0 %v4668
    %4759 = vmatpush1.msra.mxu0 %v4667
    %4760 = vmatprep.subr.mxu0 %v4670
    %4761 = vmatpush1.msra.mxu0 %v4669
    %4762 = vmatprep.subr.mxu0 %v4672
    %4763 = vmatpush1.msra.mxu0 %v4671
    %4764 = vmatprep.subr.mxu0 %v4674
    %4765 = vmatpush1.msra.mxu0 %v4673
    %4766 = vmatprep.subr.mxu0 %v4676
    %4767 = vmatpush1.msra.mxu0 %v4675
    %4768 = vmatprep.subr.mxu0 %v4678
    %4769 = vmatpush1.msra.mxu0 %v4677
    %4770 = vmatprep.subr.mxu0 %v4680
    %4771 = vmatpush1.msra.mxu0 %v4679
    %4772 = vmatprep.subr.mxu0 %v4682
    %4773 = vmatpush1.msra.mxu0 %v4681
    %4774 = vmatprep.subr.mxu0 %v4684
    %4775 = vmatpush1.msra.mxu0 %v4683
    %4776 = vmatprep.subr.mxu0 %v4686
    %4777 = vmatpush1.msra.mxu0 %v4685
    %4778 = vmatprep.subr.mxu0 %v4688
    %4779 = vmatpush1.msra.mxu0 %v4687
    %4780 = vmatprep.subr.mxu0 %v4690
    %4781 = vmatpush1.msra.mxu0 %v4689
    %4782 = vmatprep.subr.mxu0 %v4692
    %4783 = vmatpush1.msra.mxu0 %v4691
    %4784 = vmatprep.subr.mxu0 %v4694
    %4785 = vmatpush1.msra.mxu0 %v4693
    %4786 = vmatprep.subr.mxu0 %v4696
    %4787 = vmatpush1.msra.mxu0 %v4695
    %4788 = vmatprep.subr.mxu0 %v4698
    %4789 = vmatpush1.msra.mxu0 %v4697
    %4790 = vmatprep.subr.mxu0 %v4700
    %4791 = vmatpush1.msra.mxu0 %v4699
    %4792 = vmatprep.subr.mxu0 %v4702
    %4793 = vmatpush1.msra.mxu0 %v4701
    %4794 = vmatprep.subr.mxu0 %v4704
    %4795 = vmatpush1.msra.mxu0 %v4703
    %4796 = vmatprep.subr.mxu0 %v4706
    %4797 = vmatpush1.msra.mxu0 %v4705
    %4798 = vmatprep.subr.mxu0 %v4708
    %4799 = vmatpush1.msra.mxu0 %v4707
    %4800 = vmatprep.subr.mxu0 %v4710
    %4801 = vmatpush1.msra.mxu0 %v4709
    %4802 = vmatprep.subr.mxu0 %v4712
    %4803 = vmatpush1.msra.mxu0 %v4711
    %4804 = vmatprep.subr.mxu0 %v4714
    %4805 = vmatpush1.msra.mxu0 %v4713
    %4806 = vmatprep.subr.mxu0 %v4716
    %4807 = vmatpush1.msra.mxu0 %v4715
    %4808 = vmatprep.subr.mxu0 %v4718
    %4809 = vmatpush1.msra.mxu0 %v4717
    %4810 = vmatprep.subr.mxu0 %v4720
    %4811 = vmatpush1.msra.mxu0 %v4719
    %4812 = vmatprep.subr.mxu0 %v4722
    %4813 = vmatpush1.msra.mxu0 %v4721
    %4814 = vmatprep.mubr.f32.mxu0 %v4077
    %4815 = vmatmul.mubr.f32.gmra.mrb[0].mxu0 %v4076
    %v4816 = vpop.f32.mrb[0].mxu0
    %v4817 = vadd.f32 0.0, %v4816
    %v4818 = vpop.f32.mrb[0].mxu0
    %v4819 = vadd.f32 0.0, %v4818
    %4820 = vmatprep.mubr.f32.mxu0 %v4083
    %4821 = vmatmul.mubr.f32.gmra.mrb[0].mxu0 %v4082
    %v4822 = vpop.f32.mrb[0].mxu0
    %v4823 = vadd.f32 0.0, %v4822
    %v4824 = vpop.f32.mrb[0].mxu0
    %v4825 = vadd.f32 0.0, %v4824
    %4826 = vmatprep.mubr.f32.mxu0 %v4089
    %4827 = vmatmul.mubr.f32.gmra.mrb[0].mxu0 %v4088
    %v4828 = vpop.f32.mrb[0].mxu0
    %v4829 = vadd.f32 0.0, %v4828
    %v4830 = vpop.f32.mrb[0].mxu0
    %v4831 = vadd.f32 0.0, %v4830
    %4832 = vmatprep.mubr.f32.mxu0 %v4095
    %4833 = vmatmul.mubr.f32.gmra.mrb[0].mxu0 %v4094
    %v4834 = vpop.f32.mrb[0].mxu0
    %v4835 = vadd.f32 0.0, %v4834
    %v4836 = vpop.f32.mrb[0].mxu0
    %v4837 = vadd.f32 0.0, %v4836
    %4838 = vdwg.mxu0
    %4839 = vmatprep.subr.mxu0 %v4724
    %4840 = vmatpush1.msra.mxu0 %v4723
    %4841 = vmatprep.subr.mxu0 %v4726
    %4842 = vmatpush1.msra.mxu0 %v4725
    %4843 = vmatprep.subr.mxu0 %v4728
    %4844 = vmatpush1.msra.mxu0 %v4727
    %4845 = vmatprep.subr.mxu0 %v4730
    %4846 = vmatpush1.msra.mxu0 %v4729
    %4847 = vmatprep.subr.mxu0 %v4732
    %4848 = vmatpush1.msra.mxu0 %v4731
    %4849 = vmatprep.subr.mxu0 %v4734
    %4850 = vmatpush1.msra.mxu0 %v4733
    %4851 = vmatprep.subr.mxu0 %v4736
    %4852 = vmatpush1.msra.mxu0 %v4735
    %4853 = vmatprep.subr.mxu0 %v4738
    %4854 = vmatpush1.msra.mxu0 %v4737
    %4855 = vmatprep.subr.mxu0 %v4740
    %4856 = vmatpush1.msra.mxu0 %v4739
    %4857 = vmatprep.subr.mxu0 %v4742
    %4858 = vmatpush1.msra.mxu0 %v4741
    %4859 = vmatprep.subr.mxu0 %v4744
    %4860 = vmatpush1.msra.mxu0 %v4743
    %4861 = vmatprep.subr.mxu0 %v4746
    %4862 = vmatpush1.msra.mxu0 %v4745
    %4863 = vmatprep.subr.mxu0 0.0
    %4864 = vmatpush1.msra.mxu0 0.0
    %4865 = vmatprep.subr.mxu0 0.0
    %4866 = vmatpush1.msra.mxu0 0.0
    %4867 = vmatprep.subr.mxu0 0.0
    %4868 = vmatpush1.msra.mxu0 0.0
    %4869 = vmatprep.subr.mxu0 0.0
    %4870 = vmatpush1.msra.mxu0 0.0
    %4871 = vmatprep.subr.mxu0 0.0
    %4872 = vmatpush1.msra.mxu0 0.0
    %4873 = vmatprep.subr.mxu0 0.0
    %4874 = vmatpush1.msra.mxu0 0.0
    %4875 = vmatprep.subr.mxu0 0.0
    %4876 = vmatpush1.msra.mxu0 0.0
    %4877 = vmatprep.subr.mxu0 0.0
    %4878 = vmatpush1.msra.mxu0 0.0
    %4879 = vmatprep.subr.mxu0 0.0
    %4880 = vmatpush1.msra.mxu0 0.0
    %4881 = vmatprep.subr.mxu0 0.0
    %4882 = vmatpush1.msra.mxu0 0.0
    %4883 = vmatprep.subr.mxu0 0.0
    %4884 = vmatpush1.msra.mxu0 0.0
    %4885 = vmatprep.subr.mxu0 0.0
    %4886 = vmatpush1.msra.mxu0 0.0
    %4887 = vmatprep.subr.mxu0 0.0
    %4888 = vmatpush1.msra.mxu0 0.0
    %4889 = vmatprep.subr.mxu0 0.0
    %4890 = vmatpush1.msra.mxu0 0.0
    %4891 = vmatprep.subr.mxu0 0.0
    %4892 = vmatpush1.msra.mxu0 0.0
    %4893 = vmatprep.subr.mxu0 0.0
    %4894 = vmatpush1.msra.mxu0 0.0
    %4895 = vmatprep.subr.mxu0 0.0
    %4896 = vmatpush1.msra.mxu0 0.0
    %4897 = vmatprep.subr.mxu0 0.0
    %4898 = vmatpush1.msra.mxu0 0.0
    %4899 = vmatprep.subr.mxu0 0.0
    %4900 = vmatpush1.msra.mxu0 0.0
    %4901 = vmatprep.subr.mxu0 0.0
    %4902 = vmatpush1.msra.mxu0 0.0
    %4903 = vmatprep.mubr.f32.mxu0 0.0
    %4904 = vmatmul.mubr.f32.gmra.mrb[0].mxu0 %v4472
    %v4905 = vpop.f32.mrb[0].mxu0
    %v4906 = vadd.f32 %v4817, %v4905
    %v4907 = vpop.f32.mrb[0].mxu0
    %v4908 = vadd.f32 %v4819, %v4907
    %4909 = vmatprep.mubr.f32.mxu0 0.0
    %4910 = vmatmul.mubr.f32.gmra.mrb[0].mxu0 %v4475
    %v4911 = vpop.f32.mrb[0].mxu0
    %v4912 = vadd.f32 %v4823, %v4911
    %v4913 = vpop.f32.mrb[0].mxu0
    %v4914 = vadd.f32 %v4825, %v4913
    %4915 = vmatprep.mubr.f32.mxu0 0.0
    %4916 = vmatmul.mubr.f32.gmra.mrb[0].mxu0 %v4478
    %v4917 = vpop.f32.mrb[0].mxu0
    %v4918 = vadd.f32 %v4829, %v4917
    %v4919 = vpop.f32.mrb[0].mxu0
    %v4920 = vadd.f32 %v4831, %v4919
    %4921 = vmatprep.mubr.f32.mxu0 0.0
    %4922 = vmatmul.mubr.f32.gmra.mrb[0].mxu0 %v4748
    %v4923 = vpop.f32.mrb[0].mxu0
    %v4924 = vadd.f32 %v4835, %v4923
    %v4925 = vpop.f32.mrb[0].mxu0
    %v4926 = vadd.f32 %v4837, %v4925
    %4927 = vdwg.mxu0
    %v4928 = vadd.f32 %v4636, %v4906
    %v4929 = vadd.f32 %v4638, %v4908
    %v4930 = vadd.f32 %v4642, %v4912
    %v4931 = vadd.f32 %v4644, %v4914
    %v4932 = vadd.f32 %v4648, %v4918
    %v4933 = vadd.f32 %v4650, %v4920
    %v4934 = vadd.f32 %v4654, %v4924
    %v4935 = vadd.f32 %v4656, %v4926
    %s4936 = scalar_lea.vmem [#allocation6], 2112
    %v4937 = vld [vmem:[%s4936] sm:$0xff]
    %v4938 = vld [vmem:[%s4936 + $0x8] sm:$0xff]
    %v4939 = vld [vmem:[%s4936 + $0x10] sm:$0xff]
    %v4940 = vld [vmem:[%s4936 + $0x18] sm:$0xff]
    %v4941 = vld [vmem:[%s4936 + $0x20] sm:$0xff]
    %v4942 = vld [vmem:[%s4936 + $0x28] sm:$0xff]
    %v4943 = vld [vmem:[%s4936 + $0x30] sm:$0xff]
    %v4944 = vld [vmem:[%s4936 + $0x38] sm:$0xff]
    %v4945 = vld [vmem:[%s4936 + $0x40] sm:$0xff]
    %v4946 = vld [vmem:[%s4936 + $0x48] sm:$0xff]
    %v4947 = vld [vmem:[%s4936 + $0x50] sm:$0xff]
    %v4948 = vld [vmem:[%s4936 + $0x58] sm:$0xff]
    %v4949 = vld [vmem:[%s4936 + $0x60] sm:$0xff]
    %v4950 = vld [vmem:[%s4936 + $0x68] sm:$0xff]
    %v4951 = vld [vmem:[%s4936 + $0x70] sm:$0xff]
    %v4952 = vld [vmem:[%s4936 + $0x78] sm:$0xff]
    %v4953 = vld [vmem:[%s4936 + $0x80] sm:$0xff]
    %v4954 = vld [vmem:[%s4936 + $0x88] sm:$0xff]
    %v4955 = vld [vmem:[%s4936 + $0x90] sm:$0xff]
    %v4956 = vld [vmem:[%s4936 + $0x98] sm:$0xff]
    %v4957 = vld [vmem:[%s4936 + $0xa0] sm:$0xff]
    %v4958 = vld [vmem:[%s4936 + $0xa8] sm:$0xff]
    %v4959 = vld [vmem:[%s4936 + $0xb0] sm:$0xff]
    %v4960 = vld [vmem:[%s4936 + $0xb8] sm:$0xff]
    %v4961 = vld [vmem:[%s4936 + $0xc0] sm:$0xff]
    %v4962 = vld [vmem:[%s4936 + $0xc8] sm:$0xff]
    %v4963 = vld [vmem:[%s4936 + $0xd0] sm:$0xff]
    %v4964 = vld [vmem:[%s4936 + $0xd8] sm:$0xff]
    %v4965 = vld [vmem:[%s4936 + $0xe0] sm:$0xff]
    %v4966 = vld [vmem:[%s4936 + $0xe8] sm:$0xff]
    %v4967 = vld [vmem:[%s4936 + $0xf0] sm:$0xff]
    %v4968 = vld [vmem:[%s4936 + $0xf8] sm:$0xff]
    %v4969 = vld [vmem:[%s4936 + $0x100] sm:$0xff]
    %v4970 = vld [vmem:[%s4936 + $0x108] sm:$0xff]
    %v4971 = vld [vmem:[%s4936 + $0x110] sm:$0xff]
    %v4972 = vld [vmem:[%s4936 + $0x118] sm:$0xff]
    %v4973 = vld [vmem:[%s4936 + $0x120] sm:$0xff]
    %v4974 = vld [vmem:[%s4936 + $0x128] sm:$0xff]
    %v4975 = vld [vmem:[%s4936 + $0x130] sm:$0xff]
    %v4976 = vld [vmem:[%s4936 + $0x138] sm:$0xff]
    %v4977 = vld [vmem:[%s4936 + $0x140] sm:$0xff]
    %v4978 = vld [vmem:[%s4936 + $0x148] sm:$0xff]
    %v4979 = vld [vmem:[%s4936 + $0x150] sm:$0xff]
    %v4980 = vld [vmem:[%s4936 + $0x158] sm:$0xff]
    %v4981 = vld [vmem:[%s4936 + $0x160] sm:$0xff]
    %v4982 = vld [vmem:[%s4936 + $0x168] sm:$0xff]
    %v4983 = vld [vmem:[%s4936 + $0x170] sm:$0xff]
    %v4984 = vld [vmem:[%s4936 + $0x178] sm:$0xff]
    %v4985 = vld [vmem:[%s4936 + $0x180] sm:$0xff]
    %v4986 = vld [vmem:[%s4936 + $0x188] sm:$0xff]
    %v4987 = vld [vmem:[%s4936 + $0x190] sm:$0xff]
    %v4988 = vld [vmem:[%s4936 + $0x198] sm:$0xff]
    %v4989 = vld [vmem:[%s4936 + $0x1a0] sm:$0xff]
    %v4990 = vld [vmem:[%s4936 + $0x1a8] sm:$0xff]
    %v4991 = vld [vmem:[%s4936 + $0x1b0] sm:$0xff]
    %v4992 = vld [vmem:[%s4936 + $0x1b8] sm:$0xff]
    %v4993 = vld [vmem:[%s4936 + $0x1c0] sm:$0xff]
    %v4994 = vld [vmem:[%s4936 + $0x1c8] sm:$0xff]
    %v4995 = vld [vmem:[%s4936 + $0x1d0] sm:$0xff]
    %v4996 = vld [vmem:[%s4936 + $0x1d8] sm:$0xff]
    %v4997 = vld [vmem:[%s4936 + $0x1e0] sm:$0xff]
    %v4998 = vld [vmem:[%s4936 + $0x1e8] sm:$0xff]
    %v4999 = vld [vmem:[%s4936 + $0x1f0] sm:$0xff]
    %v5000 = vld [vmem:[%s4936 + $0x1f8] sm:$0xff]
    %v5001 = vld [vmem:[%s4936 + $0x200] sm:$0xff]
    %v5002 = vld [vmem:[%s4936 + $0x208] sm:$0xff]
    %v5003 = vld [vmem:[%s4936 + $0x210] sm:$0xff]
    %v5004 = vld [vmem:[%s4936 + $0x218] sm:$0xff]
    %v5005 = vld [vmem:[%s4936 + $0x220] sm:$0xff]
    %v5006 = vld [vmem:[%s4936 + $0x228] sm:$0xff]
    %v5007 = vld [vmem:[%s4936 + $0x230] sm:$0xff]
    %v5008 = vld [vmem:[%s4936 + $0x238] sm:$0xff]
    %v5009 = vld [vmem:[%s4936 + $0x240] sm:$0xff]
    %v5010 = vld [vmem:[%s4936 + $0x248] sm:$0xff]
    %v5011 = vld [vmem:[%s4936 + $0x250] sm:$0xff]
    %v5012 = vld [vmem:[%s4936 + $0x258] sm:$0xff]
    %v5013 = vld [vmem:[%s4936 + $0x260] sm:$0xff]
    %v5014 = vld [vmem:[%s4936 + $0x268] sm:$0xff]
    %v5015 = vld [vmem:[%s4936 + $0x270] sm:$0xff]
    %v5016 = vld [vmem:[%s4936 + $0x278] sm:$0xff]
    %v5017 = vld [vmem:[%s4936 + $0x280] sm:$0xff]
    %v5018 = vld [vmem:[%s4936 + $0x288] sm:$0xff]
    %v5019 = vld [vmem:[%s4936 + $0x290] sm:$0xff]
    %v5020 = vld [vmem:[%s4936 + $0x298] sm:$0xff]
    %v5021 = vld [vmem:[%s4936 + $0x2a0] sm:$0xff]
    %v5022 = vld [vmem:[%s4936 + $0x2a8] sm:$0xff]
    %v5023 = vld [vmem:[%s4936 + $0x2b0] sm:$0xff]
    %v5024 = vld [vmem:[%s4936 + $0x2b8] sm:$0xff]
    %v5026 = vsel %vm4277, %v4099, 0
    %5028 = vmatprep.subr.mxu0 %v4938
    %5029 = vmatpush1.msra.mxu0 %v4937
    %5030 = vmatprep.subr.mxu0 %v4940
    %5031 = vmatpush1.msra.mxu0 %v4939
    %5032 = vmatprep.subr.mxu0 %v4942
    %5033 = vmatpush1.msra.mxu0 %v4941
    %5034 = vmatprep.subr.mxu0 %v4944
    %5035 = vmatpush1.msra.mxu0 %v4943
    %5036 = vmatprep.subr.mxu0 %v4946
    %5037 = vmatpush1.msra.mxu0 %v4945
    %5038 = vmatprep.subr.mxu0 %v4948
    %5039 = vmatpush1.msra.mxu0 %v4947
    %5040 = vmatprep.subr.mxu0 %v4950
    %5041 = vmatpush1.msra.mxu0 %v4949
    %5042 = vmatprep.subr.mxu0 %v4952
    %5043 = vmatpush1.msra.mxu0 %v4951
    %5044 = vmatprep.subr.mxu0 %v4954
    %5045 = vmatpush1.msra.mxu0 %v4953
    %5046 = vmatprep.subr.mxu0 %v4956
    %5047 = vmatpush1.msra.mxu0 %v4955
    %5048 = vmatprep.subr.mxu0 %v4958
    %5049 = vmatpush1.msra.mxu0 %v4957
    %5050 = vmatprep.subr.mxu0 %v4960
    %5051 = vmatpush1.msra.mxu0 %v4959
    %5052 = vmatprep.subr.mxu0 %v4962
    %5053 = vmatpush1.msra.mxu0 %v4961
    %5054 = vmatprep.subr.mxu0 %v4964
    %5055 = vmatpush1.msra.mxu0 %v4963
    %5056 = vmatprep.subr.mxu0 %v4966
    %5057 = vmatpush1.msra.mxu0 %v4965
    %5058 = vmatprep.subr.mxu0 %v4968
    %5059 = vmatpush1.msra.mxu0 %v4967
    %5060 = vmatprep.subr.mxu0 %v4970
    %5061 = vmatpush1.msra.mxu0 %v4969
    %5062 = vmatprep.subr.mxu0 %v4972
    %5063 = vmatpush1.msra.mxu0 %v4971
    %5064 = vmatprep.subr.mxu0 %v4974
    %5065 = vmatpush1.msra.mxu0 %v4973
    %5066 = vmatprep.subr.mxu0 %v4976
    %5067 = vmatpush1.msra.mxu0 %v4975
    %5068 = vmatprep.subr.mxu0 %v4978
    %5069 = vmatpush1.msra.mxu0 %v4977
    %5070 = vmatprep.subr.mxu0 %v4980
    %5071 = vmatpush1.msra.mxu0 %v4979
    %5072 = vmatprep.subr.mxu0 %v4982
    %5073 = vmatpush1.msra.mxu0 %v4981
    %5074 = vmatprep.subr.mxu0 %v4984
    %5075 = vmatpush1.msra.mxu0 %v4983
    %5076 = vmatprep.subr.mxu0 %v4986
    %5077 = vmatpush1.msra.mxu0 %v4985
    %5078 = vmatprep.subr.mxu0 %v4988
    %5079 = vmatpush1.msra.mxu0 %v4987
    %5080 = vmatprep.subr.mxu0 %v4990
    %5081 = vmatpush1.msra.mxu0 %v4989
    %5082 = vmatprep.subr.mxu0 %v4992
    %5083 = vmatpush1.msra.mxu0 %v4991
    %5084 = vmatprep.subr.mxu0 %v4994
    %5085 = vmatpush1.msra.mxu0 %v4993
    %5086 = vmatprep.subr.mxu0 %v4996
    %5087 = vmatpush1.msra.mxu0 %v4995
    %5088 = vmatprep.subr.mxu0 %v4998
    %5089 = vmatpush1.msra.mxu0 %v4997
    %5090 = vmatprep.subr.mxu0 %v5000
    %5091 = vmatpush1.msra.mxu0 %v4999
    %5092 = vmatprep.mubr.f32.mxu0 %v4080
    %5093 = vmatmul.mubr.f32.gmra.mrb[0].mxu0 %v4079
    %v5094 = vpop.f32.mrb[0].mxu0
    %v5095 = vadd.f32 0.0, %v5094
    %v5096 = vpop.f32.mrb[0].mxu0
    %v5097 = vadd.f32 0.0, %v5096
    %5098 = vmatprep.mubr.f32.mxu0 %v4086
    %5099 = vmatmul.mubr.f32.gmra.mrb[0].mxu0 %v4085
    %v5100 = vpop.f32.mrb[0].mxu0
    %v5101 = vadd.f32 0.0, %v5100
    %v5102 = vpop.f32.mrb[0].mxu0
    %v5103 = vadd.f32 0.0, %v5102
    %5104 = vmatprep.mubr.f32.mxu0 %v4092
    %5105 = vmatmul.mubr.f32.gmra.mrb[0].mxu0 %v4091
    %v5106 = vpop.f32.mrb[0].mxu0
    %v5107 = vadd.f32 0.0, %v5106
    %v5108 = vpop.f32.mrb[0].mxu0
    %v5109 = vadd.f32 0.0, %v5108
    %5110 = vmatprep.mubr.f32.mxu0 %v4098
    %5111 = vmatmul.mubr.f32.gmra.mrb[0].mxu0 %v4097
    %v5112 = vpop.f32.mrb[0].mxu0
    %v5113 = vadd.f32 0.0, %v5112
    %v5114 = vpop.f32.mrb[0].mxu0
    %v5115 = vadd.f32 0.0, %v5114
    %5116 = vdwg.mxu0
    %5117 = vmatprep.subr.mxu0 %v5002
    %5118 = vmatpush1.msra.mxu0 %v5001
    %5119 = vmatprep.subr.mxu0 %v5004
    %5120 = vmatpush1.msra.mxu0 %v5003
    %5121 = vmatprep.subr.mxu0 %v5006
    %5122 = vmatpush1.msra.mxu0 %v5005
    %5123 = vmatprep.subr.mxu0 %v5008
    %5124 = vmatpush1.msra.mxu0 %v5007
    %5125 = vmatprep.subr.mxu0 %v5010
    %5126 = vmatpush1.msra.mxu0 %v5009
    %5127 = vmatprep.subr.mxu0 %v5012
    %5128 = vmatpush1.msra.mxu0 %v5011
    %5129 = vmatprep.subr.mxu0 %v5014
    %5130 = vmatpush1.msra.mxu0 %v5013
    %5131 = vmatprep.subr.mxu0 %v5016
    %5132 = vmatpush1.msra.mxu0 %v5015
    %5133 = vmatprep.subr.mxu0 %v5018
    %5134 = vmatpush1.msra.mxu0 %v5017
    %5135 = vmatprep.subr.mxu0 %v5020
    %5136 = vmatpush1.msra.mxu0 %v5019
    %5137 = vmatprep.subr.mxu0 %v5022
    %5138 = vmatpush1.msra.mxu0 %v5021
    %5139 = vmatprep.subr.mxu0 %v5024
    %5140 = vmatpush1.msra.mxu0 %v5023
    %5141 = vmatprep.subr.mxu0 0.0
    %5142 = vmatpush1.msra.mxu0 0.0
    %5143 = vmatprep.subr.mxu0 0.0
    %5144 = vmatpush1.msra.mxu0 0.0
    %5145 = vmatprep.subr.mxu0 0.0
    %5146 = vmatpush1.msra.mxu0 0.0
    %5147 = vmatprep.subr.mxu0 0.0
    %5148 = vmatpush1.msra.mxu0 0.0
    %5149 = vmatprep.subr.mxu0 0.0
    %5150 = vmatpush1.msra.mxu0 0.0
    %5151 = vmatprep.subr.mxu0 0.0
    %5152 = vmatpush1.msra.mxu0 0.0
    %5153 = vmatprep.subr.mxu0 0.0
    %5154 = vmatpush1.msra.mxu0 0.0
    %5155 = vmatprep.subr.mxu0 0.0
    %5156 = vmatpush1.msra.mxu0 0.0
    %5157 = vmatprep.subr.mxu0 0.0
    %5158 = vmatpush1.msra.mxu0 0.0
    %5159 = vmatprep.subr.mxu0 0.0
    %5160 = vmatpush1.msra.mxu0 0.0
    %5161 = vmatprep.subr.mxu0 0.0
    %5162 = vmatpush1.msra.mxu0 0.0
    %5163 = vmatprep.subr.mxu0 0.0
    %5164 = vmatpush1.msra.mxu0 0.0
    %5165 = vmatprep.subr.mxu0 0.0
    %5166 = vmatpush1.msra.mxu0 0.0
    %5167 = vmatprep.subr.mxu0 0.0
    %5168 = vmatpush1.msra.mxu0 0.0
    %5169 = vmatprep.subr.mxu0 0.0
    %5170 = vmatpush1.msra.mxu0 0.0
    %5171 = vmatprep.subr.mxu0 0.0
    %5172 = vmatpush1.msra.mxu0 0.0
    %5173 = vmatprep.subr.mxu0 0.0
    %5174 = vmatpush1.msra.mxu0 0.0
    %5175 = vmatprep.subr.mxu0 0.0
    %5176 = vmatpush1.msra.mxu0 0.0
    %5177 = vmatprep.subr.mxu0 0.0
    %5178 = vmatpush1.msra.mxu0 0.0
    %5179 = vmatprep.subr.mxu0 0.0
    %5180 = vmatpush1.msra.mxu0 0.0
    %5181 = vmatprep.mubr.f32.mxu0 0.0
    %5182 = vmatmul.mubr.f32.gmra.mrb[0].mxu0 %v4282
    %v5183 = vpop.f32.mrb[0].mxu0
    %v5184 = vadd.f32 %v5095, %v5183
    %v5185 = vpop.f32.mrb[0].mxu0
    %v5186 = vadd.f32 %v5097, %v5185
    %5187 = vmatprep.mubr.f32.mxu0 0.0
    %5188 = vmatmul.mubr.f32.gmra.mrb[0].mxu0 %v4285
    %v5189 = vpop.f32.mrb[0].mxu0
    %v5190 = vadd.f32 %v5101, %v5189
    %v5191 = vpop.f32.mrb[0].mxu0
    %v5192 = vadd.f32 %v5103, %v5191
    %5193 = vmatprep.mubr.f32.mxu0 0.0
    %5194 = vmatmul.mubr.f32.gmra.mrb[0].mxu0 %v4288
    %v5195 = vpop.f32.mrb[0].mxu0
    %v5196 = vadd.f32 %v5107, %v5195
    %v5197 = vpop.f32.mrb[0].mxu0
    %v5198 = vadd.f32 %v5109, %v5197
    %5199 = vmatprep.mubr.f32.mxu0 0.0
    %5200 = vmatmul.mubr.f32.gmra.mrb[0].mxu0 %v5026
    %v5201 = vpop.f32.mrb[0].mxu0
    %v5202 = vadd.f32 %v5113, %v5201
    %v5203 = vpop.f32.mrb[0].mxu0
    %v5204 = vadd.f32 %v5115, %v5203
    %5205 = vdwg.mxu0
    %v5206 = vadd.f32 %v4928, %v5184
    %v5207 = vadd.f32 %v4929, %v5186
    %v5208 = vadd.f32 %v4930, %v5190
    %v5209 = vadd.f32 %v4931, %v5192
    %v5210 = vadd.f32 %v4932, %v5196
    %v5211 = vadd.f32 %v4933, %v5198
    %v5212 = vadd.f32 %v4934, %v5202
    %v5213 = vadd.f32 %v4935, %v5204
    %v5214 = vld [vmem:[#allocation7] sm:$0x3]
    %v5216 = vlaneseq
    %v5217 = vshrl.u32 %v5216, 7
    %v5218 = vsub.s32 0, %v5217
    %v5219 = vrot.slane %v5214, %v5218
    %v5220 = vlaneseq
    %v5221 = vshrl.u32 %v5220, 7
    %v5222 = vsub.s32 1, %v5221
    %v5223 = vrot.slane %v5214, %v5222
    %v5226 = vadd.f32 %v5206, %v5219
    %v5227 = vadd.f32 %v5207, %v5223
    %v5228 = vadd.f32 %v5208, %v5219
    %v5229 = vadd.f32 %v5209, %v5223
    %v5230 = vadd.f32 %v5210, %v5219
    %v5231 = vadd.f32 %v5211, %v5223
    %v5232 = vadd.f32 %v5212, %v5219
    %v5233 = vadd.f32 %v5213, %v5223
    %v5234 = vmax.f32 %v5226, 0.0
    %v5235 = vmax.f32 %v5227, 0.0
    %v5236 = vmax.f32 %v5228, 0.0
    %v5237 = vmax.f32 %v5229, 0.0
    %v5238 = vmax.f32 %v5230, 0.0
    %v5239 = vmax.f32 %v5231, 0.0
    %v5240 = vmax.f32 %v5232, 0.0
    %v5241 = vmax.f32 %v5233, 0.0
    %v5242 = vld [vmem:[#allocation9] sm:$0xff]
    %v5243 = vld [vmem:[#allocation9 + $0x8] sm:$0xff]
    %v5244 = vld [vmem:[#allocation9 + $0x10] sm:$0xff]
    %v5245 = vld [vmem:[#allocation9 + $0x18] sm:$0xff]
    %v5246 = vld [vmem:[#allocation9 + $0x20] sm:$0xff]
    %v5247 = vld [vmem:[#allocation9 + $0x28] sm:$0xff]
    %v5248 = vld [vmem:[#allocation9 + $0x30] sm:$0xff]
    %v5249 = vld [vmem:[#allocation9 + $0x38] sm:$0xff]
    %v5250 = vld [vmem:[#allocation9 + $0x40] sm:$0xff]
    %v5251 = vld [vmem:[#allocation9 + $0x48] sm:$0xff]
    %v5252 = vld [vmem:[#allocation9 + $0x50] sm:$0xff]
    %v5253 = vld [vmem:[#allocation9 + $0x58] sm:$0xff]
    %v5254 = vld [vmem:[#allocation9 + $0x60] sm:$0xff]
    %v5255 = vld [vmem:[#allocation9 + $0x68] sm:$0xff]
    %v5256 = vld [vmem:[#allocation9 + $0x70] sm:$0xff]
    %v5257 = vld [vmem:[#allocation9 + $0x78] sm:$0xff]
    %v5258 = vld [vmem:[#allocation9 + $0x80] sm:$0xff]
    %v5259 = vld [vmem:[#allocation9 + $0x88] sm:$0xff]
    %v5260 = vld [vmem:[#allocation9 + $0x90] sm:$0xff]
    %v5261 = vld [vmem:[#allocation9 + $0x98] sm:$0xff]
    %v5262 = vld [vmem:[#allocation9 + $0xa0] sm:$0xff]
    %v5263 = vld [vmem:[#allocation9 + $0xa8] sm:$0xff]
    %v5264 = vld [vmem:[#allocation9 + $0xb0] sm:$0xff]
    %v5265 = vld [vmem:[#allocation9 + $0xb8] sm:$0xff]
    %v5266 = vld [vmem:[#allocation9 + $0xc0] sm:$0xff]
    %v5267 = vld [vmem:[#allocation9 + $0xc8] sm:$0xff]
    %v5268 = vld [vmem:[#allocation9 + $0xd0] sm:$0xff]
    %v5269 = vld [vmem:[#allocation9 + $0xd8] sm:$0xff]
    %v5270 = vld [vmem:[#allocation9 + $0xe0] sm:$0xff]
    %v5271 = vld [vmem:[#allocation9 + $0xe8] sm:$0xff]
    %v5272 = vld [vmem:[#allocation9 + $0xf0] sm:$0xff]
    %v5273 = vld [vmem:[#allocation9 + $0xf8] sm:$0xff]
    %s5274 = scalar_lea.vmem [#allocation9], 256
    %v5275 = vld [vmem:[%s5274] sm:$0xff]
    %v5276 = vld [vmem:[%s5274 + $0x8] sm:$0xff]
    %v5277 = vld [vmem:[%s5274 + $0x10] sm:$0xff]
    %v5278 = vld [vmem:[%s5274 + $0x18] sm:$0xff]
    %v5279 = vld [vmem:[%s5274 + $0x20] sm:$0xff]
    %v5280 = vld [vmem:[%s5274 + $0x28] sm:$0xff]
    %v5281 = vld [vmem:[%s5274 + $0x30] sm:$0xff]
    %v5282 = vld [vmem:[%s5274 + $0x38] sm:$0xff]
    %v5283 = vld [vmem:[%s5274 + $0x40] sm:$0xff]
    %v5284 = vld [vmem:[%s5274 + $0x48] sm:$0xff]
    %v5285 = vld [vmem:[%s5274 + $0x50] sm:$0xff]
    %v5286 = vld [vmem:[%s5274 + $0x58] sm:$0xff]
    %v5287 = vld [vmem:[%s5274 + $0x60] sm:$0xff]
    %v5288 = vld [vmem:[%s5274 + $0x68] sm:$0xff]
    %v5289 = vld [vmem:[%s5274 + $0x70] sm:$0xff]
    %v5290 = vld [vmem:[%s5274 + $0x78] sm:$0xff]
    %v5291 = vld [vmem:[%s5274 + $0x80] sm:$0xff]
    %v5292 = vld [vmem:[%s5274 + $0x88] sm:$0xff]
    %v5293 = vld [vmem:[%s5274 + $0x90] sm:$0xff]
    %v5294 = vld [vmem:[%s5274 + $0x98] sm:$0xff]
    %v5295 = vld [vmem:[%s5274 + $0xa0] sm:$0xff]
    %v5296 = vld [vmem:[%s5274 + $0xa8] sm:$0xff]
    %v5297 = vld [vmem:[%s5274 + $0xb0] sm:$0xff]
    %v5298 = vld [vmem:[%s5274 + $0xb8] sm:$0xff]
    %v5299 = vld [vmem:[%s5274 + $0xc0] sm:$0xff]
    %v5300 = vld [vmem:[%s5274 + $0xc8] sm:$0xff]
    %v5301 = vld [vmem:[%s5274 + $0xd0] sm:$0xff]
    %v5302 = vld [vmem:[%s5274 + $0xd8] sm:$0xff]
    %v5303 = vld [vmem:[%s5274 + $0xe0] sm:$0xff]
    %v5304 = vld [vmem:[%s5274 + $0xe8] sm:$0xff]
    %v5305 = vld [vmem:[%s5274 + $0xf0] sm:$0xff]
    %v5306 = vld [vmem:[%s5274 + $0xf8] sm:$0xff]
    %5307 = vmatprep.subr.mxu0 0.0
    %5308 = vmatpush1.msra.mxu0 %v5275
    %5309 = vmatprep.subr.mxu0 0.0
    %5310 = vmatpush1.msra.mxu0 %v5276
    %5311 = vmatprep.subr.mxu0 0.0
    %5312 = vmatpush1.msra.mxu0 %v5277
    %5313 = vmatprep.subr.mxu0 0.0
    %5314 = vmatpush1.msra.mxu0 %v5278
    %5315 = vmatprep.subr.mxu0 0.0
    %5316 = vmatpush1.msra.mxu0 %v5279
    %5317 = vmatprep.subr.mxu0 0.0
    %5318 = vmatpush1.msra.mxu0 %v5280
    %5319 = vmatprep.subr.mxu0 0.0
    %5320 = vmatpush1.msra.mxu0 %v5281
    %5321 = vmatprep.subr.mxu0 0.0
    %5322 = vmatpush1.msra.mxu0 %v5282
    %5323 = vmatprep.subr.mxu0 0.0
    %5324 = vmatpush1.msra.mxu0 %v5283
    %5325 = vmatprep.subr.mxu0 0.0
    %5326 = vmatpush1.msra.mxu0 %v5284
    %5327 = vmatprep.subr.mxu0 0.0
    %5328 = vmatpush1.msra.mxu0 %v5285
    %5329 = vmatprep.subr.mxu0 0.0
    %5330 = vmatpush1.msra.mxu0 %v5286
    %5331 = vmatprep.subr.mxu0 0.0
    %5332 = vmatpush1.msra.mxu0 %v5287
    %5333 = vmatprep.subr.mxu0 0.0
    %5334 = vmatpush1.msra.mxu0 %v5288
    %5335 = vmatprep.subr.mxu0 0.0
    %5336 = vmatpush1.msra.mxu0 %v5289
    %5337 = vmatprep.subr.mxu0 0.0
    %5338 = vmatpush1.msra.mxu0 %v5290
    %5339 = vmatprep.subr.mxu0 0.0
    %5340 = vmatpush1.msra.mxu0 %v5291
    %5341 = vmatprep.subr.mxu0 0.0
    %5342 = vmatpush1.msra.mxu0 %v5292
    %5343 = vmatprep.subr.mxu0 0.0
    %5344 = vmatpush1.msra.mxu0 %v5293
    %5345 = vmatprep.subr.mxu0 0.0
    %5346 = vmatpush1.msra.mxu0 %v5294
    %5347 = vmatprep.subr.mxu0 0.0
    %5348 = vmatpush1.msra.mxu0 %v5295
    %5349 = vmatprep.subr.mxu0 0.0
    %5350 = vmatpush1.msra.mxu0 %v5296
    %5351 = vmatprep.subr.mxu0 0.0
    %5352 = vmatpush1.msra.mxu0 %v5297
    %5353 = vmatprep.subr.mxu0 0.0
    %5354 = vmatpush1.msra.mxu0 %v5298
    %5355 = vmatprep.subr.mxu0 0.0
    %5356 = vmatpush1.msra.mxu0 %v5299
    %5357 = vmatprep.subr.mxu0 0.0
    %5358 = vmatpush1.msra.mxu0 %v5300
    %5359 = vmatprep.subr.mxu0 0.0
    %5360 = vmatpush1.msra.mxu0 %v5301
    %5361 = vmatprep.subr.mxu0 0.0
    %5362 = vmatpush1.msra.mxu0 %v5302
    %5363 = vmatprep.subr.mxu0 0.0
    %5364 = vmatpush1.msra.mxu0 %v5303
    %5365 = vmatprep.subr.mxu0 0.0
    %5366 = vmatpush1.msra.mxu0 %v5304
    %5367 = vmatprep.subr.mxu0 0.0
    %5368 = vmatpush1.msra.mxu0 %v5305
    %5369 = vmatprep.subr.mxu0 0.0
    %5370 = vmatpush1.msra.mxu0 %v5306
    %5371 = vmatprep.mubr.f32.mxu0 %v5237
    %5372 = vmatmul.mubr.f32.gmra.mrb[0].mxu0 %v5236
    %v5373 = vpop.f32.mrb[0].mxu0
    %v5374 = vadd.f32 0.0, %v5373
    %v5375 = vpop.f32.mrb[0].mxu0
    %5376 = vmatprep.mubr.f32.mxu0 %v5239
    %5377 = vmatmul.mubr.f32.gmra.mrb[0].mxu0 %v5238
    %v5378 = vpop.f32.mrb[0].mxu0
    %v5379 = vadd.f32 0.0, %v5378
    %v5380 = vpop.f32.mrb[0].mxu0
    %5381 = vdwg.mxu0
    %5382 = vmatprep.subr.mxu0 0.0
    %5383 = vmatpush1.msra.mxu0 %v5242
    %5384 = vmatprep.subr.mxu0 0.0
    %5385 = vmatpush1.msra.mxu0 %v5243
    %5386 = vmatprep.subr.mxu0 0.0
    %5387 = vmatpush1.msra.mxu0 %v5244
    %5388 = vmatprep.subr.mxu0 0.0
    %5389 = vmatpush1.msra.mxu0 %v5245
    %5390 = vmatprep.subr.mxu0 0.0
    %5391 = vmatpush1.msra.mxu0 %v5246
    %5392 = vmatprep.subr.mxu0 0.0
    %5393 = vmatpush1.msra.mxu0 %v5247
    %5394 = vmatprep.subr.mxu0 0.0
    %5395 = vmatpush1.msra.mxu0 %v5248
    %5396 = vmatprep.subr.mxu0 0.0
    %5397 = vmatpush1.msra.mxu0 %v5249
    %5398 = vmatprep.subr.mxu0 0.0
    %5399 = vmatpush1.msra.mxu0 %v5250
    %5400 = vmatprep.subr.mxu0 0.0
    %5401 = vmatpush1.msra.mxu0 %v5251
    %5402 = vmatprep.subr.mxu0 0.0
    %5403 = vmatpush1.msra.mxu0 %v5252
    %5404 = vmatprep.subr.mxu0 0.0
    %5405 = vmatpush1.msra.mxu0 %v5253
    %5406 = vmatprep.subr.mxu0 0.0
    %5407 = vmatpush1.msra.mxu0 %v5254
    %5408 = vmatprep.subr.mxu0 0.0
    %5409 = vmatpush1.msra.mxu0 %v5255
    %5410 = vmatprep.subr.mxu0 0.0
    %5411 = vmatpush1.msra.mxu0 %v5256
    %5412 = vmatprep.subr.mxu0 0.0
    %5413 = vmatpush1.msra.mxu0 %v5257
    %5414 = vmatprep.subr.mxu0 0.0
    %5415 = vmatpush1.msra.mxu0 %v5258
    %5416 = vmatprep.subr.mxu0 0.0
    %5417 = vmatpush1.msra.mxu0 %v5259
    %5418 = vmatprep.subr.mxu0 0.0
    %5419 = vmatpush1.msra.mxu0 %v5260
    %5420 = vmatprep.subr.mxu0 0.0
    %5421 = vmatpush1.msra.mxu0 %v5261
    %5422 = vmatprep.subr.mxu0 0.0
    %5423 = vmatpush1.msra.mxu0 %v5262
    %5424 = vmatprep.subr.mxu0 0.0
    %5425 = vmatpush1.msra.mxu0 %v5263
    %5426 = vmatprep.subr.mxu0 0.0
    %5427 = vmatpush1.msra.mxu0 %v5264
    %5428 = vmatprep.subr.mxu0 0.0
    %5429 = vmatpush1.msra.mxu0 %v5265
    %5430 = vmatprep.subr.mxu0 0.0
    %5431 = vmatpush1.msra.mxu0 %v5266
    %5432 = vmatprep.subr.mxu0 0.0
    %5433 = vmatpush1.msra.mxu0 %v5267
    %5434 = vmatprep.subr.mxu0 0.0
    %5435 = vmatpush1.msra.mxu0 %v5268
    %5436 = vmatprep.subr.mxu0 0.0
    %5437 = vmatpush1.msra.mxu0 %v5269
    %5438 = vmatprep.subr.mxu0 0.0
    %5439 = vmatpush1.msra.mxu0 %v5270
    %5440 = vmatprep.subr.mxu0 0.0
    %5441 = vmatpush1.msra.mxu0 %v5271
    %5442 = vmatprep.subr.mxu0 0.0
    %5443 = vmatpush1.msra.mxu0 %v5272
    %5444 = vmatprep.subr.mxu0 0.0
    %5445 = vmatpush1.msra.mxu0 %v5273
    %5446 = vmatprep.mubr.f32.mxu0 %v5235
    %5447 = vmatmul.mubr.f32.gmra.mrb[0].mxu0 %v5234
    %v5448 = vpop.f32.mrb[0].mxu0
    %v5449 = vadd.f32 %v5374, %v5448
    %v5450 = vpop.f32.mrb[0].mxu0
    %5451 = vmatprep.mubr.f32.mxu0 %v5237
    %5452 = vmatmul.mubr.f32.gmra.mrb[0].mxu0 %v5236
    %v5453 = vpop.f32.mrb[0].mxu0
    %v5454 = vadd.f32 %v5379, %v5453
    %v5455 = vpop.f32.mrb[0].mxu0
    %5456 = vdwg.mxu0
    %s5457 = scalar_lea.vmem [#allocation9], 512
    %v5458 = vld [vmem:[%s5457] sm:$0xff]
    %v5459 = vld [vmem:[%s5457 + $0x8] sm:$0xff]
    %v5460 = vld [vmem:[%s5457 + $0x10] sm:$0xff]
    %v5461 = vld [vmem:[%s5457 + $0x18] sm:$0xff]
    %v5462 = vld [vmem:[%s5457 + $0x20] sm:$0xff]
    %v5463 = vld [vmem:[%s5457 + $0x28] sm:$0xff]
    %v5464 = vld [vmem:[%s5457 + $0x30] sm:$0xff]
    %v5465 = vld [vmem:[%s5457 + $0x38] sm:$0xff]
    %v5466 = vld [vmem:[%s5457 + $0x40] sm:$0xff]
    %v5467 = vld [vmem:[%s5457 + $0x48] sm:$0xff]
    %v5468 = vld [vmem:[%s5457 + $0x50] sm:$0xff]
    %v5469 = vld [vmem:[%s5457 + $0x58] sm:$0xff]
    %v5470 = vld [vmem:[%s5457 + $0x60] sm:$0xff]
    %v5471 = vld [vmem:[%s5457 + $0x68] sm:$0xff]
    %v5472 = vld [vmem:[%s5457 + $0x70] sm:$0xff]
    %v5473 = vld [vmem:[%s5457 + $0x78] sm:$0xff]
    %v5474 = vld [vmem:[%s5457 + $0x80] sm:$0xff]
    %v5475 = vld [vmem:[%s5457 + $0x88] sm:$0xff]
    %v5476 = vld [vmem:[%s5457 + $0x90] sm:$0xff]
    %v5477 = vld [vmem:[%s5457 + $0x98] sm:$0xff]
    %v5478 = vld [vmem:[%s5457 + $0xa0] sm:$0xff]
    %v5479 = vld [vmem:[%s5457 + $0xa8] sm:$0xff]
    %v5480 = vld [vmem:[%s5457 + $0xb0] sm:$0xff]
    %v5481 = vld [vmem:[%s5457 + $0xb8] sm:$0xff]
    %v5482 = vld [vmem:[%s5457 + $0xc0] sm:$0xff]
    %v5483 = vld [vmem:[%s5457 + $0xc8] sm:$0xff]
    %v5484 = vld [vmem:[%s5457 + $0xd0] sm:$0xff]
    %v5485 = vld [vmem:[%s5457 + $0xd8] sm:$0xff]
    %v5486 = vld [vmem:[%s5457 + $0xe0] sm:$0xff]
    %v5487 = vld [vmem:[%s5457 + $0xe8] sm:$0xff]
    %v5488 = vld [vmem:[%s5457 + $0xf0] sm:$0xff]
    %v5489 = vld [vmem:[%s5457 + $0xf8] sm:$0xff]
    %5490 = vmatprep.subr.mxu0 0.0
    %5491 = vmatpush1.msra.mxu0 %v5458
    %5492 = vmatprep.subr.mxu0 0.0
    %5493 = vmatpush1.msra.mxu0 %v5459
    %5494 = vmatprep.subr.mxu0 0.0
    %5495 = vmatpush1.msra.mxu0 %v5460
    %5496 = vmatprep.subr.mxu0 0.0
    %5497 = vmatpush1.msra.mxu0 %v5461
    %5498 = vmatprep.subr.mxu0 0.0
    %5499 = vmatpush1.msra.mxu0 %v5462
    %5500 = vmatprep.subr.mxu0 0.0
    %5501 = vmatpush1.msra.mxu0 %v5463
    %5502 = vmatprep.subr.mxu0 0.0
    %5503 = vmatpush1.msra.mxu0 %v5464
    %5504 = vmatprep.subr.mxu0 0.0
    %5505 = vmatpush1.msra.mxu0 %v5465
    %5506 = vmatprep.subr.mxu0 0.0
    %5507 = vmatpush1.msra.mxu0 %v5466
    %5508 = vmatprep.subr.mxu0 0.0
    %5509 = vmatpush1.msra.mxu0 %v5467
    %5510 = vmatprep.subr.mxu0 0.0
    %5511 = vmatpush1.msra.mxu0 %v5468
    %5512 = vmatprep.subr.mxu0 0.0
    %5513 = vmatpush1.msra.mxu0 %v5469
    %5514 = vmatprep.subr.mxu0 0.0
    %5515 = vmatpush1.msra.mxu0 %v5470
    %5516 = vmatprep.subr.mxu0 0.0
    %5517 = vmatpush1.msra.mxu0 %v5471
    %5518 = vmatprep.subr.mxu0 0.0
    %5519 = vmatpush1.msra.mxu0 %v5472
    %5520 = vmatprep.subr.mxu0 0.0
    %5521 = vmatpush1.msra.mxu0 %v5473
    %5522 = vmatprep.subr.mxu0 0.0
    %5523 = vmatpush1.msra.mxu0 %v5474
    %5524 = vmatprep.subr.mxu0 0.0
    %5525 = vmatpush1.msra.mxu0 %v5475
    %5526 = vmatprep.subr.mxu0 0.0
    %5527 = vmatpush1.msra.mxu0 %v5476
    %5528 = vmatprep.subr.mxu0 0.0
    %5529 = vmatpush1.msra.mxu0 %v5477
    %5530 = vmatprep.subr.mxu0 0.0
    %5531 = vmatpush1.msra.mxu0 %v5478
    %5532 = vmatprep.subr.mxu0 0.0
    %5533 = vmatpush1.msra.mxu0 %v5479
    %5534 = vmatprep.subr.mxu0 0.0
    %5535 = vmatpush1.msra.mxu0 %v5480
    %5536 = vmatprep.subr.mxu0 0.0
    %5537 = vmatpush1.msra.mxu0 %v5481
    %5538 = vmatprep.subr.mxu0 0.0
    %5539 = vmatpush1.msra.mxu0 %v5482
    %5540 = vmatprep.subr.mxu0 0.0
    %5541 = vmatpush1.msra.mxu0 %v5483
    %5542 = vmatprep.subr.mxu0 0.0
    %5543 = vmatpush1.msra.mxu0 %v5484
    %5544 = vmatprep.subr.mxu0 0.0
    %5545 = vmatpush1.msra.mxu0 %v5485
    %5546 = vmatprep.subr.mxu0 0.0
    %5547 = vmatpush1.msra.mxu0 %v5486
    %5548 = vmatprep.subr.mxu0 0.0
    %5549 = vmatpush1.msra.mxu0 %v5487
    %5550 = vmatprep.subr.mxu0 0.0
    %5551 = vmatpush1.msra.mxu0 %v5488
    %5552 = vmatprep.subr.mxu0 0.0
    %5553 = vmatpush1.msra.mxu0 %v5489
    %5554 = vmatprep.mubr.f32.mxu0 %v5239
    %5555 = vmatmul.mubr.f32.gmra.mrb[0].mxu0 %v5238
    %v5556 = vpop.f32.mrb[0].mxu0
    %v5557 = vadd.f32 0.0, %v5556
    %v5558 = vpop.f32.mrb[0].mxu0
    %5559 = vmatprep.mubr.f32.mxu0 %v5241
    %5560 = vmatmul.mubr.f32.gmra.mrb[0].mxu0 %v5240
    %v5561 = vpop.f32.mrb[0].mxu0
    %v5562 = vadd.f32 0.0, %v5561
    %v5563 = vpop.f32.mrb[0].mxu0
    %5564 = vdwg.mxu0
    %v5565 = vadd.f32 %v5449, %v5557
    %v5566 = vadd.f32 %v5454, %v5562
    %v5567 = vld [vmem:[#allocation10] sm:$0x1]
    %v5569 = vlaneseq
    %v5570 = vshrl.u32 %v5569, 7
    %v5571 = vsub.s32 0, %v5570
    %v5572 = vrot.slane %v5567, %v5571
    %v5574 = vadd.f32 %v5565, %v5572
    %v5575 = vadd.f32 %v5566, %v5572
    %v5576 = vmax.f32 %v5574, 0.0
    %v5577 = vmax.f32 %v5575, 0.0
    %v5578 = vld [vmem:[#allocation12] sm:$0xff]
    %v5579 = vld [vmem:[#allocation12 + $0x8] sm:$0xff]
    %v5580 = vld [vmem:[#allocation12 + $0x10] sm:$0xff]
    %v5581 = vld [vmem:[#allocation12 + $0x18] sm:$0xff]
    %v5582 = vld [vmem:[#allocation12 + $0x20] sm:$0xff]
    %v5583 = vld [vmem:[#allocation12 + $0x28] sm:$0xff]
    %v5584 = vld [vmem:[#allocation12 + $0x30] sm:$0xff]
    %v5585 = vld [vmem:[#allocation12 + $0x38] sm:$0xff]
    %v5586 = vld [vmem:[#allocation12 + $0x40] sm:$0xff]
    %v5587 = vld [vmem:[#allocation12 + $0x48] sm:$0xff]
    %v5588 = vld [vmem:[#allocation12 + $0x50] sm:$0xff]
    %v5589 = vld [vmem:[#allocation12 + $0x58] sm:$0xff]
    %v5590 = vld [vmem:[#allocation12 + $0x60] sm:$0xff]
    %v5591 = vld [vmem:[#allocation12 + $0x68] sm:$0xff]
    %v5592 = vld [vmem:[#allocation12 + $0x70] sm:$0xff]
    %v5593 = vld [vmem:[#allocation12 + $0x78] sm:$0xff]
    %v5594 = vld [vmem:[#allocation12 + $0x80] sm:$0xff]
    %v5595 = vld [vmem:[#allocation12 + $0x88] sm:$0xff]
    %v5596 = vld [vmem:[#allocation12 + $0x90] sm:$0xff]
    %v5597 = vld [vmem:[#allocation12 + $0x98] sm:$0xff]
    %v5598 = vld [vmem:[#allocation12 + $0xa0] sm:$0xff]
    %v5599 = vld [vmem:[#allocation12 + $0xa8] sm:$0xff]
    %v5600 = vld [vmem:[#allocation12 + $0xb0] sm:$0xff]
    %v5601 = vld [vmem:[#allocation12 + $0xb8] sm:$0xff]
    %v5602 = vld [vmem:[#allocation12 + $0xc0] sm:$0xff]
    %v5603 = vld [vmem:[#allocation12 + $0xc8] sm:$0xff]
    %v5604 = vld [vmem:[#allocation12 + $0xd0] sm:$0xff]
    %v5605 = vld [vmem:[#allocation12 + $0xd8] sm:$0xff]
    %v5606 = vld [vmem:[#allocation12 + $0xe0] sm:$0xff]
    %v5607 = vld [vmem:[#allocation12 + $0xe8] sm:$0xff]
    %v5608 = vld [vmem:[#allocation12 + $0xf0] sm:$0xff]
    %v5609 = vld [vmem:[#allocation12 + $0xf8] sm:$0xff]
    %v5610 = vld [vmem:[#allocation12 + $0x100] sm:$0xff]
    %v5611 = vld [vmem:[#allocation12 + $0x108] sm:$0xff]
    %v5612 = vld [vmem:[#allocation12 + $0x110] sm:$0xff]
    %v5613 = vld [vmem:[#allocation12 + $0x118] sm:$0xff]
    %v5614 = vld [vmem:[#allocation12 + $0x120] sm:$0xff]
    %v5615 = vld [vmem:[#allocation12 + $0x128] sm:$0xff]
    %v5616 = vld [vmem:[#allocation12 + $0x130] sm:$0xff]
    %v5617 = vld [vmem:[#allocation12 + $0x138] sm:$0xff]
    %v5618 = vld [vmem:[#allocation12 + $0x140] sm:$0xff]
    %v5619 = vld [vmem:[#allocation12 + $0x148] sm:$0xff]
    %v5620 = vld [vmem:[#allocation12 + $0x150] sm:$0xff]
    %v5621 = vld [vmem:[#allocation12 + $0x158] sm:$0xff]
    %v5622 = vld [vmem:[#allocation12 + $0x160] sm:$0xff]
    %v5623 = vld [vmem:[#allocation12 + $0x168] sm:$0xff]
    %v5624 = vld [vmem:[#allocation12 + $0x170] sm:$0xff]
    %v5625 = vld [vmem:[#allocation12 + $0x178] sm:$0xff]
    %v5626 = vld [vmem:[#allocation12 + $0x180] sm:$0xff]
    %v5627 = vld [vmem:[#allocation12 + $0x188] sm:$0xff]
    %v5628 = vld [vmem:[#allocation12 + $0x190] sm:$0xff]
    %v5629 = vld [vmem:[#allocation12 + $0x198] sm:$0xff]
    %v5630 = vld [vmem:[#allocation12 + $0x1a0] sm:$0xff]
    %v5631 = vld [vmem:[#allocation12 + $0x1a8] sm:$0xff]
    %v5632 = vld [vmem:[#allocation12 + $0x1b0] sm:$0xff]
    %v5633 = vld [vmem:[#allocation12 + $0x1b8] sm:$0xff]
    %v5634 = vld [vmem:[#allocation12 + $0x1c0] sm:$0xff]
    %v5635 = vld [vmem:[#allocation12 + $0x1c8] sm:$0xff]
    %v5636 = vld [vmem:[#allocation12 + $0x1d0] sm:$0xff]
    %v5637 = vld [vmem:[#allocation12 + $0x1d8] sm:$0xff]
    %v5638 = vld [vmem:[#allocation12 + $0x1e0] sm:$0xff]
    %v5639 = vld [vmem:[#allocation12 + $0x1e8] sm:$0xff]
    %v5640 = vld [vmem:[#allocation12 + $0x1f0] sm:$0xff]
    %v5641 = vld [vmem:[#allocation12 + $0x1f8] sm:$0xff]
    %v5642 = vld [vmem:[#allocation12 + $0x200] sm:$0xff]
    %v5643 = vld [vmem:[#allocation12 + $0x208] sm:$0xff]
    %v5644 = vld [vmem:[#allocation12 + $0x210] sm:$0xff]
    %v5645 = vld [vmem:[#allocation12 + $0x218] sm:$0xff]
    %v5646 = vld [vmem:[#allocation12 + $0x220] sm:$0xff]
    %v5647 = vld [vmem:[#allocation12 + $0x228] sm:$0xff]
    %v5648 = vld [vmem:[#allocation12 + $0x230] sm:$0xff]
    %v5649 = vld [vmem:[#allocation12 + $0x238] sm:$0xff]
    %v5650 = vld [vmem:[#allocation12 + $0x240] sm:$0xff]
    %v5651 = vld [vmem:[#allocation12 + $0x248] sm:$0xff]
    %v5652 = vld [vmem:[#allocation12 + $0x250] sm:$0xff]
    %v5653 = vld [vmem:[#allocation12 + $0x258] sm:$0xff]
    %v5654 = vld [vmem:[#allocation12 + $0x260] sm:$0xff]
    %v5655 = vld [vmem:[#allocation12 + $0x268] sm:$0xff]
    %v5656 = vld [vmem:[#allocation12 + $0x270] sm:$0xff]
    %v5657 = vld [vmem:[#allocation12 + $0x278] sm:$0xff]
    %v5658 = vld [vmem:[#allocation12 + $0x280] sm:$0xff]
    %v5659 = vld [vmem:[#allocation12 + $0x288] sm:$0xff]
    %v5660 = vld [vmem:[#allocation12 + $0x290] sm:$0xff]
    %v5661 = vld [vmem:[#allocation12 + $0x298] sm:$0xff]
    %v5662 = vld [vmem:[#allocation12 + $0x2a0] sm:$0xff]
    %v5663 = vld [vmem:[#allocation12 + $0x2a8] sm:$0xff]
    %v5664 = vld [vmem:[#allocation12 + $0x2b0] sm:$0xff]
    %v5665 = vld [vmem:[#allocation12 + $0x2b8] sm:$0xff]
    %v5666 = vld [vmem:[#allocation12 + $0x2c0] sm:$0xff]
    %v5667 = vld [vmem:[#allocation12 + $0x2c8] sm:$0xff]
    %v5668 = vld [vmem:[#allocation12 + $0x2d0] sm:$0xff]
    %v5669 = vld [vmem:[#allocation12 + $0x2d8] sm:$0xff]
    %v5670 = vld [vmem:[#allocation12 + $0x2e0] sm:$0xff]
    %v5671 = vld [vmem:[#allocation12 + $0x2e8] sm:$0xff]
    %v5672 = vld [vmem:[#allocation12 + $0x2f0] sm:$0xff]
    %v5673 = vld [vmem:[#allocation12 + $0x2f8] sm:$0xff]
    %v5674 = vld [vmem:[#allocation12 + $0x300] sm:$0xff]
    %v5675 = vld [vmem:[#allocation12 + $0x308] sm:$0xff]
    %v5676 = vld [vmem:[#allocation12 + $0x310] sm:$0xff]
    %v5677 = vld [vmem:[#allocation12 + $0x318] sm:$0xff]
    %v5678 = vld [vmem:[#allocation12 + $0x320] sm:$0xff]
    %v5679 = vld [vmem:[#allocation12 + $0x328] sm:$0xff]
    %v5680 = vld [vmem:[#allocation12 + $0x330] sm:$0xff]
    %v5681 = vld [vmem:[#allocation12 + $0x338] sm:$0xff]
    %v5682 = vld [vmem:[#allocation12 + $0x340] sm:$0xff]
    %v5683 = vld [vmem:[#allocation12 + $0x348] sm:$0xff]
    %v5684 = vld [vmem:[#allocation12 + $0x350] sm:$0xff]
    %v5685 = vld [vmem:[#allocation12 + $0x358] sm:$0xff]
    %v5686 = vld [vmem:[#allocation12 + $0x360] sm:$0xff]
    %v5687 = vld [vmem:[#allocation12 + $0x368] sm:$0xff]
    %v5688 = vld [vmem:[#allocation12 + $0x370] sm:$0xff]
    %v5689 = vld [vmem:[#allocation12 + $0x378] sm:$0xff]
    %v5690 = vld [vmem:[#allocation12 + $0x380] sm:$0xff]
    %v5691 = vld [vmem:[#allocation12 + $0x388] sm:$0xff]
    %v5692 = vld [vmem:[#allocation12 + $0x390] sm:$0xff]
    %v5693 = vld [vmem:[#allocation12 + $0x398] sm:$0xff]
    %v5694 = vld [vmem:[#allocation12 + $0x3a0] sm:$0xff]
    %v5695 = vld [vmem:[#allocation12 + $0x3a8] sm:$0xff]
    %v5696 = vld [vmem:[#allocation12 + $0x3b0] sm:$0xff]
    %v5697 = vld [vmem:[#allocation12 + $0x3b8] sm:$0xff]
    %v5698 = vld [vmem:[#allocation12 + $0x3c0] sm:$0xff]
    %v5699 = vld [vmem:[#allocation12 + $0x3c8] sm:$0xff]
    %v5700 = vld [vmem:[#allocation12 + $0x3d0] sm:$0xff]
    %v5701 = vld [vmem:[#allocation12 + $0x3d8] sm:$0xff]
    %v5702 = vld [vmem:[#allocation12 + $0x3e0] sm:$0xff]
    %v5703 = vld [vmem:[#allocation12 + $0x3e8] sm:$0xff]
    %v5704 = vld [vmem:[#allocation12 + $0x3f0] sm:$0xff]
    %v5705 = vld [vmem:[#allocation12 + $0x3f8] sm:$0xff]
    %v5706 = vld [vmem:[#allocation13] sm:$0xf]
    %v5708 = vlaneseq
    %v5709 = vshrl.u32 %v5708, 7
    %v5710 = vsub.s32 0, %v5709
    %v5711 = vrot.slane %v5706, %v5710
    %v5712 = vlaneseq
    %v5713 = vshrl.u32 %v5712, 7
    %v5714 = vsub.s32 1, %v5713
    %v5715 = vrot.slane %v5706, %v5714
    %v5716 = vlaneseq
    %v5717 = vshrl.u32 %v5716, 7
    %v5718 = vsub.s32 2, %v5717
    %v5719 = vrot.slane %v5706, %v5718
    %v5720 = vlaneseq
    %v5721 = vshrl.u32 %v5720, 7
    %v5722 = vsub.s32 3, %v5721
    %v5723 = vrot.slane %v5706, %v5722
    %5728 = vmatprep.subr.mxu0 %v5579
    %5729 = vmatpush1.msra.mxu0 %v5578
    %5730 = vmatprep.subr.mxu0 %v5583
    %5731 = vmatpush1.msra.mxu0 %v5582
    %5732 = vmatprep.subr.mxu0 %v5587
    %5733 = vmatpush1.msra.mxu0 %v5586
    %5734 = vmatprep.subr.mxu0 %v5591
    %5735 = vmatpush1.msra.mxu0 %v5590
    %5736 = vmatprep.subr.mxu0 %v5595
    %5737 = vmatpush1.msra.mxu0 %v5594
    %5738 = vmatprep.subr.mxu0 %v5599
    %5739 = vmatpush1.msra.mxu0 %v5598
    %5740 = vmatprep.subr.mxu0 %v5603
    %5741 = vmatpush1.msra.mxu0 %v5602
    %5742 = vmatprep.subr.mxu0 %v5607
    %5743 = vmatpush1.msra.mxu0 %v5606
    %5744 = vmatprep.subr.mxu0 %v5611
    %5745 = vmatpush1.msra.mxu0 %v5610
    %5746 = vmatprep.subr.mxu0 %v5615
    %5747 = vmatpush1.msra.mxu0 %v5614
    %5748 = vmatprep.subr.mxu0 %v5619
    %5749 = vmatpush1.msra.mxu0 %v5618
    %5750 = vmatprep.subr.mxu0 %v5623
    %5751 = vmatpush1.msra.mxu0 %v5622
    %5752 = vmatprep.subr.mxu0 %v5627
    %5753 = vmatpush1.msra.mxu0 %v5626
    %5754 = vmatprep.subr.mxu0 %v5631
    %5755 = vmatpush1.msra.mxu0 %v5630
    %5756 = vmatprep.subr.mxu0 %v5635
    %5757 = vmatpush1.msra.mxu0 %v5634
    %5758 = vmatprep.subr.mxu0 %v5639
    %5759 = vmatpush1.msra.mxu0 %v5638
    %5760 = vmatprep.subr.mxu0 %v5643
    %5761 = vmatpush1.msra.mxu0 %v5642
    %5762 = vmatprep.subr.mxu0 %v5647
    %5763 = vmatpush1.msra.mxu0 %v5646
    %5764 = vmatprep.subr.mxu0 %v5651
    %5765 = vmatpush1.msra.mxu0 %v5650
    %5766 = vmatprep.subr.mxu0 %v5655
    %5767 = vmatpush1.msra.mxu0 %v5654
    %5768 = vmatprep.subr.mxu0 %v5659
    %5769 = vmatpush1.msra.mxu0 %v5658
    %5770 = vmatprep.subr.mxu0 %v5663
    %5771 = vmatpush1.msra.mxu0 %v5662
    %5772 = vmatprep.subr.mxu0 %v5667
    %5773 = vmatpush1.msra.mxu0 %v5666
    %5774 = vmatprep.subr.mxu0 %v5671
    %5775 = vmatpush1.msra.mxu0 %v5670
    %5776 = vmatprep.subr.mxu0 %v5675
    %5777 = vmatpush1.msra.mxu0 %v5674
    %5778 = vmatprep.subr.mxu0 %v5679
    %5779 = vmatpush1.msra.mxu0 %v5678
    %5780 = vmatprep.subr.mxu0 %v5683
    %5781 = vmatpush1.msra.mxu0 %v5682
    %5782 = vmatprep.subr.mxu0 %v5687
    %5783 = vmatpush1.msra.mxu0 %v5686
    %5784 = vmatprep.subr.mxu0 %v5691
    %5785 = vmatpush1.msra.mxu0 %v5690
    %5786 = vmatprep.subr.mxu0 %v5695
    %5787 = vmatpush1.msra.mxu0 %v5694
    %5788 = vmatprep.subr.mxu0 %v5699
    %5789 = vmatpush1.msra.mxu0 %v5698
    %5790 = vmatprep.subr.mxu0 %v5703
    %5791 = vmatpush1.msra.mxu0 %v5702
    %5792 = vmatprep.mubr.f32.mxu0 %v5577
    %5793 = vmatmul.mubr.f32.gmra.mrb[0].mxu0 %v5576
    %v5794 = vpop.f32.mrb[0].mxu0
    %v5795 = vadd.f32 %v5711, %v5794
    %v5796 = vpop.f32.mrb[0].mxu0
    %v5797 = vadd.f32 %v5715, %v5796
    %5798 = vdwg.mxu0
    %5799 = vmatprep.subr.mxu0 %v5581
    %5800 = vmatpush1.msra.mxu0 %v5580
    %5801 = vmatprep.subr.mxu0 %v5585
    %5802 = vmatpush1.msra.mxu0 %v5584
    %5803 = vmatprep.subr.mxu0 %v5589
    %5804 = vmatpush1.msra.mxu0 %v5588
    %5805 = vmatprep.subr.mxu0 %v5593
    %5806 = vmatpush1.msra.mxu0 %v5592
    %5807 = vmatprep.subr.mxu0 %v5597
    %5808 = vmatpush1.msra.mxu0 %v5596
    %5809 = vmatprep.subr.mxu0 %v5601
    %5810 = vmatpush1.msra.mxu0 %v5600
    %5811 = vmatprep.subr.mxu0 %v5605
    %5812 = vmatpush1.msra.mxu0 %v5604
    %5813 = vmatprep.subr.mxu0 %v5609
    %5814 = vmatpush1.msra.mxu0 %v5608
    %5815 = vmatprep.subr.mxu0 %v5613
    %5816 = vmatpush1.msra.mxu0 %v5612
    %5817 = vmatprep.subr.mxu0 %v5617
    %5818 = vmatpush1.msra.mxu0 %v5616
    %5819 = vmatprep.subr.mxu0 %v5621
    %5820 = vmatpush1.msra.mxu0 %v5620
    %5821 = vmatprep.subr.mxu0 %v5625
    %5822 = vmatpush1.msra.mxu0 %v5624
    %5823 = vmatprep.subr.mxu0 %v5629
    %5824 = vmatpush1.msra.mxu0 %v5628
    %5825 = vmatprep.subr.mxu0 %v5633
    %5826 = vmatpush1.msra.mxu0 %v5632
    %5827 = vmatprep.subr.mxu0 %v5637
    %5828 = vmatpush1.msra.mxu0 %v5636
    %5829 = vmatprep.subr.mxu0 %v5641
    %5830 = vmatpush1.msra.mxu0 %v5640
    %5831 = vmatprep.subr.mxu0 %v5645
    %5832 = vmatpush1.msra.mxu0 %v5644
    %5833 = vmatprep.subr.mxu0 %v5649
    %5834 = vmatpush1.msra.mxu0 %v5648
    %5835 = vmatprep.subr.mxu0 %v5653
    %5836 = vmatpush1.msra.mxu0 %v5652
    %5837 = vmatprep.subr.mxu0 %v5657
    %5838 = vmatpush1.msra.mxu0 %v5656
    %5839 = vmatprep.subr.mxu0 %v5661
    %5840 = vmatpush1.msra.mxu0 %v5660
    %5841 = vmatprep.subr.mxu0 %v5665
    %5842 = vmatpush1.msra.mxu0 %v5664
    %5843 = vmatprep.subr.mxu0 %v5669
    %5844 = vmatpush1.msra.mxu0 %v5668
    %5845 = vmatprep.subr.mxu0 %v5673
    %5846 = vmatpush1.msra.mxu0 %v5672
    %5847 = vmatprep.subr.mxu0 %v5677
    %5848 = vmatpush1.msra.mxu0 %v5676
    %5849 = vmatprep.subr.mxu0 %v5681
    %5850 = vmatpush1.msra.mxu0 %v5680
    %5851 = vmatprep.subr.mxu0 %v5685
    %5852 = vmatpush1.msra.mxu0 %v5684
    %5853 = vmatprep.subr.mxu0 %v5689
    %5854 = vmatpush1.msra.mxu0 %v5688
    %5855 = vmatprep.subr.mxu0 %v5693
    %5856 = vmatpush1.msra.mxu0 %v5692
    %5857 = vmatprep.subr.mxu0 %v5697
    %5858 = vmatpush1.msra.mxu0 %v5696
    %5859 = vmatprep.subr.mxu0 %v5701
    %5860 = vmatpush1.msra.mxu0 %v5700
    %5861 = vmatprep.subr.mxu0 %v5705
    %5862 = vmatpush1.msra.mxu0 %v5704
    %5863 = vmatprep.mubr.f32.mxu0 %v5577
    %5864 = vmatmul.mubr.f32.gmra.mrb[0].mxu0 %v5576
    %v5865 = vpop.f32.mrb[0].mxu0
    %v5866 = vadd.f32 %v5719, %v5865
    %v5867 = vpop.f32.mrb[0].mxu0
    %v5868 = vadd.f32 %v5723, %v5867
    %5869 = vdwg.mxu0
    %v5870 = vmax.f32 %v5795, 0.0
    %v5871 = vmax.f32 %v5797, 0.0
    %v5872 = vmax.f32 %v5866, 0.0
    %v5873 = vmax.f32 %v5868, 0.0
    %v5874 = vld [vmem:[#allocation15] sm:$0xff]
    %v5875 = vld [vmem:[#allocation15 + $0x8] sm:$0xff]
    %v5876 = vld [vmem:[#allocation15 + $0x10] sm:$0xff]
    %v5877 = vld [vmem:[#allocation15 + $0x18] sm:$0xff]
    %v5878 = vld [vmem:[#allocation15 + $0x20] sm:$0xff]
    %v5879 = vld [vmem:[#allocation15 + $0x28] sm:$0xff]
    %v5880 = vld [vmem:[#allocation15 + $0x30] sm:$0xff]
    %v5881 = vld [vmem:[#allocation15 + $0x38] sm:$0xff]
    %v5882 = vld [vmem:[#allocation15 + $0x40] sm:$0xff]
    %v5883 = vld [vmem:[#allocation15 + $0x48] sm:$0xff]
    %v5884 = vld [vmem:[#allocation15 + $0x50] sm:$0xff]
    %v5885 = vld [vmem:[#allocation15 + $0x58] sm:$0xff]
    %v5886 = vld [vmem:[#allocation15 + $0x60] sm:$0xff]
    %v5887 = vld [vmem:[#allocation15 + $0x68] sm:$0xff]
    %v5888 = vld [vmem:[#allocation15 + $0x70] sm:$0xff]
    %v5889 = vld [vmem:[#allocation15 + $0x78] sm:$0xff]
    %v5890 = vld [vmem:[#allocation15 + $0x80] sm:$0xff]
    %v5891 = vld [vmem:[#allocation15 + $0x88] sm:$0xff]
    %v5892 = vld [vmem:[#allocation15 + $0x90] sm:$0xff]
    %v5893 = vld [vmem:[#allocation15 + $0x98] sm:$0xff]
    %v5894 = vld [vmem:[#allocation15 + $0xa0] sm:$0xff]
    %v5895 = vld [vmem:[#allocation15 + $0xa8] sm:$0xff]
    %v5896 = vld [vmem:[#allocation15 + $0xb0] sm:$0xff]
    %v5897 = vld [vmem:[#allocation15 + $0xb8] sm:$0xff]
    %v5898 = vld [vmem:[#allocation15 + $0xc0] sm:$0xff]
    %v5899 = vld [vmem:[#allocation15 + $0xc8] sm:$0xff]
    %v5900 = vld [vmem:[#allocation15 + $0xd0] sm:$0xff]
    %v5901 = vld [vmem:[#allocation15 + $0xd8] sm:$0xff]
    %v5902 = vld [vmem:[#allocation15 + $0xe0] sm:$0xff]
    %v5903 = vld [vmem:[#allocation15 + $0xe8] sm:$0xff]
    %v5904 = vld [vmem:[#allocation15 + $0xf0] sm:$0xff]
    %v5905 = vld [vmem:[#allocation15 + $0xf8] sm:$0xff]
    %v5906 = vld [vmem:[#allocation15 + $0x100] sm:$0xff]
    %v5907 = vld [vmem:[#allocation15 + $0x108] sm:$0xff]
    %v5908 = vld [vmem:[#allocation15 + $0x110] sm:$0xff]
    %v5909 = vld [vmem:[#allocation15 + $0x118] sm:$0xff]
    %v5910 = vld [vmem:[#allocation15 + $0x120] sm:$0xff]
    %v5911 = vld [vmem:[#allocation15 + $0x128] sm:$0xff]
    %v5912 = vld [vmem:[#allocation15 + $0x130] sm:$0xff]
    %v5913 = vld [vmem:[#allocation15 + $0x138] sm:$0xff]
    %v5914 = vld [vmem:[#allocation15 + $0x140] sm:$0xff]
    %v5915 = vld [vmem:[#allocation15 + $0x148] sm:$0xff]
    %v5916 = vld [vmem:[#allocation15 + $0x150] sm:$0xff]
    %v5917 = vld [vmem:[#allocation15 + $0x158] sm:$0xff]
    %v5918 = vld [vmem:[#allocation15 + $0x160] sm:$0xff]
    %v5919 = vld [vmem:[#allocation15 + $0x168] sm:$0xff]
    %v5920 = vld [vmem:[#allocation15 + $0x170] sm:$0xff]
    %v5921 = vld [vmem:[#allocation15 + $0x178] sm:$0xff]
    %v5922 = vld [vmem:[#allocation15 + $0x180] sm:$0xff]
    %v5923 = vld [vmem:[#allocation15 + $0x188] sm:$0xff]
    %v5924 = vld [vmem:[#allocation15 + $0x190] sm:$0xff]
    %v5925 = vld [vmem:[#allocation15 + $0x198] sm:$0xff]
    %v5926 = vld [vmem:[#allocation15 + $0x1a0] sm:$0xff]
    %v5927 = vld [vmem:[#allocation15 + $0x1a8] sm:$0xff]
    %v5928 = vld [vmem:[#allocation15 + $0x1b0] sm:$0xff]
    %v5929 = vld [vmem:[#allocation15 + $0x1b8] sm:$0xff]
    %v5930 = vld [vmem:[#allocation15 + $0x1c0] sm:$0xff]
    %v5931 = vld [vmem:[#allocation15 + $0x1c8] sm:$0xff]
    %v5932 = vld [vmem:[#allocation15 + $0x1d0] sm:$0xff]
    %v5933 = vld [vmem:[#allocation15 + $0x1d8] sm:$0xff]
    %v5934 = vld [vmem:[#allocation15 + $0x1e0] sm:$0xff]
    %v5935 = vld [vmem:[#allocation15 + $0x1e8] sm:$0xff]
    %v5936 = vld [vmem:[#allocation15 + $0x1f0] sm:$0xff]
    %v5937 = vld [vmem:[#allocation15 + $0x1f8] sm:$0xff]
    %v5938 = vld [vmem:[#allocation16] sm:$0x1]
    %v5940 = vlaneseq
    %v5941 = vshrl.u32 %v5940, 7
    %v5942 = vsub.s32 0, %v5941
    %v5943 = vrot.slane %v5938, %v5942
    %5945 = vmatprep.subr.mxu0 0.0
    %5946 = vmatpush1.msra.mxu0 %v5874
    %5947 = vmatprep.subr.mxu0 0.0
    %5948 = vmatpush1.msra.mxu0 %v5875
    %5949 = vmatprep.subr.mxu0 0.0
    %5950 = vmatpush1.msra.mxu0 %v5876
    %5951 = vmatprep.subr.mxu0 0.0
    %5952 = vmatpush1.msra.mxu0 %v5877
    %5953 = vmatprep.subr.mxu0 0.0
    %5954 = vmatpush1.msra.mxu0 %v5878
    %5955 = vmatprep.subr.mxu0 0.0
    %5956 = vmatpush1.msra.mxu0 %v5879
    %5957 = vmatprep.subr.mxu0 0.0
    %5958 = vmatpush1.msra.mxu0 %v5880
    %5959 = vmatprep.subr.mxu0 0.0
    %5960 = vmatpush1.msra.mxu0 %v5881
    %5961 = vmatprep.subr.mxu0 0.0
    %5962 = vmatpush1.msra.mxu0 %v5882
    %5963 = vmatprep.subr.mxu0 0.0
    %5964 = vmatpush1.msra.mxu0 %v5883
    %5965 = vmatprep.subr.mxu0 0.0
    %5966 = vmatpush1.msra.mxu0 %v5884
    %5967 = vmatprep.subr.mxu0 0.0
    %5968 = vmatpush1.msra.mxu0 %v5885
    %5969 = vmatprep.subr.mxu0 0.0
    %5970 = vmatpush1.msra.mxu0 %v5886
    %5971 = vmatprep.subr.mxu0 0.0
    %5972 = vmatpush1.msra.mxu0 %v5887
    %5973 = vmatprep.subr.mxu0 0.0
    %5974 = vmatpush1.msra.mxu0 %v5888
    %5975 = vmatprep.subr.mxu0 0.0
    %5976 = vmatpush1.msra.mxu0 %v5889
    %5977 = vmatprep.subr.mxu0 0.0
    %5978 = vmatpush1.msra.mxu0 %v5890
    %5979 = vmatprep.subr.mxu0 0.0
    %5980 = vmatpush1.msra.mxu0 %v5891
    %5981 = vmatprep.subr.mxu0 0.0
    %5982 = vmatpush1.msra.mxu0 %v5892
    %5983 = vmatprep.subr.mxu0 0.0
    %5984 = vmatpush1.msra.mxu0 %v5893
    %5985 = vmatprep.subr.mxu0 0.0
    %5986 = vmatpush1.msra.mxu0 %v5894
    %5987 = vmatprep.subr.mxu0 0.0
    %5988 = vmatpush1.msra.mxu0 %v5895
    %5989 = vmatprep.subr.mxu0 0.0
    %5990 = vmatpush1.msra.mxu0 %v5896
    %5991 = vmatprep.subr.mxu0 0.0
    %5992 = vmatpush1.msra.mxu0 %v5897
    %5993 = vmatprep.subr.mxu0 0.0
    %5994 = vmatpush1.msra.mxu0 %v5898
    %5995 = vmatprep.subr.mxu0 0.0
    %5996 = vmatpush1.msra.mxu0 %v5899
    %5997 = vmatprep.subr.mxu0 0.0
    %5998 = vmatpush1.msra.mxu0 %v5900
    %5999 = vmatprep.subr.mxu0 0.0
    %6000 = vmatpush1.msra.mxu0 %v5901
    %6001 = vmatprep.subr.mxu0 0.0
    %6002 = vmatpush1.msra.mxu0 %v5902
    %6003 = vmatprep.subr.mxu0 0.0
    %6004 = vmatpush1.msra.mxu0 %v5903
    %6005 = vmatprep.subr.mxu0 0.0
    %6006 = vmatpush1.msra.mxu0 %v5904
    %6007 = vmatprep.subr.mxu0 0.0
    %6008 = vmatpush1.msra.mxu0 %v5905
    %6009 = vmatprep.mubr.f32.mxu0 %v5871
    %6010 = vmatmul.mubr.f32.gmra.mrb[0].mxu0 %v5870
    %v6011 = vpop.f32.mrb[0].mxu0
    %v6012 = vadd.f32 %v5943, %v6011
    %v6013 = vpop.f32.mrb[0].mxu0
    %6014 = vdwg.mxu0
    %6015 = vmatprep.subr.mxu0 0.0
    %6016 = vmatpush1.msra.mxu0 %v5906
    %6017 = vmatprep.subr.mxu0 0.0
    %6018 = vmatpush1.msra.mxu0 %v5907
    %6019 = vmatprep.subr.mxu0 0.0
    %6020 = vmatpush1.msra.mxu0 %v5908
    %6021 = vmatprep.subr.mxu0 0.0
    %6022 = vmatpush1.msra.mxu0 %v5909
    %6023 = vmatprep.subr.mxu0 0.0
    %6024 = vmatpush1.msra.mxu0 %v5910
    %6025 = vmatprep.subr.mxu0 0.0
    %6026 = vmatpush1.msra.mxu0 %v5911
    %6027 = vmatprep.subr.mxu0 0.0
    %6028 = vmatpush1.msra.mxu0 %v5912
    %6029 = vmatprep.subr.mxu0 0.0
    %6030 = vmatpush1.msra.mxu0 %v5913
    %6031 = vmatprep.subr.mxu0 0.0
    %6032 = vmatpush1.msra.mxu0 %v5914
    %6033 = vmatprep.subr.mxu0 0.0
    %6034 = vmatpush1.msra.mxu0 %v5915
    %6035 = vmatprep.subr.mxu0 0.0
    %6036 = vmatpush1.msra.mxu0 %v5916
    %6037 = vmatprep.subr.mxu0 0.0
    %6038 = vmatpush1.msra.mxu0 %v5917
    %6039 = vmatprep.subr.mxu0 0.0
    %6040 = vmatpush1.msra.mxu0 %v5918
    %6041 = vmatprep.subr.mxu0 0.0
    %6042 = vmatpush1.msra.mxu0 %v5919
    %6043 = vmatprep.subr.mxu0 0.0
    %6044 = vmatpush1.msra.mxu0 %v5920
    %6045 = vmatprep.subr.mxu0 0.0
    %6046 = vmatpush1.msra.mxu0 %v5921
    %6047 = vmatprep.subr.mxu0 0.0
    %6048 = vmatpush1.msra.mxu0 %v5922
    %6049 = vmatprep.subr.mxu0 0.0
    %6050 = vmatpush1.msra.mxu0 %v5923
    %6051 = vmatprep.subr.mxu0 0.0
    %6052 = vmatpush1.msra.mxu0 %v5924
    %6053 = vmatprep.subr.mxu0 0.0
    %6054 = vmatpush1.msra.mxu0 %v5925
    %6055 = vmatprep.subr.mxu0 0.0
    %6056 = vmatpush1.msra.mxu0 %v5926
    %6057 = vmatprep.subr.mxu0 0.0
    %6058 = vmatpush1.msra.mxu0 %v5927
    %6059 = vmatprep.subr.mxu0 0.0
    %6060 = vmatpush1.msra.mxu0 %v5928
    %6061 = vmatprep.subr.mxu0 0.0
    %6062 = vmatpush1.msra.mxu0 %v5929
    %6063 = vmatprep.subr.mxu0 0.0
    %6064 = vmatpush1.msra.mxu0 %v5930
    %6065 = vmatprep.subr.mxu0 0.0
    %6066 = vmatpush1.msra.mxu0 %v5931
    %6067 = vmatprep.subr.mxu0 0.0
    %6068 = vmatpush1.msra.mxu0 %v5932
    %6069 = vmatprep.subr.mxu0 0.0
    %6070 = vmatpush1.msra.mxu0 %v5933
    %6071 = vmatprep.subr.mxu0 0.0
    %6072 = vmatpush1.msra.mxu0 %v5934
    %6073 = vmatprep.subr.mxu0 0.0
    %6074 = vmatpush1.msra.mxu0 %v5935
    %6075 = vmatprep.subr.mxu0 0.0
    %6076 = vmatpush1.msra.mxu0 %v5936
    %6077 = vmatprep.subr.mxu0 0.0
    %6078 = vmatpush1.msra.mxu0 %v5937
    %6079 = vmatprep.mubr.f32.mxu0 %v5873
    %6080 = vmatmul.mubr.f32.gmra.mrb[0].mxu0 %v5872
    %v6081 = vpop.f32.mrb[0].mxu0
    %v6082 = vadd.f32 %v6012, %v6081
    %v6083 = vpop.f32.mrb[0].mxu0
    %6084 = vdwg.mxu0
    %6085 = vst [vmem:[%s11] sm:$0xff] %v6082
    // Predicated region
    $region86: #{deep_q_network_forward.1} parent=1 // pred_check
      _
    $region87: #{deep_q_network_forward.1} parent=1 // pred_check_branch
      %6087 = sbr.rel (0) target = $region89
    $region88: #{deep_q_network_forward.1} parent=1 // pred_region
      _
    $region89: #{deep_q_network_forward.1} parent=1 // pred_fallthru
      _
    // Predicated region
    $region90: #{deep_q_network_forward.1} parent=1 // pred_check
      _
    $region91: #{deep_q_network_forward.1} parent=1 // pred_check_branch
      %6089 = sbr.rel (0) target = $region93
    $region92: #{deep_q_network_forward.1} parent=1 // pred_region
      _
    $region93: #{deep_q_network_forward.1} parent=1 // pred_fallthru
      _
    %6090 = vsyncpa [#allocation3], 1
    %6091 = vsyncpa [#allocation5], 1
    %6092 = vsyncpa [#allocation8], 1
    %6093 = vsyncpa [#allocation11], 1
    %6094 = vsyncpa [#allocation14], 1
    %6095 = vsyncpa [#allocation17], 1

</llo_original>
